<compile_context>
chip_gen: v5e
topology: v5e:2x2
jax: 0.10.0
libtpu: 0.0.40
codegen_flags: <defaults>
</compile_context>

<pallas_src>
import functools

import jax
import jax.numpy as jnp
from jax import lax
from jax.experimental import pallas as pl
from jax.experimental.pallas import tpu as pltpu

BN_EPS = 1e-5

# bf16 operands: ~2x MXU throughput on v6e/v7x, half the matmul-operand VMEM/DMA size.
# Accumulation stays f32 (preferred_element_type below); elementwise math stays f32.
MATMUL_DTYPE = jnp.bfloat16


def _mm(a, b):
    """MXU matmul with f32 accumulation; operands cast to MATMUL_DTYPE."""
    return jnp.dot(a.astype(MATMUL_DTYPE), b.astype(MATMUL_DTYPE),
                   preferred_element_type=jnp.float32)


def _mish(x):
    # mish(x) = x * tanh(softplus(x)) = x * t / (t + 2) with t = e*(e+2), e = exp(x).
    # One exp + one approximate EUP reciprocal instead of exp + log1p + tanh.
    e = jnp.exp(jnp.minimum(x, 20.0))
    t = e * (e + 2.0)
    y = x * t * pl.reciprocal(t + 2.0, approx=True)
    return jnp.where(x > 20.0, x, y)


def _stats_pair(y, inv_cnt_t):
    # Per-tile centered partials for Chan's parallel variance: (sum, M2) over rows.
    s = jnp.sum(y, axis=0, keepdims=True)                  # (1, C)
    d = y - s * inv_cnt_t
    m2 = jnp.sum(d * d, axis=0, keepdims=True)             # (1, C)
    return jnp.concatenate([s, m2], axis=0)                # (2, C)


# ----------------------------------- kernels ---------------------------------------
def _conv1_stats_kernel(x_ref, w1_ref, st_ref):
    # Per-tile (sum, M2) partials of the bias-less 1x1 conv output (block 0 only;
    # later blocks get these fused into the previous block's finalize pass).
    th, w, c = x_ref.shape
    y = _mm(x_ref[...].reshape(th * w, c), w1_ref[...])            # (th*w, C) f32
    st_ref[...] = _stats_pair(y, 1.0 / (th * w)).reshape(1, 2, c)


def _conv3_kernel(tiles_per_image, x_top_ref, x_cur_ref, x_bot_ref,
                  w1_ref, aff1_ref, w3_ref, z_ref, st_ref):
    th, w, c = x_cur_ref.shape
    r2 = th + 2
    t = pl.program_id(0)

    # conv1x1 -> BN1 (scale/shift folded from the global batch stats) -> Mish -> Mish,
    # recomputed for the tile plus its 1-row halo (cheaper than writing y1 to HBM).
    xh = jnp.concatenate([x_top_ref[...], x_cur_ref[...], x_bot_ref[...]], axis=0)
    y1 = _mm(xh.reshape(r2 * w, c), w1_ref[...])
    m = y1 * aff1_ref[0, :] + aff1_ref[1, :]
    m = _mish(_mish(m)).reshape(r2, w, c)

    # Zero the halo rows that fall outside the image (conv zero-padding applies to m).
    at_top = (t % tiles_per_image) == 0
    at_bot = (t % tiles_per_image) == tiles_per_image - 1
    row = lax.broadcasted_iota(jnp.int32, (r2, 1, 1), 0)
    keep = jnp.logical_and(jnp.logical_or(row > 0, jnp.logical_not(at_top)),
                           jnp.logical_or(row < r2 - 1, jnp.logical_not(at_bot)))
    # Cast to the matmul dtype *before* building the padded/folded buffers: halves the
    # mp/m3 VMEM footprint, which is what caps the tile size (v7x: 64 MiB VMEM).
    mb = jnp.where(keep, m, 0.0).astype(MATMUL_DTYPE)

    # Fold the three dx taps onto the channel axis: pad W once, take three static views.
    zcol = jnp.zeros((r2, 1, c), MATMUL_DTYPE)
    mp = jnp.concatenate([zcol, mb, zcol], axis=1)                      # (r2, W+2, C)
    m3 = jnp.concatenate([mp[:, 0:w, :], mp[:, 1:w + 1, :], mp[:, 2:w + 2, :]],
                         axis=2)                                        # (r2, W, 3C)

    # One (th*W, 3C) x (3C, C) matmul per ky; row slices of m3 give the dy shifts free.
    z = _mm(m3[0:th].reshape(th * w, 3 * c), w3_ref[0])
    z = z + _mm(m3[1:th + 1].reshape(th * w, 3 * c), w3_ref[1])
    z = z + _mm(m3[2:th + 2].reshape(th * w, 3 * c), w3_ref[2])

    # Stats come from the f32 value; the HBM round-trip of z is bf16 (half the traffic).
    z_ref[...] = z.reshape(th, w, c).astype(z_ref.dtype)
    st_ref[...] = _stats_pair(z, 1.0 / (th * w)).reshape(1, 2, c)


def _finalize_fused_kernel(z_ref, x_ref, aff2_ref, w1n_ref, o_ref, stn_ref):
    # BN2 (scale/shift) -> Mish -> Mish -> residual add, plus the *next* block's conv1x1
    # stats partials (fuses block k+1's stats pass into block k's finalize pass).
    th, w, c = x_ref.shape
    h = z_ref[...].astype(jnp.float32) * aff2_ref[0, :] + aff2_ref[1, :]
    h = _mish(_mish(h))
    out = x_ref[...] + h
    o_ref[...] = out.astype(o_ref.dtype)
    yn = _mm(out.reshape(th * w, c), w1n_ref[...])
    stn_ref[...] = _stats_pair(yn, 1.0 / (th * w)).reshape(1, 2, c)


def _finalize_last_kernel(z_ref, x_ref, aff2_ref, o_ref):
    # Last block: no next-block stats matmul (it would be dead work on every tile).
    h = z_ref[...].astype(jnp.float32) * aff2_ref[0, :] + aff2_ref[1, :]
    h = _mish(_mish(h))
    o_ref[...] = (x_ref[...] + h).astype(o_ref.dtype)


# ------------------------------- tile-size selection ---------------------------------
def _vmem_capacity_bytes():
    try:
        info = pltpu.get_tpu_info()
        cap = getattr(info, "vmem_capacity_bytes", None)
        if cap:
            return int(cap)
    except Exception:
        pass
    return 64 * 1024 * 1024   # assume the smallest per-core VMEM (v7x)


def _pick_row_tile(hh, w, c, budget_bytes):
    # conv3 is the binding pass.  Rough per-row bytes (w*c elements per row):
    #   x tile f32 2x-buffered (8 B/elem) + z bf16 out 2x-buffered (4 B/elem)
    #   + in-kernel intermediates xh/y1/m f32 + mb/mp/m3 bf16 + f32 accum (~30-36 B/elem).
    per_row = 48 * w * c                                  # conservative B per tile row
    fixed = 40 * c * c + (1 << 20)                        # bf16 w1 + folded w3, 2x-buffered
    target = max(1, int((budget_bytes - fixed) // per_row))
    # Largest divisor of H that fits the budget (tiles must not straddle image rows so
    # the 1-row halo masking stays per-image).
    # TODO(synk): for prime H larger than the budget target this degrades to th=1;
    # pad H (or tile N*H with in-kernel row masking) instead.
    best = 1
    for d in range(1, hh + 1):
        if hh % d == 0 and d <= target:
            best = d
    return best


# ------------------------------------ wrapper ---------------------------------------
def resblock_forward(x_nchw, params, row_tile=None):
    """params: list (one per block) of dicts with
         w1 (C,C) [in,out], b1 (C,), g1 (C,), be1 (C,),
         w3 (9,C,C) [tap=ky*3+kx, in, out], b3 (C,), g2 (C,), be2 (C,).
       b1/b3 are accepted but unused by the kernels: training-mode BN cancels them.
       row_tile: rows per grid step; None -> derived from the per-core VMEM budget."""
    x4 = jnp.transpose(x_nchw, (0, 2, 3, 1)).astype(jnp.float32)    # NCHW -> NHWC
    n, hh, w, c = x4.shape

    vmem_cap = _vmem_capacity_bytes()                  # 128 MiB v5e/v6e, 64 MiB v7x
    vmem_limit = int(vmem_cap * 0.75)                  # raise the scoped-VMEM default

    if row_tile is None:
        row_tile = _pick_row_tile(hh, w, c, int(vmem_limit * 0.7))
    th = max(1, min(int(row_tile), hh))
    while hh % th:                   # tiles must not straddle image boundaries
        th -= 1
    tpi = hh // th                   # row-tiles per image
    nh = n * hh
    nt = nh // th                    # grid size (prefer even for v7x's two TCs)
    cnt = float(n * hh * w)          # elements per channel for the BN batch statistics
    cnt_t = float(th * w)            # elements per channel per tile

    x = x4.reshape(nh, w, c)

    par = pltpu.CompilerParams(dimension_semantics=("parallel",),
                               vmem_limit_bytes=vmem_limit)
    f32 = jnp.float32
    tile_spec = pl.BlockSpec((th, w, c), lambda t: (t, 0, 0))
    x_shape = jax.ShapeDtypeStruct((nh, w, c), f32)
    z_shape = jax.ShapeDtypeStruct((nh, w, c), jnp.bfloat16)   # halved HBM round-trip
    stat_spec = pl.BlockSpec((1, 2, c), lambda t: (t, 0, 0))
    stat_shape = jax.ShapeDtypeStruct((nt, 2, c), f32)
    aff_spec = pl.BlockSpec((2, c), lambda t: (0, 0))
    w1_spec = pl.BlockSpec((c, c), lambda t: (0, 0))
    w3_spec = pl.BlockSpec((3, 3 * c, c), lambda t: (0, 0, 0))
    # 1-row halo above / below the tile (indices clamped; the out-of-image case is
    # masked inside the kernel).
    halo_top = pl.BlockSpec((1, w, c), lambda t: (jnp.maximum(t * th - 1, 0), 0, 0))
    halo_bot = pl.BlockSpec((1, w, c), lambda t: (jnp.minimum(t * th + th, nh - 1), 0, 0))

    conv1_stats = pl.pallas_call(
        _conv1_stats_kernel,
        grid=(nt,),
        in_specs=[tile_spec, w1_spec],
        out_specs=stat_spec,
        out_shape=stat_shape,
        compiler_params=par,
    )

    conv3 = pl.pallas_call(
        functools.partial(_conv3_kernel, tpi),
        grid=(nt,),
        in_specs=[halo_top, tile_spec, halo_bot, w1_spec, aff_spec, w3_spec],
        out_specs=(tile_spec, stat_spec),
        out_shape=(z_shape, stat_shape),
        compiler_params=par,
    )

    finalize_fused = pl.pallas_call(
        _finalize_fused_kernel,
        grid=(nt,),
        in_specs=[tile_spec, tile_spec, aff_spec, w1_spec],
        out_specs=(tile_spec, stat_spec),
        out_shape=(x_shape, stat_shape),
        compiler_params=par,
    )

    finalize_last = pl.pallas_call(
        _finalize_last_kernel,
        grid=(nt,),
        in_specs=[tile_spec, tile_spec, aff_spec],
        out_specs=tile_spec,
        out_shape=x_shape,
        compiler_params=par,
    )

    def affine(stat_tiles, gamma, beta):
        # Combine per-tile (sum, M2) partials with Chan's parallel formula, then fold
        # BN gamma/beta with the batch stats into a per-channel scale/shift.
        sums = stat_tiles[:, 0, :]                       # (nt, C)
        m2s = stat_tiles[:, 1, :]                        # (nt, C)
        mean = jnp.sum(sums, axis=0) / cnt
        mean_t = sums / cnt_t
        var = (jnp.sum(m2s, axis=0)
               + cnt_t * jnp.sum((mean_t - mean) ** 2, axis=0)) / cnt
        scale = gamma * lax.rsqrt(var + BN_EPS)
        return jnp.stack([scale, beta - mean * scale], axis=0)   # (2, C) f32

    def fold_w3(w3):
        # (9,C,C) tap=ky*3+kx -> (3, 3C, C): dx taps stacked along the contraction dim.
        return jnp.stack(
            [jnp.concatenate([w3[3 * ky], w3[3 * ky + 1], w3[3 * ky + 2]], axis=0)
             for ky in range(3)], axis=0)

    w1_b = [p["w1"].astype(MATMUL_DTYPE) for p in params]
    w3_b = [fold_w3(p["w3"]).astype(MATMUL_DTYPE) for p in params]

    st1 = conv1_stats(x, w1_b[0])                        # stats of conv1 for block 0
    for k, p in enumerate(params):
        aff1 = affine(st1, p["g1"], p["be1"])
        z, st2 = conv3(x, x, x, w1_b[k], aff1, w3_b[k])
        aff2 = affine(st2, p["g2"], p["be2"])
        if k + 1 < len(params):
            x, st1 = finalize_fused(z, x, aff2, w1_b[k + 1])   # also next block's stats
        else:
            x = finalize_last(z, x, aff2)

    return jnp.transpose(x.reshape(n, hh, w, c), (0, 3, 1, 2))   # NHWC -> NCHW


# ------------------------------- pure-JAX reference ----------------------------------
def _mish_ref(x):
    sp = jnp.where(x > 20.0, x, jnp.log1p(jnp.exp(jnp.minimum(x, 20.0))))
    return x * jnp.tanh(sp)


def _bn_ref(y, gamma, beta):
    mean = jnp.mean(y, axis=(0, 1, 2), keepdims=True)
    var = jnp.mean((y - mean) ** 2, axis=(0, 1, 2), keepdims=True)
    return gamma * (y - mean) * lax.rsqrt(var + BN_EPS) + beta


def resblock_reference(x_nchw, params):
    x = jnp.transpose(x_nchw, (0, 2, 3, 1)).astype(jnp.float32)
    c = x.shape[-1]
    hp = lax.Precision.HIGHEST
    for p in params:
        h = jnp.einsum("nhwi,io->nhwo", x, p["w1"], precision=hp) + p["b1"]
        h = _mish_ref(_mish_ref(_bn_ref(h, p["g1"], p["be1"])))
        w_hwio = p["w3"].reshape(3, 3, c, c)
        h = lax.conv_general_dilated(
            h, w_hwio, window_strides=(1, 1), padding="SAME",
            dimension_numbers=("NHWC", "HWIO", "NHWC"), precision=hp) + p["b3"]
        h = _mish_ref(_mish_ref(_bn_ref(h, p["g2"], p["be2"])))
        x = x + h
    return jnp.transpose(x, (0, 3, 1, 2))


# --------------------------------- param construction --------------------------------
def init_params(key, ch, nblocks=1):
    params = []
    for _ in range(nblocks):
        keys = jax.random.split(key, 9)
        key = keys[0]
        params.append({
            "w1": 0.3 * jax.random.normal(keys[1], (ch, ch), jnp.float32),   # (in, out)
            "b1": 0.1 * jax.random.normal(keys[2], (ch,), jnp.float32),
            "g1": 1.0 + 0.1 * jax.random.normal(keys[3], (ch,), jnp.float32),
            "be1": 0.1 * jax.random.normal(keys[4], (ch,), jnp.float32),
            "w3": 0.1 * jax.random.normal(keys[5], (9, ch, ch), jnp.float32),  # tap,(in,out)
            "b3": 0.1 * jax.random.normal(keys[6], (ch,), jnp.float32),
            "g2": 1.0 + 0.1 * jax.random.normal(keys[7], (ch,), jnp.float32),
            "be2": 0.1 * jax.random.normal(keys[8], (ch,), jnp.float32),
        })
    return params


if __name__ == "__main__":
    N, C, H, W = 2, 8, 16, 16
    nblocks = 2   # exercises the cross-block stats fusion and the last-block finalize

    key = jax.random.PRNGKey(0)
    kx, kp = jax.random.split(key)
    x = jax.random.normal(kx, (N, C, H, W), jnp.float32)   # NCHW, like the PyTorch module
    params = init_params(kp, C, nblocks)

    out = jax.jit(resblock_forward)(x, params)
    out = jax.block_until_ready(out)

    ref = resblock_reference(x, params)
    assert out.shape == (N, C, H, W)
    # Tolerance is intentional: bf16 MXU operands, a bf16 HBM round-trip of z, and the
    # approximate-EUP reciprocal in Mish, vs an f32 HIGHEST-precision reference across
    # two blocks.  Structural bugs produce O(1)-of-scale errors, so a few percent of
    # the activation scale still discriminates.
    err = float(jnp.max(jnp.abs(out - ref)))
    scale = float(jnp.max(jnp.abs(ref)))
    assert err <= 0.05 * max(scale, 1.0), (err, scale)

    print("KERNEL_OK")
</pallas_src>

<mosaic_0001>
module attributes {stable_mosaic.version = 11 : i64} {
  func.func @_conv1_stats_kernel(%arg0: i32, %arg1: memref<16x16x8xf32, #tpu.memory_space<vmem>>, %arg2: memref<8x8xbf16, #tpu.memory_space<vmem>>, %arg3: memref<1x2x8xf32, #tpu.memory_space<vmem>>) attributes {dimension_semantics = [#tpu.dimension_semantics<parallel>], iteration_bounds = array<i64: 2>, scalar_prefetch = 0 : i64, scratch_operands = 0 : i64, tpu.core_type = #tpu.core_type<tc>, window_params = [{transform_indices = @transform_0, window_bounds = array<i64: 16, 16, 8>}, {pipeline_mode = #tpu.pipeline_mode<synchronous>, transform_indices = @transform_1, window_bounds = array<i64: 8, 8>}, {transform_indices = @transform_2, window_bounds = array<i64: 1, 2, 8>}]} {
    %c0 = arith.constant 0 : index
    %c0_0 = arith.constant 0 : index
    %c0_1 = arith.constant 0 : index
    %0 = vector.load %arg1[%c0, %c0_0, %c0_1] : memref<16x16x8xf32, #tpu.memory_space<vmem>>, vector<16x16x8xf32>
    %1 = vector.shape_cast %0 : vector<16x16x8xf32> to vector<256x8xf32>
    %c0_2 = arith.constant 0 : index
    %c0_3 = arith.constant 0 : index
    %2 = vector.load %arg2[%c0_2, %c0_3] : memref<8x8xbf16, #tpu.memory_space<vmem>>, vector<8x8xbf16>
    %3 = arith.truncf %1 : vector<256x8xf32> to vector<256x8xbf16>
    %cst = arith.constant dense<0.000000e+00> : vector<256x8xf32>
    %4 = tpu.matmul %3, %2, %cst {dimension_numbers = #tpu.dot_dimension_numbers<[1], [0], [0], [1], [0, 0, 1, 1], [], []>} : vector<256x8xbf16>, vector<8x8xbf16>, vector<256x8xf32> -> vector<256x8xf32>
    %cst_4 = arith.constant dense<0.000000e+00> : vector<8xf32>
    %5 = vector.multi_reduction <add>, %4, %cst_4 [0] : vector<256x8xf32> to vector<8xf32>
    %6 = vector.shape_cast %5 : vector<8xf32> to vector<1x8xf32>
    %cst_5 = arith.constant 3.906250e-03 : f32
    %7 = vector.broadcast %cst_5 : f32 to vector<1x8xf32>
    %8 = arith.mulf %6, %7 : vector<1x8xf32>
    %9 = vector.broadcast %8 : vector<1x8xf32> to vector<256x8xf32>
    %10 = arith.subf %4, %9 : vector<256x8xf32>
    %11 = arith.mulf %10, %10 : vector<256x8xf32>
    %cst_6 = arith.constant dense<0.000000e+00> : vector<8xf32>
    %12 = vector.multi_reduction <add>, %11, %cst_6 [0] : vector<256x8xf32> to vector<8xf32>
    %13 = vector.shape_cast %12 : vector<8xf32> to vector<1x8xf32>
    %14 = tpu.concatenate %6, %13 in 0 : vector<1x8xf32>, vector<1x8xf32> -> vector<2x8xf32>
    %15 = vector.shape_cast %14 : vector<2x8xf32> to vector<1x2x8xf32>
    %c0_7 = arith.constant 0 : index
    %c0_8 = arith.constant 0 : index
    %c0_9 = arith.constant 0 : index
    %16 = vector.load %arg3[%c0_7, %c0_8, %c0_9] : memref<1x2x8xf32, #tpu.memory_space<vmem>>, vector<1x2x8xf32>
    tpu.vector_store %arg3[%c0_7, %c0_8, %c0_9], %15 {strides = array<i32>} : memref<1x2x8xf32, #tpu.memory_space<vmem>>, vector<1x2x8xf32>,
    return
  }
  func.func @transform_0(%arg0: i32) -> (i32, i32, i32) {
    %c0_i32 = arith.constant 0 : i32
    %c0_i32_0 = arith.constant 0 : i32
    %c0_i32_1 = arith.constant 0 : i32
    return %arg0, %c0_i32, %c0_i32_0 : i32, i32, i32
  }
  func.func @transform_1(%arg0: i32) -> (i32, i32) {
    %c0_i32 = arith.constant 0 : i32
    %c0_i32_0 = arith.constant 0 : i32
    %c0_i32_1 = arith.constant 0 : i32
    return %c0_i32, %c0_i32_0 : i32, i32
  }
  func.func @transform_2(%arg0: i32) -> (i32, i32, i32) {
    %c0_i32 = arith.constant 0 : i32
    %c0_i32_0 = arith.constant 0 : i32
    %c0_i32_1 = arith.constant 0 : i32
    return %arg0, %c0_i32, %c0_i32_0 : i32, i32, i32
  }
}

module attributes {stable_mosaic.version = 11 : i64} {
  func.func @_finalize_fused_kernel(%arg0: i32, %arg1: memref<16x16x8xbf16, #tpu.memory_space<vmem>>, %arg2: memref<16x16x8xf32, #tpu.memory_space<vmem>>, %arg3: memref<2x8xf32, #tpu.memory_space<vmem>>, %arg4: memref<8x8xbf16, #tpu.memory_space<vmem>>, %arg5: memref<16x16x8xf32, #tpu.memory_space<vmem>>, %arg6: memref<1x2x8xf32, #tpu.memory_space<vmem>>) attributes {dimension_semantics = [#tpu.dimension_semantics<parallel>], iteration_bounds = array<i64: 2>, scalar_prefetch = 0 : i64, scratch_operands = 0 : i64, tpu.core_type = #tpu.core_type<tc>, window_params = [{transform_indices = @transform_0, window_bounds = array<i64: 16, 16, 8>}, {transform_indices = @transform_1, window_bounds = array<i64: 16, 16, 8>}, {pipeline_mode = #tpu.pipeline_mode<synchronous>, transform_indices = @transform_2, window_bounds = array<i64: 2, 8>}, {pipeline_mode = #tpu.pipeline_mode<synchronous>, transform_indices = @transform_3, window_bounds = array<i64: 8, 8>}, {transform_indices = @transform_4, window_bounds = array<i64: 16, 16, 8>}, {transform_indices = @transform_5, window_bounds = array<i64: 1, 2, 8>}]} {
    %c0 = arith.constant 0 : index
    %c0_0 = arith.constant 0 : index
    %c0_1 = arith.constant 0 : index
    %0 = vector.load %arg1[%c0, %c0_0, %c0_1] : memref<16x16x8xbf16, #tpu.memory_space<vmem>>, vector<16x16x8xbf16>
    %1 = arith.extf %0 : vector<16x16x8xbf16> to vector<16x16x8xf32>
    %c0_2 = arith.constant 0 : index
    %c0_3 = arith.constant 0 : index
    %2 = vector.load %arg3[%c0_2, %c0_3] : memref<2x8xf32, #tpu.memory_space<vmem>>, vector<1x8xf32>
    %3 = vector.shape_cast %2 : vector<1x8xf32> to vector<8xf32>
    %4 = vector.shape_cast %3 : vector<8xf32> to vector<1x1x8xf32>
    %5 = vector.broadcast %4 : vector<1x1x8xf32> to vector<16x16x8xf32>
    %6 = arith.mulf %1, %5 : vector<16x16x8xf32>
    %c1 = arith.constant 1 : index
    %c0_4 = arith.constant 0 : index
    %7 = vector.load %arg3[%c1, %c0_4] : memref<2x8xf32, #tpu.memory_space<vmem>>, vector<1x8xf32>
    %8 = vector.shape_cast %7 : vector<1x8xf32> to vector<8xf32>
    %9 = vector.shape_cast %8 : vector<8xf32> to vector<1x1x8xf32>
    %10 = vector.broadcast %9 : vector<1x1x8xf32> to vector<16x16x8xf32>
    %11 = arith.addf %6, %10 : vector<16x16x8xf32>
    %cst = arith.constant 2.000000e+01 : f32
    %12 = vector.broadcast %cst : f32 to vector<16x16x8xf32>
    %13 = arith.minimumf %11, %12 : vector<16x16x8xf32>
    %14 = math.exp %13 : vector<16x16x8xf32>
    %cst_5 = arith.constant 2.000000e+00 : f32
    %15 = vector.broadcast %cst_5 : f32 to vector<16x16x8xf32>
    %16 = arith.addf %14, %15 : vector<16x16x8xf32>
    %17 = arith.mulf %14, %16 : vector<16x16x8xf32>
    %18 = arith.mulf %11, %17 : vector<16x16x8xf32>
    %cst_6 = arith.constant 2.000000e+00 : f32
    %19 = vector.broadcast %cst_6 : f32 to vector<16x16x8xf32>
    %20 = arith.addf %17, %19 : vector<16x16x8xf32>
    %21 = tpu.reciprocal %20 {approx = true} : vector<16x16x8xf32> -> vector<16x16x8xf32>
    %22 = arith.mulf %18, %21 : vector<16x16x8xf32>
    %cst_7 = arith.constant 2.000000e+01 : f32
    %23 = vector.broadcast %cst_7 : f32 to vector<16x16x8xf32>
    %24 = arith.cmpf ogt, %11, %23 : vector<16x16x8xf32>
    %25 = arith.select %24, %11, %22 : vector<16x16x8xi1>, vector<16x16x8xf32>
    %cst_8 = arith.constant 2.000000e+01 : f32
    %26 = vector.broadcast %cst_8 : f32 to vector<16x16x8xf32>
    %27 = arith.minimumf %25, %26 : vector<16x16x8xf32>
    %28 = math.exp %27 : vector<16x16x8xf32>
    %cst_9 = arith.constant 2.000000e+00 : f32
    %29 = vector.broadcast %cst_9 : f32 to vector<16x16x8xf32>
    %30 = arith.addf %28, %29 : vector<16x16x8xf32>
    %31 = arith.mulf %28, %30 : vector<16x16x8xf32>
    %32 = arith.mulf %25, %31 : vector<16x16x8xf32>
    %cst_10 = arith.constant 2.000000e+00 : f32
    %33 = vector.broadcast %cst_10 : f32 to vector<16x16x8xf32>
    %34 = arith.addf %31, %33 : vector<16x16x8xf32>
    %35 = tpu.reciprocal %34 {approx = true} : vector<16x16x8xf32> -> vector<16x16x8xf32>
    %36 = arith.mulf %32, %35 : vector<16x16x8xf32>
    %cst_11 = arith.constant 2.000000e+01 : f32
    %37 = vector.broadcast %cst_11 : f32 to vector<16x16x8xf32>
    %38 = arith.cmpf ogt, %25, %37 : vector<16x16x8xf32>
    %39 = arith.select %38, %25, %36 : vector<16x16x8xi1>, vector<16x16x8xf32>
    %c0_12 = arith.constant 0 : index
    %c0_13 = arith.constant 0 : index
    %c0_14 = arith.constant 0 : index
    %40 = vector.load %arg2[%c0_12, %c0_13, %c0_14] : memref<16x16x8xf32, #tpu.memory_space<vmem>>, vector<16x16x8xf32>
    %41 = arith.addf %40, %39 : vector<16x16x8xf32>
    %c0_15 = arith.constant 0 : index
    %c0_16 = arith.constant 0 : index
    %c0_17 = arith.constant 0 : index
    %42 = vector.load %arg5[%c0_15, %c0_16, %c0_17] : memref<16x16x8xf32, #tpu.memory_space<vmem>>, vector<16x16x8xf32>
    tpu.vector_store %arg5[%c0_15, %c0_16, %c0_17], %41 {strides = array<i32>} : memref<16x16x8xf32, #tpu.memory_space<vmem>>, vector<16x16x8xf32>,
    %43 = vector.shape_cast %41 : vector<16x16x8xf32> to vector<256x8xf32>
    %c0_18 = arith.constant 0 : index
    %c0_19 = arith.constant 0 : index
    %44 = vector.load %arg4[%c0_18, %c0_19] : memref<8x8xbf16, #tpu.memory_space<vmem>>, vector<8x8xbf16>
    %45 = arith.truncf %43 : vector<256x8xf32> to vector<256x8xbf16>
    %cst_20 = arith.constant dense<0.000000e+00> : vector<256x8xf32>
    %46 = tpu.matmul %45, %44, %cst_20 {dimension_numbers = #tpu.dot_dimension_numbers<[1], [0], [0], [1], [0, 0, 1, 1], [], []>} : vector<256x8xbf16>, vector<8x8xbf16>, vector<256x8xf32> -> vector<256x8xf32>
    %cst_21 = arith.constant dense<0.000000e+00> : vector<8xf32>
    %47 = vector.multi_reduction <add>, %46, %cst_21 [0] : vector<256x8xf32> to vector<8xf32>
    %48 = vector.shape_cast %47 : vector<8xf32> to vector<1x8xf32>
    %cst_22 = arith.constant 3.906250e-03 : f32
    %49 = vector.broadcast %cst_22 : f32 to vector<1x8xf32>
    %50 = arith.mulf %48, %49 : vector<1x8xf32>
    %51 = vector.broadcast %50 : vector<1x8xf32> to vector<256x8xf32>
    %52 = arith.subf %46, %51 : vector<256x8xf32>
    %53 = arith.mulf %52, %52 : vector<256x8xf32>
    %cst_23 = arith.constant dense<0.000000e+00> : vector<8xf32>
    %54 = vector.multi_reduction <add>, %53, %cst_23 [0] : vector<256x8xf32> to vector<8xf32>
    %55 = vector.shape_cast %54 : vector<8xf32> to vector<1x8xf32>
    %56 = tpu.concatenate %48, %55 in 0 : vector<1x8xf32>, vector<1x8xf32> -> vector<2x8xf32>
    %57 = vector.shape_cast %56 : vector<2x8xf32> to vector<1x2x8xf32>
    %c0_24 = arith.constant 0 : index
    %c0_25 = arith.constant 0 : index
    %c0_26 = arith.constant 0 : index
    %58 = vector.load %arg6[%c0_24, %c0_25, %c0_26] : memref<1x2x8xf32, #tpu.memory_space<vmem>>, vector<1x2x8xf32>
    tpu.vector_store %arg6[%c0_24, %c0_25, %c0_26], %57 {strides = array<i32>} : memref<1x2x8xf32, #tpu.memory_space<vmem>>, vector<1x2x8xf32>,
    return
  }
  func.func @transform_0(%arg0: i32) -> (i32, i32, i32) {
    %c0_i32 = arith.constant 0 : i32
    %c0_i32_0 = arith.constant 0 : i32
    %c0_i32_1 = arith.constant 0 : i32
    return %arg0, %c0_i32, %c0_i32_0 : i32, i32, i32
  }
  func.func @transform_1(%arg0: i32) -> (i32, i32, i32) {
    %c0_i32 = arith.constant 0 : i32
    %c0_i32_0 = arith.constant 0 : i32
    %c0_i32_1 = arith.constant 0 : i32
    return %arg0, %c0_i32, %c0_i32_0 : i32, i32, i32
  }
  func.func @transform_2(%arg0: i32) -> (i32, i32) {
    %c0_i32 = arith.constant 0 : i32
    %c0_i32_0 = arith.constant 0 : i32
    %c0_i32_1 = arith.constant 0 : i32
    return %c0_i32, %c0_i32_0 : i32, i32
  }
  func.func @transform_3(%arg0: i32) -> (i32, i32) {
    %c0_i32 = arith.constant 0 : i32
    %c0_i32_0 = arith.constant 0 : i32
    %c0_i32_1 = arith.constant 0 : i32
    return %c0_i32, %c0_i32_0 : i32, i32
  }
  func.func @transform_4(%arg0: i32) -> (i32, i32, i32) {
    %c0_i32 = arith.constant 0 : i32
    %c0_i32_0 = arith.constant 0 : i32
    %c0_i32_1 = arith.constant 0 : i32
    return %arg0, %c0_i32, %c0_i32_0 : i32, i32, i32
  }
  func.func @transform_5(%arg0: i32) -> (i32, i32, i32) {
    %c0_i32 = arith.constant 0 : i32
    %c0_i32_0 = arith.constant 0 : i32
    %c0_i32_1 = arith.constant 0 : i32
    return %arg0, %c0_i32, %c0_i32_0 : i32, i32, i32
  }
}

module attributes {stable_mosaic.version = 11 : i64} {
  func.func @_conv3_kernel(%arg0: i32, %arg1: memref<1x16x8xf32, #tpu.memory_space<vmem>>, %arg2: memref<16x16x8xf32, #tpu.memory_space<vmem>>, %arg3: memref<1x16x8xf32, #tpu.memory_space<vmem>>, %arg4: memref<8x8xbf16, #tpu.memory_space<vmem>>, %arg5: memref<2x8xf32, #tpu.memory_space<vmem>>, %arg6: memref<3x24x8xbf16, #tpu.memory_space<vmem>>, %arg7: memref<16x16x8xbf16, #tpu.memory_space<vmem>>, %arg8: memref<1x2x8xf32, #tpu.memory_space<vmem>>) attributes {dimension_semantics = [#tpu.dimension_semantics<parallel>], iteration_bounds = array<i64: 2>, scalar_prefetch = 0 : i64, scratch_operands = 0 : i64, tpu.core_type = #tpu.core_type<tc>, window_params = [{transform_indices = @transform_0, window_bounds = array<i64: 1, 16, 8>}, {transform_indices = @transform_1, window_bounds = array<i64: 16, 16, 8>}, {transform_indices = @transform_2, window_bounds = array<i64: 1, 16, 8>}, {pipeline_mode = #tpu.pipeline_mode<synchronous>, transform_indices = @transform_3, window_bounds = array<i64: 8, 8>}, {pipeline_mode = #tpu.pipeline_mode<synchronous>, transform_indices = @transform_4, window_bounds = array<i64: 2, 8>}, {pipeline_mode = #tpu.pipeline_mode<synchronous>, transform_indices = @transform_5, window_bounds = array<i64: 3, 24, 8>}, {transform_indices = @transform_6, window_bounds = array<i64: 16, 16, 8>}, {transform_indices = @transform_7, window_bounds = array<i64: 1, 2, 8>}]} {
    %c0 = arith.constant 0 : index
    %c0_0 = arith.constant 0 : index
    %c0_1 = arith.constant 0 : index
    %0 = vector.load %arg1[%c0, %c0_0, %c0_1] : memref<1x16x8xf32, #tpu.memory_space<vmem>>, vector<1x16x8xf32>
    %c0_2 = arith.constant 0 : index
    %c0_3 = arith.constant 0 : index
    %c0_4 = arith.constant 0 : index
    %1 = vector.load %arg2[%c0_2, %c0_3, %c0_4] : memref<16x16x8xf32, #tpu.memory_space<vmem>>, vector<16x16x8xf32>
    %c0_5 = arith.constant 0 : index
    %c0_6 = arith.constant 0 : index
    %c0_7 = arith.constant 0 : index
    %2 = vector.load %arg3[%c0_5, %c0_6, %c0_7] : memref<1x16x8xf32, #tpu.memory_space<vmem>>, vector<1x16x8xf32>
    %3 = tpu.concatenate %0, %1, %2 in 0 : vector<1x16x8xf32>, vector<16x16x8xf32>, vector<1x16x8xf32> -> vector<18x16x8xf32>
    %4 = vector.shape_cast %3 : vector<18x16x8xf32> to vector<288x8xf32>
    %c0_8 = arith.constant 0 : index
    %c0_9 = arith.constant 0 : index
    %5 = vector.load %arg4[%c0_8, %c0_9] : memref<8x8xbf16, #tpu.memory_space<vmem>>, vector<8x8xbf16>
    %6 = arith.truncf %4 : vector<288x8xf32> to vector<288x8xbf16>
    %cst = arith.constant dense<0.000000e+00> : vector<288x8xf32>
    %7 = tpu.matmul %6, %5, %cst {dimension_numbers = #tpu.dot_dimension_numbers<[1], [0], [0], [1], [0, 0, 1, 1], [], []>} : vector<288x8xbf16>, vector<8x8xbf16>, vector<288x8xf32> -> vector<288x8xf32>
    %c0_10 = arith.constant 0 : index
    %c0_11 = arith.constant 0 : index
    %8 = vector.load %arg5[%c0_10, %c0_11] : memref<2x8xf32, #tpu.memory_space<vmem>>, vector<1x8xf32>
    %9 = vector.shape_cast %8 : vector<1x8xf32> to vector<8xf32>
    %10 = vector.shape_cast %9 : vector<8xf32> to vector<1x8xf32>
    %11 = vector.broadcast %10 : vector<1x8xf32> to vector<288x8xf32>
    %12 = arith.mulf %7, %11 : vector<288x8xf32>
    %c1 = arith.constant 1 : index
    %c0_12 = arith.constant 0 : index
    %13 = vector.load %arg5[%c1, %c0_12] : memref<2x8xf32, #tpu.memory_space<vmem>>, vector<1x8xf32>
    %14 = vector.shape_cast %13 : vector<1x8xf32> to vector<8xf32>
    %15 = vector.shape_cast %14 : vector<8xf32> to vector<1x8xf32>
    %16 = vector.broadcast %15 : vector<1x8xf32> to vector<288x8xf32>
    %17 = arith.addf %12, %16 : vector<288x8xf32>
    %cst_13 = arith.constant 2.000000e+01 : f32
    %18 = vector.broadcast %cst_13 : f32 to vector<288x8xf32>
    %19 = arith.minimumf %17, %18 : vector<288x8xf32>
    %20 = math.exp %19 : vector<288x8xf32>
    %cst_14 = arith.constant 2.000000e+00 : f32
    %21 = vector.broadcast %cst_14 : f32 to vector<288x8xf32>
    %22 = arith.addf %20, %21 : vector<288x8xf32>
    %23 = arith.mulf %20, %22 : vector<288x8xf32>
    %24 = arith.mulf %17, %23 : vector<288x8xf32>
    %cst_15 = arith.constant 2.000000e+00 : f32
    %25 = vector.broadcast %cst_15 : f32 to vector<288x8xf32>
    %26 = arith.addf %23, %25 : vector<288x8xf32>
    %27 = tpu.reciprocal %26 {approx = true} : vector<288x8xf32> -> vector<288x8xf32>
    %28 = arith.mulf %24, %27 : vector<288x8xf32>
    %cst_16 = arith.constant 2.000000e+01 : f32
    %29 = vector.broadcast %cst_16 : f32 to vector<288x8xf32>
    %30 = arith.cmpf ogt, %17, %29 : vector<288x8xf32>
    %31 = arith.select %30, %17, %28 : vector<288x8xi1>, vector<288x8xf32>
    %cst_17 = arith.constant 2.000000e+01 : f32
    %32 = vector.broadcast %cst_17 : f32 to vector<288x8xf32>
    %33 = arith.minimumf %31, %32 : vector<288x8xf32>
    %34 = math.exp %33 : vector<288x8xf32>
    %cst_18 = arith.constant 2.000000e+00 : f32
    %35 = vector.broadcast %cst_18 : f32 to vector<288x8xf32>
    %36 = arith.addf %34, %35 : vector<288x8xf32>
    %37 = arith.mulf %34, %36 : vector<288x8xf32>
    %38 = arith.mulf %31, %37 : vector<288x8xf32>
    %cst_19 = arith.constant 2.000000e+00 : f32
    %39 = vector.broadcast %cst_19 : f32 to vector<288x8xf32>
    %40 = arith.addf %37, %39 : vector<288x8xf32>
    %41 = tpu.reciprocal %40 {approx = true} : vector<288x8xf32> -> vector<288x8xf32>
    %42 = arith.mulf %38, %41 : vector<288x8xf32>
    %cst_20 = arith.constant 2.000000e+01 : f32
    %43 = vector.broadcast %cst_20 : f32 to vector<288x8xf32>
    %44 = arith.cmpf ogt, %31, %43 : vector<288x8xf32>
    %45 = arith.select %44, %31, %42 : vector<288x8xi1>, vector<288x8xf32>
    %46 = vector.shape_cast %45 : vector<288x8xf32> to vector<18x16x8xf32>
    %c1_i32 = arith.constant 1 : i32
    %c0_i32 = arith.constant 0 : i32
    %47 = arith.cmpi eq, %c1_i32, %c0_i32 : i32
    %c1_i32_21 = arith.constant 1 : i32
    %48 = arith.select %47, %c1_i32_21, %c1_i32 : i32
    %49 = arith.remsi %arg0, %48 : i32
    %c0_i32_22 = arith.constant 0 : i32
    %50 = arith.cmpi ne, %49, %c0_i32_22 : i32
    %c0_i32_23 = arith.constant 0 : i32
    %51 = arith.cmpi slt, %49, %c0_i32_23 : i32
    %c0_i32_24 = arith.constant 0 : i32
    %52 = arith.cmpi slt, %48, %c0_i32_24 : i32
    %53 = arith.xori %51, %52 : i1
    %54 = arith.andi %53, %50 : i1
    %55 = arith.addi %49, %48 : i32
    %56 = arith.select %54, %55, %49 : i32
    %c0_i32_25 = arith.constant 0 : i32
    %57 = arith.cmpi eq, %56, %c0_i32_25 : i32
    %c1_i32_26 = arith.constant 1 : i32
    %c0_i32_27 = arith.constant 0 : i32
    %58 = arith.cmpi eq, %c1_i32_26, %c0_i32_27 : i32
    %c1_i32_28 = arith.constant 1 : i32
    %59 = arith.select %58, %c1_i32_28, %c1_i32_26 : i32
    %60 = arith.remsi %arg0, %59 : i32
    %c0_i32_29 = arith.constant 0 : i32
    %61 = arith.cmpi ne, %60, %c0_i32_29 : i32
    %c0_i32_30 = arith.constant 0 : i32
    %62 = arith.cmpi slt, %60, %c0_i32_30 : i32
    %c0_i32_31 = arith.constant 0 : i32
    %63 = arith.cmpi slt, %59, %c0_i32_31 : i32
    %64 = arith.xori %62, %63 : i1
    %65 = arith.andi %64, %61 : i1
    %66 = arith.addi %60, %59 : i32
    %67 = arith.select %65, %66, %60 : i32
    %c0_i32_32 = arith.constant 0 : i32
    %68 = arith.cmpi eq, %67, %c0_i32_32 : i32
    %69 = tpu.iota {dimensions = array<i32: 0>} : vector<18x1x1xi32>
    %c0_i32_33 = arith.constant 0 : i32
    %70 = vector.broadcast %c0_i32_33 : i32 to vector<18x1x1xi32>
    %71 = arith.cmpi sgt, %69, %70 : vector<18x1x1xi32>
    %true = arith.constant true
    %72 = arith.xori %57, %true : i1
    %73 = vector.broadcast %72 : i1 to vector<18x1x1xi1>
    %74 = arith.ori %71, %73 : vector<18x1x1xi1>
    %c17_i32 = arith.constant 17 : i32
    %75 = vector.broadcast %c17_i32 : i32 to vector<18x1x1xi32>
    %76 = arith.cmpi slt, %69, %75 : vector<18x1x1xi32>
    %true_34 = arith.constant true
    %77 = arith.xori %68, %true_34 : i1
    %78 = vector.broadcast %77 : i1 to vector<18x1x1xi1>
    %79 = arith.ori %76, %78 : vector<18x1x1xi1>
    %80 = arith.andi %74, %79 : vector<18x1x1xi1>
    %cst_35 = arith.constant 0.000000e+00 : f32
    %81 = vector.shape_cast %80 : vector<18x1x1xi1> to vector<18x1x1xi1>
    %82 = vector.broadcast %81 : vector<18x1x1xi1> to vector<18x16x8xi1>
    %83 = vector.broadcast %cst_35 : f32 to vector<18x16x8xf32>
    %84 = arith.select %82, %46, %83 : vector<18x16x8xi1>, vector<18x16x8xf32>
    %85 = arith.truncf %84 : vector<18x16x8xf32> to vector<18x16x8xbf16>
    %cst_36 = arith.constant 0.000000e+00 : bf16
    %86 = vector.broadcast %cst_36 : bf16 to vector<18x1x8xbf16>
    %87 = tpu.concatenate %86, %85, %86 in 1 : vector<18x1x8xbf16>, vector<18x16x8xbf16>, vector<18x1x8xbf16> -> vector<18x18x8xbf16>
    %88 = vector.extract_strided_slice %87 {offsets = [0, 0, 0], sizes = [18, 16, 8], strides = [1, 1, 1]} : vector<18x18x8xbf16> to vector<18x16x8xbf16>
    %89 = vector.extract_strided_slice %87 {offsets = [0, 1, 0], sizes = [18, 16, 8], strides = [1, 1, 1]} : vector<18x18x8xbf16> to vector<18x16x8xbf16>
    %90 = vector.extract_strided_slice %87 {offsets = [0, 2, 0], sizes = [18, 16, 8], strides = [1, 1, 1]} : vector<18x18x8xbf16> to vector<18x16x8xbf16>
    %91 = tpu.concatenate %88, %89, %90 in 2 : vector<18x16x8xbf16>, vector<18x16x8xbf16>, vector<18x16x8xbf16> -> vector<18x16x24xbf16>
    %92 = vector.extract_strided_slice %91 {offsets = [0, 0, 0], sizes = [16, 16, 24], strides = [1, 1, 1]} : vector<18x16x24xbf16> to vector<16x16x24xbf16>
    %93 = vector.shape_cast %92 : vector<16x16x24xbf16> to vector<256x24xbf16>
    %c0_37 = arith.constant 0 : index
    %c0_38 = arith.constant 0 : index
    %c0_39 = arith.constant 0 : index
    %94 = vector.load %arg6[%c0_37, %c0_38, %c0_39] : memref<3x24x8xbf16, #tpu.memory_space<vmem>>, vector<1x24x8xbf16>
    %95 = vector.shape_cast %94 : vector<1x24x8xbf16> to vector<24x8xbf16>
    %cst_40 = arith.constant dense<0.000000e+00> : vector<256x8xf32>
    %96 = tpu.matmul %93, %95, %cst_40 {dimension_numbers = #tpu.dot_dimension_numbers<[1], [0], [0], [1], [0, 0, 1, 1], [], []>} : vector<256x24xbf16>, vector<24x8xbf16>, vector<256x8xf32> -> vector<256x8xf32>
    %97 = vector.extract_strided_slice %91 {offsets = [1, 0, 0], sizes = [16, 16, 24], strides = [1, 1, 1]} : vector<18x16x24xbf16> to vector<16x16x24xbf16>
    %98 = vector.shape_cast %97 : vector<16x16x24xbf16> to vector<256x24xbf16>
    %c1_41 = arith.constant 1 : index
    %c0_42 = arith.constant 0 : index
    %c0_43 = arith.constant 0 : index
    %99 = vector.load %arg6[%c1_41, %c0_42, %c0_43] : memref<3x24x8xbf16, #tpu.memory_space<vmem>>, vector<1x24x8xbf16>
    %100 = vector.shape_cast %99 : vector<1x24x8xbf16> to vector<24x8xbf16>
    %cst_44 = arith.constant dense<0.000000e+00> : vector<256x8xf32>
    %101 = tpu.matmul %98, %100, %cst_44 {dimension_numbers = #tpu.dot_dimension_numbers<[1], [0], [0], [1], [0, 0, 1, 1], [], []>} : vector<256x24xbf16>, vector<24x8xbf16>, vector<256x8xf32> -> vector<256x8xf32>
    %102 = arith.addf %96, %101 : vector<256x8xf32>
    %103 = vector.extract_strided_slice %91 {offsets = [2, 0, 0], sizes = [16, 16, 24], strides = [1, 1, 1]} : vector<18x16x24xbf16> to vector<16x16x24xbf16>
    %104 = vector.shape_cast %103 : vector<16x16x24xbf16> to vector<256x24xbf16>
    %c2 = arith.constant 2 : index
    %c0_45 = arith.constant 0 : index
    %c0_46 = arith.constant 0 : index
    %105 = vector.load %arg6[%c2, %c0_45, %c0_46] : memref<3x24x8xbf16, #tpu.memory_space<vmem>>, vector<1x24x8xbf16>
    %106 = vector.shape_cast %105 : vector<1x24x8xbf16> to vector<24x8xbf16>
    %cst_47 = arith.constant dense<0.000000e+00> : vector<256x8xf32>
    %107 = tpu.matmul %104, %106, %cst_47 {dimension_numbers = #tpu.dot_dimension_numbers<[1], [0], [0], [1], [0, 0, 1, 1], [], []>} : vector<256x24xbf16>, vector<24x8xbf16>, vector<256x8xf32> -> vector<256x8xf32>
    %108 = arith.addf %102, %107 : vector<256x8xf32>
    %109 = vector.shape_cast %108 : vector<256x8xf32> to vector<16x16x8xf32>
    %110 = arith.truncf %109 : vector<16x16x8xf32> to vector<16x16x8xbf16>
    %c0_48 = arith.constant 0 : index
    %c0_49 = arith.constant 0 : index
    %c0_50 = arith.constant 0 : index
    %111 = vector.load %arg7[%c0_48, %c0_49, %c0_50] : memref<16x16x8xbf16, #tpu.memory_space<vmem>>, vector<16x16x8xbf16>
    tpu.vector_store %arg7[%c0_48, %c0_49, %c0_50], %110 {strides = array<i32>} : memref<16x16x8xbf16, #tpu.memory_space<vmem>>, vector<16x16x8xbf16>,
    %cst_51 = arith.constant dense<0.000000e+00> : vector<8xf32>
    %112 = vector.multi_reduction <add>, %108, %cst_51 [0] : vector<256x8xf32> to vector<8xf32>
    %113 = vector.shape_cast %112 : vector<8xf32> to vector<1x8xf32>
    %cst_52 = arith.constant 3.906250e-03 : f32
    %114 = vector.broadcast %cst_52 : f32 to vector<1x8xf32>
    %115 = arith.mulf %113, %114 : vector<1x8xf32>
    %116 = vector.broadcast %115 : vector<1x8xf32> to vector<256x8xf32>
    %117 = arith.subf %108, %116 : vector<256x8xf32>
    %118 = arith.mulf %117, %117 : vector<256x8xf32>
    %cst_53 = arith.constant dense<0.000000e+00> : vector<8xf32>
    %119 = vector.multi_reduction <add>, %118, %cst_53 [0] : vector<256x8xf32> to vector<8xf32>
    %120 = vector.shape_cast %119 : vector<8xf32> to vector<1x8xf32>
    %121 = tpu.concatenate %113, %120 in 0 : vector<1x8xf32>, vector<1x8xf32> -> vector<2x8xf32>
    %122 = vector.shape_cast %121 : vector<2x8xf32> to vector<1x2x8xf32>
    %c0_54 = arith.constant 0 : index
    %c0_55 = arith.constant 0 : index
    %c0_56 = arith.constant 0 : index
    %123 = vector.load %arg8[%c0_54, %c0_55, %c0_56] : memref<1x2x8xf32, #tpu.memory_space<vmem>>, vector<1x2x8xf32>
    tpu.vector_store %arg8[%c0_54, %c0_55, %c0_56], %122 {strides = array<i32>} : memref<1x2x8xf32, #tpu.memory_space<vmem>>, vector<1x2x8xf32>,
    return
  }
  func.func @transform_0(%arg0: i32) -> (i32, i32, i32) {
    %c16_i32 = arith.constant 16 : i32
    %0 = arith.muli %arg0, %c16_i32 : i32
    %c1_i32 = arith.constant 1 : i32
    %1 = arith.subi %0, %c1_i32 : i32
    %c0_i32 = arith.constant 0 : i32
    %2 = arith.maxsi %1, %c0_i32 : i32
    %c0_i32_0 = arith.constant 0 : i32
    %c0_i32_1 = arith.constant 0 : i32
    %c0_i32_2 = arith.constant 0 : i32
    return %2, %c0_i32_0, %c0_i32_1 : i32, i32, i32
  }
  func.func @transform_1(%arg0: i32) -> (i32, i32, i32) {
    %c0_i32 = arith.constant 0 : i32
    %c0_i32_0 = arith.constant 0 : i32
    %c0_i32_1 = arith.constant 0 : i32
    return %arg0, %c0_i32, %c0_i32_0 : i32, i32, i32
  }
  func.func @transform_2(%arg0: i32) -> (i32, i32, i32) {
    %c16_i32 = arith.constant 16 : i32
    %0 = arith.muli %arg0, %c16_i32 : i32
    %c16_i32_0 = arith.constant 16 : i32
    %1 = arith.addi %0, %c16_i32_0 : i32
    %c31_i32 = arith.constant 31 : i32
    %2 = arith.minsi %1, %c31_i32 : i32
    %c0_i32 = arith.constant 0 : i32
    %c0_i32_1 = arith.constant 0 : i32
    %c0_i32_2 = arith.constant 0 : i32
    return %2, %c0_i32, %c0_i32_1 : i32, i32, i32
  }
  func.func @transform_3(%arg0: i32) -> (i32, i32) {
    %c0_i32 = arith.constant 0 : i32
    %c0_i32_0 = arith.constant 0 : i32
    %c0_i32_1 = arith.constant 0 : i32
    return %c0_i32, %c0_i32_0 : i32, i32
  }
  func.func @transform_4(%arg0: i32) -> (i32, i32) {
    %c0_i32 = arith.constant 0 : i32
    %c0_i32_0 = arith.constant 0 : i32
    %c0_i32_1 = arith.constant 0 : i32
    return %c0_i32, %c0_i32_0 : i32, i32
  }
  func.func @transform_5(%arg0: i32) -> (i32, i32, i32) {
    %c0_i32 = arith.constant 0 : i32
    %c0_i32_0 = arith.constant 0 : i32
    %c0_i32_1 = arith.constant 0 : i32
    %c0_i32_2 = arith.constant 0 : i32
    return %c0_i32, %c0_i32_0, %c0_i32_1 : i32, i32, i32
  }
  func.func @transform_6(%arg0: i32) -> (i32, i32, i32) {
    %c0_i32 = arith.constant 0 : i32
    %c0_i32_0 = arith.constant 0 : i32
    %c0_i32_1 = arith.constant 0 : i32
    return %arg0, %c0_i32, %c0_i32_0 : i32, i32, i32
  }
  func.func @transform_7(%arg0: i32) -> (i32, i32, i32) {
    %c0_i32 = arith.constant 0 : i32
    %c0_i32_0 = arith.constant 0 : i32
    %c0_i32_1 = arith.constant 0 : i32
    return %arg0, %c0_i32, %c0_i32_0 : i32, i32, i32
  }
}

module attributes {stable_mosaic.version = 11 : i64} {
  func.func @_finalize_last_kernel(%arg0: i32, %arg1: memref<16x16x8xbf16, #tpu.memory_space<vmem>>, %arg2: memref<16x16x8xf32, #tpu.memory_space<vmem>>, %arg3: memref<2x8xf32, #tpu.memory_space<vmem>>, %arg4: memref<16x16x8xf32, #tpu.memory_space<vmem>>) attributes {dimension_semantics = [#tpu.dimension_semantics<parallel>], iteration_bounds = array<i64: 2>, scalar_prefetch = 0 : i64, scratch_operands = 0 : i64, tpu.core_type = #tpu.core_type<tc>, window_params = [{transform_indices = @transform_0, window_bounds = array<i64: 16, 16, 8>}, {transform_indices = @transform_1, window_bounds = array<i64: 16, 16, 8>}, {pipeline_mode = #tpu.pipeline_mode<synchronous>, transform_indices = @transform_2, window_bounds = array<i64: 2, 8>}, {transform_indices = @transform_3, window_bounds = array<i64: 16, 16, 8>}]} {
    %c0 = arith.constant 0 : index
    %c0_0 = arith.constant 0 : index
    %c0_1 = arith.constant 0 : index
    %0 = vector.load %arg1[%c0, %c0_0, %c0_1] : memref<16x16x8xbf16, #tpu.memory_space<vmem>>, vector<16x16x8xbf16>
    %1 = arith.extf %0 : vector<16x16x8xbf16> to vector<16x16x8xf32>
    %c0_2 = arith.constant 0 : index
    %c0_3 = arith.constant 0 : index
    %2 = vector.load %arg3[%c0_2, %c0_3] : memref<2x8xf32, #tpu.memory_space<vmem>>, vector<1x8xf32>
    %3 = vector.shape_cast %2 : vector<1x8xf32> to vector<8xf32>
    %4 = vector.shape_cast %3 : vector<8xf32> to vector<1x1x8xf32>
    %5 = vector.broadcast %4 : vector<1x1x8xf32> to vector<16x16x8xf32>
    %6 = arith.mulf %1, %5 : vector<16x16x8xf32>
    %c1 = arith.constant 1 : index
    %c0_4 = arith.constant 0 : index
    %7 = vector.load %arg3[%c1, %c0_4] : memref<2x8xf32, #tpu.memory_space<vmem>>, vector<1x8xf32>
    %8 = vector.shape_cast %7 : vector<1x8xf32> to vector<8xf32>
    %9 = vector.shape_cast %8 : vector<8xf32> to vector<1x1x8xf32>
    %10 = vector.broadcast %9 : vector<1x1x8xf32> to vector<16x16x8xf32>
    %11 = arith.addf %6, %10 : vector<16x16x8xf32>
    %cst = arith.constant 2.000000e+01 : f32
    %12 = vector.broadcast %cst : f32 to vector<16x16x8xf32>
    %13 = arith.minimumf %11, %12 : vector<16x16x8xf32>
    %14 = math.exp %13 : vector<16x16x8xf32>
    %cst_5 = arith.constant 2.000000e+00 : f32
    %15 = vector.broadcast %cst_5 : f32 to vector<16x16x8xf32>
    %16 = arith.addf %14, %15 : vector<16x16x8xf32>
    %17 = arith.mulf %14, %16 : vector<16x16x8xf32>
    %18 = arith.mulf %11, %17 : vector<16x16x8xf32>
    %cst_6 = arith.constant 2.000000e+00 : f32
    %19 = vector.broadcast %cst_6 : f32 to vector<16x16x8xf32>
    %20 = arith.addf %17, %19 : vector<16x16x8xf32>
    %21 = tpu.reciprocal %20 {approx = true} : vector<16x16x8xf32> -> vector<16x16x8xf32>
    %22 = arith.mulf %18, %21 : vector<16x16x8xf32>
    %cst_7 = arith.constant 2.000000e+01 : f32
    %23 = vector.broadcast %cst_7 : f32 to vector<16x16x8xf32>
    %24 = arith.cmpf ogt, %11, %23 : vector<16x16x8xf32>
    %25 = arith.select %24, %11, %22 : vector<16x16x8xi1>, vector<16x16x8xf32>
    %cst_8 = arith.constant 2.000000e+01 : f32
    %26 = vector.broadcast %cst_8 : f32 to vector<16x16x8xf32>
    %27 = arith.minimumf %25, %26 : vector<16x16x8xf32>
    %28 = math.exp %27 : vector<16x16x8xf32>
    %cst_9 = arith.constant 2.000000e+00 : f32
    %29 = vector.broadcast %cst_9 : f32 to vector<16x16x8xf32>
    %30 = arith.addf %28, %29 : vector<16x16x8xf32>
    %31 = arith.mulf %28, %30 : vector<16x16x8xf32>
    %32 = arith.mulf %25, %31 : vector<16x16x8xf32>
    %cst_10 = arith.constant 2.000000e+00 : f32
    %33 = vector.broadcast %cst_10 : f32 to vector<16x16x8xf32>
    %34 = arith.addf %31, %33 : vector<16x16x8xf32>
    %35 = tpu.reciprocal %34 {approx = true} : vector<16x16x8xf32> -> vector<16x16x8xf32>
    %36 = arith.mulf %32, %35 : vector<16x16x8xf32>
    %cst_11 = arith.constant 2.000000e+01 : f32
    %37 = vector.broadcast %cst_11 : f32 to vector<16x16x8xf32>
    %38 = arith.cmpf ogt, %25, %37 : vector<16x16x8xf32>
    %39 = arith.select %38, %25, %36 : vector<16x16x8xi1>, vector<16x16x8xf32>
    %c0_12 = arith.constant 0 : index
    %c0_13 = arith.constant 0 : index
    %c0_14 = arith.constant 0 : index
    %40 = vector.load %arg2[%c0_12, %c0_13, %c0_14] : memref<16x16x8xf32, #tpu.memory_space<vmem>>, vector<16x16x8xf32>
    %41 = arith.addf %40, %39 : vector<16x16x8xf32>
    %c0_15 = arith.constant 0 : index
    %c0_16 = arith.constant 0 : index
    %c0_17 = arith.constant 0 : index
    %42 = vector.load %arg4[%c0_15, %c0_16, %c0_17] : memref<16x16x8xf32, #tpu.memory_space<vmem>>, vector<16x16x8xf32>
    tpu.vector_store %arg4[%c0_15, %c0_16, %c0_17], %41 {strides = array<i32>} : memref<16x16x8xf32, #tpu.memory_space<vmem>>, vector<16x16x8xf32>,
    return
  }
  func.func @transform_0(%arg0: i32) -> (i32, i32, i32) {
    %c0_i32 = arith.constant 0 : i32
    %c0_i32_0 = arith.constant 0 : i32
    %c0_i32_1 = arith.constant 0 : i32
    return %arg0, %c0_i32, %c0_i32_0 : i32, i32, i32
  }
  func.func @transform_1(%arg0: i32) -> (i32, i32, i32) {
    %c0_i32 = arith.constant 0 : i32
    %c0_i32_0 = arith.constant 0 : i32
    %c0_i32_1 = arith.constant 0 : i32
    return %arg0, %c0_i32, %c0_i32_0 : i32, i32, i32
  }
  func.func @transform_2(%arg0: i32) -> (i32, i32) {
    %c0_i32 = arith.constant 0 : i32
    %c0_i32_0 = arith.constant 0 : i32
    %c0_i32_1 = arith.constant 0 : i32
    return %c0_i32, %c0_i32_0 : i32, i32
  }
  func.func @transform_3(%arg0: i32) -> (i32, i32, i32) {
    %c0_i32 = arith.constant 0 : i32
    %c0_i32_0 = arith.constant 0 : i32
    %c0_i32_1 = arith.constant 0 : i32
    return %arg0, %c0_i32, %c0_i32_0 : i32, i32, i32
  }
}

</mosaic_0001>

<llo_original>
// kernel: resblock_forward.5
$region0: #{resblock_forward.5}
  #allocation0 [shape = 'u32[]', space=smem, size = 0x4, offset = 0x4, fixed_abs, tag = 'smem constant byte address 0x4 - core index']
  #allocation1 [shape = 'u32[72,128]{1,0:T(1,128)}', space=vmem, size = 0x9000, scoped, tag = 'internal scratch']
  %s0 = inlined_call_operand.vmem [shape: f32[32,16,8], index: 0, kind: input, shape index: {}]
  %s1 = inlined_call_operand.vmem [shape: bf16[8,8], index: 1, kind: input, shape index: {}]
  %s2 = inlined_call_operand.vmem [shape: f32[2,2,8], index: 2, kind: output, shape index: {}]
  %s3 = sld [smem:[#allocation0]]
  $region41: #{resblock_forward.5} parent=0
    _
  %s5 = ssub.s32 1, %s3
  %s6 = scalar_select 0, %s5, %s3
  loop: start=0, step=1, limit=4
  $region2: #{resblock_forward.5} parent=0 // loop_pre_header
    _
  $region3: #{resblock_forward.5} parent=0 // loop_header
    %s8 = sphi 0, %s12
    %p9 = scmp.ge.s32.totalorder %s8, 4
    %s18 = sphi 0, %s20
    %s21 = sphi 0, %s18
    %s22 = sphi 0, %s21
    %s38 = sphi 0, %s22
    %s42 = sphi 0, %s42
    %s44 = sphi 0, %s42
    %s45 = sphi 0, %s44
    %s59 = sphi 0, %s45
    %s65 = sphi 0, %s67
    %s68 = sphi 0, %s65
    %s69 = sphi 0, %s68
    %s85 = sphi 0, %s69
  $region4: #{resblock_forward.5} parent=0 // loop_header_branch
    %11 = sbr.rel (%p9) target = $region8
  $region5: #{resblock_forward.5} parent=0 // loop_body
    %s13 = ssub.s32 %s8, 1
    %s14 = ssub.s32 %s8, 2
    %s15 = sadd.s32 %s8, 1
    %s16 = ssub.s32 %s8, %s15
    %p17 = scmp.eq.s32.totalorder %s16, 0
    %s19 = sadd.s32 %s18, 1
    %s20 = scalar_select %p17, %s18, %s19
    %p23 = pneg %p17
    %p24 = scmp.eq.s32.totalorder %s8, 1
    %p25 = por %p23, %p24
    %p26 = scmp.ne.s32.totalorder %s18, %s21
    %p27 = scmp.eq.s32.totalorder %s8, 0
    %p28 = por %p26, %p27
    %p29 = scmp.ne.s32.totalorder %s18, %s21
    %p30 = scmp.eq.s32.totalorder %s13, 1
    %p31 = por %p29, %p30
    %p32 = scmp.ne.s32.totalorder %s21, %s22
    %p33 = scmp.eq.s32.totalorder %s13, 0
    %p34 = por %p32, %p33
    %p35 = scmp.ne.s32.totalorder %s21, %s22
    %p36 = scmp.eq.s32.totalorder %s14, 1
    %p37 = por %p35, %p36
    %p39 = scmp.ne.s32.totalorder %s22, %s38
    %p40 = scmp.eq.s32.totalorder %s14, 0
    %p41 = por %p39, %p40
    %s43 = sadd.s32 %s42, 1
    %p46 = scmp.eq.s32.totalorder %s8, 1
    %p47 = scmp.ne.s32.totalorder %s42, %s44
    %p48 = scmp.eq.s32.totalorder %s8, 0
    %p49 = por %p47, %p48
    %p50 = scmp.ne.s32.totalorder %s42, %s44
    %p51 = scmp.eq.s32.totalorder %s13, 1
    %p52 = por %p50, %p51
    %p53 = scmp.ne.s32.totalorder %s44, %s45
    %p54 = scmp.eq.s32.totalorder %s13, 0
    %p55 = por %p53, %p54
    %p56 = scmp.ne.s32.totalorder %s44, %s45
    %p57 = scmp.eq.s32.totalorder %s14, 1
    %p58 = por %p56, %p57
    %p60 = scmp.ne.s32.totalorder %s45, %s59
    %p61 = scmp.eq.s32.totalorder %s14, 0
    %p62 = por %p60, %p61
    %s63 = ssub.s32 %s8, %s15
    %p64 = scmp.eq.s32.totalorder %s63, 0
    %s66 = sadd.s32 %s65, 1
    %s67 = scalar_select %p64, %s65, %s66
    %p70 = pneg %p64
    %p71 = scmp.eq.s32.totalorder %s8, 1
    %p72 = por %p70, %p71
    %p73 = scmp.ne.s32.totalorder %s65, %s68
    %p74 = scmp.eq.s32.totalorder %s8, 0
    %p75 = por %p73, %p74
    %p76 = scmp.ne.s32.totalorder %s65, %s68
    %p77 = scmp.eq.s32.totalorder %s13, 1
    %p78 = por %p76, %p77
    %p79 = scmp.ne.s32.totalorder %s68, %s69
    %p80 = scmp.eq.s32.totalorder %s13, 0
    %p81 = por %p79, %p80
    %p82 = scmp.ne.s32.totalorder %s68, %s69
    %p83 = scmp.eq.s32.totalorder %s14, 1
    %p84 = por %p82, %p83
    %p86 = scmp.ne.s32.totalorder %s69, %s85
    %p87 = scmp.eq.s32.totalorder %s14, 0
    %p88 = por %p86, %p87
    %p89 = scmp.le.s32.totalorder 1, %s8
    %p90 = scmp.lt.s32.totalorder %s8, 3
    %p91 = pnand %p89, %p90
    %p92 = pneg %p91
    // Predicated region
    $region9: #{resblock_forward.5} parent=5 // pred_check
      _
    $region10: #{resblock_forward.5} parent=5 // pred_check_branch
      %94 = sbr.rel (%p91) target = $region12
    $region11: #{resblock_forward.5} parent=5 // pred_region
      %s95 = ssub.s32 %s8, 1
      // Predicated region
      $region13: #{resblock_forward.5} parent=11 // pred_check
        %p96 = pneg %p55
      $region14: #{resblock_forward.5} parent=11 // pred_check_branch
        %98 = sbr.rel (%p96) target = $region16
      $region15: #{resblock_forward.5} parent=11 // pred_region
        _
      $region16: #{resblock_forward.5} parent=11 // pred_fallthru
        _
    $region12: #{resblock_forward.5} parent=5 // pred_fallthru
      _
    %p99 = scmp.lt.s32.totalorder %s8, 2
    // Predicated region
    $region17: #{resblock_forward.5} parent=5 // pred_check
      %p100 = pneg %p99
    $region18: #{resblock_forward.5} parent=5 // pred_check_branch
      %102 = sbr.rel (%p100) target = $region20
    $region19: #{resblock_forward.5} parent=5 // pred_region
      // Predicated region
      $region21: #{resblock_forward.5} parent=19 // pred_check
        %p103 = pneg %p28
      $region22: #{resblock_forward.5} parent=19 // pred_check_branch
        %105 = sbr.rel (%p103) target = $region24
      $region23: #{resblock_forward.5} parent=19 // pred_region
        %s106 = smul.u32 16, %s8
        %p107 = scmp.lt.s32.totalorder %s106, 31
        %s108 = scalar_select %p107, %s106, 31
        %s109 = smul.addr %s108, 2
        %s110 = smul.addr %s109, 8
        %s111 = scalar_lea.vmem %s0, %s110
        %s112 = smul.u32 16, %s8
      $region24: #{resblock_forward.5} parent=19 // pred_fallthru
        _
    $region20: #{resblock_forward.5} parent=5 // pred_fallthru
      _
    %p113 = scmp.le.s32.totalorder 1, %s8
    %p114 = scmp.lt.s32.totalorder %s8, 3
    %p115 = pnand %p113, %p114
    %p116 = pneg %p115
    // Predicated region
    $region25: #{resblock_forward.5} parent=5 // pred_check
      _
    $region26: #{resblock_forward.5} parent=5 // pred_check_branch
      %118 = sbr.rel (%p115) target = $region28
    $region27: #{resblock_forward.5} parent=5 // pred_region
      %s119 = ssub.s32 %s8, 1
      %s120 = smul.u32 16, %s13
      %p121 = scmp.lt.s32.totalorder %s120, 31
      %s122 = scalar_select %p121, %s120, 31
      %s123 = smul.addr %s122, 2
      %s124 = smul.addr %s123, 8
      %s125 = scalar_lea.vmem %s0, %s124
      %p126 = pneg %p34
      %p127 = pneg %p31
      %p128 = pneg %p55
      %p129 = pneg %p52
      %p130 = pneg %p81
      %p131 = pneg %p78
      %p132 = scmp.lt.s32.totalorder %s13, 1
      %s133 = scalar_select %p132, %s13, 1
      %s134 = smul.addr %s133, 2
      %s135 = scalar_lea.vmem %s2, %s134
      %s136 = smul.u32 16, %s13
      %p137 = scmp.lt.s32.totalorder %s136, 31
      %s138 = scalar_select %p137, %s136, 31
      %s139 = smul.addr %s138, 2
      %s140 = smul.addr %s139, 8
      %s141 = scalar_lea.vmem %s0, %s140
      %s142 = smul.u32 16, %s13
      %p143 = scmp.lt.s32.totalorder %s13, 1
      %s144 = scalar_select %p143, %s13, 1
      %s145 = smul.addr %s144, 2
      %s146 = scalar_lea.vmem %s2, %s145
      %v148 = vld [vmem:[%s141] sm:$0xff]
      %v149 = vld [vmem:[%s141 + $0x8] sm:$0xff]
      %v150 = vld [vmem:[%s141 + $0x10] sm:$0xff]
      %v151 = vld [vmem:[%s141 + $0x18] sm:$0xff]
      %v152 = vld [vmem:[%s141 + $0x20] sm:$0xff]
      %v153 = vld [vmem:[%s141 + $0x28] sm:$0xff]
      %v154 = vld [vmem:[%s141 + $0x30] sm:$0xff]
      %v155 = vld [vmem:[%s141 + $0x38] sm:$0xff]
      %v156 = vld [vmem:[%s141 + $0x40] sm:$0xff]
      %v157 = vld [vmem:[%s141 + $0x48] sm:$0xff]
      %v158 = vld [vmem:[%s141 + $0x50] sm:$0xff]
      %v159 = vld [vmem:[%s141 + $0x58] sm:$0xff]
      %v160 = vld [vmem:[%s141 + $0x60] sm:$0xff]
      %v161 = vld [vmem:[%s141 + $0x68] sm:$0xff]
      %v162 = vld [vmem:[%s141 + $0x70] sm:$0xff]
      %v163 = vld [vmem:[%s141 + $0x78] sm:$0xff]
      %v164 = vld [vmem:[%s141 + $0x80] sm:$0xff]
      %v165 = vld [vmem:[%s141 + $0x88] sm:$0xff]
      %v166 = vld [vmem:[%s141 + $0x90] sm:$0xff]
      %v167 = vld [vmem:[%s141 + $0x98] sm:$0xff]
      %v168 = vld [vmem:[%s141 + $0xa0] sm:$0xff]
      %v169 = vld [vmem:[%s141 + $0xa8] sm:$0xff]
      %v170 = vld [vmem:[%s141 + $0xb0] sm:$0xff]
      %v171 = vld [vmem:[%s141 + $0xb8] sm:$0xff]
      %v172 = vld [vmem:[%s141 + $0xc0] sm:$0xff]
      %v173 = vld [vmem:[%s141 + $0xc8] sm:$0xff]
      %v174 = vld [vmem:[%s141 + $0xd0] sm:$0xff]
      %v175 = vld [vmem:[%s141 + $0xd8] sm:$0xff]
      %v176 = vld [vmem:[%s141 + $0xe0] sm:$0xff]
      %v177 = vld [vmem:[%s141 + $0xe8] sm:$0xff]
      %v178 = vld [vmem:[%s141 + $0xf0] sm:$0xff]
      %v179 = vld [vmem:[%s141 + $0xf8] sm:$0xff]
      %v180 = vld [vmem:[%s1] sm:$0xf]
      %v181 = vpack.c.bf16 %v149, %v148
      %v182 = vpack.c.bf16 %v151, %v150
      %v183 = vpack.c.bf16 %v153, %v152
      %v184 = vpack.c.bf16 %v155, %v154
      %v185 = vpack.c.bf16 %v157, %v156
      %v186 = vpack.c.bf16 %v159, %v158
      %v187 = vpack.c.bf16 %v161, %v160
      %v188 = vpack.c.bf16 %v163, %v162
      %v189 = vpack.c.bf16 %v165, %v164
      %v190 = vpack.c.bf16 %v167, %v166
      %v191 = vpack.c.bf16 %v169, %v168
      %v192 = vpack.c.bf16 %v171, %v170
      %v193 = vpack.c.bf16 %v173, %v172
      %v194 = vpack.c.bf16 %v175, %v174
      %v195 = vpack.c.bf16 %v177, %v176
      %v196 = vpack.c.bf16 %v179, %v178
      %vm197 = vcmask 64512
      %v199 = vsel %vm197, %v181, 0
      %v202 = vsel %vm197, %v182, 0
      %v205 = vsel %vm197, %v183, 0
      %v208 = vsel %vm197, %v184, 0
      %v211 = vsel %vm197, %v185, 0
      %v214 = vsel %vm197, %v186, 0
      %v217 = vsel %vm197, %v187, 0
      %v220 = vsel %vm197, %v188, 0
      %v223 = vsel %vm197, %v189, 0
      %v226 = vsel %vm197, %v190, 0
      %v229 = vsel %vm197, %v191, 0
      %v232 = vsel %vm197, %v192, 0
      %v235 = vsel %vm197, %v193, 0
      %v238 = vsel %vm197, %v194, 0
      %v241 = vsel %vm197, %v195, 0
      %v244 = vsel %vm197, %v196, 0
      %vm246 = vcmask 1043456
      %v248 = vsel %vm246, %v180, 0
      %250 = vmatpush.bf16.msra.mxu0 0
      %251 = vmatpush.bf16.msra.mxu0 0
      %252 = vmatpush.bf16.msra.mxu0 0
      %253 = vmatpush.bf16.msra.mxu0 0
      %254 = vmatpush.bf16.msra.mxu0 0
      %255 = vmatpush.bf16.msra.mxu0 0
      %256 = vmatpush.bf16.msra.mxu0 0
      %257 = vmatpush.bf16.msra.mxu0 %v248
      %258 = vmatmul.bf16.gmra.mxu0 %v199
      %v259 = vpop.f32.mrf.mxu0
      %v260 = vadd.f32 0.0, %v259
      %v261 = vpop.f32.mrf.mxu0
      %v262 = vadd.f32 0.0, %v261
      %263 = vmatmul.bf16.gmra.mxu0 %v202
      %v264 = vpop.f32.mrf.mxu0
      %v265 = vadd.f32 0.0, %v264
      %v266 = vpop.f32.mrf.mxu0
      %v267 = vadd.f32 0.0, %v266
      %268 = vmatmul.bf16.gmra.mxu0 %v205
      %v269 = vpop.f32.mrf.mxu0
      %v270 = vadd.f32 0.0, %v269
      %v271 = vpop.f32.mrf.mxu0
      %v272 = vadd.f32 0.0, %v271
      %273 = vmatmul.bf16.gmra.mxu0 %v208
      %v274 = vpop.f32.mrf.mxu0
      %v275 = vadd.f32 0.0, %v274
      %v276 = vpop.f32.mrf.mxu0
      %v277 = vadd.f32 0.0, %v276
      %278 = vmatmul.bf16.gmra.mxu0 %v211
      %v279 = vpop.f32.mrf.mxu0
      %v280 = vadd.f32 0.0, %v279
      %v281 = vpop.f32.mrf.mxu0
      %v282 = vadd.f32 0.0, %v281
      %283 = vmatmul.bf16.gmra.mxu0 %v214
      %v284 = vpop.f32.mrf.mxu0
      %v285 = vadd.f32 0.0, %v284
      %v286 = vpop.f32.mrf.mxu0
      %v287 = vadd.f32 0.0, %v286
      %288 = vmatmul.bf16.gmra.mxu0 %v217
      %v289 = vpop.f32.mrf.mxu0
      %v290 = vadd.f32 0.0, %v289
      %v291 = vpop.f32.mrf.mxu0
      %v292 = vadd.f32 0.0, %v291
      %293 = vmatmul.bf16.gmra.mxu0 %v220
      %v294 = vpop.f32.mrf.mxu0
      %v295 = vadd.f32 0.0, %v294
      %v296 = vpop.f32.mrf.mxu0
      %v297 = vadd.f32 0.0, %v296
      %298 = vmatmul.bf16.gmra.mxu0 %v223
      %v299 = vpop.f32.mrf.mxu0
      %v300 = vadd.f32 0.0, %v299
      %v301 = vpop.f32.mrf.mxu0
      %v302 = vadd.f32 0.0, %v301
      %303 = vmatmul.bf16.gmra.mxu0 %v226
      %v304 = vpop.f32.mrf.mxu0
      %v305 = vadd.f32 0.0, %v304
      %v306 = vpop.f32.mrf.mxu0
      %v307 = vadd.f32 0.0, %v306
      %308 = vmatmul.bf16.gmra.mxu0 %v229
      %v309 = vpop.f32.mrf.mxu0
      %v310 = vadd.f32 0.0, %v309
      %v311 = vpop.f32.mrf.mxu0
      %v312 = vadd.f32 0.0, %v311
      %313 = vmatmul.bf16.gmra.mxu0 %v232
      %v314 = vpop.f32.mrf.mxu0
      %v315 = vadd.f32 0.0, %v314
      %v316 = vpop.f32.mrf.mxu0
      %v317 = vadd.f32 0.0, %v316
      %318 = vmatmul.bf16.gmra.mxu0 %v235
      %v319 = vpop.f32.mrf.mxu0
      %v320 = vadd.f32 0.0, %v319
      %v321 = vpop.f32.mrf.mxu0
      %v322 = vadd.f32 0.0, %v321
      %323 = vmatmul.bf16.gmra.mxu0 %v238
      %v324 = vpop.f32.mrf.mxu0
      %v325 = vadd.f32 0.0, %v324
      %v326 = vpop.f32.mrf.mxu0
      %v327 = vadd.f32 0.0, %v326
      %328 = vmatmul.bf16.gmra.mxu0 %v241
      %v329 = vpop.f32.mrf.mxu0
      %v330 = vadd.f32 0.0, %v329
      %v331 = vpop.f32.mrf.mxu0
      %v332 = vadd.f32 0.0, %v331
      %333 = vmatmul.bf16.gmra.mxu0 %v244
      %v334 = vpop.f32.mrf.mxu0
      %v335 = vadd.f32 0.0, %v334
      %v336 = vpop.f32.mrf.mxu0
      %v337 = vadd.f32 0.0, %v336
      %338 = vdwg.mxu0
      %v339 = vsel %vm197, %v260, 0.0
      %v340 = vsel %vm197, %v262, 0.0
      %v341 = vadd.f32 %v339, %v340
      %v342 = vsel %vm197, %v265, 0.0
      %v343 = vadd.f32 %v341, %v342
      %v344 = vsel %vm197, %v267, 0.0
      %v345 = vadd.f32 %v343, %v344
      %v346 = vsel %vm197, %v270, 0.0
      %v347 = vadd.f32 %v345, %v346
      %v348 = vsel %vm197, %v272, 0.0
      %v349 = vadd.f32 %v347, %v348
      %v350 = vsel %vm197, %v275, 0.0
      %v351 = vadd.f32 %v349, %v350
      %v352 = vsel %vm197, %v277, 0.0
      %v353 = vadd.f32 %v351, %v352
      %v354 = vsel %vm197, %v280, 0.0
      %v355 = vadd.f32 %v353, %v354
      %v356 = vsel %vm197, %v282, 0.0
      %v357 = vadd.f32 %v355, %v356
      %v358 = vsel %vm197, %v285, 0.0
      %v359 = vadd.f32 %v357, %v358
      %v360 = vsel %vm197, %v287, 0.0
      %v361 = vadd.f32 %v359, %v360
      %v362 = vsel %vm197, %v290, 0.0
      %v363 = vadd.f32 %v361, %v362
      %v364 = vsel %vm197, %v292, 0.0
      %v365 = vadd.f32 %v363, %v364
      %v366 = vsel %vm197, %v295, 0.0
      %v367 = vadd.f32 %v365, %v366
      %v368 = vsel %vm197, %v297, 0.0
      %v369 = vadd.f32 %v367, %v368
      %v370 = vsel %vm197, %v300, 0.0
      %v371 = vadd.f32 %v369, %v370
      %v372 = vsel %vm197, %v302, 0.0
      %v373 = vadd.f32 %v371, %v372
      %v374 = vsel %vm197, %v305, 0.0
      %v375 = vadd.f32 %v373, %v374
      %v376 = vsel %vm197, %v307, 0.0
      %v377 = vadd.f32 %v375, %v376
      %v378 = vsel %vm197, %v310, 0.0
      %v379 = vadd.f32 %v377, %v378
      %v380 = vsel %vm197, %v312, 0.0
      %v381 = vadd.f32 %v379, %v380
      %v382 = vsel %vm197, %v315, 0.0
      %v383 = vadd.f32 %v381, %v382
      %v384 = vsel %vm197, %v317, 0.0
      %v385 = vadd.f32 %v383, %v384
      %v386 = vsel %vm197, %v320, 0.0
      %v387 = vadd.f32 %v385, %v386
      %v388 = vsel %vm197, %v322, 0.0
      %v389 = vadd.f32 %v387, %v388
      %v390 = vsel %vm197, %v325, 0.0
      %v391 = vadd.f32 %v389, %v390
      %v392 = vsel %vm197, %v327, 0.0
      %v393 = vadd.f32 %v391, %v392
      %v394 = vsel %vm197, %v330, 0.0
      %v395 = vadd.f32 %v393, %v394
      %v396 = vsel %vm197, %v332, 0.0
      %v397 = vadd.f32 %v395, %v396
      %v398 = vsel %vm197, %v335, 0.0
      %v399 = vadd.f32 %v397, %v398
      %v400 = vsel %vm197, %v337, 0.0
      %v401 = vadd.f32 %v399, %v400
      %v402 = vrot.slane %v401, 4
      %v403 = vadd.f32 %v401, %v402
      %v404 = vrot.slane %v403, 2
      %v405 = vadd.f32 %v403, %v404
      %v406 = vrot.slane %v405, 1
      %v407 = vadd.f32 %v405, %v406
      %v408 = vmul.f32 %v407, 0.00390625
      %v409 = vsub.f32 %v260, %v408
      %v410 = vsub.f32 %v262, %v408
      %v411 = vsub.f32 %v265, %v408
      %v412 = vsub.f32 %v267, %v408
      %v413 = vsub.f32 %v270, %v408
      %v414 = vsub.f32 %v272, %v408
      %v415 = vsub.f32 %v275, %v408
      %v416 = vsub.f32 %v277, %v408
      %v417 = vsub.f32 %v280, %v408
      %v418 = vsub.f32 %v282, %v408
      %v419 = vsub.f32 %v285, %v408
      %v420 = vsub.f32 %v287, %v408
      %v421 = vsub.f32 %v290, %v408
      %v422 = vsub.f32 %v292, %v408
      %v423 = vsub.f32 %v295, %v408
      %v424 = vsub.f32 %v297, %v408
      %v425 = vsub.f32 %v300, %v408
      %v426 = vsub.f32 %v302, %v408
      %v427 = vsub.f32 %v305, %v408
      %v428 = vsub.f32 %v307, %v408
      %v429 = vsub.f32 %v310, %v408
      %v430 = vsub.f32 %v312, %v408
      %v431 = vsub.f32 %v315, %v408
      %v432 = vsub.f32 %v317, %v408
      %v433 = vsub.f32 %v320, %v408
      %v434 = vsub.f32 %v322, %v408
      %v435 = vsub.f32 %v325, %v408
      %v436 = vsub.f32 %v327, %v408
      %v437 = vsub.f32 %v330, %v408
      %v438 = vsub.f32 %v332, %v408
      %v439 = vsub.f32 %v335, %v408
      %v440 = vsub.f32 %v337, %v408
      %v441 = vmul.f32 %v409, %v409
      %v442 = vmul.f32 %v410, %v410
      %v443 = vmul.f32 %v411, %v411
      %v444 = vmul.f32 %v412, %v412
      %v445 = vmul.f32 %v413, %v413
      %v446 = vmul.f32 %v414, %v414
      %v447 = vmul.f32 %v415, %v415
      %v448 = vmul.f32 %v416, %v416
      %v449 = vmul.f32 %v417, %v417
      %v450 = vmul.f32 %v418, %v418
      %v451 = vmul.f32 %v419, %v419
      %v452 = vmul.f32 %v420, %v420
      %v453 = vmul.f32 %v421, %v421
      %v454 = vmul.f32 %v422, %v422
      %v455 = vmul.f32 %v423, %v423
      %v456 = vmul.f32 %v424, %v424
      %v457 = vmul.f32 %v425, %v425
      %v458 = vmul.f32 %v426, %v426
      %v459 = vmul.f32 %v427, %v427
      %v460 = vmul.f32 %v428, %v428
      %v461 = vmul.f32 %v429, %v429
      %v462 = vmul.f32 %v430, %v430
      %v463 = vmul.f32 %v431, %v431
      %v464 = vmul.f32 %v432, %v432
      %v465 = vmul.f32 %v433, %v433
      %v466 = vmul.f32 %v434, %v434
      %v467 = vmul.f32 %v435, %v435
      %v468 = vmul.f32 %v436, %v436
      %v469 = vmul.f32 %v437, %v437
      %v470 = vmul.f32 %v438, %v438
      %v471 = vmul.f32 %v439, %v439
      %v472 = vmul.f32 %v440, %v440
      %v473 = vsel %vm197, %v441, 0.0
      %v474 = vsel %vm197, %v442, 0.0
      %v475 = vadd.f32 %v473, %v474
      %v476 = vsel %vm197, %v443, 0.0
      %v477 = vadd.f32 %v475, %v476
      %v478 = vsel %vm197, %v444, 0.0
      %v479 = vadd.f32 %v477, %v478
      %v480 = vsel %vm197, %v445, 0.0
      %v481 = vadd.f32 %v479, %v480
      %v482 = vsel %vm197, %v446, 0.0
      %v483 = vadd.f32 %v481, %v482
      %v484 = vsel %vm197, %v447, 0.0
      %v485 = vadd.f32 %v483, %v484
      %v486 = vsel %vm197, %v448, 0.0
      %v487 = vadd.f32 %v485, %v486
      %v488 = vsel %vm197, %v449, 0.0
      %v489 = vadd.f32 %v487, %v488
      %v490 = vsel %vm197, %v450, 0.0
      %v491 = vadd.f32 %v489, %v490
      %v492 = vsel %vm197, %v451, 0.0
      %v493 = vadd.f32 %v491, %v492
      %v494 = vsel %vm197, %v452, 0.0
      %v495 = vadd.f32 %v493, %v494
      %v496 = vsel %vm197, %v453, 0.0
      %v497 = vadd.f32 %v495, %v496
      %v498 = vsel %vm197, %v454, 0.0
      %v499 = vadd.f32 %v497, %v498
      %v500 = vsel %vm197, %v455, 0.0
      %v501 = vadd.f32 %v499, %v500
      %v502 = vsel %vm197, %v456, 0.0
      %v503 = vadd.f32 %v501, %v502
      %v504 = vsel %vm197, %v457, 0.0
      %v505 = vadd.f32 %v503, %v504
      %v506 = vsel %vm197, %v458, 0.0
      %v507 = vadd.f32 %v505, %v506
      %v508 = vsel %vm197, %v459, 0.0
      %v509 = vadd.f32 %v507, %v508
      %v510 = vsel %vm197, %v460, 0.0
      %v511 = vadd.f32 %v509, %v510
      %v512 = vsel %vm197, %v461, 0.0
      %v513 = vadd.f32 %v511, %v512
      %v514 = vsel %vm197, %v462, 0.0
      %v515 = vadd.f32 %v513, %v514
      %v516 = vsel %vm197, %v463, 0.0
      %v517 = vadd.f32 %v515, %v516
      %v518 = vsel %vm197, %v464, 0.0
      %v519 = vadd.f32 %v517, %v518
      %v520 = vsel %vm197, %v465, 0.0
      %v521 = vadd.f32 %v519, %v520
      %v522 = vsel %vm197, %v466, 0.0
      %v523 = vadd.f32 %v521, %v522
      %v524 = vsel %vm197, %v467, 0.0
      %v525 = vadd.f32 %v523, %v524
      %v526 = vsel %vm197, %v468, 0.0
      %v527 = vadd.f32 %v525, %v526
      %v528 = vsel %vm197, %v469, 0.0
      %v529 = vadd.f32 %v527, %v528
      %v530 = vsel %vm197, %v470, 0.0
      %v531 = vadd.f32 %v529, %v530
      %v532 = vsel %vm197, %v471, 0.0
      %v533 = vadd.f32 %v531, %v532
      %v534 = vsel %vm197, %v472, 0.0
      %v535 = vadd.f32 %v533, %v534
      %v536 = vrot.slane %v535, 4
      %v537 = vadd.f32 %v535, %v536
      %v538 = vrot.slane %v537, 2
      %v539 = vadd.f32 %v537, %v538
      %v540 = vrot.slane %v539, 1
      %v541 = vadd.f32 %v539, %v540
      %vm542 = vcmask 1040384
      %v543 = vsel %vm542, %v407, %v541
      %vm544 = vcmask 58368
      %545 = vst.msk [vmem:[%s146] sm:$0x3] %vm544, %v543
      %p546 = scmp.lt.s32.totalorder %s13, 1
      %s547 = scalar_select %p546, %s13, 1
      %s548 = smul.addr %s547, 2
      %s549 = scalar_lea.vmem %s2, %s548
      // Predicated region
      $region29: #{resblock_forward.5} parent=27 // pred_check
        %p550 = pneg %p78
      $region30: #{resblock_forward.5} parent=27 // pred_check_branch
        %552 = sbr.rel (%p550) target = $region32
      $region31: #{resblock_forward.5} parent=27 // pred_region
        _
      $region32: #{resblock_forward.5} parent=27 // pred_fallthru
        _
    $region28: #{resblock_forward.5} parent=5 // pred_fallthru
      _
    %p553 = scmp.le.s32.totalorder 2, %s8
    // Predicated region
    $region33: #{resblock_forward.5} parent=5 // pred_check
      %p554 = pneg %p553
    $region34: #{resblock_forward.5} parent=5 // pred_check_branch
      %556 = sbr.rel (%p554) target = $region36
    $region35: #{resblock_forward.5} parent=5 // pred_region
      %s557 = ssub.s32 %s8, 2
      // Predicated region
      $region37: #{resblock_forward.5} parent=35 // pred_check
        %p558 = pneg %p84
      $region38: #{resblock_forward.5} parent=35 // pred_check_branch
        %560 = sbr.rel (%p558) target = $region40
      $region39: #{resblock_forward.5} parent=35 // pred_region
        %p561 = scmp.lt.s32.totalorder %s14, 1
        %s562 = scalar_select %p561, %s14, 1
        %s563 = smul.addr %s562, 2
        %s564 = scalar_lea.vmem %s2, %s563
      $region40: #{resblock_forward.5} parent=35 // pred_fallthru
        _
    $region36: #{resblock_forward.5} parent=5 // pred_fallthru
      _
  $region6: #{resblock_forward.5} parent=0 // loop_footer
    %s12 = sadd.s32 1, %s8
  $region7: #{resblock_forward.5} parent=0 // loop_footer_branch
    %7 = sbr.rel target = $region3
  $region8: #{resblock_forward.5} parent=0 // loop_exit
    _

// kernel: resblock_forward.7
$region0: #{resblock_forward.7}
  #allocation0 [shape = 'u32[]', space=smem, size = 0x4, offset = 0x4, fixed_abs, tag = 'smem constant byte address 0x4 - core index']
  #allocation1 [shape = 'u32[72,128]{1,0:T(1,128)}', space=vmem, size = 0x9000, scoped, tag = 'internal scratch']
  %s0 = inlined_call_operand.vmem [shape: bf16[32,16,8], index: 0, kind: input, shape index: {}]
  %s1 = inlined_call_operand.vmem [shape: f32[32,16,8], index: 1, kind: input, shape index: {}]
  %s2 = inlined_call_operand.vmem [shape: f32[2,8], index: 2, kind: input, shape index: {}]
  %s3 = inlined_call_operand.vmem [shape: bf16[8,8], index: 3, kind: input, shape index: {}]
  %s4 = inlined_call_operand.vmem [shape: f32[32,16,8], index: 4, kind: output, shape index: {0}]
  %s5 = inlined_call_operand.vmem [shape: f32[2,2,8], index: 5, kind: output, shape index: {1}]
  %6 = xla_tuple %s4, %s5
  %s7 = sld [smem:[#allocation0]]
  $region57: #{resblock_forward.7} parent=0
    _
  %s9 = ssub.s32 1, %s7
  %s10 = scalar_select 0, %s9, %s7
  loop: start=0, step=1, limit=4
  $region2: #{resblock_forward.7} parent=0 // loop_pre_header
    _
  $region3: #{resblock_forward.7} parent=0 // loop_header
    %s12 = sphi 0, %s16
    %p13 = scmp.ge.s32.totalorder %s12, 4
    %s22 = sphi 0, %s24
    %s25 = sphi 0, %s22
    %s26 = sphi 0, %s25
    %s42 = sphi 0, %s26
    %s48 = sphi 0, %s50
    %s51 = sphi 0, %s48
    %s52 = sphi 0, %s51
    %s68 = sphi 0, %s52
    %s72 = sphi 0, %s72
    %s74 = sphi 0, %s72
    %s75 = sphi 0, %s74
    %s89 = sphi 0, %s75
    %s93 = sphi 0, %s93
    %s95 = sphi 0, %s93
    %s96 = sphi 0, %s95
    %s110 = sphi 0, %s96
    %s116 = sphi 0, %s118
    %s119 = sphi 0, %s116
    %s120 = sphi 0, %s119
    %s136 = sphi 0, %s120
    %s142 = sphi 0, %s144
    %s145 = sphi 0, %s142
    %s146 = sphi 0, %s145
    %s162 = sphi 0, %s146
  $region4: #{resblock_forward.7} parent=0 // loop_header_branch
    %15 = sbr.rel (%p13) target = $region8
  $region5: #{resblock_forward.7} parent=0 // loop_body
    %s17 = ssub.s32 %s12, 1
    %s18 = ssub.s32 %s12, 2
    %s19 = sadd.s32 %s12, 1
    %s20 = ssub.s32 %s12, %s19
    %p21 = scmp.eq.s32.totalorder %s20, 0
    %s23 = sadd.s32 %s22, 1
    %s24 = scalar_select %p21, %s22, %s23
    %p27 = pneg %p21
    %p28 = scmp.eq.s32.totalorder %s12, 1
    %p29 = por %p27, %p28
    %p30 = scmp.ne.s32.totalorder %s22, %s25
    %p31 = scmp.eq.s32.totalorder %s12, 0
    %p32 = por %p30, %p31
    %p33 = scmp.ne.s32.totalorder %s22, %s25
    %p34 = scmp.eq.s32.totalorder %s17, 1
    %p35 = por %p33, %p34
    %p36 = scmp.ne.s32.totalorder %s25, %s26
    %p37 = scmp.eq.s32.totalorder %s17, 0
    %p38 = por %p36, %p37
    %p39 = scmp.ne.s32.totalorder %s25, %s26
    %p40 = scmp.eq.s32.totalorder %s18, 1
    %p41 = por %p39, %p40
    %p43 = scmp.ne.s32.totalorder %s26, %s42
    %p44 = scmp.eq.s32.totalorder %s18, 0
    %p45 = por %p43, %p44
    %s46 = ssub.s32 %s12, %s19
    %p47 = scmp.eq.s32.totalorder %s46, 0
    %s49 = sadd.s32 %s48, 1
    %s50 = scalar_select %p47, %s48, %s49
    %p53 = pneg %p47
    %p54 = scmp.eq.s32.totalorder %s12, 1
    %p55 = por %p53, %p54
    %p56 = scmp.ne.s32.totalorder %s48, %s51
    %p57 = scmp.eq.s32.totalorder %s12, 0
    %p58 = por %p56, %p57
    %p59 = scmp.ne.s32.totalorder %s48, %s51
    %p60 = scmp.eq.s32.totalorder %s17, 1
    %p61 = por %p59, %p60
    %p62 = scmp.ne.s32.totalorder %s51, %s52
    %p63 = scmp.eq.s32.totalorder %s17, 0
    %p64 = por %p62, %p63
    %p65 = scmp.ne.s32.totalorder %s51, %s52
    %p66 = scmp.eq.s32.totalorder %s18, 1
    %p67 = por %p65, %p66
    %p69 = scmp.ne.s32.totalorder %s52, %s68
    %p70 = scmp.eq.s32.totalorder %s18, 0
    %p71 = por %p69, %p70
    %s73 = sadd.s32 %s72, 1
    %p76 = scmp.eq.s32.totalorder %s12, 1
    %p77 = scmp.ne.s32.totalorder %s72, %s74
    %p78 = scmp.eq.s32.totalorder %s12, 0
    %p79 = por %p77, %p78
    %p80 = scmp.ne.s32.totalorder %s72, %s74
    %p81 = scmp.eq.s32.totalorder %s17, 1
    %p82 = por %p80, %p81
    %p83 = scmp.ne.s32.totalorder %s74, %s75
    %p84 = scmp.eq.s32.totalorder %s17, 0
    %p85 = por %p83, %p84
    %p86 = scmp.ne.s32.totalorder %s74, %s75
    %p87 = scmp.eq.s32.totalorder %s18, 1
    %p88 = por %p86, %p87
    %p90 = scmp.ne.s32.totalorder %s75, %s89
    %p91 = scmp.eq.s32.totalorder %s18, 0
    %p92 = por %p90, %p91
    %s94 = sadd.s32 %s93, 1
    %p97 = scmp.eq.s32.totalorder %s12, 1
    %p98 = scmp.ne.s32.totalorder %s93, %s95
    %p99 = scmp.eq.s32.totalorder %s12, 0
    %p100 = por %p98, %p99
    %p101 = scmp.ne.s32.totalorder %s93, %s95
    %p102 = scmp.eq.s32.totalorder %s17, 1
    %p103 = por %p101, %p102
    %p104 = scmp.ne.s32.totalorder %s95, %s96
    %p105 = scmp.eq.s32.totalorder %s17, 0
    %p106 = por %p104, %p105
    %p107 = scmp.ne.s32.totalorder %s95, %s96
    %p108 = scmp.eq.s32.totalorder %s18, 1
    %p109 = por %p107, %p108
    %p111 = scmp.ne.s32.totalorder %s96, %s110
    %p112 = scmp.eq.s32.totalorder %s18, 0
    %p113 = por %p111, %p112
    %s114 = ssub.s32 %s12, %s19
    %p115 = scmp.eq.s32.totalorder %s114, 0
    %s117 = sadd.s32 %s116, 1
    %s118 = scalar_select %p115, %s116, %s117
    %p121 = pneg %p115
    %p122 = scmp.eq.s32.totalorder %s12, 1
    %p123 = por %p121, %p122
    %p124 = scmp.ne.s32.totalorder %s116, %s119
    %p125 = scmp.eq.s32.totalorder %s12, 0
    %p126 = por %p124, %p125
    %p127 = scmp.ne.s32.totalorder %s116, %s119
    %p128 = scmp.eq.s32.totalorder %s17, 1
    %p129 = por %p127, %p128
    %p130 = scmp.ne.s32.totalorder %s119, %s120
    %p131 = scmp.eq.s32.totalorder %s17, 0
    %p132 = por %p130, %p131
    %p133 = scmp.ne.s32.totalorder %s119, %s120
    %p134 = scmp.eq.s32.totalorder %s18, 1
    %p135 = por %p133, %p134
    %p137 = scmp.ne.s32.totalorder %s120, %s136
    %p138 = scmp.eq.s32.totalorder %s18, 0
    %p139 = por %p137, %p138
    %s140 = ssub.s32 %s12, %s19
    %p141 = scmp.eq.s32.totalorder %s140, 0
    %s143 = sadd.s32 %s142, 1
    %s144 = scalar_select %p141, %s142, %s143
    %p147 = pneg %p141
    %p148 = scmp.eq.s32.totalorder %s12, 1
    %p149 = por %p147, %p148
    %p150 = scmp.ne.s32.totalorder %s142, %s145
    %p151 = scmp.eq.s32.totalorder %s12, 0
    %p152 = por %p150, %p151
    %p153 = scmp.ne.s32.totalorder %s142, %s145
    %p154 = scmp.eq.s32.totalorder %s17, 1
    %p155 = por %p153, %p154
    %p156 = scmp.ne.s32.totalorder %s145, %s146
    %p157 = scmp.eq.s32.totalorder %s17, 0
    %p158 = por %p156, %p157
    %p159 = scmp.ne.s32.totalorder %s145, %s146
    %p160 = scmp.eq.s32.totalorder %s18, 1
    %p161 = por %p159, %p160
    %p163 = scmp.ne.s32.totalorder %s146, %s162
    %p164 = scmp.eq.s32.totalorder %s18, 0
    %p165 = por %p163, %p164
    %p166 = scmp.le.s32.totalorder 1, %s12
    %p167 = scmp.lt.s32.totalorder %s12, 3
    %p168 = pnand %p166, %p167
    %p169 = pneg %p168
    // Predicated region
    $region9: #{resblock_forward.7} parent=5 // pred_check
      _
    $region10: #{resblock_forward.7} parent=5 // pred_check_branch
      %171 = sbr.rel (%p168) target = $region12
    $region11: #{resblock_forward.7} parent=5 // pred_region
      %s172 = ssub.s32 %s12, 1
      // Predicated region
      $region13: #{resblock_forward.7} parent=11 // pred_check
        %p173 = pneg %p85
      $region14: #{resblock_forward.7} parent=11 // pred_check_branch
        %175 = sbr.rel (%p173) target = $region16
      $region15: #{resblock_forward.7} parent=11 // pred_region
        _
      $region16: #{resblock_forward.7} parent=11 // pred_fallthru
        _
      // Predicated region
      $region17: #{resblock_forward.7} parent=11 // pred_check
        %p176 = pneg %p106
      $region18: #{resblock_forward.7} parent=11 // pred_check_branch
        %178 = sbr.rel (%p176) target = $region20
      $region19: #{resblock_forward.7} parent=11 // pred_region
        _
      $region20: #{resblock_forward.7} parent=11 // pred_fallthru
        _
    $region12: #{resblock_forward.7} parent=5 // pred_fallthru
      _
    %p179 = scmp.lt.s32.totalorder %s12, 2
    // Predicated region
    $region21: #{resblock_forward.7} parent=5 // pred_check
      %p180 = pneg %p179
    $region22: #{resblock_forward.7} parent=5 // pred_check_branch
      %182 = sbr.rel (%p180) target = $region24
    $region23: #{resblock_forward.7} parent=5 // pred_region
      // Predicated region
      $region25: #{resblock_forward.7} parent=23 // pred_check
        %p183 = pneg %p32
      $region26: #{resblock_forward.7} parent=23 // pred_check_branch
        %185 = sbr.rel (%p183) target = $region28
      $region27: #{resblock_forward.7} parent=23 // pred_region
        %s186 = smul.u32 16, %s12
        %p187 = scmp.lt.s32.totalorder %s186, 31
        %s188 = scalar_select %p187, %s186, 31
        %s189 = smul.addr %s188, 2
        %s190 = smul.addr %s189, 4
        %s191 = scalar_lea.vmem %s0, %s190
        %s192 = smul.u32 16, %s12
      $region28: #{resblock_forward.7} parent=23 // pred_fallthru
        _
      // Predicated region
      $region29: #{resblock_forward.7} parent=23 // pred_check
        %p193 = pneg %p58
      $region30: #{resblock_forward.7} parent=23 // pred_check_branch
        %195 = sbr.rel (%p193) target = $region32
      $region31: #{resblock_forward.7} parent=23 // pred_region
        %s196 = smul.u32 16, %s12
        %p197 = scmp.lt.s32.totalorder %s196, 31
        %s198 = scalar_select %p197, %s196, 31
        %s199 = smul.addr %s198, 2
        %s200 = smul.addr %s199, 8
        %s201 = scalar_lea.vmem %s1, %s200
        %s202 = smul.u32 16, %s12
      $region32: #{resblock_forward.7} parent=23 // pred_fallthru
        _
    $region24: #{resblock_forward.7} parent=5 // pred_fallthru
      _
    %p203 = scmp.le.s32.totalorder 1, %s12
    %p204 = scmp.lt.s32.totalorder %s12, 3
    %p205 = pnand %p203, %p204
    %p206 = pneg %p205
    // Predicated region
    $region33: #{resblock_forward.7} parent=5 // pred_check
      _
    $region34: #{resblock_forward.7} parent=5 // pred_check_branch
      %208 = sbr.rel (%p205) target = $region36
    $region35: #{resblock_forward.7} parent=5 // pred_region
      %s209 = ssub.s32 %s12, 1
      %s210 = smul.u32 16, %s17
      %p211 = scmp.lt.s32.totalorder %s210, 31
      %s212 = scalar_select %p211, %s210, 31
      %s213 = smul.addr %s212, 2
      %s214 = smul.addr %s213, 4
      %s215 = scalar_lea.vmem %s0, %s214
      %p216 = pneg %p38
      %p217 = pneg %p35
      %s218 = smul.u32 16, %s17
      %p219 = scmp.lt.s32.totalorder %s218, 31
      %s220 = scalar_select %p219, %s218, 31
      %s221 = smul.addr %s220, 2
      %s222 = smul.addr %s221, 8
      %s223 = scalar_lea.vmem %s1, %s222
      %p224 = pneg %p64
      %p225 = pneg %p61
      %p226 = pneg %p85
      %p227 = pneg %p82
      %p228 = pneg %p106
      %p229 = pneg %p103
      %p230 = pneg %p132
      %p231 = pneg %p129
      %s232 = smul.u32 16, %s17
      %p233 = scmp.lt.s32.totalorder %s232, 31
      %s234 = scalar_select %p233, %s232, 31
      %s235 = smul.addr %s234, 2
      %s236 = smul.addr %s235, 8
      %s237 = scalar_lea.vmem %s4, %s236
      %p238 = pneg %p158
      %p239 = pneg %p155
      %p240 = scmp.lt.s32.totalorder %s17, 1
      %s241 = scalar_select %p240, %s17, 1
      %s242 = smul.addr %s241, 2
      %s243 = scalar_lea.vmem %s5, %s242
      %s244 = smul.u32 16, %s17
      %p245 = scmp.lt.s32.totalorder %s244, 31
      %s246 = scalar_select %p245, %s244, 31
      %s247 = smul.addr %s246, 2
      %s248 = smul.addr %s247, 4
      %s249 = scalar_lea.vmem %s0, %s248
      %s250 = smul.u32 16, %s17
      %s251 = smul.u32 16, %s17
      %p252 = scmp.lt.s32.totalorder %s251, 31
      %s253 = scalar_select %p252, %s251, 31
      %s254 = smul.addr %s253, 2
      %s255 = smul.addr %s254, 8
      %s256 = scalar_lea.vmem %s1, %s255
      %s257 = smul.u32 16, %s17
      %s258 = smul.u32 16, %s17
      %p259 = scmp.lt.s32.totalorder %s258, 31
      %s260 = scalar_select %p259, %s258, 31
      %s261 = smul.addr %s260, 2
      %s262 = smul.addr %s261, 8
      %s263 = scalar_lea.vmem %s4, %s262
      %s264 = smul.u32 16, %s17
      %p265 = scmp.lt.s32.totalorder %s17, 1
      %s266 = scalar_select %p265, %s17, 1
      %s267 = smul.addr %s266, 2
      %s268 = scalar_lea.vmem %s5, %s267
      %v270 = vld [vmem:[%s249] sm:$0xf]
      %v271 = vld [vmem:[%s249 + $0x4] sm:$0xf]
      %v272 = vld [vmem:[%s249 + $0x8] sm:$0xf]
      %v273 = vld [vmem:[%s249 + $0xc] sm:$0xf]
      %v274 = vld [vmem:[%s249 + $0x10] sm:$0xf]
      %v275 = vld [vmem:[%s249 + $0x14] sm:$0xf]
      %v276 = vld [vmem:[%s249 + $0x18] sm:$0xf]
      %v277 = vld [vmem:[%s249 + $0x1c] sm:$0xf]
      %v278 = vld [vmem:[%s249 + $0x20] sm:$0xf]
      %v279 = vld [vmem:[%s249 + $0x24] sm:$0xf]
      %v280 = vld [vmem:[%s249 + $0x28] sm:$0xf]
      %v281 = vld [vmem:[%s249 + $0x2c] sm:$0xf]
      %v282 = vld [vmem:[%s249 + $0x30] sm:$0xf]
      %v283 = vld [vmem:[%s249 + $0x34] sm:$0xf]
      %v284 = vld [vmem:[%s249 + $0x38] sm:$0xf]
      %v285 = vld [vmem:[%s249 + $0x3c] sm:$0xf]
      %v286 = vld [vmem:[%s249 + $0x40] sm:$0xf]
      %v287 = vld [vmem:[%s249 + $0x44] sm:$0xf]
      %v288 = vld [vmem:[%s249 + $0x48] sm:$0xf]
      %v289 = vld [vmem:[%s249 + $0x4c] sm:$0xf]
      %v290 = vld [vmem:[%s249 + $0x50] sm:$0xf]
      %v291 = vld [vmem:[%s249 + $0x54] sm:$0xf]
      %v292 = vld [vmem:[%s249 + $0x58] sm:$0xf]
      %v293 = vld [vmem:[%s249 + $0x5c] sm:$0xf]
      %v294 = vld [vmem:[%s249 + $0x60] sm:$0xf]
      %v295 = vld [vmem:[%s249 + $0x64] sm:$0xf]
      %v296 = vld [vmem:[%s249 + $0x68] sm:$0xf]
      %v297 = vld [vmem:[%s249 + $0x6c] sm:$0xf]
      %v298 = vld [vmem:[%s249 + $0x70] sm:$0xf]
      %v299 = vld [vmem:[%s249 + $0x74] sm:$0xf]
      %v300 = vld [vmem:[%s249 + $0x78] sm:$0xf]
      %v301 = vld [vmem:[%s249 + $0x7c] sm:$0xf]
      %v302 = vunpack.c.l.bf16 %v270
      %v303 = vunpack.c.l.bf16 %v271
      %v304 = vunpack.c.l.bf16 %v272
      %v305 = vunpack.c.l.bf16 %v273
      %v306 = vunpack.c.l.bf16 %v274
      %v307 = vunpack.c.l.bf16 %v275
      %v308 = vunpack.c.l.bf16 %v276
      %v309 = vunpack.c.l.bf16 %v277
      %v310 = vunpack.c.l.bf16 %v278
      %v311 = vunpack.c.l.bf16 %v279
      %v312 = vunpack.c.l.bf16 %v280
      %v313 = vunpack.c.l.bf16 %v281
      %v314 = vunpack.c.l.bf16 %v282
      %v315 = vunpack.c.l.bf16 %v283
      %v316 = vunpack.c.l.bf16 %v284
      %v317 = vunpack.c.l.bf16 %v285
      %v318 = vunpack.c.l.bf16 %v286
      %v319 = vunpack.c.l.bf16 %v287
      %v320 = vunpack.c.l.bf16 %v288
      %v321 = vunpack.c.l.bf16 %v289
      %v322 = vunpack.c.l.bf16 %v290
      %v323 = vunpack.c.l.bf16 %v291
      %v324 = vunpack.c.l.bf16 %v292
      %v325 = vunpack.c.l.bf16 %v293
      %v326 = vunpack.c.l.bf16 %v294
      %v327 = vunpack.c.l.bf16 %v295
      %v328 = vunpack.c.l.bf16 %v296
      %v329 = vunpack.c.l.bf16 %v297
      %v330 = vunpack.c.l.bf16 %v298
      %v331 = vunpack.c.l.bf16 %v299
      %v332 = vunpack.c.l.bf16 %v300
      %v333 = vunpack.c.l.bf16 %v301
      %v334 = vld [vmem:[%s2] sm:$0x1]
      %v335 = vperm.slane %v334, 0
      %v336 = vmul.f32 %v302, %v335
      %v337 = vmul.f32 %v303, %v335
      %v338 = vmul.f32 %v304, %v335
      %v339 = vmul.f32 %v305, %v335
      %v340 = vmul.f32 %v306, %v335
      %v341 = vmul.f32 %v307, %v335
      %v342 = vmul.f32 %v308, %v335
      %v343 = vmul.f32 %v309, %v335
      %v344 = vmul.f32 %v310, %v335
      %v345 = vmul.f32 %v311, %v335
      %v346 = vmul.f32 %v312, %v335
      %v347 = vmul.f32 %v313, %v335
      %v348 = vmul.f32 %v314, %v335
      %v349 = vmul.f32 %v315, %v335
      %v350 = vmul.f32 %v316, %v335
      %v351 = vmul.f32 %v317, %v335
      %v352 = vmul.f32 %v318, %v335
      %v353 = vmul.f32 %v319, %v335
      %v354 = vmul.f32 %v320, %v335
      %v355 = vmul.f32 %v321, %v335
      %v356 = vmul.f32 %v322, %v335
      %v357 = vmul.f32 %v323, %v335
      %v358 = vmul.f32 %v324, %v335
      %v359 = vmul.f32 %v325, %v335
      %v360 = vmul.f32 %v326, %v335
      %v361 = vmul.f32 %v327, %v335
      %v362 = vmul.f32 %v328, %v335
      %v363 = vmul.f32 %v329, %v335
      %v364 = vmul.f32 %v330, %v335
      %v365 = vmul.f32 %v331, %v335
      %v366 = vmul.f32 %v332, %v335
      %v367 = vmul.f32 %v333, %v335
      %v368 = vld [vmem:[%s2 + $0x1] sm:$0x1]
      %v369 = vperm.slane %v368, 0
      %v370 = vadd.f32 %v336, %v369
      %v371 = vadd.f32 %v337, %v369
      %v372 = vadd.f32 %v338, %v369
      %v373 = vadd.f32 %v339, %v369
      %v374 = vadd.f32 %v340, %v369
      %v375 = vadd.f32 %v341, %v369
      %v376 = vadd.f32 %v342, %v369
      %v377 = vadd.f32 %v343, %v369
      %v378 = vadd.f32 %v344, %v369
      %v379 = vadd.f32 %v345, %v369
      %v380 = vadd.f32 %v346, %v369
      %v381 = vadd.f32 %v347, %v369
      %v382 = vadd.f32 %v348, %v369
      %v383 = vadd.f32 %v349, %v369
      %v384 = vadd.f32 %v350, %v369
      %v385 = vadd.f32 %v351, %v369
      %v386 = vadd.f32 %v352, %v369
      %v387 = vadd.f32 %v353, %v369
      %v388 = vadd.f32 %v354, %v369
      %v389 = vadd.f32 %v355, %v369
      %v390 = vadd.f32 %v356, %v369
      %v391 = vadd.f32 %v357, %v369
      %v392 = vadd.f32 %v358, %v369
      %v393 = vadd.f32 %v359, %v369
      %v394 = vadd.f32 %v360, %v369
      %v395 = vadd.f32 %v361, %v369
      %v396 = vadd.f32 %v362, %v369
      %v397 = vadd.f32 %v363, %v369
      %v398 = vadd.f32 %v364, %v369
      %v399 = vadd.f32 %v365, %v369
      %v400 = vadd.f32 %v366, %v369
      %v401 = vadd.f32 %v367, %v369
      %v402 = vmin.f32 %v370, 20.0
      %v403 = vmin.f32 %v371, 20.0
      %v404 = vmin.f32 %v372, 20.0
      %v405 = vmin.f32 %v373, 20.0
      %v406 = vmin.f32 %v374, 20.0
      %v407 = vmin.f32 %v375, 20.0
      %v408 = vmin.f32 %v376, 20.0
      %v409 = vmin.f32 %v377, 20.0
      %v410 = vmin.f32 %v378, 20.0
      %v411 = vmin.f32 %v379, 20.0
      %v412 = vmin.f32 %v380, 20.0
      %v413 = vmin.f32 %v381, 20.0
      %v414 = vmin.f32 %v382, 20.0
      %v415 = vmin.f32 %v383, 20.0
      %v416 = vmin.f32 %v384, 20.0
      %v417 = vmin.f32 %v385, 20.0
      %v418 = vmin.f32 %v386, 20.0
      %v419 = vmin.f32 %v387, 20.0
      %v420 = vmin.f32 %v388, 20.0
      %v421 = vmin.f32 %v389, 20.0
      %v422 = vmin.f32 %v390, 20.0
      %v423 = vmin.f32 %v391, 20.0
      %v424 = vmin.f32 %v392, 20.0
      %v425 = vmin.f32 %v393, 20.0
      %v426 = vmin.f32 %v394, 20.0
      %v427 = vmin.f32 %v395, 20.0
      %v428 = vmin.f32 %v396, 20.0
      %v429 = vmin.f32 %v397, 20.0
      %v430 = vmin.f32 %v398, 20.0
      %v431 = vmin.f32 %v399, 20.0
      %v432 = vmin.f32 %v400, 20.0
      %v433 = vmin.f32 %v401, 20.0
      %v434 = vmul.f32 %v402, 1.442695
      %v435 = vpow.pop %v434
      %v436 = vmul.f32 %v403, 1.442695
      %v437 = vpow.pop %v436
      %v438 = vmul.f32 %v404, 1.442695
      %v439 = vpow.pop %v438
      %v440 = vmul.f32 %v405, 1.442695
      %v441 = vpow.pop %v440
      %v442 = vmul.f32 %v406, 1.442695
      %v443 = vpow.pop %v442
      %v444 = vmul.f32 %v407, 1.442695
      %v445 = vpow.pop %v444
      %v446 = vmul.f32 %v408, 1.442695
      %v447 = vpow.pop %v446
      %v448 = vmul.f32 %v409, 1.442695
      %v449 = vpow.pop %v448
      %v450 = vmul.f32 %v410, 1.442695
      %v451 = vpow.pop %v450
      %v452 = vmul.f32 %v411, 1.442695
      %v453 = vpow.pop %v452
      %v454 = vmul.f32 %v412, 1.442695
      %v455 = vpow.pop %v454
      %v456 = vmul.f32 %v413, 1.442695
      %v457 = vpow.pop %v456
      %v458 = vmul.f32 %v414, 1.442695
      %v459 = vpow.pop %v458
      %v460 = vmul.f32 %v415, 1.442695
      %v461 = vpow.pop %v460
      %v462 = vmul.f32 %v416, 1.442695
      %v463 = vpow.pop %v462
      %v464 = vmul.f32 %v417, 1.442695
      %v465 = vpow.pop %v464
      %v466 = vmul.f32 %v418, 1.442695
      %v467 = vpow.pop %v466
      %v468 = vmul.f32 %v419, 1.442695
      %v469 = vpow.pop %v468
      %v470 = vmul.f32 %v420, 1.442695
      %v471 = vpow.pop %v470
      %v472 = vmul.f32 %v421, 1.442695
      %v473 = vpow.pop %v472
      %v474 = vmul.f32 %v422, 1.442695
      %v475 = vpow.pop %v474
      %v476 = vmul.f32 %v423, 1.442695
      %v477 = vpow.pop %v476
      %v478 = vmul.f32 %v424, 1.442695
      %v479 = vpow.pop %v478
      %v480 = vmul.f32 %v425, 1.442695
      %v481 = vpow.pop %v480
      %v482 = vmul.f32 %v426, 1.442695
      %v483 = vpow.pop %v482
      %v484 = vmul.f32 %v427, 1.442695
      %v485 = vpow.pop %v484
      %v486 = vmul.f32 %v428, 1.442695
      %v487 = vpow.pop %v486
      %v488 = vmul.f32 %v429, 1.442695
      %v489 = vpow.pop %v488
      %v490 = vmul.f32 %v430, 1.442695
      %v491 = vpow.pop %v490
      %v492 = vmul.f32 %v431, 1.442695
      %v493 = vpow.pop %v492
      %v494 = vmul.f32 %v432, 1.442695
      %v495 = vpow.pop %v494
      %v496 = vmul.f32 %v433, 1.442695
      %v497 = vpow.pop %v496
      %v498 = vadd.f32 %v435, 2.0
      %v499 = vadd.f32 %v437, 2.0
      %v500 = vadd.f32 %v439, 2.0
      %v501 = vadd.f32 %v441, 2.0
      %v502 = vadd.f32 %v443, 2.0
      %v503 = vadd.f32 %v445, 2.0
      %v504 = vadd.f32 %v447, 2.0
      %v505 = vadd.f32 %v449, 2.0
      %v506 = vadd.f32 %v451, 2.0
      %v507 = vadd.f32 %v453, 2.0
      %v508 = vadd.f32 %v455, 2.0
      %v509 = vadd.f32 %v457, 2.0
      %v510 = vadd.f32 %v459, 2.0
      %v511 = vadd.f32 %v461, 2.0
      %v512 = vadd.f32 %v463, 2.0
      %v513 = vadd.f32 %v465, 2.0
      %v514 = vadd.f32 %v467, 2.0
      %v515 = vadd.f32 %v469, 2.0
      %v516 = vadd.f32 %v471, 2.0
      %v517 = vadd.f32 %v473, 2.0
      %v518 = vadd.f32 %v475, 2.0
      %v519 = vadd.f32 %v477, 2.0
      %v520 = vadd.f32 %v479, 2.0
      %v521 = vadd.f32 %v481, 2.0
      %v522 = vadd.f32 %v483, 2.0
      %v523 = vadd.f32 %v485, 2.0
      %v524 = vadd.f32 %v487, 2.0
      %v525 = vadd.f32 %v489, 2.0
      %v526 = vadd.f32 %v491, 2.0
      %v527 = vadd.f32 %v493, 2.0
      %v528 = vadd.f32 %v495, 2.0
      %v529 = vadd.f32 %v497, 2.0
      %v530 = vmul.f32 %v435, %v498
      %v531 = vmul.f32 %v437, %v499
      %v532 = vmul.f32 %v439, %v500
      %v533 = vmul.f32 %v441, %v501
      %v534 = vmul.f32 %v443, %v502
      %v535 = vmul.f32 %v445, %v503
      %v536 = vmul.f32 %v447, %v504
      %v537 = vmul.f32 %v449, %v505
      %v538 = vmul.f32 %v451, %v506
      %v539 = vmul.f32 %v453, %v507
      %v540 = vmul.f32 %v455, %v508
      %v541 = vmul.f32 %v457, %v509
      %v542 = vmul.f32 %v459, %v510
      %v543 = vmul.f32 %v461, %v511
      %v544 = vmul.f32 %v463, %v512
      %v545 = vmul.f32 %v465, %v513
      %v546 = vmul.f32 %v467, %v514
      %v547 = vmul.f32 %v469, %v515
      %v548 = vmul.f32 %v471, %v516
      %v549 = vmul.f32 %v473, %v517
      %v550 = vmul.f32 %v475, %v518
      %v551 = vmul.f32 %v477, %v519
      %v552 = vmul.f32 %v479, %v520
      %v553 = vmul.f32 %v481, %v521
      %v554 = vmul.f32 %v483, %v522
      %v555 = vmul.f32 %v485, %v523
      %v556 = vmul.f32 %v487, %v524
      %v557 = vmul.f32 %v489, %v525
      %v558 = vmul.f32 %v491, %v526
      %v559 = vmul.f32 %v493, %v527
      %v560 = vmul.f32 %v495, %v528
      %v561 = vmul.f32 %v497, %v529
      %v562 = vmul.f32 %v370, %v530
      %v563 = vmul.f32 %v371, %v531
      %v564 = vmul.f32 %v372, %v532
      %v565 = vmul.f32 %v373, %v533
      %v566 = vmul.f32 %v374, %v534
      %v567 = vmul.f32 %v375, %v535
      %v568 = vmul.f32 %v376, %v536
      %v569 = vmul.f32 %v377, %v537
      %v570 = vmul.f32 %v378, %v538
      %v571 = vmul.f32 %v379, %v539
      %v572 = vmul.f32 %v380, %v540
      %v573 = vmul.f32 %v381, %v541
      %v574 = vmul.f32 %v382, %v542
      %v575 = vmul.f32 %v383, %v543
      %v576 = vmul.f32 %v384, %v544
      %v577 = vmul.f32 %v385, %v545
      %v578 = vmul.f32 %v386, %v546
      %v579 = vmul.f32 %v387, %v547
      %v580 = vmul.f32 %v388, %v548
      %v581 = vmul.f32 %v389, %v549
      %v582 = vmul.f32 %v390, %v550
      %v583 = vmul.f32 %v391, %v551
      %v584 = vmul.f32 %v392, %v552
      %v585 = vmul.f32 %v393, %v553
      %v586 = vmul.f32 %v394, %v554
      %v587 = vmul.f32 %v395, %v555
      %v588 = vmul.f32 %v396, %v556
      %v589 = vmul.f32 %v397, %v557
      %v590 = vmul.f32 %v398, %v558
      %v591 = vmul.f32 %v399, %v559
      %v592 = vmul.f32 %v400, %v560
      %v593 = vmul.f32 %v401, %v561
      %v594 = vadd.f32 %v530, 2.0
      %v595 = vadd.f32 %v531, 2.0
      %v596 = vadd.f32 %v532, 2.0
      %v597 = vadd.f32 %v533, 2.0
      %v598 = vadd.f32 %v534, 2.0
      %v599 = vadd.f32 %v535, 2.0
      %v600 = vadd.f32 %v536, 2.0
      %v601 = vadd.f32 %v537, 2.0
      %v602 = vadd.f32 %v538, 2.0
      %v603 = vadd.f32 %v539, 2.0
      %v604 = vadd.f32 %v540, 2.0
      %v605 = vadd.f32 %v541, 2.0
      %v606 = vadd.f32 %v542, 2.0
      %v607 = vadd.f32 %v543, 2.0
      %v608 = vadd.f32 %v544, 2.0
      %v609 = vadd.f32 %v545, 2.0
      %v610 = vadd.f32 %v546, 2.0
      %v611 = vadd.f32 %v547, 2.0
      %v612 = vadd.f32 %v548, 2.0
      %v613 = vadd.f32 %v549, 2.0
      %v614 = vadd.f32 %v550, 2.0
      %v615 = vadd.f32 %v551, 2.0
      %v616 = vadd.f32 %v552, 2.0
      %v617 = vadd.f32 %v553, 2.0
      %v618 = vadd.f32 %v554, 2.0
      %v619 = vadd.f32 %v555, 2.0
      %v620 = vadd.f32 %v556, 2.0
      %v621 = vadd.f32 %v557, 2.0
      %v622 = vadd.f32 %v558, 2.0
      %v623 = vadd.f32 %v559, 2.0
      %v624 = vadd.f32 %v560, 2.0
      %v625 = vadd.f32 %v561, 2.0
      %v626 = vrcp.pop %v594
      %v627 = vrcp.pop %v595
      %v628 = vrcp.pop %v596
      %v629 = vrcp.pop %v597
      %v630 = vrcp.pop %v598
      %v631 = vrcp.pop %v599
      %v632 = vrcp.pop %v600
      %v633 = vrcp.pop %v601
      %v634 = vrcp.pop %v602
      %v635 = vrcp.pop %v603
      %v636 = vrcp.pop %v604
      %v637 = vrcp.pop %v605
      %v638 = vrcp.pop %v606
      %v639 = vrcp.pop %v607
      %v640 = vrcp.pop %v608
      %v641 = vrcp.pop %v609
      %v642 = vrcp.pop %v610
      %v643 = vrcp.pop %v611
      %v644 = vrcp.pop %v612
      %v645 = vrcp.pop %v613
      %v646 = vrcp.pop %v614
      %v647 = vrcp.pop %v615
      %v648 = vrcp.pop %v616
      %v649 = vrcp.pop %v617
      %v650 = vrcp.pop %v618
      %v651 = vrcp.pop %v619
      %v652 = vrcp.pop %v620
      %v653 = vrcp.pop %v621
      %v654 = vrcp.pop %v622
      %v655 = vrcp.pop %v623
      %v656 = vrcp.pop %v624
      %v657 = vrcp.pop %v625
      %v658 = vmul.f32 %v562, %v626
      %v659 = vmul.f32 %v563, %v627
      %v660 = vmul.f32 %v564, %v628
      %v661 = vmul.f32 %v565, %v629
      %v662 = vmul.f32 %v566, %v630
      %v663 = vmul.f32 %v567, %v631
      %v664 = vmul.f32 %v568, %v632
      %v665 = vmul.f32 %v569, %v633
      %v666 = vmul.f32 %v570, %v634
      %v667 = vmul.f32 %v571, %v635
      %v668 = vmul.f32 %v572, %v636
      %v669 = vmul.f32 %v573, %v637
      %v670 = vmul.f32 %v574, %v638
      %v671 = vmul.f32 %v575, %v639
      %v672 = vmul.f32 %v576, %v640
      %v673 = vmul.f32 %v577, %v641
      %v674 = vmul.f32 %v578, %v642
      %v675 = vmul.f32 %v579, %v643
      %v676 = vmul.f32 %v580, %v644
      %v677 = vmul.f32 %v581, %v645
      %v678 = vmul.f32 %v582, %v646
      %v679 = vmul.f32 %v583, %v647
      %v680 = vmul.f32 %v584, %v648
      %v681 = vmul.f32 %v585, %v649
      %v682 = vmul.f32 %v586, %v650
      %v683 = vmul.f32 %v587, %v651
      %v684 = vmul.f32 %v588, %v652
      %v685 = vmul.f32 %v589, %v653
      %v686 = vmul.f32 %v590, %v654
      %v687 = vmul.f32 %v591, %v655
      %v688 = vmul.f32 %v592, %v656
      %v689 = vmul.f32 %v593, %v657
      %vm690 = vcmp.gt.f32.partialorder %v370, 20.0
      %vm691 = vcmp.gt.f32.partialorder %v371, 20.0
      %vm692 = vcmp.gt.f32.partialorder %v372, 20.0
      %vm693 = vcmp.gt.f32.partialorder %v373, 20.0
      %vm694 = vcmp.gt.f32.partialorder %v374, 20.0
      %vm695 = vcmp.gt.f32.partialorder %v375, 20.0
      %vm696 = vcmp.gt.f32.partialorder %v376, 20.0
      %vm697 = vcmp.gt.f32.partialorder %v377, 20.0
      %vm698 = vcmp.gt.f32.partialorder %v378, 20.0
      %vm699 = vcmp.gt.f32.partialorder %v379, 20.0
      %vm700 = vcmp.gt.f32.partialorder %v380, 20.0
      %vm701 = vcmp.gt.f32.partialorder %v381, 20.0
      %vm702 = vcmp.gt.f32.partialorder %v382, 20.0
      %vm703 = vcmp.gt.f32.partialorder %v383, 20.0
      %vm704 = vcmp.gt.f32.partialorder %v384, 20.0
      %vm705 = vcmp.gt.f32.partialorder %v385, 20.0
      %vm706 = vcmp.gt.f32.partialorder %v386, 20.0
      %vm707 = vcmp.gt.f32.partialorder %v387, 20.0
      %vm708 = vcmp.gt.f32.partialorder %v388, 20.0
      %vm709 = vcmp.gt.f32.partialorder %v389, 20.0
      %vm710 = vcmp.gt.f32.partialorder %v390, 20.0
      %vm711 = vcmp.gt.f32.partialorder %v391, 20.0
      %vm712 = vcmp.gt.f32.partialorder %v392, 20.0
      %vm713 = vcmp.gt.f32.partialorder %v393, 20.0
      %vm714 = vcmp.gt.f32.partialorder %v394, 20.0
      %vm715 = vcmp.gt.f32.partialorder %v395, 20.0
      %vm716 = vcmp.gt.f32.partialorder %v396, 20.0
      %vm717 = vcmp.gt.f32.partialorder %v397, 20.0
      %vm718 = vcmp.gt.f32.partialorder %v398, 20.0
      %vm719 = vcmp.gt.f32.partialorder %v399, 20.0
      %vm720 = vcmp.gt.f32.partialorder %v400, 20.0
      %vm721 = vcmp.gt.f32.partialorder %v401, 20.0
      %v722 = vsel %vm690, %v370, %v658
      %v723 = vsel %vm691, %v371, %v659
      %v724 = vsel %vm692, %v372, %v660
      %v725 = vsel %vm693, %v373, %v661
      %v726 = vsel %vm694, %v374, %v662
      %v727 = vsel %vm695, %v375, %v663
      %v728 = vsel %vm696, %v376, %v664
      %v729 = vsel %vm697, %v377, %v665
      %v730 = vsel %vm698, %v378, %v666
      %v731 = vsel %vm699, %v379, %v667
      %v732 = vsel %vm700, %v380, %v668
      %v733 = vsel %vm701, %v381, %v669
      %v734 = vsel %vm702, %v382, %v670
      %v735 = vsel %vm703, %v383, %v671
      %v736 = vsel %vm704, %v384, %v672
      %v737 = vsel %vm705, %v385, %v673
      %v738 = vsel %vm706, %v386, %v674
      %v739 = vsel %vm707, %v387, %v675
      %v740 = vsel %vm708, %v388, %v676
      %v741 = vsel %vm709, %v389, %v677
      %v742 = vsel %vm710, %v390, %v678
      %v743 = vsel %vm711, %v391, %v679
      %v744 = vsel %vm712, %v392, %v680
      %v745 = vsel %vm713, %v393, %v681
      %v746 = vsel %vm714, %v394, %v682
      %v747 = vsel %vm715, %v395, %v683
      %v748 = vsel %vm716, %v396, %v684
      %v749 = vsel %vm717, %v397, %v685
      %v750 = vsel %vm718, %v398, %v686
      %v751 = vsel %vm719, %v399, %v687
      %v752 = vsel %vm720, %v400, %v688
      %v753 = vsel %vm721, %v401, %v689
      %v754 = vmin.f32 %v722, 20.0
      %v755 = vmin.f32 %v723, 20.0
      %v756 = vmin.f32 %v724, 20.0
      %v757 = vmin.f32 %v725, 20.0
      %v758 = vmin.f32 %v726, 20.0
      %v759 = vmin.f32 %v727, 20.0
      %v760 = vmin.f32 %v728, 20.0
      %v761 = vmin.f32 %v729, 20.0
      %v762 = vmin.f32 %v730, 20.0
      %v763 = vmin.f32 %v731, 20.0
      %v764 = vmin.f32 %v732, 20.0
      %v765 = vmin.f32 %v733, 20.0
      %v766 = vmin.f32 %v734, 20.0
      %v767 = vmin.f32 %v735, 20.0
      %v768 = vmin.f32 %v736, 20.0
      %v769 = vmin.f32 %v737, 20.0
      %v770 = vmin.f32 %v738, 20.0
      %v771 = vmin.f32 %v739, 20.0
      %v772 = vmin.f32 %v740, 20.0
      %v773 = vmin.f32 %v741, 20.0
      %v774 = vmin.f32 %v742, 20.0
      %v775 = vmin.f32 %v743, 20.0
      %v776 = vmin.f32 %v744, 20.0
      %v777 = vmin.f32 %v745, 20.0
      %v778 = vmin.f32 %v746, 20.0
      %v779 = vmin.f32 %v747, 20.0
      %v780 = vmin.f32 %v748, 20.0
      %v781 = vmin.f32 %v749, 20.0
      %v782 = vmin.f32 %v750, 20.0
      %v783 = vmin.f32 %v751, 20.0
      %v784 = vmin.f32 %v752, 20.0
      %v785 = vmin.f32 %v753, 20.0
      %v786 = vmul.f32 %v754, 1.442695
      %v787 = vpow.pop %v786
      %v788 = vmul.f32 %v755, 1.442695
      %v789 = vpow.pop %v788
      %v790 = vmul.f32 %v756, 1.442695
      %v791 = vpow.pop %v790
      %v792 = vmul.f32 %v757, 1.442695
      %v793 = vpow.pop %v792
      %v794 = vmul.f32 %v758, 1.442695
      %v795 = vpow.pop %v794
      %v796 = vmul.f32 %v759, 1.442695
      %v797 = vpow.pop %v796
      %v798 = vmul.f32 %v760, 1.442695
      %v799 = vpow.pop %v798
      %v800 = vmul.f32 %v761, 1.442695
      %v801 = vpow.pop %v800
      %v802 = vmul.f32 %v762, 1.442695
      %v803 = vpow.pop %v802
      %v804 = vmul.f32 %v763, 1.442695
      %v805 = vpow.pop %v804
      %v806 = vmul.f32 %v764, 1.442695
      %v807 = vpow.pop %v806
      %v808 = vmul.f32 %v765, 1.442695
      %v809 = vpow.pop %v808
      %v810 = vmul.f32 %v766, 1.442695
      %v811 = vpow.pop %v810
      %v812 = vmul.f32 %v767, 1.442695
      %v813 = vpow.pop %v812
      %v814 = vmul.f32 %v768, 1.442695
      %v815 = vpow.pop %v814
      %v816 = vmul.f32 %v769, 1.442695
      %v817 = vpow.pop %v816
      %v818 = vmul.f32 %v770, 1.442695
      %v819 = vpow.pop %v818
      %v820 = vmul.f32 %v771, 1.442695
      %v821 = vpow.pop %v820
      %v822 = vmul.f32 %v772, 1.442695
      %v823 = vpow.pop %v822
      %v824 = vmul.f32 %v773, 1.442695
      %v825 = vpow.pop %v824
      %v826 = vmul.f32 %v774, 1.442695
      %v827 = vpow.pop %v826
      %v828 = vmul.f32 %v775, 1.442695
      %v829 = vpow.pop %v828
      %v830 = vmul.f32 %v776, 1.442695
      %v831 = vpow.pop %v830
      %v832 = vmul.f32 %v777, 1.442695
      %v833 = vpow.pop %v832
      %v834 = vmul.f32 %v778, 1.442695
      %v835 = vpow.pop %v834
      %v836 = vmul.f32 %v779, 1.442695
      %v837 = vpow.pop %v836
      %v838 = vmul.f32 %v780, 1.442695
      %v839 = vpow.pop %v838
      %v840 = vmul.f32 %v781, 1.442695
      %v841 = vpow.pop %v840
      %v842 = vmul.f32 %v782, 1.442695
      %v843 = vpow.pop %v842
      %v844 = vmul.f32 %v783, 1.442695
      %v845 = vpow.pop %v844
      %v846 = vmul.f32 %v784, 1.442695
      %v847 = vpow.pop %v846
      %v848 = vmul.f32 %v785, 1.442695
      %v849 = vpow.pop %v848
      %v850 = vadd.f32 %v787, 2.0
      %v851 = vadd.f32 %v789, 2.0
      %v852 = vadd.f32 %v791, 2.0
      %v853 = vadd.f32 %v793, 2.0
      %v854 = vadd.f32 %v795, 2.0
      %v855 = vadd.f32 %v797, 2.0
      %v856 = vadd.f32 %v799, 2.0
      %v857 = vadd.f32 %v801, 2.0
      %v858 = vadd.f32 %v803, 2.0
      %v859 = vadd.f32 %v805, 2.0
      %v860 = vadd.f32 %v807, 2.0
      %v861 = vadd.f32 %v809, 2.0
      %v862 = vadd.f32 %v811, 2.0
      %v863 = vadd.f32 %v813, 2.0
      %v864 = vadd.f32 %v815, 2.0
      %v865 = vadd.f32 %v817, 2.0
      %v866 = vadd.f32 %v819, 2.0
      %v867 = vadd.f32 %v821, 2.0
      %v868 = vadd.f32 %v823, 2.0
      %v869 = vadd.f32 %v825, 2.0
      %v870 = vadd.f32 %v827, 2.0
      %v871 = vadd.f32 %v829, 2.0
      %v872 = vadd.f32 %v831, 2.0
      %v873 = vadd.f32 %v833, 2.0
      %v874 = vadd.f32 %v835, 2.0
      %v875 = vadd.f32 %v837, 2.0
      %v876 = vadd.f32 %v839, 2.0
      %v877 = vadd.f32 %v841, 2.0
      %v878 = vadd.f32 %v843, 2.0
      %v879 = vadd.f32 %v845, 2.0
      %v880 = vadd.f32 %v847, 2.0
      %v881 = vadd.f32 %v849, 2.0
      %v882 = vmul.f32 %v787, %v850
      %v883 = vmul.f32 %v789, %v851
      %v884 = vmul.f32 %v791, %v852
      %v885 = vmul.f32 %v793, %v853
      %v886 = vmul.f32 %v795, %v854
      %v887 = vmul.f32 %v797, %v855
      %v888 = vmul.f32 %v799, %v856
      %v889 = vmul.f32 %v801, %v857
      %v890 = vmul.f32 %v803, %v858
      %v891 = vmul.f32 %v805, %v859
      %v892 = vmul.f32 %v807, %v860
      %v893 = vmul.f32 %v809, %v861
      %v894 = vmul.f32 %v811, %v862
      %v895 = vmul.f32 %v813, %v863
      %v896 = vmul.f32 %v815, %v864
      %v897 = vmul.f32 %v817, %v865
      %v898 = vmul.f32 %v819, %v866
      %v899 = vmul.f32 %v821, %v867
      %v900 = vmul.f32 %v823, %v868
      %v901 = vmul.f32 %v825, %v869
      %v902 = vmul.f32 %v827, %v870
      %v903 = vmul.f32 %v829, %v871
      %v904 = vmul.f32 %v831, %v872
      %v905 = vmul.f32 %v833, %v873
      %v906 = vmul.f32 %v835, %v874
      %v907 = vmul.f32 %v837, %v875
      %v908 = vmul.f32 %v839, %v876
      %v909 = vmul.f32 %v841, %v877
      %v910 = vmul.f32 %v843, %v878
      %v911 = vmul.f32 %v845, %v879
      %v912 = vmul.f32 %v847, %v880
      %v913 = vmul.f32 %v849, %v881
      %v914 = vmul.f32 %v722, %v882
      %v915 = vmul.f32 %v723, %v883
      %v916 = vmul.f32 %v724, %v884
      %v917 = vmul.f32 %v725, %v885
      %v918 = vmul.f32 %v726, %v886
      %v919 = vmul.f32 %v727, %v887
      %v920 = vmul.f32 %v728, %v888
      %v921 = vmul.f32 %v729, %v889
      %v922 = vmul.f32 %v730, %v890
      %v923 = vmul.f32 %v731, %v891
      %v924 = vmul.f32 %v732, %v892
      %v925 = vmul.f32 %v733, %v893
      %v926 = vmul.f32 %v734, %v894
      %v927 = vmul.f32 %v735, %v895
      %v928 = vmul.f32 %v736, %v896
      %v929 = vmul.f32 %v737, %v897
      %v930 = vmul.f32 %v738, %v898
      %v931 = vmul.f32 %v739, %v899
      %v932 = vmul.f32 %v740, %v900
      %v933 = vmul.f32 %v741, %v901
      %v934 = vmul.f32 %v742, %v902
      %v935 = vmul.f32 %v743, %v903
      %v936 = vmul.f32 %v744, %v904
      %v937 = vmul.f32 %v745, %v905
      %v938 = vmul.f32 %v746, %v906
      %v939 = vmul.f32 %v747, %v907
      %v940 = vmul.f32 %v748, %v908
      %v941 = vmul.f32 %v749, %v909
      %v942 = vmul.f32 %v750, %v910
      %v943 = vmul.f32 %v751, %v911
      %v944 = vmul.f32 %v752, %v912
      %v945 = vmul.f32 %v753, %v913
      %v946 = vadd.f32 %v882, 2.0
      %v947 = vadd.f32 %v883, 2.0
      %v948 = vadd.f32 %v884, 2.0
      %v949 = vadd.f32 %v885, 2.0
      %v950 = vadd.f32 %v886, 2.0
      %v951 = vadd.f32 %v887, 2.0
      %v952 = vadd.f32 %v888, 2.0
      %v953 = vadd.f32 %v889, 2.0
      %v954 = vadd.f32 %v890, 2.0
      %v955 = vadd.f32 %v891, 2.0
      %v956 = vadd.f32 %v892, 2.0
      %v957 = vadd.f32 %v893, 2.0
      %v958 = vadd.f32 %v894, 2.0
      %v959 = vadd.f32 %v895, 2.0
      %v960 = vadd.f32 %v896, 2.0
      %v961 = vadd.f32 %v897, 2.0
      %v962 = vadd.f32 %v898, 2.0
      %v963 = vadd.f32 %v899, 2.0
      %v964 = vadd.f32 %v900, 2.0
      %v965 = vadd.f32 %v901, 2.0
      %v966 = vadd.f32 %v902, 2.0
      %v967 = vadd.f32 %v903, 2.0
      %v968 = vadd.f32 %v904, 2.0
      %v969 = vadd.f32 %v905, 2.0
      %v970 = vadd.f32 %v906, 2.0
      %v971 = vadd.f32 %v907, 2.0
      %v972 = vadd.f32 %v908, 2.0
      %v973 = vadd.f32 %v909, 2.0
      %v974 = vadd.f32 %v910, 2.0
      %v975 = vadd.f32 %v911, 2.0
      %v976 = vadd.f32 %v912, 2.0
      %v977 = vadd.f32 %v913, 2.0
      %v978 = vrcp.pop %v946
      %v979 = vrcp.pop %v947
      %v980 = vrcp.pop %v948
      %v981 = vrcp.pop %v949
      %v982 = vrcp.pop %v950
      %v983 = vrcp.pop %v951
      %v984 = vrcp.pop %v952
      %v985 = vrcp.pop %v953
      %v986 = vrcp.pop %v954
      %v987 = vrcp.pop %v955
      %v988 = vrcp.pop %v956
      %v989 = vrcp.pop %v957
      %v990 = vrcp.pop %v958
      %v991 = vrcp.pop %v959
      %v992 = vrcp.pop %v960
      %v993 = vrcp.pop %v961
      %v994 = vrcp.pop %v962
      %v995 = vrcp.pop %v963
      %v996 = vrcp.pop %v964
      %v997 = vrcp.pop %v965
      %v998 = vrcp.pop %v966
      %v999 = vrcp.pop %v967
      %v1000 = vrcp.pop %v968
      %v1001 = vrcp.pop %v969
      %v1002 = vrcp.pop %v970
      %v1003 = vrcp.pop %v971
      %v1004 = vrcp.pop %v972
      %v1005 = vrcp.pop %v973
      %v1006 = vrcp.pop %v974
      %v1007 = vrcp.pop %v975
      %v1008 = vrcp.pop %v976
      %v1009 = vrcp.pop %v977
      %v1010 = vmul.f32 %v914, %v978
      %v1011 = vmul.f32 %v915, %v979
      %v1012 = vmul.f32 %v916, %v980
      %v1013 = vmul.f32 %v917, %v981
      %v1014 = vmul.f32 %v918, %v982
      %v1015 = vmul.f32 %v919, %v983
      %v1016 = vmul.f32 %v920, %v984
      %v1017 = vmul.f32 %v921, %v985
      %v1018 = vmul.f32 %v922, %v986
      %v1019 = vmul.f32 %v923, %v987
      %v1020 = vmul.f32 %v924, %v988
      %v1021 = vmul.f32 %v925, %v989
      %v1022 = vmul.f32 %v926, %v990
      %v1023 = vmul.f32 %v927, %v991
      %v1024 = vmul.f32 %v928, %v992
      %v1025 = vmul.f32 %v929, %v993
      %v1026 = vmul.f32 %v930, %v994
      %v1027 = vmul.f32 %v931, %v995
      %v1028 = vmul.f32 %v932, %v996
      %v1029 = vmul.f32 %v933, %v997
      %v1030 = vmul.f32 %v934, %v998
      %v1031 = vmul.f32 %v935, %v999
      %v1032 = vmul.f32 %v936, %v1000
      %v1033 = vmul.f32 %v937, %v1001
      %v1034 = vmul.f32 %v938, %v1002
      %v1035 = vmul.f32 %v939, %v1003
      %v1036 = vmul.f32 %v940, %v1004
      %v1037 = vmul.f32 %v941, %v1005
      %v1038 = vmul.f32 %v942, %v1006
      %v1039 = vmul.f32 %v943, %v1007
      %v1040 = vmul.f32 %v944, %v1008
      %v1041 = vmul.f32 %v945, %v1009
      %vm1042 = vcmp.gt.f32.partialorder %v722, 20.0
      %vm1043 = vcmp.gt.f32.partialorder %v723, 20.0
      %vm1044 = vcmp.gt.f32.partialorder %v724, 20.0
      %vm1045 = vcmp.gt.f32.partialorder %v725, 20.0
      %vm1046 = vcmp.gt.f32.partialorder %v726, 20.0
      %vm1047 = vcmp.gt.f32.partialorder %v727, 20.0
      %vm1048 = vcmp.gt.f32.partialorder %v728, 20.0
      %vm1049 = vcmp.gt.f32.partialorder %v729, 20.0
      %vm1050 = vcmp.gt.f32.partialorder %v730, 20.0
      %vm1051 = vcmp.gt.f32.partialorder %v731, 20.0
      %vm1052 = vcmp.gt.f32.partialorder %v732, 20.0
      %vm1053 = vcmp.gt.f32.partialorder %v733, 20.0
      %vm1054 = vcmp.gt.f32.partialorder %v734, 20.0
      %vm1055 = vcmp.gt.f32.partialorder %v735, 20.0
      %vm1056 = vcmp.gt.f32.partialorder %v736, 20.0
      %vm1057 = vcmp.gt.f32.partialorder %v737, 20.0
      %vm1058 = vcmp.gt.f32.partialorder %v738, 20.0
      %vm1059 = vcmp.gt.f32.partialorder %v739, 20.0
      %vm1060 = vcmp.gt.f32.partialorder %v740, 20.0
      %vm1061 = vcmp.gt.f32.partialorder %v741, 20.0
      %vm1062 = vcmp.gt.f32.partialorder %v742, 20.0
      %vm1063 = vcmp.gt.f32.partialorder %v743, 20.0
      %vm1064 = vcmp.gt.f32.partialorder %v744, 20.0
      %vm1065 = vcmp.gt.f32.partialorder %v745, 20.0
      %vm1066 = vcmp.gt.f32.partialorder %v746, 20.0
      %vm1067 = vcmp.gt.f32.partialorder %v747, 20.0
      %vm1068 = vcmp.gt.f32.partialorder %v748, 20.0
      %vm1069 = vcmp.gt.f32.partialorder %v749, 20.0
      %vm1070 = vcmp.gt.f32.partialorder %v750, 20.0
      %vm1071 = vcmp.gt.f32.partialorder %v751, 20.0
      %vm1072 = vcmp.gt.f32.partialorder %v752, 20.0
      %vm1073 = vcmp.gt.f32.partialorder %v753, 20.0
      %v1074 = vsel %vm1042, %v722, %v1010
      %v1075 = vsel %vm1043, %v723, %v1011
      %v1076 = vsel %vm1044, %v724, %v1012
      %v1077 = vsel %vm1045, %v725, %v1013
      %v1078 = vsel %vm1046, %v726, %v1014
      %v1079 = vsel %vm1047, %v727, %v1015
      %v1080 = vsel %vm1048, %v728, %v1016
      %v1081 = vsel %vm1049, %v729, %v1017
      %v1082 = vsel %vm1050, %v730, %v1018
      %v1083 = vsel %vm1051, %v731, %v1019
      %v1084 = vsel %vm1052, %v732, %v1020
      %v1085 = vsel %vm1053, %v733, %v1021
      %v1086 = vsel %vm1054, %v734, %v1022
      %v1087 = vsel %vm1055, %v735, %v1023
      %v1088 = vsel %vm1056, %v736, %v1024
      %v1089 = vsel %vm1057, %v737, %v1025
      %v1090 = vsel %vm1058, %v738, %v1026
      %v1091 = vsel %vm1059, %v739, %v1027
      %v1092 = vsel %vm1060, %v740, %v1028
      %v1093 = vsel %vm1061, %v741, %v1029
      %v1094 = vsel %vm1062, %v742, %v1030
      %v1095 = vsel %vm1063, %v743, %v1031
      %v1096 = vsel %vm1064, %v744, %v1032
      %v1097 = vsel %vm1065, %v745, %v1033
      %v1098 = vsel %vm1066, %v746, %v1034
      %v1099 = vsel %vm1067, %v747, %v1035
      %v1100 = vsel %vm1068, %v748, %v1036
      %v1101 = vsel %vm1069, %v749, %v1037
      %v1102 = vsel %vm1070, %v750, %v1038
      %v1103 = vsel %vm1071, %v751, %v1039
      %v1104 = vsel %vm1072, %v752, %v1040
      %v1105 = vsel %vm1073, %v753, %v1041
      %v1106 = vld [vmem:[%s256] sm:$0xff]
      %v1107 = vld [vmem:[%s256 + $0x8] sm:$0xff]
      %v1108 = vld [vmem:[%s256 + $0x10] sm:$0xff]
      %v1109 = vld [vmem:[%s256 + $0x18] sm:$0xff]
      %v1110 = vld [vmem:[%s256 + $0x20] sm:$0xff]
      %v1111 = vld [vmem:[%s256 + $0x28] sm:$0xff]
      %v1112 = vld [vmem:[%s256 + $0x30] sm:$0xff]
      %v1113 = vld [vmem:[%s256 + $0x38] sm:$0xff]
      %v1114 = vld [vmem:[%s256 + $0x40] sm:$0xff]
      %v1115 = vld [vmem:[%s256 + $0x48] sm:$0xff]
      %v1116 = vld [vmem:[%s256 + $0x50] sm:$0xff]
      %v1117 = vld [vmem:[%s256 + $0x58] sm:$0xff]
      %v1118 = vld [vmem:[%s256 + $0x60] sm:$0xff]
      %v1119 = vld [vmem:[%s256 + $0x68] sm:$0xff]
      %v1120 = vld [vmem:[%s256 + $0x70] sm:$0xff]
      %v1121 = vld [vmem:[%s256 + $0x78] sm:$0xff]
      %v1122 = vld [vmem:[%s256 + $0x80] sm:$0xff]
      %v1123 = vld [vmem:[%s256 + $0x88] sm:$0xff]
      %v1124 = vld [vmem:[%s256 + $0x90] sm:$0xff]
      %v1125 = vld [vmem:[%s256 + $0x98] sm:$0xff]
      %v1126 = vld [vmem:[%s256 + $0xa0] sm:$0xff]
      %v1127 = vld [vmem:[%s256 + $0xa8] sm:$0xff]
      %v1128 = vld [vmem:[%s256 + $0xb0] sm:$0xff]
      %v1129 = vld [vmem:[%s256 + $0xb8] sm:$0xff]
      %v1130 = vld [vmem:[%s256 + $0xc0] sm:$0xff]
      %v1131 = vld [vmem:[%s256 + $0xc8] sm:$0xff]
      %v1132 = vld [vmem:[%s256 + $0xd0] sm:$0xff]
      %v1133 = vld [vmem:[%s256 + $0xd8] sm:$0xff]
      %v1134 = vld [vmem:[%s256 + $0xe0] sm:$0xff]
      %v1135 = vld [vmem:[%s256 + $0xe8] sm:$0xff]
      %v1136 = vld [vmem:[%s256 + $0xf0] sm:$0xff]
      %v1137 = vld [vmem:[%s256 + $0xf8] sm:$0xff]
      %v1138 = vadd.f32 %v1106, %v1074
      %v1139 = vadd.f32 %v1107, %v1075
      %v1140 = vadd.f32 %v1108, %v1076
      %v1141 = vadd.f32 %v1109, %v1077
      %v1142 = vadd.f32 %v1110, %v1078
      %v1143 = vadd.f32 %v1111, %v1079
      %v1144 = vadd.f32 %v1112, %v1080
      %v1145 = vadd.f32 %v1113, %v1081
      %v1146 = vadd.f32 %v1114, %v1082
      %v1147 = vadd.f32 %v1115, %v1083
      %v1148 = vadd.f32 %v1116, %v1084
      %v1149 = vadd.f32 %v1117, %v1085
      %v1150 = vadd.f32 %v1118, %v1086
      %v1151 = vadd.f32 %v1119, %v1087
      %v1152 = vadd.f32 %v1120, %v1088
      %v1153 = vadd.f32 %v1121, %v1089
      %v1154 = vadd.f32 %v1122, %v1090
      %v1155 = vadd.f32 %v1123, %v1091
      %v1156 = vadd.f32 %v1124, %v1092
      %v1157 = vadd.f32 %v1125, %v1093
      %v1158 = vadd.f32 %v1126, %v1094
      %v1159 = vadd.f32 %v1127, %v1095
      %v1160 = vadd.f32 %v1128, %v1096
      %v1161 = vadd.f32 %v1129, %v1097
      %v1162 = vadd.f32 %v1130, %v1098
      %v1163 = vadd.f32 %v1131, %v1099
      %v1164 = vadd.f32 %v1132, %v1100
      %v1165 = vadd.f32 %v1133, %v1101
      %v1166 = vadd.f32 %v1134, %v1102
      %v1167 = vadd.f32 %v1135, %v1103
      %v1168 = vadd.f32 %v1136, %v1104
      %v1169 = vadd.f32 %v1137, %v1105
      %vm1170 = vcmask 64512
      %1171 = vst.msk [vmem:[%s263] sm:$0xff] %vm1170, %v1138
      %1172 = vst.msk [vmem:[%s263 + $0x8] sm:$0xff] %vm1170, %v1139
      %1173 = vst.msk [vmem:[%s263 + $0x10] sm:$0xff] %vm1170, %v1140
      %1174 = vst.msk [vmem:[%s263 + $0x18] sm:$0xff] %vm1170, %v1141
      %1175 = vst.msk [vmem:[%s263 + $0x20] sm:$0xff] %vm1170, %v1142
      %1176 = vst.msk [vmem:[%s263 + $0x28] sm:$0xff] %vm1170, %v1143
      %1177 = vst.msk [vmem:[%s263 + $0x30] sm:$0xff] %vm1170, %v1144
      %1178 = vst.msk [vmem:[%s263 + $0x38] sm:$0xff] %vm1170, %v1145
      %1179 = vst.msk [vmem:[%s263 + $0x40] sm:$0xff] %vm1170, %v1146
      %1180 = vst.msk [vmem:[%s263 + $0x48] sm:$0xff] %vm1170, %v1147
      %1181 = vst.msk [vmem:[%s263 + $0x50] sm:$0xff] %vm1170, %v1148
      %1182 = vst.msk [vmem:[%s263 + $0x58] sm:$0xff] %vm1170, %v1149
      %1183 = vst.msk [vmem:[%s263 + $0x60] sm:$0xff] %vm1170, %v1150
      %1184 = vst.msk [vmem:[%s263 + $0x68] sm:$0xff] %vm1170, %v1151
      %1185 = vst.msk [vmem:[%s263 + $0x70] sm:$0xff] %vm1170, %v1152
      %1186 = vst.msk [vmem:[%s263 + $0x78] sm:$0xff] %vm1170, %v1153
      %1187 = vst.msk [vmem:[%s263 + $0x80] sm:$0xff] %vm1170, %v1154
      %1188 = vst.msk [vmem:[%s263 + $0x88] sm:$0xff] %vm1170, %v1155
      %1189 = vst.msk [vmem:[%s263 + $0x90] sm:$0xff] %vm1170, %v1156
      %1190 = vst.msk [vmem:[%s263 + $0x98] sm:$0xff] %vm1170, %v1157
      %1191 = vst.msk [vmem:[%s263 + $0xa0] sm:$0xff] %vm1170, %v1158
      %1192 = vst.msk [vmem:[%s263 + $0xa8] sm:$0xff] %vm1170, %v1159
      %1193 = vst.msk [vmem:[%s263 + $0xb0] sm:$0xff] %vm1170, %v1160
      %1194 = vst.msk [vmem:[%s263 + $0xb8] sm:$0xff] %vm1170, %v1161
      %1195 = vst.msk [vmem:[%s263 + $0xc0] sm:$0xff] %vm1170, %v1162
      %1196 = vst.msk [vmem:[%s263 + $0xc8] sm:$0xff] %vm1170, %v1163
      %1197 = vst.msk [vmem:[%s263 + $0xd0] sm:$0xff] %vm1170, %v1164
      %1198 = vst.msk [vmem:[%s263 + $0xd8] sm:$0xff] %vm1170, %v1165
      %1199 = vst.msk [vmem:[%s263 + $0xe0] sm:$0xff] %vm1170, %v1166
      %1200 = vst.msk [vmem:[%s263 + $0xe8] sm:$0xff] %vm1170, %v1167
      %1201 = vst.msk [vmem:[%s263 + $0xf0] sm:$0xff] %vm1170, %v1168
      %1202 = vst.msk [vmem:[%s263 + $0xf8] sm:$0xff] %vm1170, %v1169
      %v1203 = vld [vmem:[%s3] sm:$0xf]
      %v1204 = vpack.c.bf16 %v1139, %v1138
      %v1205 = vpack.c.bf16 %v1141, %v1140
      %v1206 = vpack.c.bf16 %v1143, %v1142
      %v1207 = vpack.c.bf16 %v1145, %v1144
      %v1208 = vpack.c.bf16 %v1147, %v1146
      %v1209 = vpack.c.bf16 %v1149, %v1148
      %v1210 = vpack.c.bf16 %v1151, %v1150
      %v1211 = vpack.c.bf16 %v1153, %v1152
      %v1212 = vpack.c.bf16 %v1155, %v1154
      %v1213 = vpack.c.bf16 %v1157, %v1156
      %v1214 = vpack.c.bf16 %v1159, %v1158
      %v1215 = vpack.c.bf16 %v1161, %v1160
      %v1216 = vpack.c.bf16 %v1163, %v1162
      %v1217 = vpack.c.bf16 %v1165, %v1164
      %v1218 = vpack.c.bf16 %v1167, %v1166
      %v1219 = vpack.c.bf16 %v1169, %v1168
      %v1221 = vsel %vm1170, %v1204, 0
      %v1224 = vsel %vm1170, %v1205, 0
      %v1227 = vsel %vm1170, %v1206, 0
      %v1230 = vsel %vm1170, %v1207, 0
      %v1233 = vsel %vm1170, %v1208, 0
      %v1236 = vsel %vm1170, %v1209, 0
      %v1239 = vsel %vm1170, %v1210, 0
      %v1242 = vsel %vm1170, %v1211, 0
      %v1245 = vsel %vm1170, %v1212, 0
      %v1248 = vsel %vm1170, %v1213, 0
      %v1251 = vsel %vm1170, %v1214, 0
      %v1254 = vsel %vm1170, %v1215, 0
      %v1257 = vsel %vm1170, %v1216, 0
      %v1260 = vsel %vm1170, %v1217, 0
      %v1263 = vsel %vm1170, %v1218, 0
      %v1266 = vsel %vm1170, %v1219, 0
      %vm1268 = vcmask 1043456
      %v1270 = vsel %vm1268, %v1203, 0
      %1272 = vmatpush.bf16.msra.mxu0 0
      %1273 = vmatpush.bf16.msra.mxu0 0
      %1274 = vmatpush.bf16.msra.mxu0 0
      %1275 = vmatpush.bf16.msra.mxu0 0
      %1276 = vmatpush.bf16.msra.mxu0 0
      %1277 = vmatpush.bf16.msra.mxu0 0
      %1278 = vmatpush.bf16.msra.mxu0 0
      %1279 = vmatpush.bf16.msra.mxu0 %v1270
      %1280 = vmatmul.bf16.gmra.mxu0 %v1221
      %v1281 = vpop.f32.mrf.mxu0
      %v1282 = vadd.f32 0.0, %v1281
      %v1283 = vpop.f32.mrf.mxu0
      %v1284 = vadd.f32 0.0, %v1283
      %1285 = vmatmul.bf16.gmra.mxu0 %v1224
      %v1286 = vpop.f32.mrf.mxu0
      %v1287 = vadd.f32 0.0, %v1286
      %v1288 = vpop.f32.mrf.mxu0
      %v1289 = vadd.f32 0.0, %v1288
      %1290 = vmatmul.bf16.gmra.mxu0 %v1227
      %v1291 = vpop.f32.mrf.mxu0
      %v1292 = vadd.f32 0.0, %v1291
      %v1293 = vpop.f32.mrf.mxu0
      %v1294 = vadd.f32 0.0, %v1293
      %1295 = vmatmul.bf16.gmra.mxu0 %v1230
      %v1296 = vpop.f32.mrf.mxu0
      %v1297 = vadd.f32 0.0, %v1296
      %v1298 = vpop.f32.mrf.mxu0
      %v1299 = vadd.f32 0.0, %v1298
      %1300 = vmatmul.bf16.gmra.mxu0 %v1233
      %v1301 = vpop.f32.mrf.mxu0
      %v1302 = vadd.f32 0.0, %v1301
      %v1303 = vpop.f32.mrf.mxu0
      %v1304 = vadd.f32 0.0, %v1303
      %1305 = vmatmul.bf16.gmra.mxu0 %v1236
      %v1306 = vpop.f32.mrf.mxu0
      %v1307 = vadd.f32 0.0, %v1306
      %v1308 = vpop.f32.mrf.mxu0
      %v1309 = vadd.f32 0.0, %v1308
      %1310 = vmatmul.bf16.gmra.mxu0 %v1239
      %v1311 = vpop.f32.mrf.mxu0
      %v1312 = vadd.f32 0.0, %v1311
      %v1313 = vpop.f32.mrf.mxu0
      %v1314 = vadd.f32 0.0, %v1313
      %1315 = vmatmul.bf16.gmra.mxu0 %v1242
      %v1316 = vpop.f32.mrf.mxu0
      %v1317 = vadd.f32 0.0, %v1316
      %v1318 = vpop.f32.mrf.mxu0
      %v1319 = vadd.f32 0.0, %v1318
      %1320 = vmatmul.bf16.gmra.mxu0 %v1245
      %v1321 = vpop.f32.mrf.mxu0
      %v1322 = vadd.f32 0.0, %v1321
      %v1323 = vpop.f32.mrf.mxu0
      %v1324 = vadd.f32 0.0, %v1323
      %1325 = vmatmul.bf16.gmra.mxu0 %v1248
      %v1326 = vpop.f32.mrf.mxu0
      %v1327 = vadd.f32 0.0, %v1326
      %v1328 = vpop.f32.mrf.mxu0
      %v1329 = vadd.f32 0.0, %v1328
      %1330 = vmatmul.bf16.gmra.mxu0 %v1251
      %v1331 = vpop.f32.mrf.mxu0
      %v1332 = vadd.f32 0.0, %v1331
      %v1333 = vpop.f32.mrf.mxu0
      %v1334 = vadd.f32 0.0, %v1333
      %1335 = vmatmul.bf16.gmra.mxu0 %v1254
      %v1336 = vpop.f32.mrf.mxu0
      %v1337 = vadd.f32 0.0, %v1336
      %v1338 = vpop.f32.mrf.mxu0
      %v1339 = vadd.f32 0.0, %v1338
      %1340 = vmatmul.bf16.gmra.mxu0 %v1257
      %v1341 = vpop.f32.mrf.mxu0
      %v1342 = vadd.f32 0.0, %v1341
      %v1343 = vpop.f32.mrf.mxu0
      %v1344 = vadd.f32 0.0, %v1343
      %1345 = vmatmul.bf16.gmra.mxu0 %v1260
      %v1346 = vpop.f32.mrf.mxu0
      %v1347 = vadd.f32 0.0, %v1346
      %v1348 = vpop.f32.mrf.mxu0
      %v1349 = vadd.f32 0.0, %v1348
      %1350 = vmatmul.bf16.gmra.mxu0 %v1263
      %v1351 = vpop.f32.mrf.mxu0
      %v1352 = vadd.f32 0.0, %v1351
      %v1353 = vpop.f32.mrf.mxu0
      %v1354 = vadd.f32 0.0, %v1353
      %1355 = vmatmul.bf16.gmra.mxu0 %v1266
      %v1356 = vpop.f32.mrf.mxu0
      %v1357 = vadd.f32 0.0, %v1356
      %v1358 = vpop.f32.mrf.mxu0
      %v1359 = vadd.f32 0.0, %v1358
      %1360 = vdwg.mxu0
      %v1361 = vsel %vm1170, %v1282, 0.0
      %v1362 = vsel %vm1170, %v1284, 0.0
      %v1363 = vadd.f32 %v1361, %v1362
      %v1364 = vsel %vm1170, %v1287, 0.0
      %v1365 = vadd.f32 %v1363, %v1364
      %v1366 = vsel %vm1170, %v1289, 0.0
      %v1367 = vadd.f32 %v1365, %v1366
      %v1368 = vsel %vm1170, %v1292, 0.0
      %v1369 = vadd.f32 %v1367, %v1368
      %v1370 = vsel %vm1170, %v1294, 0.0
      %v1371 = vadd.f32 %v1369, %v1370
      %v1372 = vsel %vm1170, %v1297, 0.0
      %v1373 = vadd.f32 %v1371, %v1372
      %v1374 = vsel %vm1170, %v1299, 0.0
      %v1375 = vadd.f32 %v1373, %v1374
      %v1376 = vsel %vm1170, %v1302, 0.0
      %v1377 = vadd.f32 %v1375, %v1376
      %v1378 = vsel %vm1170, %v1304, 0.0
      %v1379 = vadd.f32 %v1377, %v1378
      %v1380 = vsel %vm1170, %v1307, 0.0
      %v1381 = vadd.f32 %v1379, %v1380
      %v1382 = vsel %vm1170, %v1309, 0.0
      %v1383 = vadd.f32 %v1381, %v1382
      %v1384 = vsel %vm1170, %v1312, 0.0
      %v1385 = vadd.f32 %v1383, %v1384
      %v1386 = vsel %vm1170, %v1314, 0.0
      %v1387 = vadd.f32 %v1385, %v1386
      %v1388 = vsel %vm1170, %v1317, 0.0
      %v1389 = vadd.f32 %v1387, %v1388
      %v1390 = vsel %vm1170, %v1319, 0.0
      %v1391 = vadd.f32 %v1389, %v1390
      %v1392 = vsel %vm1170, %v1322, 0.0
      %v1393 = vadd.f32 %v1391, %v1392
      %v1394 = vsel %vm1170, %v1324, 0.0
      %v1395 = vadd.f32 %v1393, %v1394
      %v1396 = vsel %vm1170, %v1327, 0.0
      %v1397 = vadd.f32 %v1395, %v1396
      %v1398 = vsel %vm1170, %v1329, 0.0
      %v1399 = vadd.f32 %v1397, %v1398
      %v1400 = vsel %vm1170, %v1332, 0.0
      %v1401 = vadd.f32 %v1399, %v1400
      %v1402 = vsel %vm1170, %v1334, 0.0
      %v1403 = vadd.f32 %v1401, %v1402
      %v1404 = vsel %vm1170, %v1337, 0.0
      %v1405 = vadd.f32 %v1403, %v1404
      %v1406 = vsel %vm1170, %v1339, 0.0
      %v1407 = vadd.f32 %v1405, %v1406
      %v1408 = vsel %vm1170, %v1342, 0.0
      %v1409 = vadd.f32 %v1407, %v1408
      %v1410 = vsel %vm1170, %v1344, 0.0
      %v1411 = vadd.f32 %v1409, %v1410
      %v1412 = vsel %vm1170, %v1347, 0.0
      %v1413 = vadd.f32 %v1411, %v1412
      %v1414 = vsel %vm1170, %v1349, 0.0
      %v1415 = vadd.f32 %v1413, %v1414
      %v1416 = vsel %vm1170, %v1352, 0.0
      %v1417 = vadd.f32 %v1415, %v1416
      %v1418 = vsel %vm1170, %v1354, 0.0
      %v1419 = vadd.f32 %v1417, %v1418
      %v1420 = vsel %vm1170, %v1357, 0.0
      %v1421 = vadd.f32 %v1419, %v1420
      %v1422 = vsel %vm1170, %v1359, 0.0
      %v1423 = vadd.f32 %v1421, %v1422
      %v1424 = vrot.slane %v1423, 4
      %v1425 = vadd.f32 %v1423, %v1424
      %v1426 = vrot.slane %v1425, 2
      %v1427 = vadd.f32 %v1425, %v1426
      %v1428 = vrot.slane %v1427, 1
      %v1429 = vadd.f32 %v1427, %v1428
      %v1430 = vmul.f32 %v1429, 0.00390625
      %v1431 = vsub.f32 %v1282, %v1430
      %v1432 = vsub.f32 %v1284, %v1430
      %v1433 = vsub.f32 %v1287, %v1430
      %v1434 = vsub.f32 %v1289, %v1430
      %v1435 = vsub.f32 %v1292, %v1430
      %v1436 = vsub.f32 %v1294, %v1430
      %v1437 = vsub.f32 %v1297, %v1430
      %v1438 = vsub.f32 %v1299, %v1430
      %v1439 = vsub.f32 %v1302, %v1430
      %v1440 = vsub.f32 %v1304, %v1430
      %v1441 = vsub.f32 %v1307, %v1430
      %v1442 = vsub.f32 %v1309, %v1430
      %v1443 = vsub.f32 %v1312, %v1430
      %v1444 = vsub.f32 %v1314, %v1430
      %v1445 = vsub.f32 %v1317, %v1430
      %v1446 = vsub.f32 %v1319, %v1430
      %v1447 = vsub.f32 %v1322, %v1430
      %v1448 = vsub.f32 %v1324, %v1430
      %v1449 = vsub.f32 %v1327, %v1430
      %v1450 = vsub.f32 %v1329, %v1430
      %v1451 = vsub.f32 %v1332, %v1430
      %v1452 = vsub.f32 %v1334, %v1430
      %v1453 = vsub.f32 %v1337, %v1430
      %v1454 = vsub.f32 %v1339, %v1430
      %v1455 = vsub.f32 %v1342, %v1430
      %v1456 = vsub.f32 %v1344, %v1430
      %v1457 = vsub.f32 %v1347, %v1430
      %v1458 = vsub.f32 %v1349, %v1430
      %v1459 = vsub.f32 %v1352, %v1430
      %v1460 = vsub.f32 %v1354, %v1430
      %v1461 = vsub.f32 %v1357, %v1430
      %v1462 = vsub.f32 %v1359, %v1430
      %v1463 = vmul.f32 %v1431, %v1431
      %v1464 = vmul.f32 %v1432, %v1432
      %v1465 = vmul.f32 %v1433, %v1433
      %v1466 = vmul.f32 %v1434, %v1434
      %v1467 = vmul.f32 %v1435, %v1435
      %v1468 = vmul.f32 %v1436, %v1436
      %v1469 = vmul.f32 %v1437, %v1437
      %v1470 = vmul.f32 %v1438, %v1438
      %v1471 = vmul.f32 %v1439, %v1439
      %v1472 = vmul.f32 %v1440, %v1440
      %v1473 = vmul.f32 %v1441, %v1441
      %v1474 = vmul.f32 %v1442, %v1442
      %v1475 = vmul.f32 %v1443, %v1443
      %v1476 = vmul.f32 %v1444, %v1444
      %v1477 = vmul.f32 %v1445, %v1445
      %v1478 = vmul.f32 %v1446, %v1446
      %v1479 = vmul.f32 %v1447, %v1447
      %v1480 = vmul.f32 %v1448, %v1448
      %v1481 = vmul.f32 %v1449, %v1449
      %v1482 = vmul.f32 %v1450, %v1450
      %v1483 = vmul.f32 %v1451, %v1451
      %v1484 = vmul.f32 %v1452, %v1452
      %v1485 = vmul.f32 %v1453, %v1453
      %v1486 = vmul.f32 %v1454, %v1454
      %v1487 = vmul.f32 %v1455, %v1455
      %v1488 = vmul.f32 %v1456, %v1456
      %v1489 = vmul.f32 %v1457, %v1457
      %v1490 = vmul.f32 %v1458, %v1458
      %v1491 = vmul.f32 %v1459, %v1459
      %v1492 = vmul.f32 %v1460, %v1460
      %v1493 = vmul.f32 %v1461, %v1461
      %v1494 = vmul.f32 %v1462, %v1462
      %v1495 = vsel %vm1170, %v1463, 0.0
      %v1496 = vsel %vm1170, %v1464, 0.0
      %v1497 = vadd.f32 %v1495, %v1496
      %v1498 = vsel %vm1170, %v1465, 0.0
      %v1499 = vadd.f32 %v1497, %v1498
      %v1500 = vsel %vm1170, %v1466, 0.0
      %v1501 = vadd.f32 %v1499, %v1500
      %v1502 = vsel %vm1170, %v1467, 0.0
      %v1503 = vadd.f32 %v1501, %v1502
      %v1504 = vsel %vm1170, %v1468, 0.0
      %v1505 = vadd.f32 %v1503, %v1504
      %v1506 = vsel %vm1170, %v1469, 0.0
      %v1507 = vadd.f32 %v1505, %v1506
      %v1508 = vsel %vm1170, %v1470, 0.0
      %v1509 = vadd.f32 %v1507, %v1508
      %v1510 = vsel %vm1170, %v1471, 0.0
      %v1511 = vadd.f32 %v1509, %v1510
      %v1512 = vsel %vm1170, %v1472, 0.0
      %v1513 = vadd.f32 %v1511, %v1512
      %v1514 = vsel %vm1170, %v1473, 0.0
      %v1515 = vadd.f32 %v1513, %v1514
      %v1516 = vsel %vm1170, %v1474, 0.0
      %v1517 = vadd.f32 %v1515, %v1516
      %v1518 = vsel %vm1170, %v1475, 0.0
      %v1519 = vadd.f32 %v1517, %v1518
      %v1520 = vsel %vm1170, %v1476, 0.0
      %v1521 = vadd.f32 %v1519, %v1520
      %v1522 = vsel %vm1170, %v1477, 0.0
      %v1523 = vadd.f32 %v1521, %v1522
      %v1524 = vsel %vm1170, %v1478, 0.0
      %v1525 = vadd.f32 %v1523, %v1524
      %v1526 = vsel %vm1170, %v1479, 0.0
      %v1527 = vadd.f32 %v1525, %v1526
      %v1528 = vsel %vm1170, %v1480, 0.0
      %v1529 = vadd.f32 %v1527, %v1528
      %v1530 = vsel %vm1170, %v1481, 0.0
      %v1531 = vadd.f32 %v1529, %v1530
      %v1532 = vsel %vm1170, %v1482, 0.0
      %v1533 = vadd.f32 %v1531, %v1532
      %v1534 = vsel %vm1170, %v1483, 0.0
      %v1535 = vadd.f32 %v1533, %v1534
      %v1536 = vsel %vm1170, %v1484, 0.0
      %v1537 = vadd.f32 %v1535, %v1536
      %v1538 = vsel %vm1170, %v1485, 0.0
      %v1539 = vadd.f32 %v1537, %v1538
      %v1540 = vsel %vm1170, %v1486, 0.0
      %v1541 = vadd.f32 %v1539, %v1540
      %v1542 = vsel %vm1170, %v1487, 0.0
      %v1543 = vadd.f32 %v1541, %v1542
      %v1544 = vsel %vm1170, %v1488, 0.0
      %v1545 = vadd.f32 %v1543, %v1544
      %v1546 = vsel %vm1170, %v1489, 0.0
      %v1547 = vadd.f32 %v1545, %v1546
      %v1548 = vsel %vm1170, %v1490, 0.0
      %v1549 = vadd.f32 %v1547, %v1548
      %v1550 = vsel %vm1170, %v1491, 0.0
      %v1551 = vadd.f32 %v1549, %v1550
      %v1552 = vsel %vm1170, %v1492, 0.0
      %v1553 = vadd.f32 %v1551, %v1552
      %v1554 = vsel %vm1170, %v1493, 0.0
      %v1555 = vadd.f32 %v1553, %v1554
      %v1556 = vsel %vm1170, %v1494, 0.0
      %v1557 = vadd.f32 %v1555, %v1556
      %v1558 = vrot.slane %v1557, 4
      %v1559 = vadd.f32 %v1557, %v1558
      %v1560 = vrot.slane %v1559, 2
      %v1561 = vadd.f32 %v1559, %v1560
      %v1562 = vrot.slane %v1561, 1
      %v1563 = vadd.f32 %v1561, %v1562
      %vm1564 = vcmask 1040384
      %v1565 = vsel %vm1564, %v1429, %v1563
      %vm1566 = vcmask 58368
      %1567 = vst.msk [vmem:[%s268] sm:$0x3] %vm1566, %v1565
      %s1568 = smul.u32 16, %s17
      %p1569 = scmp.lt.s32.totalorder %s1568, 31
      %s1570 = scalar_select %p1569, %s1568, 31
      %s1571 = smul.addr %s1570, 2
      %s1572 = smul.addr %s1571, 8
      %s1573 = scalar_lea.vmem %s4, %s1572
      %p1574 = scmp.lt.s32.totalorder %s17, 1
      %s1575 = scalar_select %p1574, %s17, 1
      %s1576 = smul.addr %s1575, 2
      %s1577 = scalar_lea.vmem %s5, %s1576
      // Predicated region
      $region37: #{resblock_forward.7} parent=35 // pred_check
        %p1578 = pneg %p129
      $region38: #{resblock_forward.7} parent=35 // pred_check_branch
        %1580 = sbr.rel (%p1578) target = $region40
      $region39: #{resblock_forward.7} parent=35 // pred_region
        %s1581 = smul.u32 16, %s17
      $region40: #{resblock_forward.7} parent=35 // pred_fallthru
        _
      // Predicated region
      $region41: #{resblock_forward.7} parent=35 // pred_check
        %p1582 = pneg %p155
      $region42: #{resblock_forward.7} parent=35 // pred_check_branch
        %1584 = sbr.rel (%p1582) target = $region44
      $region43: #{resblock_forward.7} parent=35 // pred_region
        _
      $region44: #{resblock_forward.7} parent=35 // pred_fallthru
        _
    $region36: #{resblock_forward.7} parent=5 // pred_fallthru
      _
    %p1585 = scmp.le.s32.totalorder 2, %s12
    // Predicated region
    $region45: #{resblock_forward.7} parent=5 // pred_check
      %p1586 = pneg %p1585
    $region46: #{resblock_forward.7} parent=5 // pred_check_branch
      %1588 = sbr.rel (%p1586) target = $region48
    $region47: #{resblock_forward.7} parent=5 // pred_region
      %s1589 = ssub.s32 %s12, 2
      // Predicated region
      $region49: #{resblock_forward.7} parent=47 // pred_check
        %p1590 = pneg %p135
      $region50: #{resblock_forward.7} parent=47 // pred_check_branch
        %1592 = sbr.rel (%p1590) target = $region52
      $region51: #{resblock_forward.7} parent=47 // pred_region
        %s1593 = smul.u32 16, %s18
        %p1594 = scmp.lt.s32.totalorder %s1593, 31
        %s1595 = scalar_select %p1594, %s1593, 31
        %s1596 = smul.addr %s1595, 2
        %s1597 = smul.addr %s1596, 8
        %s1598 = scalar_lea.vmem %s4, %s1597
      $region52: #{resblock_forward.7} parent=47 // pred_fallthru
        _
      // Predicated region
      $region53: #{resblock_forward.7} parent=47 // pred_check
        %p1599 = pneg %p161
      $region54: #{resblock_forward.7} parent=47 // pred_check_branch
        %1601 = sbr.rel (%p1599) target = $region56
      $region55: #{resblock_forward.7} parent=47 // pred_region
        %p1602 = scmp.lt.s32.totalorder %s18, 1
        %s1603 = scalar_select %p1602, %s18, 1
        %s1604 = smul.addr %s1603, 2
        %s1605 = scalar_lea.vmem %s5, %s1604
      $region56: #{resblock_forward.7} parent=47 // pred_fallthru
        _
    $region48: #{resblock_forward.7} parent=5 // pred_fallthru
      _
  $region6: #{resblock_forward.7} parent=0 // loop_footer
    %s16 = sadd.s32 1, %s12
  $region7: #{resblock_forward.7} parent=0 // loop_footer_branch
    %11 = sbr.rel target = $region3
  $region8: #{resblock_forward.7} parent=0 // loop_exit
    _

// kernel: resblock_forward.9
$region0: #{resblock_forward.9}
  #allocation0 [shape = 'u32[]', space=smem, size = 0x4, offset = 0x4, fixed_abs, tag = 'smem constant byte address 0x4 - core index']
  #allocation1 [shape = 'u32[72,128]{1,0:T(1,128)}', space=vmem, size = 0x9000, scoped, tag = 'internal scratch']
  %s0 = inlined_call_operand.vmem [shape: bf16[32,16,8], index: 0, kind: input, shape index: {}]
  %s1 = inlined_call_operand.vmem [shape: f32[32,16,8], index: 1, kind: input, shape index: {}]
  %s2 = inlined_call_operand.vmem [shape: f32[2,8], index: 2, kind: input, shape index: {}]
  %s3 = inlined_call_operand.vmem [shape: f32[32,16,8], index: 3, kind: output, shape index: {}]
  %s4 = sld [smem:[#allocation0]]
  $region45: #{resblock_forward.9} parent=0
    _
  %s6 = ssub.s32 1, %s4
  %s7 = scalar_select 0, %s6, %s4
  loop: start=0, step=1, limit=4
  $region2: #{resblock_forward.9} parent=0 // loop_pre_header
    _
  $region3: #{resblock_forward.9} parent=0 // loop_header
    %s9 = sphi 0, %s13
    %p10 = scmp.ge.s32.totalorder %s9, 4
    %s19 = sphi 0, %s21
    %s22 = sphi 0, %s19
    %s23 = sphi 0, %s22
    %s39 = sphi 0, %s23
    %s45 = sphi 0, %s47
    %s48 = sphi 0, %s45
    %s49 = sphi 0, %s48
    %s65 = sphi 0, %s49
    %s69 = sphi 0, %s69
    %s71 = sphi 0, %s69
    %s72 = sphi 0, %s71
    %s86 = sphi 0, %s72
    %s92 = sphi 0, %s94
    %s95 = sphi 0, %s92
    %s96 = sphi 0, %s95
    %s112 = sphi 0, %s96
  $region4: #{resblock_forward.9} parent=0 // loop_header_branch
    %12 = sbr.rel (%p10) target = $region8
  $region5: #{resblock_forward.9} parent=0 // loop_body
    %s14 = ssub.s32 %s9, 1
    %s15 = ssub.s32 %s9, 2
    %s16 = sadd.s32 %s9, 1
    %s17 = ssub.s32 %s9, %s16
    %p18 = scmp.eq.s32.totalorder %s17, 0
    %s20 = sadd.s32 %s19, 1
    %s21 = scalar_select %p18, %s19, %s20
    %p24 = pneg %p18
    %p25 = scmp.eq.s32.totalorder %s9, 1
    %p26 = por %p24, %p25
    %p27 = scmp.ne.s32.totalorder %s19, %s22
    %p28 = scmp.eq.s32.totalorder %s9, 0
    %p29 = por %p27, %p28
    %p30 = scmp.ne.s32.totalorder %s19, %s22
    %p31 = scmp.eq.s32.totalorder %s14, 1
    %p32 = por %p30, %p31
    %p33 = scmp.ne.s32.totalorder %s22, %s23
    %p34 = scmp.eq.s32.totalorder %s14, 0
    %p35 = por %p33, %p34
    %p36 = scmp.ne.s32.totalorder %s22, %s23
    %p37 = scmp.eq.s32.totalorder %s15, 1
    %p38 = por %p36, %p37
    %p40 = scmp.ne.s32.totalorder %s23, %s39
    %p41 = scmp.eq.s32.totalorder %s15, 0
    %p42 = por %p40, %p41
    %s43 = ssub.s32 %s9, %s16
    %p44 = scmp.eq.s32.totalorder %s43, 0
    %s46 = sadd.s32 %s45, 1
    %s47 = scalar_select %p44, %s45, %s46
    %p50 = pneg %p44
    %p51 = scmp.eq.s32.totalorder %s9, 1
    %p52 = por %p50, %p51
    %p53 = scmp.ne.s32.totalorder %s45, %s48
    %p54 = scmp.eq.s32.totalorder %s9, 0
    %p55 = por %p53, %p54
    %p56 = scmp.ne.s32.totalorder %s45, %s48
    %p57 = scmp.eq.s32.totalorder %s14, 1
    %p58 = por %p56, %p57
    %p59 = scmp.ne.s32.totalorder %s48, %s49
    %p60 = scmp.eq.s32.totalorder %s14, 0
    %p61 = por %p59, %p60
    %p62 = scmp.ne.s32.totalorder %s48, %s49
    %p63 = scmp.eq.s32.totalorder %s15, 1
    %p64 = por %p62, %p63
    %p66 = scmp.ne.s32.totalorder %s49, %s65
    %p67 = scmp.eq.s32.totalorder %s15, 0
    %p68 = por %p66, %p67
    %s70 = sadd.s32 %s69, 1
    %p73 = scmp.eq.s32.totalorder %s9, 1
    %p74 = scmp.ne.s32.totalorder %s69, %s71
    %p75 = scmp.eq.s32.totalorder %s9, 0
    %p76 = por %p74, %p75
    %p77 = scmp.ne.s32.totalorder %s69, %s71
    %p78 = scmp.eq.s32.totalorder %s14, 1
    %p79 = por %p77, %p78
    %p80 = scmp.ne.s32.totalorder %s71, %s72
    %p81 = scmp.eq.s32.totalorder %s14, 0
    %p82 = por %p80, %p81
    %p83 = scmp.ne.s32.totalorder %s71, %s72
    %p84 = scmp.eq.s32.totalorder %s15, 1
    %p85 = por %p83, %p84
    %p87 = scmp.ne.s32.totalorder %s72, %s86
    %p88 = scmp.eq.s32.totalorder %s15, 0
    %p89 = por %p87, %p88
    %s90 = ssub.s32 %s9, %s16
    %p91 = scmp.eq.s32.totalorder %s90, 0
    %s93 = sadd.s32 %s92, 1
    %s94 = scalar_select %p91, %s92, %s93
    %p97 = pneg %p91
    %p98 = scmp.eq.s32.totalorder %s9, 1
    %p99 = por %p97, %p98
    %p100 = scmp.ne.s32.totalorder %s92, %s95
    %p101 = scmp.eq.s32.totalorder %s9, 0
    %p102 = por %p100, %p101
    %p103 = scmp.ne.s32.totalorder %s92, %s95
    %p104 = scmp.eq.s32.totalorder %s14, 1
    %p105 = por %p103, %p104
    %p106 = scmp.ne.s32.totalorder %s95, %s96
    %p107 = scmp.eq.s32.totalorder %s14, 0
    %p108 = por %p106, %p107
    %p109 = scmp.ne.s32.totalorder %s95, %s96
    %p110 = scmp.eq.s32.totalorder %s15, 1
    %p111 = por %p109, %p110
    %p113 = scmp.ne.s32.totalorder %s96, %s112
    %p114 = scmp.eq.s32.totalorder %s15, 0
    %p115 = por %p113, %p114
    %p116 = scmp.le.s32.totalorder 1, %s9
    %p117 = scmp.lt.s32.totalorder %s9, 3
    %p118 = pnand %p116, %p117
    %p119 = pneg %p118
    // Predicated region
    $region9: #{resblock_forward.9} parent=5 // pred_check
      _
    $region10: #{resblock_forward.9} parent=5 // pred_check_branch
      %121 = sbr.rel (%p118) target = $region12
    $region11: #{resblock_forward.9} parent=5 // pred_region
      %s122 = ssub.s32 %s9, 1
      // Predicated region
      $region13: #{resblock_forward.9} parent=11 // pred_check
        %p123 = pneg %p82
      $region14: #{resblock_forward.9} parent=11 // pred_check_branch
        %125 = sbr.rel (%p123) target = $region16
      $region15: #{resblock_forward.9} parent=11 // pred_region
        _
      $region16: #{resblock_forward.9} parent=11 // pred_fallthru
        _
    $region12: #{resblock_forward.9} parent=5 // pred_fallthru
      _
    %p126 = scmp.lt.s32.totalorder %s9, 2
    // Predicated region
    $region17: #{resblock_forward.9} parent=5 // pred_check
      %p127 = pneg %p126
    $region18: #{resblock_forward.9} parent=5 // pred_check_branch
      %129 = sbr.rel (%p127) target = $region20
    $region19: #{resblock_forward.9} parent=5 // pred_region
      // Predicated region
      $region21: #{resblock_forward.9} parent=19 // pred_check
        %p130 = pneg %p29
      $region22: #{resblock_forward.9} parent=19 // pred_check_branch
        %132 = sbr.rel (%p130) target = $region24
      $region23: #{resblock_forward.9} parent=19 // pred_region
        %s133 = smul.u32 16, %s9
        %p134 = scmp.lt.s32.totalorder %s133, 31
        %s135 = scalar_select %p134, %s133, 31
        %s136 = smul.addr %s135, 2
        %s137 = smul.addr %s136, 4
        %s138 = scalar_lea.vmem %s0, %s137
        %s139 = smul.u32 16, %s9
      $region24: #{resblock_forward.9} parent=19 // pred_fallthru
        _
      // Predicated region
      $region25: #{resblock_forward.9} parent=19 // pred_check
        %p140 = pneg %p55
      $region26: #{resblock_forward.9} parent=19 // pred_check_branch
        %142 = sbr.rel (%p140) target = $region28
      $region27: #{resblock_forward.9} parent=19 // pred_region
        %s143 = smul.u32 16, %s9
        %p144 = scmp.lt.s32.totalorder %s143, 31
        %s145 = scalar_select %p144, %s143, 31
        %s146 = smul.addr %s145, 2
        %s147 = smul.addr %s146, 8
        %s148 = scalar_lea.vmem %s1, %s147
        %s149 = smul.u32 16, %s9
      $region28: #{resblock_forward.9} parent=19 // pred_fallthru
        _
    $region20: #{resblock_forward.9} parent=5 // pred_fallthru
      _
    %p150 = scmp.le.s32.totalorder 1, %s9
    %p151 = scmp.lt.s32.totalorder %s9, 3
    %p152 = pnand %p150, %p151
    %p153 = pneg %p152
    // Predicated region
    $region29: #{resblock_forward.9} parent=5 // pred_check
      _
    $region30: #{resblock_forward.9} parent=5 // pred_check_branch
      %155 = sbr.rel (%p152) target = $region32
    $region31: #{resblock_forward.9} parent=5 // pred_region
      %s156 = ssub.s32 %s9, 1
      %s157 = smul.u32 16, %s14
      %p158 = scmp.lt.s32.totalorder %s157, 31
      %s159 = scalar_select %p158, %s157, 31
      %s160 = smul.addr %s159, 2
      %s161 = smul.addr %s160, 4
      %s162 = scalar_lea.vmem %s0, %s161
      %p163 = pneg %p35
      %p164 = pneg %p32
      %s165 = smul.u32 16, %s14
      %p166 = scmp.lt.s32.totalorder %s165, 31
      %s167 = scalar_select %p166, %s165, 31
      %s168 = smul.addr %s167, 2
      %s169 = smul.addr %s168, 8
      %s170 = scalar_lea.vmem %s1, %s169
      %p171 = pneg %p61
      %p172 = pneg %p58
      %p173 = pneg %p82
      %p174 = pneg %p79
      %p175 = pneg %p108
      %p176 = pneg %p105
      %s177 = smul.u32 16, %s14
      %p178 = scmp.lt.s32.totalorder %s177, 31
      %s179 = scalar_select %p178, %s177, 31
      %s180 = smul.addr %s179, 2
      %s181 = smul.addr %s180, 8
      %s182 = scalar_lea.vmem %s3, %s181
      %s183 = smul.u32 16, %s14
      %p184 = scmp.lt.s32.totalorder %s183, 31
      %s185 = scalar_select %p184, %s183, 31
      %s186 = smul.addr %s185, 2
      %s187 = smul.addr %s186, 4
      %s188 = scalar_lea.vmem %s0, %s187
      %s189 = smul.u32 16, %s14
      %s190 = smul.u32 16, %s14
      %p191 = scmp.lt.s32.totalorder %s190, 31
      %s192 = scalar_select %p191, %s190, 31
      %s193 = smul.addr %s192, 2
      %s194 = smul.addr %s193, 8
      %s195 = scalar_lea.vmem %s1, %s194
      %s196 = smul.u32 16, %s14
      %s197 = smul.u32 16, %s14
      %p198 = scmp.lt.s32.totalorder %s197, 31
      %s199 = scalar_select %p198, %s197, 31
      %s200 = smul.addr %s199, 2
      %s201 = smul.addr %s200, 8
      %s202 = scalar_lea.vmem %s3, %s201
      %s203 = smul.u32 16, %s14
      %v204 = vld [vmem:[%s188] sm:$0xf]
      %v205 = vld [vmem:[%s188 + $0x4] sm:$0xf]
      %v206 = vld [vmem:[%s188 + $0x8] sm:$0xf]
      %v207 = vld [vmem:[%s188 + $0xc] sm:$0xf]
      %v208 = vld [vmem:[%s188 + $0x10] sm:$0xf]
      %v209 = vld [vmem:[%s188 + $0x14] sm:$0xf]
      %v210 = vld [vmem:[%s188 + $0x18] sm:$0xf]
      %v211 = vld [vmem:[%s188 + $0x1c] sm:$0xf]
      %v212 = vld [vmem:[%s188 + $0x20] sm:$0xf]
      %v213 = vld [vmem:[%s188 + $0x24] sm:$0xf]
      %v214 = vld [vmem:[%s188 + $0x28] sm:$0xf]
      %v215 = vld [vmem:[%s188 + $0x2c] sm:$0xf]
      %v216 = vld [vmem:[%s188 + $0x30] sm:$0xf]
      %v217 = vld [vmem:[%s188 + $0x34] sm:$0xf]
      %v218 = vld [vmem:[%s188 + $0x38] sm:$0xf]
      %v219 = vld [vmem:[%s188 + $0x3c] sm:$0xf]
      %v220 = vld [vmem:[%s188 + $0x40] sm:$0xf]
      %v221 = vld [vmem:[%s188 + $0x44] sm:$0xf]
      %v222 = vld [vmem:[%s188 + $0x48] sm:$0xf]
      %v223 = vld [vmem:[%s188 + $0x4c] sm:$0xf]
      %v224 = vld [vmem:[%s188 + $0x50] sm:$0xf]
      %v225 = vld [vmem:[%s188 + $0x54] sm:$0xf]
      %v226 = vld [vmem:[%s188 + $0x58] sm:$0xf]
      %v227 = vld [vmem:[%s188 + $0x5c] sm:$0xf]
      %v228 = vld [vmem:[%s188 + $0x60] sm:$0xf]
      %v229 = vld [vmem:[%s188 + $0x64] sm:$0xf]
      %v230 = vld [vmem:[%s188 + $0x68] sm:$0xf]
      %v231 = vld [vmem:[%s188 + $0x6c] sm:$0xf]
      %v232 = vld [vmem:[%s188 + $0x70] sm:$0xf]
      %v233 = vld [vmem:[%s188 + $0x74] sm:$0xf]
      %v234 = vld [vmem:[%s188 + $0x78] sm:$0xf]
      %v235 = vld [vmem:[%s188 + $0x7c] sm:$0xf]
      %v236 = vunpack.c.l.bf16 %v204
      %v237 = vunpack.c.l.bf16 %v205
      %v238 = vunpack.c.l.bf16 %v206
      %v239 = vunpack.c.l.bf16 %v207
      %v240 = vunpack.c.l.bf16 %v208
      %v241 = vunpack.c.l.bf16 %v209
      %v242 = vunpack.c.l.bf16 %v210
      %v243 = vunpack.c.l.bf16 %v211
      %v244 = vunpack.c.l.bf16 %v212
      %v245 = vunpack.c.l.bf16 %v213
      %v246 = vunpack.c.l.bf16 %v214
      %v247 = vunpack.c.l.bf16 %v215
      %v248 = vunpack.c.l.bf16 %v216
      %v249 = vunpack.c.l.bf16 %v217
      %v250 = vunpack.c.l.bf16 %v218
      %v251 = vunpack.c.l.bf16 %v219
      %v252 = vunpack.c.l.bf16 %v220
      %v253 = vunpack.c.l.bf16 %v221
      %v254 = vunpack.c.l.bf16 %v222
      %v255 = vunpack.c.l.bf16 %v223
      %v256 = vunpack.c.l.bf16 %v224
      %v257 = vunpack.c.l.bf16 %v225
      %v258 = vunpack.c.l.bf16 %v226
      %v259 = vunpack.c.l.bf16 %v227
      %v260 = vunpack.c.l.bf16 %v228
      %v261 = vunpack.c.l.bf16 %v229
      %v262 = vunpack.c.l.bf16 %v230
      %v263 = vunpack.c.l.bf16 %v231
      %v264 = vunpack.c.l.bf16 %v232
      %v265 = vunpack.c.l.bf16 %v233
      %v266 = vunpack.c.l.bf16 %v234
      %v267 = vunpack.c.l.bf16 %v235
      %v268 = vld [vmem:[%s2] sm:$0x1]
      %v269 = vperm.slane %v268, 0
      %v270 = vmul.f32 %v236, %v269
      %v271 = vmul.f32 %v237, %v269
      %v272 = vmul.f32 %v238, %v269
      %v273 = vmul.f32 %v239, %v269
      %v274 = vmul.f32 %v240, %v269
      %v275 = vmul.f32 %v241, %v269
      %v276 = vmul.f32 %v242, %v269
      %v277 = vmul.f32 %v243, %v269
      %v278 = vmul.f32 %v244, %v269
      %v279 = vmul.f32 %v245, %v269
      %v280 = vmul.f32 %v246, %v269
      %v281 = vmul.f32 %v247, %v269
      %v282 = vmul.f32 %v248, %v269
      %v283 = vmul.f32 %v249, %v269
      %v284 = vmul.f32 %v250, %v269
      %v285 = vmul.f32 %v251, %v269
      %v286 = vmul.f32 %v252, %v269
      %v287 = vmul.f32 %v253, %v269
      %v288 = vmul.f32 %v254, %v269
      %v289 = vmul.f32 %v255, %v269
      %v290 = vmul.f32 %v256, %v269
      %v291 = vmul.f32 %v257, %v269
      %v292 = vmul.f32 %v258, %v269
      %v293 = vmul.f32 %v259, %v269
      %v294 = vmul.f32 %v260, %v269
      %v295 = vmul.f32 %v261, %v269
      %v296 = vmul.f32 %v262, %v269
      %v297 = vmul.f32 %v263, %v269
      %v298 = vmul.f32 %v264, %v269
      %v299 = vmul.f32 %v265, %v269
      %v300 = vmul.f32 %v266, %v269
      %v301 = vmul.f32 %v267, %v269
      %v302 = vld [vmem:[%s2 + $0x1] sm:$0x1]
      %v303 = vperm.slane %v302, 0
      %v304 = vadd.f32 %v270, %v303
      %v305 = vadd.f32 %v271, %v303
      %v306 = vadd.f32 %v272, %v303
      %v307 = vadd.f32 %v273, %v303
      %v308 = vadd.f32 %v274, %v303
      %v309 = vadd.f32 %v275, %v303
      %v310 = vadd.f32 %v276, %v303
      %v311 = vadd.f32 %v277, %v303
      %v312 = vadd.f32 %v278, %v303
      %v313 = vadd.f32 %v279, %v303
      %v314 = vadd.f32 %v280, %v303
      %v315 = vadd.f32 %v281, %v303
      %v316 = vadd.f32 %v282, %v303
      %v317 = vadd.f32 %v283, %v303
      %v318 = vadd.f32 %v284, %v303
      %v319 = vadd.f32 %v285, %v303
      %v320 = vadd.f32 %v286, %v303
      %v321 = vadd.f32 %v287, %v303
      %v322 = vadd.f32 %v288, %v303
      %v323 = vadd.f32 %v289, %v303
      %v324 = vadd.f32 %v290, %v303
      %v325 = vadd.f32 %v291, %v303
      %v326 = vadd.f32 %v292, %v303
      %v327 = vadd.f32 %v293, %v303
      %v328 = vadd.f32 %v294, %v303
      %v329 = vadd.f32 %v295, %v303
      %v330 = vadd.f32 %v296, %v303
      %v331 = vadd.f32 %v297, %v303
      %v332 = vadd.f32 %v298, %v303
      %v333 = vadd.f32 %v299, %v303
      %v334 = vadd.f32 %v300, %v303
      %v335 = vadd.f32 %v301, %v303
      %v336 = vmin.f32 %v304, 20.0
      %v337 = vmin.f32 %v305, 20.0
      %v338 = vmin.f32 %v306, 20.0
      %v339 = vmin.f32 %v307, 20.0
      %v340 = vmin.f32 %v308, 20.0
      %v341 = vmin.f32 %v309, 20.0
      %v342 = vmin.f32 %v310, 20.0
      %v343 = vmin.f32 %v311, 20.0
      %v344 = vmin.f32 %v312, 20.0
      %v345 = vmin.f32 %v313, 20.0
      %v346 = vmin.f32 %v314, 20.0
      %v347 = vmin.f32 %v315, 20.0
      %v348 = vmin.f32 %v316, 20.0
      %v349 = vmin.f32 %v317, 20.0
      %v350 = vmin.f32 %v318, 20.0
      %v351 = vmin.f32 %v319, 20.0
      %v352 = vmin.f32 %v320, 20.0
      %v353 = vmin.f32 %v321, 20.0
      %v354 = vmin.f32 %v322, 20.0
      %v355 = vmin.f32 %v323, 20.0
      %v356 = vmin.f32 %v324, 20.0
      %v357 = vmin.f32 %v325, 20.0
      %v358 = vmin.f32 %v326, 20.0
      %v359 = vmin.f32 %v327, 20.0
      %v360 = vmin.f32 %v328, 20.0
      %v361 = vmin.f32 %v329, 20.0
      %v362 = vmin.f32 %v330, 20.0
      %v363 = vmin.f32 %v331, 20.0
      %v364 = vmin.f32 %v332, 20.0
      %v365 = vmin.f32 %v333, 20.0
      %v366 = vmin.f32 %v334, 20.0
      %v367 = vmin.f32 %v335, 20.0
      %v368 = vmul.f32 %v336, 1.442695
      %v369 = vpow.pop %v368
      %v370 = vmul.f32 %v337, 1.442695
      %v371 = vpow.pop %v370
      %v372 = vmul.f32 %v338, 1.442695
      %v373 = vpow.pop %v372
      %v374 = vmul.f32 %v339, 1.442695
      %v375 = vpow.pop %v374
      %v376 = vmul.f32 %v340, 1.442695
      %v377 = vpow.pop %v376
      %v378 = vmul.f32 %v341, 1.442695
      %v379 = vpow.pop %v378
      %v380 = vmul.f32 %v342, 1.442695
      %v381 = vpow.pop %v380
      %v382 = vmul.f32 %v343, 1.442695
      %v383 = vpow.pop %v382
      %v384 = vmul.f32 %v344, 1.442695
      %v385 = vpow.pop %v384
      %v386 = vmul.f32 %v345, 1.442695
      %v387 = vpow.pop %v386
      %v388 = vmul.f32 %v346, 1.442695
      %v389 = vpow.pop %v388
      %v390 = vmul.f32 %v347, 1.442695
      %v391 = vpow.pop %v390
      %v392 = vmul.f32 %v348, 1.442695
      %v393 = vpow.pop %v392
      %v394 = vmul.f32 %v349, 1.442695
      %v395 = vpow.pop %v394
      %v396 = vmul.f32 %v350, 1.442695
      %v397 = vpow.pop %v396
      %v398 = vmul.f32 %v351, 1.442695
      %v399 = vpow.pop %v398
      %v400 = vmul.f32 %v352, 1.442695
      %v401 = vpow.pop %v400
      %v402 = vmul.f32 %v353, 1.442695
      %v403 = vpow.pop %v402
      %v404 = vmul.f32 %v354, 1.442695
      %v405 = vpow.pop %v404
      %v406 = vmul.f32 %v355, 1.442695
      %v407 = vpow.pop %v406
      %v408 = vmul.f32 %v356, 1.442695
      %v409 = vpow.pop %v408
      %v410 = vmul.f32 %v357, 1.442695
      %v411 = vpow.pop %v410
      %v412 = vmul.f32 %v358, 1.442695
      %v413 = vpow.pop %v412
      %v414 = vmul.f32 %v359, 1.442695
      %v415 = vpow.pop %v414
      %v416 = vmul.f32 %v360, 1.442695
      %v417 = vpow.pop %v416
      %v418 = vmul.f32 %v361, 1.442695
      %v419 = vpow.pop %v418
      %v420 = vmul.f32 %v362, 1.442695
      %v421 = vpow.pop %v420
      %v422 = vmul.f32 %v363, 1.442695
      %v423 = vpow.pop %v422
      %v424 = vmul.f32 %v364, 1.442695
      %v425 = vpow.pop %v424
      %v426 = vmul.f32 %v365, 1.442695
      %v427 = vpow.pop %v426
      %v428 = vmul.f32 %v366, 1.442695
      %v429 = vpow.pop %v428
      %v430 = vmul.f32 %v367, 1.442695
      %v431 = vpow.pop %v430
      %v432 = vadd.f32 %v369, 2.0
      %v433 = vadd.f32 %v371, 2.0
      %v434 = vadd.f32 %v373, 2.0
      %v435 = vadd.f32 %v375, 2.0
      %v436 = vadd.f32 %v377, 2.0
      %v437 = vadd.f32 %v379, 2.0
      %v438 = vadd.f32 %v381, 2.0
      %v439 = vadd.f32 %v383, 2.0
      %v440 = vadd.f32 %v385, 2.0
      %v441 = vadd.f32 %v387, 2.0
      %v442 = vadd.f32 %v389, 2.0
      %v443 = vadd.f32 %v391, 2.0
      %v444 = vadd.f32 %v393, 2.0
      %v445 = vadd.f32 %v395, 2.0
      %v446 = vadd.f32 %v397, 2.0
      %v447 = vadd.f32 %v399, 2.0
      %v448 = vadd.f32 %v401, 2.0
      %v449 = vadd.f32 %v403, 2.0
      %v450 = vadd.f32 %v405, 2.0
      %v451 = vadd.f32 %v407, 2.0
      %v452 = vadd.f32 %v409, 2.0
      %v453 = vadd.f32 %v411, 2.0
      %v454 = vadd.f32 %v413, 2.0
      %v455 = vadd.f32 %v415, 2.0
      %v456 = vadd.f32 %v417, 2.0
      %v457 = vadd.f32 %v419, 2.0
      %v458 = vadd.f32 %v421, 2.0
      %v459 = vadd.f32 %v423, 2.0
      %v460 = vadd.f32 %v425, 2.0
      %v461 = vadd.f32 %v427, 2.0
      %v462 = vadd.f32 %v429, 2.0
      %v463 = vadd.f32 %v431, 2.0
      %v464 = vmul.f32 %v369, %v432
      %v465 = vmul.f32 %v371, %v433
      %v466 = vmul.f32 %v373, %v434
      %v467 = vmul.f32 %v375, %v435
      %v468 = vmul.f32 %v377, %v436
      %v469 = vmul.f32 %v379, %v437
      %v470 = vmul.f32 %v381, %v438
      %v471 = vmul.f32 %v383, %v439
      %v472 = vmul.f32 %v385, %v440
      %v473 = vmul.f32 %v387, %v441
      %v474 = vmul.f32 %v389, %v442
      %v475 = vmul.f32 %v391, %v443
      %v476 = vmul.f32 %v393, %v444
      %v477 = vmul.f32 %v395, %v445
      %v478 = vmul.f32 %v397, %v446
      %v479 = vmul.f32 %v399, %v447
      %v480 = vmul.f32 %v401, %v448
      %v481 = vmul.f32 %v403, %v449
      %v482 = vmul.f32 %v405, %v450
      %v483 = vmul.f32 %v407, %v451
      %v484 = vmul.f32 %v409, %v452
      %v485 = vmul.f32 %v411, %v453
      %v486 = vmul.f32 %v413, %v454
      %v487 = vmul.f32 %v415, %v455
      %v488 = vmul.f32 %v417, %v456
      %v489 = vmul.f32 %v419, %v457
      %v490 = vmul.f32 %v421, %v458
      %v491 = vmul.f32 %v423, %v459
      %v492 = vmul.f32 %v425, %v460
      %v493 = vmul.f32 %v427, %v461
      %v494 = vmul.f32 %v429, %v462
      %v495 = vmul.f32 %v431, %v463
      %v496 = vmul.f32 %v304, %v464
      %v497 = vmul.f32 %v305, %v465
      %v498 = vmul.f32 %v306, %v466
      %v499 = vmul.f32 %v307, %v467
      %v500 = vmul.f32 %v308, %v468
      %v501 = vmul.f32 %v309, %v469
      %v502 = vmul.f32 %v310, %v470
      %v503 = vmul.f32 %v311, %v471
      %v504 = vmul.f32 %v312, %v472
      %v505 = vmul.f32 %v313, %v473
      %v506 = vmul.f32 %v314, %v474
      %v507 = vmul.f32 %v315, %v475
      %v508 = vmul.f32 %v316, %v476
      %v509 = vmul.f32 %v317, %v477
      %v510 = vmul.f32 %v318, %v478
      %v511 = vmul.f32 %v319, %v479
      %v512 = vmul.f32 %v320, %v480
      %v513 = vmul.f32 %v321, %v481
      %v514 = vmul.f32 %v322, %v482
      %v515 = vmul.f32 %v323, %v483
      %v516 = vmul.f32 %v324, %v484
      %v517 = vmul.f32 %v325, %v485
      %v518 = vmul.f32 %v326, %v486
      %v519 = vmul.f32 %v327, %v487
      %v520 = vmul.f32 %v328, %v488
      %v521 = vmul.f32 %v329, %v489
      %v522 = vmul.f32 %v330, %v490
      %v523 = vmul.f32 %v331, %v491
      %v524 = vmul.f32 %v332, %v492
      %v525 = vmul.f32 %v333, %v493
      %v526 = vmul.f32 %v334, %v494
      %v527 = vmul.f32 %v335, %v495
      %v528 = vadd.f32 %v464, 2.0
      %v529 = vadd.f32 %v465, 2.0
      %v530 = vadd.f32 %v466, 2.0
      %v531 = vadd.f32 %v467, 2.0
      %v532 = vadd.f32 %v468, 2.0
      %v533 = vadd.f32 %v469, 2.0
      %v534 = vadd.f32 %v470, 2.0
      %v535 = vadd.f32 %v471, 2.0
      %v536 = vadd.f32 %v472, 2.0
      %v537 = vadd.f32 %v473, 2.0
      %v538 = vadd.f32 %v474, 2.0
      %v539 = vadd.f32 %v475, 2.0
      %v540 = vadd.f32 %v476, 2.0
      %v541 = vadd.f32 %v477, 2.0
      %v542 = vadd.f32 %v478, 2.0
      %v543 = vadd.f32 %v479, 2.0
      %v544 = vadd.f32 %v480, 2.0
      %v545 = vadd.f32 %v481, 2.0
      %v546 = vadd.f32 %v482, 2.0
      %v547 = vadd.f32 %v483, 2.0
      %v548 = vadd.f32 %v484, 2.0
      %v549 = vadd.f32 %v485, 2.0
      %v550 = vadd.f32 %v486, 2.0
      %v551 = vadd.f32 %v487, 2.0
      %v552 = vadd.f32 %v488, 2.0
      %v553 = vadd.f32 %v489, 2.0
      %v554 = vadd.f32 %v490, 2.0
      %v555 = vadd.f32 %v491, 2.0
      %v556 = vadd.f32 %v492, 2.0
      %v557 = vadd.f32 %v493, 2.0
      %v558 = vadd.f32 %v494, 2.0
      %v559 = vadd.f32 %v495, 2.0
      %v560 = vrcp.pop %v528
      %v561 = vrcp.pop %v529
      %v562 = vrcp.pop %v530
      %v563 = vrcp.pop %v531
      %v564 = vrcp.pop %v532
      %v565 = vrcp.pop %v533
      %v566 = vrcp.pop %v534
      %v567 = vrcp.pop %v535
      %v568 = vrcp.pop %v536
      %v569 = vrcp.pop %v537
      %v570 = vrcp.pop %v538
      %v571 = vrcp.pop %v539
      %v572 = vrcp.pop %v540
      %v573 = vrcp.pop %v541
      %v574 = vrcp.pop %v542
      %v575 = vrcp.pop %v543
      %v576 = vrcp.pop %v544
      %v577 = vrcp.pop %v545
      %v578 = vrcp.pop %v546
      %v579 = vrcp.pop %v547
      %v580 = vrcp.pop %v548
      %v581 = vrcp.pop %v549
      %v582 = vrcp.pop %v550
      %v583 = vrcp.pop %v551
      %v584 = vrcp.pop %v552
      %v585 = vrcp.pop %v553
      %v586 = vrcp.pop %v554
      %v587 = vrcp.pop %v555
      %v588 = vrcp.pop %v556
      %v589 = vrcp.pop %v557
      %v590 = vrcp.pop %v558
      %v591 = vrcp.pop %v559
      %v592 = vmul.f32 %v496, %v560
      %v593 = vmul.f32 %v497, %v561
      %v594 = vmul.f32 %v498, %v562
      %v595 = vmul.f32 %v499, %v563
      %v596 = vmul.f32 %v500, %v564
      %v597 = vmul.f32 %v501, %v565
      %v598 = vmul.f32 %v502, %v566
      %v599 = vmul.f32 %v503, %v567
      %v600 = vmul.f32 %v504, %v568
      %v601 = vmul.f32 %v505, %v569
      %v602 = vmul.f32 %v506, %v570
      %v603 = vmul.f32 %v507, %v571
      %v604 = vmul.f32 %v508, %v572
      %v605 = vmul.f32 %v509, %v573
      %v606 = vmul.f32 %v510, %v574
      %v607 = vmul.f32 %v511, %v575
      %v608 = vmul.f32 %v512, %v576
      %v609 = vmul.f32 %v513, %v577
      %v610 = vmul.f32 %v514, %v578
      %v611 = vmul.f32 %v515, %v579
      %v612 = vmul.f32 %v516, %v580
      %v613 = vmul.f32 %v517, %v581
      %v614 = vmul.f32 %v518, %v582
      %v615 = vmul.f32 %v519, %v583
      %v616 = vmul.f32 %v520, %v584
      %v617 = vmul.f32 %v521, %v585
      %v618 = vmul.f32 %v522, %v586
      %v619 = vmul.f32 %v523, %v587
      %v620 = vmul.f32 %v524, %v588
      %v621 = vmul.f32 %v525, %v589
      %v622 = vmul.f32 %v526, %v590
      %v623 = vmul.f32 %v527, %v591
      %vm624 = vcmp.gt.f32.partialorder %v304, 20.0
      %vm625 = vcmp.gt.f32.partialorder %v305, 20.0
      %vm626 = vcmp.gt.f32.partialorder %v306, 20.0
      %vm627 = vcmp.gt.f32.partialorder %v307, 20.0
      %vm628 = vcmp.gt.f32.partialorder %v308, 20.0
      %vm629 = vcmp.gt.f32.partialorder %v309, 20.0
      %vm630 = vcmp.gt.f32.partialorder %v310, 20.0
      %vm631 = vcmp.gt.f32.partialorder %v311, 20.0
      %vm632 = vcmp.gt.f32.partialorder %v312, 20.0
      %vm633 = vcmp.gt.f32.partialorder %v313, 20.0
      %vm634 = vcmp.gt.f32.partialorder %v314, 20.0
      %vm635 = vcmp.gt.f32.partialorder %v315, 20.0
      %vm636 = vcmp.gt.f32.partialorder %v316, 20.0
      %vm637 = vcmp.gt.f32.partialorder %v317, 20.0
      %vm638 = vcmp.gt.f32.partialorder %v318, 20.0
      %vm639 = vcmp.gt.f32.partialorder %v319, 20.0
      %vm640 = vcmp.gt.f32.partialorder %v320, 20.0
      %vm641 = vcmp.gt.f32.partialorder %v321, 20.0
      %vm642 = vcmp.gt.f32.partialorder %v322, 20.0
      %vm643 = vcmp.gt.f32.partialorder %v323, 20.0
      %vm644 = vcmp.gt.f32.partialorder %v324, 20.0
      %vm645 = vcmp.gt.f32.partialorder %v325, 20.0
      %vm646 = vcmp.gt.f32.partialorder %v326, 20.0
      %vm647 = vcmp.gt.f32.partialorder %v327, 20.0
      %vm648 = vcmp.gt.f32.partialorder %v328, 20.0
      %vm649 = vcmp.gt.f32.partialorder %v329, 20.0
      %vm650 = vcmp.gt.f32.partialorder %v330, 20.0
      %vm651 = vcmp.gt.f32.partialorder %v331, 20.0
      %vm652 = vcmp.gt.f32.partialorder %v332, 20.0
      %vm653 = vcmp.gt.f32.partialorder %v333, 20.0
      %vm654 = vcmp.gt.f32.partialorder %v334, 20.0
      %vm655 = vcmp.gt.f32.partialorder %v335, 20.0
      %v656 = vsel %vm624, %v304, %v592
      %v657 = vsel %vm625, %v305, %v593
      %v658 = vsel %vm626, %v306, %v594
      %v659 = vsel %vm627, %v307, %v595
      %v660 = vsel %vm628, %v308, %v596
      %v661 = vsel %vm629, %v309, %v597
      %v662 = vsel %vm630, %v310, %v598
      %v663 = vsel %vm631, %v311, %v599
      %v664 = vsel %vm632, %v312, %v600
      %v665 = vsel %vm633, %v313, %v601
      %v666 = vsel %vm634, %v314, %v602
      %v667 = vsel %vm635, %v315, %v603
      %v668 = vsel %vm636, %v316, %v604
      %v669 = vsel %vm637, %v317, %v605
      %v670 = vsel %vm638, %v318, %v606
      %v671 = vsel %vm639, %v319, %v607
      %v672 = vsel %vm640, %v320, %v608
      %v673 = vsel %vm641, %v321, %v609
      %v674 = vsel %vm642, %v322, %v610
      %v675 = vsel %vm643, %v323, %v611
      %v676 = vsel %vm644, %v324, %v612
      %v677 = vsel %vm645, %v325, %v613
      %v678 = vsel %vm646, %v326, %v614
      %v679 = vsel %vm647, %v327, %v615
      %v680 = vsel %vm648, %v328, %v616
      %v681 = vsel %vm649, %v329, %v617
      %v682 = vsel %vm650, %v330, %v618
      %v683 = vsel %vm651, %v331, %v619
      %v684 = vsel %vm652, %v332, %v620
      %v685 = vsel %vm653, %v333, %v621
      %v686 = vsel %vm654, %v334, %v622
      %v687 = vsel %vm655, %v335, %v623
      %v688 = vmin.f32 %v656, 20.0
      %v689 = vmin.f32 %v657, 20.0
      %v690 = vmin.f32 %v658, 20.0
      %v691 = vmin.f32 %v659, 20.0
      %v692 = vmin.f32 %v660, 20.0
      %v693 = vmin.f32 %v661, 20.0
      %v694 = vmin.f32 %v662, 20.0
      %v695 = vmin.f32 %v663, 20.0
      %v696 = vmin.f32 %v664, 20.0
      %v697 = vmin.f32 %v665, 20.0
      %v698 = vmin.f32 %v666, 20.0
      %v699 = vmin.f32 %v667, 20.0
      %v700 = vmin.f32 %v668, 20.0
      %v701 = vmin.f32 %v669, 20.0
      %v702 = vmin.f32 %v670, 20.0
      %v703 = vmin.f32 %v671, 20.0
      %v704 = vmin.f32 %v672, 20.0
      %v705 = vmin.f32 %v673, 20.0
      %v706 = vmin.f32 %v674, 20.0
      %v707 = vmin.f32 %v675, 20.0
      %v708 = vmin.f32 %v676, 20.0
      %v709 = vmin.f32 %v677, 20.0
      %v710 = vmin.f32 %v678, 20.0
      %v711 = vmin.f32 %v679, 20.0
      %v712 = vmin.f32 %v680, 20.0
      %v713 = vmin.f32 %v681, 20.0
      %v714 = vmin.f32 %v682, 20.0
      %v715 = vmin.f32 %v683, 20.0
      %v716 = vmin.f32 %v684, 20.0
      %v717 = vmin.f32 %v685, 20.0
      %v718 = vmin.f32 %v686, 20.0
      %v719 = vmin.f32 %v687, 20.0
      %v720 = vmul.f32 %v688, 1.442695
      %v721 = vpow.pop %v720
      %v722 = vmul.f32 %v689, 1.442695
      %v723 = vpow.pop %v722
      %v724 = vmul.f32 %v690, 1.442695
      %v725 = vpow.pop %v724
      %v726 = vmul.f32 %v691, 1.442695
      %v727 = vpow.pop %v726
      %v728 = vmul.f32 %v692, 1.442695
      %v729 = vpow.pop %v728
      %v730 = vmul.f32 %v693, 1.442695
      %v731 = vpow.pop %v730
      %v732 = vmul.f32 %v694, 1.442695
      %v733 = vpow.pop %v732
      %v734 = vmul.f32 %v695, 1.442695
      %v735 = vpow.pop %v734
      %v736 = vmul.f32 %v696, 1.442695
      %v737 = vpow.pop %v736
      %v738 = vmul.f32 %v697, 1.442695
      %v739 = vpow.pop %v738
      %v740 = vmul.f32 %v698, 1.442695
      %v741 = vpow.pop %v740
      %v742 = vmul.f32 %v699, 1.442695
      %v743 = vpow.pop %v742
      %v744 = vmul.f32 %v700, 1.442695
      %v745 = vpow.pop %v744
      %v746 = vmul.f32 %v701, 1.442695
      %v747 = vpow.pop %v746
      %v748 = vmul.f32 %v702, 1.442695
      %v749 = vpow.pop %v748
      %v750 = vmul.f32 %v703, 1.442695
      %v751 = vpow.pop %v750
      %v752 = vmul.f32 %v704, 1.442695
      %v753 = vpow.pop %v752
      %v754 = vmul.f32 %v705, 1.442695
      %v755 = vpow.pop %v754
      %v756 = vmul.f32 %v706, 1.442695
      %v757 = vpow.pop %v756
      %v758 = vmul.f32 %v707, 1.442695
      %v759 = vpow.pop %v758
      %v760 = vmul.f32 %v708, 1.442695
      %v761 = vpow.pop %v760
      %v762 = vmul.f32 %v709, 1.442695
      %v763 = vpow.pop %v762
      %v764 = vmul.f32 %v710, 1.442695
      %v765 = vpow.pop %v764
      %v766 = vmul.f32 %v711, 1.442695
      %v767 = vpow.pop %v766
      %v768 = vmul.f32 %v712, 1.442695
      %v769 = vpow.pop %v768
      %v770 = vmul.f32 %v713, 1.442695
      %v771 = vpow.pop %v770
      %v772 = vmul.f32 %v714, 1.442695
      %v773 = vpow.pop %v772
      %v774 = vmul.f32 %v715, 1.442695
      %v775 = vpow.pop %v774
      %v776 = vmul.f32 %v716, 1.442695
      %v777 = vpow.pop %v776
      %v778 = vmul.f32 %v717, 1.442695
      %v779 = vpow.pop %v778
      %v780 = vmul.f32 %v718, 1.442695
      %v781 = vpow.pop %v780
      %v782 = vmul.f32 %v719, 1.442695
      %v783 = vpow.pop %v782
      %v784 = vadd.f32 %v721, 2.0
      %v785 = vadd.f32 %v723, 2.0
      %v786 = vadd.f32 %v725, 2.0
      %v787 = vadd.f32 %v727, 2.0
      %v788 = vadd.f32 %v729, 2.0
      %v789 = vadd.f32 %v731, 2.0
      %v790 = vadd.f32 %v733, 2.0
      %v791 = vadd.f32 %v735, 2.0
      %v792 = vadd.f32 %v737, 2.0
      %v793 = vadd.f32 %v739, 2.0
      %v794 = vadd.f32 %v741, 2.0
      %v795 = vadd.f32 %v743, 2.0
      %v796 = vadd.f32 %v745, 2.0
      %v797 = vadd.f32 %v747, 2.0
      %v798 = vadd.f32 %v749, 2.0
      %v799 = vadd.f32 %v751, 2.0
      %v800 = vadd.f32 %v753, 2.0
      %v801 = vadd.f32 %v755, 2.0
      %v802 = vadd.f32 %v757, 2.0
      %v803 = vadd.f32 %v759, 2.0
      %v804 = vadd.f32 %v761, 2.0
      %v805 = vadd.f32 %v763, 2.0
      %v806 = vadd.f32 %v765, 2.0
      %v807 = vadd.f32 %v767, 2.0
      %v808 = vadd.f32 %v769, 2.0
      %v809 = vadd.f32 %v771, 2.0
      %v810 = vadd.f32 %v773, 2.0
      %v811 = vadd.f32 %v775, 2.0
      %v812 = vadd.f32 %v777, 2.0
      %v813 = vadd.f32 %v779, 2.0
      %v814 = vadd.f32 %v781, 2.0
      %v815 = vadd.f32 %v783, 2.0
      %v816 = vmul.f32 %v721, %v784
      %v817 = vmul.f32 %v723, %v785
      %v818 = vmul.f32 %v725, %v786
      %v819 = vmul.f32 %v727, %v787
      %v820 = vmul.f32 %v729, %v788
      %v821 = vmul.f32 %v731, %v789
      %v822 = vmul.f32 %v733, %v790
      %v823 = vmul.f32 %v735, %v791
      %v824 = vmul.f32 %v737, %v792
      %v825 = vmul.f32 %v739, %v793
      %v826 = vmul.f32 %v741, %v794
      %v827 = vmul.f32 %v743, %v795
      %v828 = vmul.f32 %v745, %v796
      %v829 = vmul.f32 %v747, %v797
      %v830 = vmul.f32 %v749, %v798
      %v831 = vmul.f32 %v751, %v799
      %v832 = vmul.f32 %v753, %v800
      %v833 = vmul.f32 %v755, %v801
      %v834 = vmul.f32 %v757, %v802
      %v835 = vmul.f32 %v759, %v803
      %v836 = vmul.f32 %v761, %v804
      %v837 = vmul.f32 %v763, %v805
      %v838 = vmul.f32 %v765, %v806
      %v839 = vmul.f32 %v767, %v807
      %v840 = vmul.f32 %v769, %v808
      %v841 = vmul.f32 %v771, %v809
      %v842 = vmul.f32 %v773, %v810
      %v843 = vmul.f32 %v775, %v811
      %v844 = vmul.f32 %v777, %v812
      %v845 = vmul.f32 %v779, %v813
      %v846 = vmul.f32 %v781, %v814
      %v847 = vmul.f32 %v783, %v815
      %v848 = vmul.f32 %v656, %v816
      %v849 = vmul.f32 %v657, %v817
      %v850 = vmul.f32 %v658, %v818
      %v851 = vmul.f32 %v659, %v819
      %v852 = vmul.f32 %v660, %v820
      %v853 = vmul.f32 %v661, %v821
      %v854 = vmul.f32 %v662, %v822
      %v855 = vmul.f32 %v663, %v823
      %v856 = vmul.f32 %v664, %v824
      %v857 = vmul.f32 %v665, %v825
      %v858 = vmul.f32 %v666, %v826
      %v859 = vmul.f32 %v667, %v827
      %v860 = vmul.f32 %v668, %v828
      %v861 = vmul.f32 %v669, %v829
      %v862 = vmul.f32 %v670, %v830
      %v863 = vmul.f32 %v671, %v831
      %v864 = vmul.f32 %v672, %v832
      %v865 = vmul.f32 %v673, %v833
      %v866 = vmul.f32 %v674, %v834
      %v867 = vmul.f32 %v675, %v835
      %v868 = vmul.f32 %v676, %v836
      %v869 = vmul.f32 %v677, %v837
      %v870 = vmul.f32 %v678, %v838
      %v871 = vmul.f32 %v679, %v839
      %v872 = vmul.f32 %v680, %v840
      %v873 = vmul.f32 %v681, %v841
      %v874 = vmul.f32 %v682, %v842
      %v875 = vmul.f32 %v683, %v843
      %v876 = vmul.f32 %v684, %v844
      %v877 = vmul.f32 %v685, %v845
      %v878 = vmul.f32 %v686, %v846
      %v879 = vmul.f32 %v687, %v847
      %v880 = vadd.f32 %v816, 2.0
      %v881 = vadd.f32 %v817, 2.0
      %v882 = vadd.f32 %v818, 2.0
      %v883 = vadd.f32 %v819, 2.0
      %v884 = vadd.f32 %v820, 2.0
      %v885 = vadd.f32 %v821, 2.0
      %v886 = vadd.f32 %v822, 2.0
      %v887 = vadd.f32 %v823, 2.0
      %v888 = vadd.f32 %v824, 2.0
      %v889 = vadd.f32 %v825, 2.0
      %v890 = vadd.f32 %v826, 2.0
      %v891 = vadd.f32 %v827, 2.0
      %v892 = vadd.f32 %v828, 2.0
      %v893 = vadd.f32 %v829, 2.0
      %v894 = vadd.f32 %v830, 2.0
      %v895 = vadd.f32 %v831, 2.0
      %v896 = vadd.f32 %v832, 2.0
      %v897 = vadd.f32 %v833, 2.0
      %v898 = vadd.f32 %v834, 2.0
      %v899 = vadd.f32 %v835, 2.0
      %v900 = vadd.f32 %v836, 2.0
      %v901 = vadd.f32 %v837, 2.0
      %v902 = vadd.f32 %v838, 2.0
      %v903 = vadd.f32 %v839, 2.0
      %v904 = vadd.f32 %v840, 2.0
      %v905 = vadd.f32 %v841, 2.0
      %v906 = vadd.f32 %v842, 2.0
      %v907 = vadd.f32 %v843, 2.0
      %v908 = vadd.f32 %v844, 2.0
      %v909 = vadd.f32 %v845, 2.0
      %v910 = vadd.f32 %v846, 2.0
      %v911 = vadd.f32 %v847, 2.0
      %v912 = vrcp.pop %v880
      %v913 = vrcp.pop %v881
      %v914 = vrcp.pop %v882
      %v915 = vrcp.pop %v883
      %v916 = vrcp.pop %v884
      %v917 = vrcp.pop %v885
      %v918 = vrcp.pop %v886
      %v919 = vrcp.pop %v887
      %v920 = vrcp.pop %v888
      %v921 = vrcp.pop %v889
      %v922 = vrcp.pop %v890
      %v923 = vrcp.pop %v891
      %v924 = vrcp.pop %v892
      %v925 = vrcp.pop %v893
      %v926 = vrcp.pop %v894
      %v927 = vrcp.pop %v895
      %v928 = vrcp.pop %v896
      %v929 = vrcp.pop %v897
      %v930 = vrcp.pop %v898
      %v931 = vrcp.pop %v899
      %v932 = vrcp.pop %v900
      %v933 = vrcp.pop %v901
      %v934 = vrcp.pop %v902
      %v935 = vrcp.pop %v903
      %v936 = vrcp.pop %v904
      %v937 = vrcp.pop %v905
      %v938 = vrcp.pop %v906
      %v939 = vrcp.pop %v907
      %v940 = vrcp.pop %v908
      %v941 = vrcp.pop %v909
      %v942 = vrcp.pop %v910
      %v943 = vrcp.pop %v911
      %v944 = vmul.f32 %v848, %v912
      %v945 = vmul.f32 %v849, %v913
      %v946 = vmul.f32 %v850, %v914
      %v947 = vmul.f32 %v851, %v915
      %v948 = vmul.f32 %v852, %v916
      %v949 = vmul.f32 %v853, %v917
      %v950 = vmul.f32 %v854, %v918
      %v951 = vmul.f32 %v855, %v919
      %v952 = vmul.f32 %v856, %v920
      %v953 = vmul.f32 %v857, %v921
      %v954 = vmul.f32 %v858, %v922
      %v955 = vmul.f32 %v859, %v923
      %v956 = vmul.f32 %v860, %v924
      %v957 = vmul.f32 %v861, %v925
      %v958 = vmul.f32 %v862, %v926
      %v959 = vmul.f32 %v863, %v927
      %v960 = vmul.f32 %v864, %v928
      %v961 = vmul.f32 %v865, %v929
      %v962 = vmul.f32 %v866, %v930
      %v963 = vmul.f32 %v867, %v931
      %v964 = vmul.f32 %v868, %v932
      %v965 = vmul.f32 %v869, %v933
      %v966 = vmul.f32 %v870, %v934
      %v967 = vmul.f32 %v871, %v935
      %v968 = vmul.f32 %v872, %v936
      %v969 = vmul.f32 %v873, %v937
      %v970 = vmul.f32 %v874, %v938
      %v971 = vmul.f32 %v875, %v939
      %v972 = vmul.f32 %v876, %v940
      %v973 = vmul.f32 %v877, %v941
      %v974 = vmul.f32 %v878, %v942
      %v975 = vmul.f32 %v879, %v943
      %vm976 = vcmp.gt.f32.partialorder %v656, 20.0
      %vm977 = vcmp.gt.f32.partialorder %v657, 20.0
      %vm978 = vcmp.gt.f32.partialorder %v658, 20.0
      %vm979 = vcmp.gt.f32.partialorder %v659, 20.0
      %vm980 = vcmp.gt.f32.partialorder %v660, 20.0
      %vm981 = vcmp.gt.f32.partialorder %v661, 20.0
      %vm982 = vcmp.gt.f32.partialorder %v662, 20.0
      %vm983 = vcmp.gt.f32.partialorder %v663, 20.0
      %vm984 = vcmp.gt.f32.partialorder %v664, 20.0
      %vm985 = vcmp.gt.f32.partialorder %v665, 20.0
      %vm986 = vcmp.gt.f32.partialorder %v666, 20.0
      %vm987 = vcmp.gt.f32.partialorder %v667, 20.0
      %vm988 = vcmp.gt.f32.partialorder %v668, 20.0
      %vm989 = vcmp.gt.f32.partialorder %v669, 20.0
      %vm990 = vcmp.gt.f32.partialorder %v670, 20.0
      %vm991 = vcmp.gt.f32.partialorder %v671, 20.0
      %vm992 = vcmp.gt.f32.partialorder %v672, 20.0
      %vm993 = vcmp.gt.f32.partialorder %v673, 20.0
      %vm994 = vcmp.gt.f32.partialorder %v674, 20.0
      %vm995 = vcmp.gt.f32.partialorder %v675, 20.0
      %vm996 = vcmp.gt.f32.partialorder %v676, 20.0
      %vm997 = vcmp.gt.f32.partialorder %v677, 20.0
      %vm998 = vcmp.gt.f32.partialorder %v678, 20.0
      %vm999 = vcmp.gt.f32.partialorder %v679, 20.0
      %vm1000 = vcmp.gt.f32.partialorder %v680, 20.0
      %vm1001 = vcmp.gt.f32.partialorder %v681, 20.0
      %vm1002 = vcmp.gt.f32.partialorder %v682, 20.0
      %vm1003 = vcmp.gt.f32.partialorder %v683, 20.0
      %vm1004 = vcmp.gt.f32.partialorder %v684, 20.0
      %vm1005 = vcmp.gt.f32.partialorder %v685, 20.0
      %vm1006 = vcmp.gt.f32.partialorder %v686, 20.0
      %vm1007 = vcmp.gt.f32.partialorder %v687, 20.0
      %v1008 = vsel %vm976, %v656, %v944
      %v1009 = vsel %vm977, %v657, %v945
      %v1010 = vsel %vm978, %v658, %v946
      %v1011 = vsel %vm979, %v659, %v947
      %v1012 = vsel %vm980, %v660, %v948
      %v1013 = vsel %vm981, %v661, %v949
      %v1014 = vsel %vm982, %v662, %v950
      %v1015 = vsel %vm983, %v663, %v951
      %v1016 = vsel %vm984, %v664, %v952
      %v1017 = vsel %vm985, %v665, %v953
      %v1018 = vsel %vm986, %v666, %v954
      %v1019 = vsel %vm987, %v667, %v955
      %v1020 = vsel %vm988, %v668, %v956
      %v1021 = vsel %vm989, %v669, %v957
      %v1022 = vsel %vm990, %v670, %v958
      %v1023 = vsel %vm991, %v671, %v959
      %v1024 = vsel %vm992, %v672, %v960
      %v1025 = vsel %vm993, %v673, %v961
      %v1026 = vsel %vm994, %v674, %v962
      %v1027 = vsel %vm995, %v675, %v963
      %v1028 = vsel %vm996, %v676, %v964
      %v1029 = vsel %vm997, %v677, %v965
      %v1030 = vsel %vm998, %v678, %v966
      %v1031 = vsel %vm999, %v679, %v967
      %v1032 = vsel %vm1000, %v680, %v968
      %v1033 = vsel %vm1001, %v681, %v969
      %v1034 = vsel %vm1002, %v682, %v970
      %v1035 = vsel %vm1003, %v683, %v971
      %v1036 = vsel %vm1004, %v684, %v972
      %v1037 = vsel %vm1005, %v685, %v973
      %v1038 = vsel %vm1006, %v686, %v974
      %v1039 = vsel %vm1007, %v687, %v975
      %v1040 = vld [vmem:[%s195] sm:$0xff]
      %v1041 = vld [vmem:[%s195 + $0x8] sm:$0xff]
      %v1042 = vld [vmem:[%s195 + $0x10] sm:$0xff]
      %v1043 = vld [vmem:[%s195 + $0x18] sm:$0xff]
      %v1044 = vld [vmem:[%s195 + $0x20] sm:$0xff]
      %v1045 = vld [vmem:[%s195 + $0x28] sm:$0xff]
      %v1046 = vld [vmem:[%s195 + $0x30] sm:$0xff]
      %v1047 = vld [vmem:[%s195 + $0x38] sm:$0xff]
      %v1048 = vld [vmem:[%s195 + $0x40] sm:$0xff]
      %v1049 = vld [vmem:[%s195 + $0x48] sm:$0xff]
      %v1050 = vld [vmem:[%s195 + $0x50] sm:$0xff]
      %v1051 = vld [vmem:[%s195 + $0x58] sm:$0xff]
      %v1052 = vld [vmem:[%s195 + $0x60] sm:$0xff]
      %v1053 = vld [vmem:[%s195 + $0x68] sm:$0xff]
      %v1054 = vld [vmem:[%s195 + $0x70] sm:$0xff]
      %v1055 = vld [vmem:[%s195 + $0x78] sm:$0xff]
      %v1056 = vld [vmem:[%s195 + $0x80] sm:$0xff]
      %v1057 = vld [vmem:[%s195 + $0x88] sm:$0xff]
      %v1058 = vld [vmem:[%s195 + $0x90] sm:$0xff]
      %v1059 = vld [vmem:[%s195 + $0x98] sm:$0xff]
      %v1060 = vld [vmem:[%s195 + $0xa0] sm:$0xff]
      %v1061 = vld [vmem:[%s195 + $0xa8] sm:$0xff]
      %v1062 = vld [vmem:[%s195 + $0xb0] sm:$0xff]
      %v1063 = vld [vmem:[%s195 + $0xb8] sm:$0xff]
      %v1064 = vld [vmem:[%s195 + $0xc0] sm:$0xff]
      %v1065 = vld [vmem:[%s195 + $0xc8] sm:$0xff]
      %v1066 = vld [vmem:[%s195 + $0xd0] sm:$0xff]
      %v1067 = vld [vmem:[%s195 + $0xd8] sm:$0xff]
      %v1068 = vld [vmem:[%s195 + $0xe0] sm:$0xff]
      %v1069 = vld [vmem:[%s195 + $0xe8] sm:$0xff]
      %v1070 = vld [vmem:[%s195 + $0xf0] sm:$0xff]
      %v1071 = vld [vmem:[%s195 + $0xf8] sm:$0xff]
      %v1072 = vadd.f32 %v1040, %v1008
      %v1073 = vadd.f32 %v1041, %v1009
      %v1074 = vadd.f32 %v1042, %v1010
      %v1075 = vadd.f32 %v1043, %v1011
      %v1076 = vadd.f32 %v1044, %v1012
      %v1077 = vadd.f32 %v1045, %v1013
      %v1078 = vadd.f32 %v1046, %v1014
      %v1079 = vadd.f32 %v1047, %v1015
      %v1080 = vadd.f32 %v1048, %v1016
      %v1081 = vadd.f32 %v1049, %v1017
      %v1082 = vadd.f32 %v1050, %v1018
      %v1083 = vadd.f32 %v1051, %v1019
      %v1084 = vadd.f32 %v1052, %v1020
      %v1085 = vadd.f32 %v1053, %v1021
      %v1086 = vadd.f32 %v1054, %v1022
      %v1087 = vadd.f32 %v1055, %v1023
      %v1088 = vadd.f32 %v1056, %v1024
      %v1089 = vadd.f32 %v1057, %v1025
      %v1090 = vadd.f32 %v1058, %v1026
      %v1091 = vadd.f32 %v1059, %v1027
      %v1092 = vadd.f32 %v1060, %v1028
      %v1093 = vadd.f32 %v1061, %v1029
      %v1094 = vadd.f32 %v1062, %v1030
      %v1095 = vadd.f32 %v1063, %v1031
      %v1096 = vadd.f32 %v1064, %v1032
      %v1097 = vadd.f32 %v1065, %v1033
      %v1098 = vadd.f32 %v1066, %v1034
      %v1099 = vadd.f32 %v1067, %v1035
      %v1100 = vadd.f32 %v1068, %v1036
      %v1101 = vadd.f32 %v1069, %v1037
      %v1102 = vadd.f32 %v1070, %v1038
      %v1103 = vadd.f32 %v1071, %v1039
      %vm1104 = vcmask 64512
      %1105 = vst.msk [vmem:[%s202] sm:$0xff] %vm1104, %v1072
      %1106 = vst.msk [vmem:[%s202 + $0x8] sm:$0xff] %vm1104, %v1073
      %1107 = vst.msk [vmem:[%s202 + $0x10] sm:$0xff] %vm1104, %v1074
      %1108 = vst.msk [vmem:[%s202 + $0x18] sm:$0xff] %vm1104, %v1075
      %1109 = vst.msk [vmem:[%s202 + $0x20] sm:$0xff] %vm1104, %v1076
      %1110 = vst.msk [vmem:[%s202 + $0x28] sm:$0xff] %vm1104, %v1077
      %1111 = vst.msk [vmem:[%s202 + $0x30] sm:$0xff] %vm1104, %v1078
      %1112 = vst.msk [vmem:[%s202 + $0x38] sm:$0xff] %vm1104, %v1079
      %1113 = vst.msk [vmem:[%s202 + $0x40] sm:$0xff] %vm1104, %v1080
      %1114 = vst.msk [vmem:[%s202 + $0x48] sm:$0xff] %vm1104, %v1081
      %1115 = vst.msk [vmem:[%s202 + $0x50] sm:$0xff] %vm1104, %v1082
      %1116 = vst.msk [vmem:[%s202 + $0x58] sm:$0xff] %vm1104, %v1083
      %1117 = vst.msk [vmem:[%s202 + $0x60] sm:$0xff] %vm1104, %v1084
      %1118 = vst.msk [vmem:[%s202 + $0x68] sm:$0xff] %vm1104, %v1085
      %1119 = vst.msk [vmem:[%s202 + $0x70] sm:$0xff] %vm1104, %v1086
      %1120 = vst.msk [vmem:[%s202 + $0x78] sm:$0xff] %vm1104, %v1087
      %1121 = vst.msk [vmem:[%s202 + $0x80] sm:$0xff] %vm1104, %v1088
      %1122 = vst.msk [vmem:[%s202 + $0x88] sm:$0xff] %vm1104, %v1089
      %1123 = vst.msk [vmem:[%s202 + $0x90] sm:$0xff] %vm1104, %v1090
      %1124 = vst.msk [vmem:[%s202 + $0x98] sm:$0xff] %vm1104, %v1091
      %1125 = vst.msk [vmem:[%s202 + $0xa0] sm:$0xff] %vm1104, %v1092
      %1126 = vst.msk [vmem:[%s202 + $0xa8] sm:$0xff] %vm1104, %v1093
      %1127 = vst.msk [vmem:[%s202 + $0xb0] sm:$0xff] %vm1104, %v1094
      %1128 = vst.msk [vmem:[%s202 + $0xb8] sm:$0xff] %vm1104, %v1095
      %1129 = vst.msk [vmem:[%s202 + $0xc0] sm:$0xff] %vm1104, %v1096
      %1130 = vst.msk [vmem:[%s202 + $0xc8] sm:$0xff] %vm1104, %v1097
      %1131 = vst.msk [vmem:[%s202 + $0xd0] sm:$0xff] %vm1104, %v1098
      %1132 = vst.msk [vmem:[%s202 + $0xd8] sm:$0xff] %vm1104, %v1099
      %1133 = vst.msk [vmem:[%s202 + $0xe0] sm:$0xff] %vm1104, %v1100
      %1134 = vst.msk [vmem:[%s202 + $0xe8] sm:$0xff] %vm1104, %v1101
      %1135 = vst.msk [vmem:[%s202 + $0xf0] sm:$0xff] %vm1104, %v1102
      %1136 = vst.msk [vmem:[%s202 + $0xf8] sm:$0xff] %vm1104, %v1103
      %s1137 = smul.u32 16, %s14
      %p1138 = scmp.lt.s32.totalorder %s1137, 31
      %s1139 = scalar_select %p1138, %s1137, 31
      %s1140 = smul.addr %s1139, 2
      %s1141 = smul.addr %s1140, 8
      %s1142 = scalar_lea.vmem %s3, %s1141
      // Predicated region
      $region33: #{resblock_forward.9} parent=31 // pred_check
        %p1143 = pneg %p105
      $region34: #{resblock_forward.9} parent=31 // pred_check_branch
        %1145 = sbr.rel (%p1143) target = $region36
      $region35: #{resblock_forward.9} parent=31 // pred_region
        %s1146 = smul.u32 16, %s14
      $region36: #{resblock_forward.9} parent=31 // pred_fallthru
        _
    $region32: #{resblock_forward.9} parent=5 // pred_fallthru
      _
    %p1147 = scmp.le.s32.totalorder 2, %s9
    // Predicated region
    $region37: #{resblock_forward.9} parent=5 // pred_check
      %p1148 = pneg %p1147
    $region38: #{resblock_forward.9} parent=5 // pred_check_branch
      %1150 = sbr.rel (%p1148) target = $region40
    $region39: #{resblock_forward.9} parent=5 // pred_region
      %s1151 = ssub.s32 %s9, 2
      // Predicated region
      $region41: #{resblock_forward.9} parent=39 // pred_check
        %p1152 = pneg %p111
      $region42: #{resblock_forward.9} parent=39 // pred_check_branch
        %1154 = sbr.rel (%p1152) target = $region44
      $region43: #{resblock_forward.9} parent=39 // pred_region
        %s1155 = smul.u32 16, %s15
        %p1156 = scmp.lt.s32.totalorder %s1155, 31
        %s1157 = scalar_select %p1156, %s1155, 31
        %s1158 = smul.addr %s1157, 2
        %s1159 = smul.addr %s1158, 8
        %s1160 = scalar_lea.vmem %s3, %s1159
      $region44: #{resblock_forward.9} parent=39 // pred_fallthru
        _
    $region40: #{resblock_forward.9} parent=5 // pred_fallthru
      _
  $region6: #{resblock_forward.9} parent=0 // loop_footer
    %s13 = sadd.s32 1, %s9
  $region7: #{resblock_forward.9} parent=0 // loop_footer_branch
    %8 = sbr.rel target = $region3
  $region8: #{resblock_forward.9} parent=0 // loop_exit
    _

// kernel: resblock_forward.6
$region0: #{resblock_forward.6}
  #allocation0 [shape = 'u32[]', space=smem, size = 0x4, offset = 0x4, fixed_abs, tag = 'smem constant byte address 0x4 - core index']
  #allocation1 [shape = 'u32[72,128]{1,0:T(1,128)}', space=vmem, size = 0x9000, scoped, tag = 'internal scratch']
  %s0 = inlined_call_operand.vmem [shape: f32[32,16,8], index: 0, kind: input, shape index: {}, may-alias: {0,1,2}]
  %s1 = inlined_call_operand.vmem [shape: f32[32,16,8], index: 1, kind: input, shape index: {}, may-alias: {0,1,2}]
  %s2 = inlined_call_operand.vmem [shape: f32[32,16,8], index: 2, kind: input, shape index: {}, may-alias: {0,1,2}]
  %s3 = inlined_call_operand.vmem [shape: bf16[8,8], index: 3, kind: input, shape index: {}]
  %s4 = inlined_call_operand.vmem [shape: f32[2,8], index: 4, kind: input, shape index: {}]
  %s5 = inlined_call_operand.vmem [shape: bf16[3,24,8], index: 5, kind: input, shape index: {}]
  %s6 = inlined_call_operand.vmem [shape: bf16[32,16,8], index: 6, kind: output, shape index: {0}]
  %s7 = inlined_call_operand.vmem [shape: f32[2,2,8], index: 7, kind: output, shape index: {1}]
  %8 = xla_tuple %s6, %s7
  %s9 = sld [smem:[#allocation0]]
  $region65: #{resblock_forward.6} parent=0
    _
  %s11 = ssub.s32 1, %s9
  %s12 = scalar_select 0, %s11, %s9
  loop: start=0, step=1, limit=4
  $region2: #{resblock_forward.6} parent=0 // loop_pre_header
    _
  $region3: #{resblock_forward.6} parent=0 // loop_header
    %s14 = sphi 0, %s18
    %p15 = scmp.ge.s32.totalorder %s14, 4
    %s32 = sphi 0, %s34
    %s35 = sphi 0, %s32
    %s36 = sphi 0, %s35
    %s52 = sphi 0, %s36
    %s58 = sphi 0, %s60
    %s61 = sphi 0, %s58
    %s62 = sphi 0, %s61
    %s78 = sphi 0, %s62
    %s92 = sphi 0, %s94
    %s95 = sphi 0, %s92
    %s96 = sphi 0, %s95
    %s112 = sphi 0, %s96
    %s116 = sphi 0, %s116
    %s118 = sphi 0, %s116
    %s119 = sphi 0, %s118
    %s133 = sphi 0, %s119
    %s137 = sphi 0, %s137
    %s139 = sphi 0, %s137
    %s140 = sphi 0, %s139
    %s154 = sphi 0, %s140
    %s158 = sphi 0, %s158
    %s160 = sphi 0, %s158
    %s161 = sphi 0, %s160
    %s175 = sphi 0, %s161
    %s181 = sphi 0, %s183
    %s184 = sphi 0, %s181
    %s185 = sphi 0, %s184
    %s201 = sphi 0, %s185
    %s207 = sphi 0, %s209
    %s210 = sphi 0, %s207
    %s211 = sphi 0, %s210
    %s227 = sphi 0, %s211
  $region4: #{resblock_forward.6} parent=0 // loop_header_branch
    %17 = sbr.rel (%p15) target = $region8
  $region5: #{resblock_forward.6} parent=0 // loop_body
    %s19 = ssub.s32 %s14, 1
    %s20 = ssub.s32 %s14, 2
    %s21 = sadd.s32 %s14, 1
    %s22 = smul.u32 %s14, 16
    %s23 = ssub.s32 %s22, 1
    %p24 = scmp.gt.s32.totalorder %s23, 0
    %s25 = scalar_select %p24, %s23, 0
    %s26 = smul.u32 %s21, 16
    %s27 = ssub.s32 %s26, 1
    %p28 = scmp.gt.s32.totalorder %s27, 0
    %s29 = scalar_select %p28, %s27, 0
    %s30 = ssub.s32 %s25, %s29
    %p31 = scmp.eq.s32.totalorder %s30, 0
    %s33 = sadd.s32 %s32, 1
    %s34 = scalar_select %p31, %s32, %s33
    %p37 = pneg %p31
    %p38 = scmp.eq.s32.totalorder %s14, 1
    %p39 = por %p37, %p38
    %p40 = scmp.ne.s32.totalorder %s32, %s35
    %p41 = scmp.eq.s32.totalorder %s14, 0
    %p42 = por %p40, %p41
    %p43 = scmp.ne.s32.totalorder %s32, %s35
    %p44 = scmp.eq.s32.totalorder %s19, 1
    %p45 = por %p43, %p44
    %p46 = scmp.ne.s32.totalorder %s35, %s36
    %p47 = scmp.eq.s32.totalorder %s19, 0
    %p48 = por %p46, %p47
    %p49 = scmp.ne.s32.totalorder %s35, %s36
    %p50 = scmp.eq.s32.totalorder %s20, 1
    %p51 = por %p49, %p50
    %p53 = scmp.ne.s32.totalorder %s36, %s52
    %p54 = scmp.eq.s32.totalorder %s20, 0
    %p55 = por %p53, %p54
    %s56 = ssub.s32 %s14, %s21
    %p57 = scmp.eq.s32.totalorder %s56, 0
    %s59 = sadd.s32 %s58, 1
    %s60 = scalar_select %p57, %s58, %s59
    %p63 = pneg %p57
    %p64 = scmp.eq.s32.totalorder %s14, 1
    %p65 = por %p63, %p64
    %p66 = scmp.ne.s32.totalorder %s58, %s61
    %p67 = scmp.eq.s32.totalorder %s14, 0
    %p68 = por %p66, %p67
    %p69 = scmp.ne.s32.totalorder %s58, %s61
    %p70 = scmp.eq.s32.totalorder %s19, 1
    %p71 = por %p69, %p70
    %p72 = scmp.ne.s32.totalorder %s61, %s62
    %p73 = scmp.eq.s32.totalorder %s19, 0
    %p74 = por %p72, %p73
    %p75 = scmp.ne.s32.totalorder %s61, %s62
    %p76 = scmp.eq.s32.totalorder %s20, 1
    %p77 = por %p75, %p76
    %p79 = scmp.ne.s32.totalorder %s62, %s78
    %p80 = scmp.eq.s32.totalorder %s20, 0
    %p81 = por %p79, %p80
    %s82 = smul.u32 %s14, 16
    %s83 = sadd.s32 %s82, 16
    %p84 = scmp.lt.s32.totalorder %s83, 31
    %s85 = scalar_select %p84, %s83, 31
    %s86 = smul.u32 %s21, 16
    %s87 = sadd.s32 %s86, 16
    %p88 = scmp.lt.s32.totalorder %s87, 31
    %s89 = scalar_select %p88, %s87, 31
    %s90 = ssub.s32 %s85, %s89
    %p91 = scmp.eq.s32.totalorder %s90, 0
    %s93 = sadd.s32 %s92, 1
    %s94 = scalar_select %p91, %s92, %s93
    %p97 = pneg %p91
    %p98 = scmp.eq.s32.totalorder %s14, 1
    %p99 = por %p97, %p98
    %p100 = scmp.ne.s32.totalorder %s92, %s95
    %p101 = scmp.eq.s32.totalorder %s14, 0
    %p102 = por %p100, %p101
    %p103 = scmp.ne.s32.totalorder %s92, %s95
    %p104 = scmp.eq.s32.totalorder %s19, 1
    %p105 = por %p103, %p104
    %p106 = scmp.ne.s32.totalorder %s95, %s96
    %p107 = scmp.eq.s32.totalorder %s19, 0
    %p108 = por %p106, %p107
    %p109 = scmp.ne.s32.totalorder %s95, %s96
    %p110 = scmp.eq.s32.totalorder %s20, 1
    %p111 = por %p109, %p110
    %p113 = scmp.ne.s32.totalorder %s96, %s112
    %p114 = scmp.eq.s32.totalorder %s20, 0
    %p115 = por %p113, %p114
    %s117 = sadd.s32 %s116, 1
    %p120 = scmp.eq.s32.totalorder %s14, 1
    %p121 = scmp.ne.s32.totalorder %s116, %s118
    %p122 = scmp.eq.s32.totalorder %s14, 0
    %p123 = por %p121, %p122
    %p124 = scmp.ne.s32.totalorder %s116, %s118
    %p125 = scmp.eq.s32.totalorder %s19, 1
    %p126 = por %p124, %p125
    %p127 = scmp.ne.s32.totalorder %s118, %s119
    %p128 = scmp.eq.s32.totalorder %s19, 0
    %p129 = por %p127, %p128
    %p130 = scmp.ne.s32.totalorder %s118, %s119
    %p131 = scmp.eq.s32.totalorder %s20, 1
    %p132 = por %p130, %p131
    %p134 = scmp.ne.s32.totalorder %s119, %s133
    %p135 = scmp.eq.s32.totalorder %s20, 0
    %p136 = por %p134, %p135
    %s138 = sadd.s32 %s137, 1
    %p141 = scmp.eq.s32.totalorder %s14, 1
    %p142 = scmp.ne.s32.totalorder %s137, %s139
    %p143 = scmp.eq.s32.totalorder %s14, 0
    %p144 = por %p142, %p143
    %p145 = scmp.ne.s32.totalorder %s137, %s139
    %p146 = scmp.eq.s32.totalorder %s19, 1
    %p147 = por %p145, %p146
    %p148 = scmp.ne.s32.totalorder %s139, %s140
    %p149 = scmp.eq.s32.totalorder %s19, 0
    %p150 = por %p148, %p149
    %p151 = scmp.ne.s32.totalorder %s139, %s140
    %p152 = scmp.eq.s32.totalorder %s20, 1
    %p153 = por %p151, %p152
    %p155 = scmp.ne.s32.totalorder %s140, %s154
    %p156 = scmp.eq.s32.totalorder %s20, 0
    %p157 = por %p155, %p156
    %s159 = sadd.s32 %s158, 1
    %p162 = scmp.eq.s32.totalorder %s14, 1
    %p163 = scmp.ne.s32.totalorder %s158, %s160
    %p164 = scmp.eq.s32.totalorder %s14, 0
    %p165 = por %p163, %p164
    %p166 = scmp.ne.s32.totalorder %s158, %s160
    %p167 = scmp.eq.s32.totalorder %s19, 1
    %p168 = por %p166, %p167
    %p169 = scmp.ne.s32.totalorder %s160, %s161
    %p170 = scmp.eq.s32.totalorder %s19, 0
    %p171 = por %p169, %p170
    %p172 = scmp.ne.s32.totalorder %s160, %s161
    %p173 = scmp.eq.s32.totalorder %s20, 1
    %p174 = por %p172, %p173
    %p176 = scmp.ne.s32.totalorder %s161, %s175
    %p177 = scmp.eq.s32.totalorder %s20, 0
    %p178 = por %p176, %p177
    %s179 = ssub.s32 %s14, %s21
    %p180 = scmp.eq.s32.totalorder %s179, 0
    %s182 = sadd.s32 %s181, 1
    %s183 = scalar_select %p180, %s181, %s182
    %p186 = pneg %p180
    %p187 = scmp.eq.s32.totalorder %s14, 1
    %p188 = por %p186, %p187
    %p189 = scmp.ne.s32.totalorder %s181, %s184
    %p190 = scmp.eq.s32.totalorder %s14, 0
    %p191 = por %p189, %p190
    %p192 = scmp.ne.s32.totalorder %s181, %s184
    %p193 = scmp.eq.s32.totalorder %s19, 1
    %p194 = por %p192, %p193
    %p195 = scmp.ne.s32.totalorder %s184, %s185
    %p196 = scmp.eq.s32.totalorder %s19, 0
    %p197 = por %p195, %p196
    %p198 = scmp.ne.s32.totalorder %s184, %s185
    %p199 = scmp.eq.s32.totalorder %s20, 1
    %p200 = por %p198, %p199
    %p202 = scmp.ne.s32.totalorder %s185, %s201
    %p203 = scmp.eq.s32.totalorder %s20, 0
    %p204 = por %p202, %p203
    %s205 = ssub.s32 %s14, %s21
    %p206 = scmp.eq.s32.totalorder %s205, 0
    %s208 = sadd.s32 %s207, 1
    %s209 = scalar_select %p206, %s207, %s208
    %p212 = pneg %p206
    %p213 = scmp.eq.s32.totalorder %s14, 1
    %p214 = por %p212, %p213
    %p215 = scmp.ne.s32.totalorder %s207, %s210
    %p216 = scmp.eq.s32.totalorder %s14, 0
    %p217 = por %p215, %p216
    %p218 = scmp.ne.s32.totalorder %s207, %s210
    %p219 = scmp.eq.s32.totalorder %s19, 1
    %p220 = por %p218, %p219
    %p221 = scmp.ne.s32.totalorder %s210, %s211
    %p222 = scmp.eq.s32.totalorder %s19, 0
    %p223 = por %p221, %p222
    %p224 = scmp.ne.s32.totalorder %s210, %s211
    %p225 = scmp.eq.s32.totalorder %s20, 1
    %p226 = por %p224, %p225
    %p228 = scmp.ne.s32.totalorder %s211, %s227
    %p229 = scmp.eq.s32.totalorder %s20, 0
    %p230 = por %p228, %p229
    %p231 = scmp.le.s32.totalorder 1, %s14
    %p232 = scmp.lt.s32.totalorder %s14, 3
    %p233 = pnand %p231, %p232
    %p234 = pneg %p233
    // Predicated region
    $region9: #{resblock_forward.6} parent=5 // pred_check
      _
    $region10: #{resblock_forward.6} parent=5 // pred_check_branch
      %236 = sbr.rel (%p233) target = $region12
    $region11: #{resblock_forward.6} parent=5 // pred_region
      %s237 = ssub.s32 %s14, 1
      // Predicated region
      $region13: #{resblock_forward.6} parent=11 // pred_check
        %p238 = pneg %p129
      $region14: #{resblock_forward.6} parent=11 // pred_check_branch
        %240 = sbr.rel (%p238) target = $region16
      $region15: #{resblock_forward.6} parent=11 // pred_region
        _
      $region16: #{resblock_forward.6} parent=11 // pred_fallthru
        _
      // Predicated region
      $region17: #{resblock_forward.6} parent=11 // pred_check
        %p241 = pneg %p150
      $region18: #{resblock_forward.6} parent=11 // pred_check_branch
        %243 = sbr.rel (%p241) target = $region20
      $region19: #{resblock_forward.6} parent=11 // pred_region
        _
      $region20: #{resblock_forward.6} parent=11 // pred_fallthru
        _
      // Predicated region
      $region21: #{resblock_forward.6} parent=11 // pred_check
        %p244 = pneg %p171
      $region22: #{resblock_forward.6} parent=11 // pred_check_branch
        %246 = sbr.rel (%p244) target = $region24
      $region23: #{resblock_forward.6} parent=11 // pred_region
        _
      $region24: #{resblock_forward.6} parent=11 // pred_fallthru
        _
    $region12: #{resblock_forward.6} parent=5 // pred_fallthru
      _
    %p247 = scmp.lt.s32.totalorder %s14, 2
    // Predicated region
    $region25: #{resblock_forward.6} parent=5 // pred_check
      %p248 = pneg %p247
    $region26: #{resblock_forward.6} parent=5 // pred_check_branch
      %250 = sbr.rel (%p248) target = $region28
    $region27: #{resblock_forward.6} parent=5 // pred_region
      // Predicated region
      $region29: #{resblock_forward.6} parent=27 // pred_check
        %p251 = pneg %p42
      $region30: #{resblock_forward.6} parent=27 // pred_check_branch
        %253 = sbr.rel (%p251) target = $region32
      $region31: #{resblock_forward.6} parent=27 // pred_region
        %s254 = smul.u32 %s14, 16
        %s255 = ssub.s32 %s254, 1
        %p256 = scmp.gt.s32.totalorder %s255, 0
        %s257 = scalar_select %p256, %s255, 0
        %p258 = scmp.lt.s32.totalorder %s257, 31
        %s259 = scalar_select %p258, %s257, 31
        %s260 = smul.addr %s259, 2
        %s261 = smul.addr %s260, 8
        %s262 = scalar_lea.vmem %s0, %s261
        %s263 = smul.u32 %s14, 16
        %s264 = ssub.s32 %s263, 1
        %p265 = scmp.gt.s32.totalorder %s264, 0
        %s266 = scalar_select %p265, %s264, 0
      $region32: #{resblock_forward.6} parent=27 // pred_fallthru
        _
      // Predicated region
      $region33: #{resblock_forward.6} parent=27 // pred_check
        %p267 = pneg %p68
      $region34: #{resblock_forward.6} parent=27 // pred_check_branch
        %269 = sbr.rel (%p267) target = $region36
      $region35: #{resblock_forward.6} parent=27 // pred_region
        %s270 = smul.u32 16, %s14
        %p271 = scmp.lt.s32.totalorder %s270, 31
        %s272 = scalar_select %p271, %s270, 31
        %s273 = smul.addr %s272, 2
        %s274 = smul.addr %s273, 8
        %s275 = scalar_lea.vmem %s1, %s274
        %s276 = smul.u32 16, %s14
      $region36: #{resblock_forward.6} parent=27 // pred_fallthru
        _
      // Predicated region
      $region37: #{resblock_forward.6} parent=27 // pred_check
        %p277 = pneg %p102
      $region38: #{resblock_forward.6} parent=27 // pred_check_branch
        %279 = sbr.rel (%p277) target = $region40
      $region39: #{resblock_forward.6} parent=27 // pred_region
        %s280 = smul.u32 %s14, 16
        %s281 = sadd.s32 %s280, 16
        %p282 = scmp.lt.s32.totalorder %s281, 31
        %s283 = scalar_select %p282, %s281, 31
        %p284 = scmp.lt.s32.totalorder %s283, 31
        %s285 = scalar_select %p284, %s283, 31
        %s286 = smul.addr %s285, 2
        %s287 = smul.addr %s286, 8
        %s288 = scalar_lea.vmem %s2, %s287
        %s289 = smul.u32 %s14, 16
        %s290 = sadd.s32 %s289, 16
        %p291 = scmp.lt.s32.totalorder %s290, 31
        %s292 = scalar_select %p291, %s290, 31
      $region40: #{resblock_forward.6} parent=27 // pred_fallthru
        _
    $region28: #{resblock_forward.6} parent=5 // pred_fallthru
      _
    %p293 = scmp.le.s32.totalorder 1, %s14
    %p294 = scmp.lt.s32.totalorder %s14, 3
    %p295 = pnand %p293, %p294
    %p296 = pneg %p295
    // Predicated region
    $region41: #{resblock_forward.6} parent=5 // pred_check
      _
    $region42: #{resblock_forward.6} parent=5 // pred_check_branch
      %298 = sbr.rel (%p295) target = $region44
    $region43: #{resblock_forward.6} parent=5 // pred_region
      %s299 = ssub.s32 %s14, 1
      %s300 = smul.u32 %s19, 16
      %s301 = ssub.s32 %s300, 1
      %p302 = scmp.gt.s32.totalorder %s301, 0
      %s303 = scalar_select %p302, %s301, 0
      %p304 = scmp.lt.s32.totalorder %s303, 31
      %s305 = scalar_select %p304, %s303, 31
      %s306 = smul.addr %s305, 2
      %s307 = smul.addr %s306, 8
      %s308 = scalar_lea.vmem %s0, %s307
      %p309 = pneg %p48
      %p310 = pneg %p45
      %s311 = smul.u32 16, %s19
      %p312 = scmp.lt.s32.totalorder %s311, 31
      %s313 = scalar_select %p312, %s311, 31
      %s314 = smul.addr %s313, 2
      %s315 = smul.addr %s314, 8
      %s316 = scalar_lea.vmem %s1, %s315
      %p317 = pneg %p74
      %p318 = pneg %p71
      %s319 = smul.u32 %s19, 16
      %s320 = sadd.s32 %s319, 16
      %p321 = scmp.lt.s32.totalorder %s320, 31
      %s322 = scalar_select %p321, %s320, 31
      %p323 = scmp.lt.s32.totalorder %s322, 31
      %s324 = scalar_select %p323, %s322, 31
      %s325 = smul.addr %s324, 2
      %s326 = smul.addr %s325, 8
      %s327 = scalar_lea.vmem %s2, %s326
      %p328 = pneg %p108
      %p329 = pneg %p105
      %p330 = pneg %p129
      %p331 = pneg %p126
      %p332 = pneg %p150
      %p333 = pneg %p147
      %p334 = pneg %p171
      %p335 = pneg %p168
      %p336 = pneg %p197
      %p337 = pneg %p194
      %s338 = smul.u32 16, %s19
      %p339 = scmp.lt.s32.totalorder %s338, 31
      %s340 = scalar_select %p339, %s338, 31
      %s341 = smul.addr %s340, 2
      %s342 = smul.addr %s341, 4
      %s343 = scalar_lea.vmem %s6, %s342
      %p344 = pneg %p223
      %p345 = pneg %p220
      %p346 = scmp.lt.s32.totalorder %s19, 1
      %s347 = scalar_select %p346, %s19, 1
      %s348 = smul.addr %s347, 2
      %s349 = scalar_lea.vmem %s7, %s348
      %s350 = smul.u32 %s19, 16
      %s351 = ssub.s32 %s350, 1
      %p352 = scmp.gt.s32.totalorder %s351, 0
      %s353 = scalar_select %p352, %s351, 0
      %p354 = scmp.lt.s32.totalorder %s353, 31
      %s355 = scalar_select %p354, %s353, 31
      %s356 = smul.addr %s355, 2
      %s357 = smul.addr %s356, 8
      %s358 = scalar_lea.vmem %s0, %s357
      %s359 = smul.u32 %s19, 16
      %s360 = ssub.s32 %s359, 1
      %p361 = scmp.gt.s32.totalorder %s360, 0
      %s362 = scalar_select %p361, %s360, 0
      %s363 = smul.u32 16, %s19
      %p364 = scmp.lt.s32.totalorder %s363, 31
      %s365 = scalar_select %p364, %s363, 31
      %s366 = smul.addr %s365, 2
      %s367 = smul.addr %s366, 8
      %s368 = scalar_lea.vmem %s1, %s367
      %s369 = smul.u32 16, %s19
      %s370 = smul.u32 %s19, 16
      %s371 = sadd.s32 %s370, 16
      %p372 = scmp.lt.s32.totalorder %s371, 31
      %s373 = scalar_select %p372, %s371, 31
      %p374 = scmp.lt.s32.totalorder %s373, 31
      %s375 = scalar_select %p374, %s373, 31
      %s376 = smul.addr %s375, 2
      %s377 = smul.addr %s376, 8
      %s378 = scalar_lea.vmem %s2, %s377
      %s379 = smul.u32 %s19, 16
      %s380 = sadd.s32 %s379, 16
      %p381 = scmp.lt.s32.totalorder %s380, 31
      %s382 = scalar_select %p381, %s380, 31
      %s383 = smul.u32 16, %s19
      %p384 = scmp.lt.s32.totalorder %s383, 31
      %s385 = scalar_select %p384, %s383, 31
      %s386 = smul.addr %s385, 2
      %s387 = smul.addr %s386, 4
      %s388 = scalar_lea.vmem %s6, %s387
      %s389 = smul.u32 16, %s19
      %p390 = scmp.lt.s32.totalorder %s19, 1
      %s391 = scalar_select %p390, %s19, 1
      %s392 = smul.addr %s391, 2
      %s393 = scalar_lea.vmem %s7, %s392
      %v395 = vld [vmem:[%s358] sm:$0xff]
      %v396 = vld [vmem:[%s358 + $0x8] sm:$0xff]
      %v397 = vld [vmem:[%s368] sm:$0xff]
      %v398 = vld [vmem:[%s368 + $0x8] sm:$0xff]
      %v399 = vld [vmem:[%s368 + $0x10] sm:$0xff]
      %v400 = vld [vmem:[%s368 + $0x18] sm:$0xff]
      %v401 = vld [vmem:[%s368 + $0x20] sm:$0xff]
      %v402 = vld [vmem:[%s368 + $0x28] sm:$0xff]
      %v403 = vld [vmem:[%s368 + $0x30] sm:$0xff]
      %v404 = vld [vmem:[%s368 + $0x38] sm:$0xff]
      %v405 = vld [vmem:[%s368 + $0x40] sm:$0xff]
      %v406 = vld [vmem:[%s368 + $0x48] sm:$0xff]
      %v407 = vld [vmem:[%s368 + $0x50] sm:$0xff]
      %v408 = vld [vmem:[%s368 + $0x58] sm:$0xff]
      %v409 = vld [vmem:[%s368 + $0x60] sm:$0xff]
      %v410 = vld [vmem:[%s368 + $0x68] sm:$0xff]
      %v411 = vld [vmem:[%s368 + $0x70] sm:$0xff]
      %v412 = vld [vmem:[%s368 + $0x78] sm:$0xff]
      %v413 = vld [vmem:[%s368 + $0x80] sm:$0xff]
      %v414 = vld [vmem:[%s368 + $0x88] sm:$0xff]
      %v415 = vld [vmem:[%s368 + $0x90] sm:$0xff]
      %v416 = vld [vmem:[%s368 + $0x98] sm:$0xff]
      %v417 = vld [vmem:[%s368 + $0xa0] sm:$0xff]
      %v418 = vld [vmem:[%s368 + $0xa8] sm:$0xff]
      %v419 = vld [vmem:[%s368 + $0xb0] sm:$0xff]
      %v420 = vld [vmem:[%s368 + $0xb8] sm:$0xff]
      %v421 = vld [vmem:[%s368 + $0xc0] sm:$0xff]
      %v422 = vld [vmem:[%s368 + $0xc8] sm:$0xff]
      %v423 = vld [vmem:[%s368 + $0xd0] sm:$0xff]
      %v424 = vld [vmem:[%s368 + $0xd8] sm:$0xff]
      %v425 = vld [vmem:[%s368 + $0xe0] sm:$0xff]
      %v426 = vld [vmem:[%s368 + $0xe8] sm:$0xff]
      %v427 = vld [vmem:[%s368 + $0xf0] sm:$0xff]
      %v428 = vld [vmem:[%s368 + $0xf8] sm:$0xff]
      %v429 = vld [vmem:[%s378] sm:$0xff]
      %v430 = vld [vmem:[%s378 + $0x8] sm:$0xff]
      %v431 = vld [vmem:[%s3] sm:$0xf]
      %v432 = vpack.c.bf16 %v396, %v395
      %v433 = vpack.c.bf16 %v398, %v397
      %v434 = vpack.c.bf16 %v400, %v399
      %v435 = vpack.c.bf16 %v402, %v401
      %v436 = vpack.c.bf16 %v404, %v403
      %v437 = vpack.c.bf16 %v406, %v405
      %v438 = vpack.c.bf16 %v408, %v407
      %v439 = vpack.c.bf16 %v410, %v409
      %v440 = vpack.c.bf16 %v412, %v411
      %v441 = vpack.c.bf16 %v414, %v413
      %v442 = vpack.c.bf16 %v416, %v415
      %v443 = vpack.c.bf16 %v418, %v417
      %v444 = vpack.c.bf16 %v420, %v419
      %v445 = vpack.c.bf16 %v422, %v421
      %v446 = vpack.c.bf16 %v424, %v423
      %v447 = vpack.c.bf16 %v426, %v425
      %v448 = vpack.c.bf16 %v428, %v427
      %v449 = vpack.c.bf16 %v430, %v429
      %vm450 = vcmask 64512
      %v452 = vsel %vm450, %v432, 0
      %v455 = vsel %vm450, %v433, 0
      %v458 = vsel %vm450, %v434, 0
      %v461 = vsel %vm450, %v435, 0
      %v464 = vsel %vm450, %v436, 0
      %v467 = vsel %vm450, %v437, 0
      %v470 = vsel %vm450, %v438, 0
      %v473 = vsel %vm450, %v439, 0
      %v476 = vsel %vm450, %v440, 0
      %v479 = vsel %vm450, %v441, 0
      %v482 = vsel %vm450, %v442, 0
      %v485 = vsel %vm450, %v443, 0
      %v488 = vsel %vm450, %v444, 0
      %v491 = vsel %vm450, %v445, 0
      %v494 = vsel %vm450, %v446, 0
      %v497 = vsel %vm450, %v447, 0
      %v500 = vsel %vm450, %v448, 0
      %v503 = vsel %vm450, %v449, 0
      %vm505 = vcmask 1043456
      %v507 = vsel %vm505, %v431, 0
      %509 = vmatpush.bf16.msra.mxu0 0
      %510 = vmatpush.bf16.msra.mxu0 0
      %511 = vmatpush.bf16.msra.mxu0 0
      %512 = vmatpush.bf16.msra.mxu0 0
      %513 = vmatpush.bf16.msra.mxu0 0
      %514 = vmatpush.bf16.msra.mxu0 0
      %515 = vmatpush.bf16.msra.mxu0 0
      %516 = vmatpush.bf16.msra.mxu0 %v507
      %517 = vmatmul.bf16.gmra.mxu0 %v452
      %v518 = vpop.f32.mrf.mxu0
      %v519 = vadd.f32 0.0, %v518
      %v520 = vpop.f32.mrf.mxu0
      %v521 = vadd.f32 0.0, %v520
      %522 = vmatmul.bf16.gmra.mxu0 %v455
      %v523 = vpop.f32.mrf.mxu0
      %v524 = vadd.f32 0.0, %v523
      %v525 = vpop.f32.mrf.mxu0
      %v526 = vadd.f32 0.0, %v525
      %527 = vmatmul.bf16.gmra.mxu0 %v458
      %v528 = vpop.f32.mrf.mxu0
      %v529 = vadd.f32 0.0, %v528
      %v530 = vpop.f32.mrf.mxu0
      %v531 = vadd.f32 0.0, %v530
      %532 = vmatmul.bf16.gmra.mxu0 %v461
      %v533 = vpop.f32.mrf.mxu0
      %v534 = vadd.f32 0.0, %v533
      %v535 = vpop.f32.mrf.mxu0
      %v536 = vadd.f32 0.0, %v535
      %537 = vmatmul.bf16.gmra.mxu0 %v464
      %v538 = vpop.f32.mrf.mxu0
      %v539 = vadd.f32 0.0, %v538
      %v540 = vpop.f32.mrf.mxu0
      %v541 = vadd.f32 0.0, %v540
      %542 = vmatmul.bf16.gmra.mxu0 %v467
      %v543 = vpop.f32.mrf.mxu0
      %v544 = vadd.f32 0.0, %v543
      %v545 = vpop.f32.mrf.mxu0
      %v546 = vadd.f32 0.0, %v545
      %547 = vmatmul.bf16.gmra.mxu0 %v470
      %v548 = vpop.f32.mrf.mxu0
      %v549 = vadd.f32 0.0, %v548
      %v550 = vpop.f32.mrf.mxu0
      %v551 = vadd.f32 0.0, %v550
      %552 = vmatmul.bf16.gmra.mxu0 %v473
      %v553 = vpop.f32.mrf.mxu0
      %v554 = vadd.f32 0.0, %v553
      %v555 = vpop.f32.mrf.mxu0
      %v556 = vadd.f32 0.0, %v555
      %557 = vmatmul.bf16.gmra.mxu0 %v476
      %v558 = vpop.f32.mrf.mxu0
      %v559 = vadd.f32 0.0, %v558
      %v560 = vpop.f32.mrf.mxu0
      %v561 = vadd.f32 0.0, %v560
      %562 = vmatmul.bf16.gmra.mxu0 %v479
      %v563 = vpop.f32.mrf.mxu0
      %v564 = vadd.f32 0.0, %v563
      %v565 = vpop.f32.mrf.mxu0
      %v566 = vadd.f32 0.0, %v565
      %567 = vmatmul.bf16.gmra.mxu0 %v482
      %v568 = vpop.f32.mrf.mxu0
      %v569 = vadd.f32 0.0, %v568
      %v570 = vpop.f32.mrf.mxu0
      %v571 = vadd.f32 0.0, %v570
      %572 = vmatmul.bf16.gmra.mxu0 %v485
      %v573 = vpop.f32.mrf.mxu0
      %v574 = vadd.f32 0.0, %v573
      %v575 = vpop.f32.mrf.mxu0
      %v576 = vadd.f32 0.0, %v575
      %577 = vmatmul.bf16.gmra.mxu0 %v488
      %v578 = vpop.f32.mrf.mxu0
      %v579 = vadd.f32 0.0, %v578
      %v580 = vpop.f32.mrf.mxu0
      %v581 = vadd.f32 0.0, %v580
      %582 = vmatmul.bf16.gmra.mxu0 %v491
      %v583 = vpop.f32.mrf.mxu0
      %v584 = vadd.f32 0.0, %v583
      %v585 = vpop.f32.mrf.mxu0
      %v586 = vadd.f32 0.0, %v585
      %587 = vmatmul.bf16.gmra.mxu0 %v494
      %v588 = vpop.f32.mrf.mxu0
      %v589 = vadd.f32 0.0, %v588
      %v590 = vpop.f32.mrf.mxu0
      %v591 = vadd.f32 0.0, %v590
      %592 = vmatmul.bf16.gmra.mxu0 %v497
      %v593 = vpop.f32.mrf.mxu0
      %v594 = vadd.f32 0.0, %v593
      %v595 = vpop.f32.mrf.mxu0
      %v596 = vadd.f32 0.0, %v595
      %597 = vmatmul.bf16.gmra.mxu0 %v500
      %v598 = vpop.f32.mrf.mxu0
      %v599 = vadd.f32 0.0, %v598
      %v600 = vpop.f32.mrf.mxu0
      %v601 = vadd.f32 0.0, %v600
      %602 = vmatmul.bf16.gmra.mxu0 %v503
      %v603 = vpop.f32.mrf.mxu0
      %v604 = vadd.f32 0.0, %v603
      %v605 = vpop.f32.mrf.mxu0
      %v606 = vadd.f32 0.0, %v605
      %607 = vdwg.mxu0
      %v608 = vld [vmem:[%s4] sm:$0x1]
      %v609 = vperm.slane %v608, 0
      %v610 = vmul.f32 %v519, %v609
      %v611 = vmul.f32 %v521, %v609
      %v612 = vmul.f32 %v524, %v609
      %v613 = vmul.f32 %v526, %v609
      %v614 = vmul.f32 %v529, %v609
      %v615 = vmul.f32 %v531, %v609
      %v616 = vmul.f32 %v534, %v609
      %v617 = vmul.f32 %v536, %v609
      %v618 = vmul.f32 %v539, %v609
      %v619 = vmul.f32 %v541, %v609
      %v620 = vmul.f32 %v544, %v609
      %v621 = vmul.f32 %v546, %v609
      %v622 = vmul.f32 %v549, %v609
      %v623 = vmul.f32 %v551, %v609
      %v624 = vmul.f32 %v554, %v609
      %v625 = vmul.f32 %v556, %v609
      %v626 = vmul.f32 %v559, %v609
      %v627 = vmul.f32 %v561, %v609
      %v628 = vmul.f32 %v564, %v609
      %v629 = vmul.f32 %v566, %v609
      %v630 = vmul.f32 %v569, %v609
      %v631 = vmul.f32 %v571, %v609
      %v632 = vmul.f32 %v574, %v609
      %v633 = vmul.f32 %v576, %v609
      %v634 = vmul.f32 %v579, %v609
      %v635 = vmul.f32 %v581, %v609
      %v636 = vmul.f32 %v584, %v609
      %v637 = vmul.f32 %v586, %v609
      %v638 = vmul.f32 %v589, %v609
      %v639 = vmul.f32 %v591, %v609
      %v640 = vmul.f32 %v594, %v609
      %v641 = vmul.f32 %v596, %v609
      %v642 = vmul.f32 %v599, %v609
      %v643 = vmul.f32 %v601, %v609
      %v644 = vmul.f32 %v604, %v609
      %v645 = vmul.f32 %v606, %v609
      %v646 = vld [vmem:[%s4 + $0x1] sm:$0x1]
      %v647 = vperm.slane %v646, 0
      %v648 = vadd.f32 %v610, %v647
      %v649 = vadd.f32 %v611, %v647
      %v650 = vadd.f32 %v612, %v647
      %v651 = vadd.f32 %v613, %v647
      %v652 = vadd.f32 %v614, %v647
      %v653 = vadd.f32 %v615, %v647
      %v654 = vadd.f32 %v616, %v647
      %v655 = vadd.f32 %v617, %v647
      %v656 = vadd.f32 %v618, %v647
      %v657 = vadd.f32 %v619, %v647
      %v658 = vadd.f32 %v620, %v647
      %v659 = vadd.f32 %v621, %v647
      %v660 = vadd.f32 %v622, %v647
      %v661 = vadd.f32 %v623, %v647
      %v662 = vadd.f32 %v624, %v647
      %v663 = vadd.f32 %v625, %v647
      %v664 = vadd.f32 %v626, %v647
      %v665 = vadd.f32 %v627, %v647
      %v666 = vadd.f32 %v628, %v647
      %v667 = vadd.f32 %v629, %v647
      %v668 = vadd.f32 %v630, %v647
      %v669 = vadd.f32 %v631, %v647
      %v670 = vadd.f32 %v632, %v647
      %v671 = vadd.f32 %v633, %v647
      %v672 = vadd.f32 %v634, %v647
      %v673 = vadd.f32 %v635, %v647
      %v674 = vadd.f32 %v636, %v647
      %v675 = vadd.f32 %v637, %v647
      %v676 = vadd.f32 %v638, %v647
      %v677 = vadd.f32 %v639, %v647
      %v678 = vadd.f32 %v640, %v647
      %v679 = vadd.f32 %v641, %v647
      %v680 = vadd.f32 %v642, %v647
      %v681 = vadd.f32 %v643, %v647
      %v682 = vadd.f32 %v644, %v647
      %v683 = vadd.f32 %v645, %v647
      %v684 = vmin.f32 %v648, 20.0
      %v685 = vmin.f32 %v649, 20.0
      %v686 = vmin.f32 %v650, 20.0
      %v687 = vmin.f32 %v651, 20.0
      %v688 = vmin.f32 %v652, 20.0
      %v689 = vmin.f32 %v653, 20.0
      %v690 = vmin.f32 %v654, 20.0
      %v691 = vmin.f32 %v655, 20.0
      %v692 = vmin.f32 %v656, 20.0
      %v693 = vmin.f32 %v657, 20.0
      %v694 = vmin.f32 %v658, 20.0
      %v695 = vmin.f32 %v659, 20.0
      %v696 = vmin.f32 %v660, 20.0
      %v697 = vmin.f32 %v661, 20.0
      %v698 = vmin.f32 %v662, 20.0
      %v699 = vmin.f32 %v663, 20.0
      %v700 = vmin.f32 %v664, 20.0
      %v701 = vmin.f32 %v665, 20.0
      %v702 = vmin.f32 %v666, 20.0
      %v703 = vmin.f32 %v667, 20.0
      %v704 = vmin.f32 %v668, 20.0
      %v705 = vmin.f32 %v669, 20.0
      %v706 = vmin.f32 %v670, 20.0
      %v707 = vmin.f32 %v671, 20.0
      %v708 = vmin.f32 %v672, 20.0
      %v709 = vmin.f32 %v673, 20.0
      %v710 = vmin.f32 %v674, 20.0
      %v711 = vmin.f32 %v675, 20.0
      %v712 = vmin.f32 %v676, 20.0
      %v713 = vmin.f32 %v677, 20.0
      %v714 = vmin.f32 %v678, 20.0
      %v715 = vmin.f32 %v679, 20.0
      %v716 = vmin.f32 %v680, 20.0
      %v717 = vmin.f32 %v681, 20.0
      %v718 = vmin.f32 %v682, 20.0
      %v719 = vmin.f32 %v683, 20.0
      %v720 = vmul.f32 %v684, 1.442695
      %v721 = vpow.pop %v720
      %v722 = vmul.f32 %v685, 1.442695
      %v723 = vpow.pop %v722
      %v724 = vmul.f32 %v686, 1.442695
      %v725 = vpow.pop %v724
      %v726 = vmul.f32 %v687, 1.442695
      %v727 = vpow.pop %v726
      %v728 = vmul.f32 %v688, 1.442695
      %v729 = vpow.pop %v728
      %v730 = vmul.f32 %v689, 1.442695
      %v731 = vpow.pop %v730
      %v732 = vmul.f32 %v690, 1.442695
      %v733 = vpow.pop %v732
      %v734 = vmul.f32 %v691, 1.442695
      %v735 = vpow.pop %v734
      %v736 = vmul.f32 %v692, 1.442695
      %v737 = vpow.pop %v736
      %v738 = vmul.f32 %v693, 1.442695
      %v739 = vpow.pop %v738
      %v740 = vmul.f32 %v694, 1.442695
      %v741 = vpow.pop %v740
      %v742 = vmul.f32 %v695, 1.442695
      %v743 = vpow.pop %v742
      %v744 = vmul.f32 %v696, 1.442695
      %v745 = vpow.pop %v744
      %v746 = vmul.f32 %v697, 1.442695
      %v747 = vpow.pop %v746
      %v748 = vmul.f32 %v698, 1.442695
      %v749 = vpow.pop %v748
      %v750 = vmul.f32 %v699, 1.442695
      %v751 = vpow.pop %v750
      %v752 = vmul.f32 %v700, 1.442695
      %v753 = vpow.pop %v752
      %v754 = vmul.f32 %v701, 1.442695
      %v755 = vpow.pop %v754
      %v756 = vmul.f32 %v702, 1.442695
      %v757 = vpow.pop %v756
      %v758 = vmul.f32 %v703, 1.442695
      %v759 = vpow.pop %v758
      %v760 = vmul.f32 %v704, 1.442695
      %v761 = vpow.pop %v760
      %v762 = vmul.f32 %v705, 1.442695
      %v763 = vpow.pop %v762
      %v764 = vmul.f32 %v706, 1.442695
      %v765 = vpow.pop %v764
      %v766 = vmul.f32 %v707, 1.442695
      %v767 = vpow.pop %v766
      %v768 = vmul.f32 %v708, 1.442695
      %v769 = vpow.pop %v768
      %v770 = vmul.f32 %v709, 1.442695
      %v771 = vpow.pop %v770
      %v772 = vmul.f32 %v710, 1.442695
      %v773 = vpow.pop %v772
      %v774 = vmul.f32 %v711, 1.442695
      %v775 = vpow.pop %v774
      %v776 = vmul.f32 %v712, 1.442695
      %v777 = vpow.pop %v776
      %v778 = vmul.f32 %v713, 1.442695
      %v779 = vpow.pop %v778
      %v780 = vmul.f32 %v714, 1.442695
      %v781 = vpow.pop %v780
      %v782 = vmul.f32 %v715, 1.442695
      %v783 = vpow.pop %v782
      %v784 = vmul.f32 %v716, 1.442695
      %v785 = vpow.pop %v784
      %v786 = vmul.f32 %v717, 1.442695
      %v787 = vpow.pop %v786
      %v788 = vmul.f32 %v718, 1.442695
      %v789 = vpow.pop %v788
      %v790 = vmul.f32 %v719, 1.442695
      %v791 = vpow.pop %v790
      %v792 = vadd.f32 %v721, 2.0
      %v793 = vadd.f32 %v723, 2.0
      %v794 = vadd.f32 %v725, 2.0
      %v795 = vadd.f32 %v727, 2.0
      %v796 = vadd.f32 %v729, 2.0
      %v797 = vadd.f32 %v731, 2.0
      %v798 = vadd.f32 %v733, 2.0
      %v799 = vadd.f32 %v735, 2.0
      %v800 = vadd.f32 %v737, 2.0
      %v801 = vadd.f32 %v739, 2.0
      %v802 = vadd.f32 %v741, 2.0
      %v803 = vadd.f32 %v743, 2.0
      %v804 = vadd.f32 %v745, 2.0
      %v805 = vadd.f32 %v747, 2.0
      %v806 = vadd.f32 %v749, 2.0
      %v807 = vadd.f32 %v751, 2.0
      %v808 = vadd.f32 %v753, 2.0
      %v809 = vadd.f32 %v755, 2.0
      %v810 = vadd.f32 %v757, 2.0
      %v811 = vadd.f32 %v759, 2.0
      %v812 = vadd.f32 %v761, 2.0
      %v813 = vadd.f32 %v763, 2.0
      %v814 = vadd.f32 %v765, 2.0
      %v815 = vadd.f32 %v767, 2.0
      %v816 = vadd.f32 %v769, 2.0
      %v817 = vadd.f32 %v771, 2.0
      %v818 = vadd.f32 %v773, 2.0
      %v819 = vadd.f32 %v775, 2.0
      %v820 = vadd.f32 %v777, 2.0
      %v821 = vadd.f32 %v779, 2.0
      %v822 = vadd.f32 %v781, 2.0
      %v823 = vadd.f32 %v783, 2.0
      %v824 = vadd.f32 %v785, 2.0
      %v825 = vadd.f32 %v787, 2.0
      %v826 = vadd.f32 %v789, 2.0
      %v827 = vadd.f32 %v791, 2.0
      %v828 = vmul.f32 %v721, %v792
      %v829 = vmul.f32 %v723, %v793
      %v830 = vmul.f32 %v725, %v794
      %v831 = vmul.f32 %v727, %v795
      %v832 = vmul.f32 %v729, %v796
      %v833 = vmul.f32 %v731, %v797
      %v834 = vmul.f32 %v733, %v798
      %v835 = vmul.f32 %v735, %v799
      %v836 = vmul.f32 %v737, %v800
      %v837 = vmul.f32 %v739, %v801
      %v838 = vmul.f32 %v741, %v802
      %v839 = vmul.f32 %v743, %v803
      %v840 = vmul.f32 %v745, %v804
      %v841 = vmul.f32 %v747, %v805
      %v842 = vmul.f32 %v749, %v806
      %v843 = vmul.f32 %v751, %v807
      %v844 = vmul.f32 %v753, %v808
      %v845 = vmul.f32 %v755, %v809
      %v846 = vmul.f32 %v757, %v810
      %v847 = vmul.f32 %v759, %v811
      %v848 = vmul.f32 %v761, %v812
      %v849 = vmul.f32 %v763, %v813
      %v850 = vmul.f32 %v765, %v814
      %v851 = vmul.f32 %v767, %v815
      %v852 = vmul.f32 %v769, %v816
      %v853 = vmul.f32 %v771, %v817
      %v854 = vmul.f32 %v773, %v818
      %v855 = vmul.f32 %v775, %v819
      %v856 = vmul.f32 %v777, %v820
      %v857 = vmul.f32 %v779, %v821
      %v858 = vmul.f32 %v781, %v822
      %v859 = vmul.f32 %v783, %v823
      %v860 = vmul.f32 %v785, %v824
      %v861 = vmul.f32 %v787, %v825
      %v862 = vmul.f32 %v789, %v826
      %v863 = vmul.f32 %v791, %v827
      %v864 = vmul.f32 %v648, %v828
      %v865 = vmul.f32 %v649, %v829
      %v866 = vmul.f32 %v650, %v830
      %v867 = vmul.f32 %v651, %v831
      %v868 = vmul.f32 %v652, %v832
      %v869 = vmul.f32 %v653, %v833
      %v870 = vmul.f32 %v654, %v834
      %v871 = vmul.f32 %v655, %v835
      %v872 = vmul.f32 %v656, %v836
      %v873 = vmul.f32 %v657, %v837
      %v874 = vmul.f32 %v658, %v838
      %v875 = vmul.f32 %v659, %v839
      %v876 = vmul.f32 %v660, %v840
      %v877 = vmul.f32 %v661, %v841
      %v878 = vmul.f32 %v662, %v842
      %v879 = vmul.f32 %v663, %v843
      %v880 = vmul.f32 %v664, %v844
      %v881 = vmul.f32 %v665, %v845
      %v882 = vmul.f32 %v666, %v846
      %v883 = vmul.f32 %v667, %v847
      %v884 = vmul.f32 %v668, %v848
      %v885 = vmul.f32 %v669, %v849
      %v886 = vmul.f32 %v670, %v850
      %v887 = vmul.f32 %v671, %v851
      %v888 = vmul.f32 %v672, %v852
      %v889 = vmul.f32 %v673, %v853
      %v890 = vmul.f32 %v674, %v854
      %v891 = vmul.f32 %v675, %v855
      %v892 = vmul.f32 %v676, %v856
      %v893 = vmul.f32 %v677, %v857
      %v894 = vmul.f32 %v678, %v858
      %v895 = vmul.f32 %v679, %v859
      %v896 = vmul.f32 %v680, %v860
      %v897 = vmul.f32 %v681, %v861
      %v898 = vmul.f32 %v682, %v862
      %v899 = vmul.f32 %v683, %v863
      %v900 = vadd.f32 %v828, 2.0
      %v901 = vadd.f32 %v829, 2.0
      %v902 = vadd.f32 %v830, 2.0
      %v903 = vadd.f32 %v831, 2.0
      %v904 = vadd.f32 %v832, 2.0
      %v905 = vadd.f32 %v833, 2.0
      %v906 = vadd.f32 %v834, 2.0
      %v907 = vadd.f32 %v835, 2.0
      %v908 = vadd.f32 %v836, 2.0
      %v909 = vadd.f32 %v837, 2.0
      %v910 = vadd.f32 %v838, 2.0
      %v911 = vadd.f32 %v839, 2.0
      %v912 = vadd.f32 %v840, 2.0
      %v913 = vadd.f32 %v841, 2.0
      %v914 = vadd.f32 %v842, 2.0
      %v915 = vadd.f32 %v843, 2.0
      %v916 = vadd.f32 %v844, 2.0
      %v917 = vadd.f32 %v845, 2.0
      %v918 = vadd.f32 %v846, 2.0
      %v919 = vadd.f32 %v847, 2.0
      %v920 = vadd.f32 %v848, 2.0
      %v921 = vadd.f32 %v849, 2.0
      %v922 = vadd.f32 %v850, 2.0
      %v923 = vadd.f32 %v851, 2.0
      %v924 = vadd.f32 %v852, 2.0
      %v925 = vadd.f32 %v853, 2.0
      %v926 = vadd.f32 %v854, 2.0
      %v927 = vadd.f32 %v855, 2.0
      %v928 = vadd.f32 %v856, 2.0
      %v929 = vadd.f32 %v857, 2.0
      %v930 = vadd.f32 %v858, 2.0
      %v931 = vadd.f32 %v859, 2.0
      %v932 = vadd.f32 %v860, 2.0
      %v933 = vadd.f32 %v861, 2.0
      %v934 = vadd.f32 %v862, 2.0
      %v935 = vadd.f32 %v863, 2.0
      %v936 = vrcp.pop %v900
      %v937 = vrcp.pop %v901
      %v938 = vrcp.pop %v902
      %v939 = vrcp.pop %v903
      %v940 = vrcp.pop %v904
      %v941 = vrcp.pop %v905
      %v942 = vrcp.pop %v906
      %v943 = vrcp.pop %v907
      %v944 = vrcp.pop %v908
      %v945 = vrcp.pop %v909
      %v946 = vrcp.pop %v910
      %v947 = vrcp.pop %v911
      %v948 = vrcp.pop %v912
      %v949 = vrcp.pop %v913
      %v950 = vrcp.pop %v914
      %v951 = vrcp.pop %v915
      %v952 = vrcp.pop %v916
      %v953 = vrcp.pop %v917
      %v954 = vrcp.pop %v918
      %v955 = vrcp.pop %v919
      %v956 = vrcp.pop %v920
      %v957 = vrcp.pop %v921
      %v958 = vrcp.pop %v922
      %v959 = vrcp.pop %v923
      %v960 = vrcp.pop %v924
      %v961 = vrcp.pop %v925
      %v962 = vrcp.pop %v926
      %v963 = vrcp.pop %v927
      %v964 = vrcp.pop %v928
      %v965 = vrcp.pop %v929
      %v966 = vrcp.pop %v930
      %v967 = vrcp.pop %v931
      %v968 = vrcp.pop %v932
      %v969 = vrcp.pop %v933
      %v970 = vrcp.pop %v934
      %v971 = vrcp.pop %v935
      %v972 = vmul.f32 %v864, %v936
      %v973 = vmul.f32 %v865, %v937
      %v974 = vmul.f32 %v866, %v938
      %v975 = vmul.f32 %v867, %v939
      %v976 = vmul.f32 %v868, %v940
      %v977 = vmul.f32 %v869, %v941
      %v978 = vmul.f32 %v870, %v942
      %v979 = vmul.f32 %v871, %v943
      %v980 = vmul.f32 %v872, %v944
      %v981 = vmul.f32 %v873, %v945
      %v982 = vmul.f32 %v874, %v946
      %v983 = vmul.f32 %v875, %v947
      %v984 = vmul.f32 %v876, %v948
      %v985 = vmul.f32 %v877, %v949
      %v986 = vmul.f32 %v878, %v950
      %v987 = vmul.f32 %v879, %v951
      %v988 = vmul.f32 %v880, %v952
      %v989 = vmul.f32 %v881, %v953
      %v990 = vmul.f32 %v882, %v954
      %v991 = vmul.f32 %v883, %v955
      %v992 = vmul.f32 %v884, %v956
      %v993 = vmul.f32 %v885, %v957
      %v994 = vmul.f32 %v886, %v958
      %v995 = vmul.f32 %v887, %v959
      %v996 = vmul.f32 %v888, %v960
      %v997 = vmul.f32 %v889, %v961
      %v998 = vmul.f32 %v890, %v962
      %v999 = vmul.f32 %v891, %v963
      %v1000 = vmul.f32 %v892, %v964
      %v1001 = vmul.f32 %v893, %v965
      %v1002 = vmul.f32 %v894, %v966
      %v1003 = vmul.f32 %v895, %v967
      %v1004 = vmul.f32 %v896, %v968
      %v1005 = vmul.f32 %v897, %v969
      %v1006 = vmul.f32 %v898, %v970
      %v1007 = vmul.f32 %v899, %v971
      %vm1008 = vcmp.gt.f32.partialorder %v648, 20.0
      %vm1009 = vcmp.gt.f32.partialorder %v649, 20.0
      %vm1010 = vcmp.gt.f32.partialorder %v650, 20.0
      %vm1011 = vcmp.gt.f32.partialorder %v651, 20.0
      %vm1012 = vcmp.gt.f32.partialorder %v652, 20.0
      %vm1013 = vcmp.gt.f32.partialorder %v653, 20.0
      %vm1014 = vcmp.gt.f32.partialorder %v654, 20.0
      %vm1015 = vcmp.gt.f32.partialorder %v655, 20.0
      %vm1016 = vcmp.gt.f32.partialorder %v656, 20.0
      %vm1017 = vcmp.gt.f32.partialorder %v657, 20.0
      %vm1018 = vcmp.gt.f32.partialorder %v658, 20.0
      %vm1019 = vcmp.gt.f32.partialorder %v659, 20.0
      %vm1020 = vcmp.gt.f32.partialorder %v660, 20.0
      %vm1021 = vcmp.gt.f32.partialorder %v661, 20.0
      %vm1022 = vcmp.gt.f32.partialorder %v662, 20.0
      %vm1023 = vcmp.gt.f32.partialorder %v663, 20.0
      %vm1024 = vcmp.gt.f32.partialorder %v664, 20.0
      %vm1025 = vcmp.gt.f32.partialorder %v665, 20.0
      %vm1026 = vcmp.gt.f32.partialorder %v666, 20.0
      %vm1027 = vcmp.gt.f32.partialorder %v667, 20.0
      %vm1028 = vcmp.gt.f32.partialorder %v668, 20.0
      %vm1029 = vcmp.gt.f32.partialorder %v669, 20.0
      %vm1030 = vcmp.gt.f32.partialorder %v670, 20.0
      %vm1031 = vcmp.gt.f32.partialorder %v671, 20.0
      %vm1032 = vcmp.gt.f32.partialorder %v672, 20.0
      %vm1033 = vcmp.gt.f32.partialorder %v673, 20.0
      %vm1034 = vcmp.gt.f32.partialorder %v674, 20.0
      %vm1035 = vcmp.gt.f32.partialorder %v675, 20.0
      %vm1036 = vcmp.gt.f32.partialorder %v676, 20.0
      %vm1037 = vcmp.gt.f32.partialorder %v677, 20.0
      %vm1038 = vcmp.gt.f32.partialorder %v678, 20.0
      %vm1039 = vcmp.gt.f32.partialorder %v679, 20.0
      %vm1040 = vcmp.gt.f32.partialorder %v680, 20.0
      %vm1041 = vcmp.gt.f32.partialorder %v681, 20.0
      %vm1042 = vcmp.gt.f32.partialorder %v682, 20.0
      %vm1043 = vcmp.gt.f32.partialorder %v683, 20.0
      %v1044 = vsel %vm1008, %v648, %v972
      %v1045 = vsel %vm1009, %v649, %v973
      %v1046 = vsel %vm1010, %v650, %v974
      %v1047 = vsel %vm1011, %v651, %v975
      %v1048 = vsel %vm1012, %v652, %v976
      %v1049 = vsel %vm1013, %v653, %v977
      %v1050 = vsel %vm1014, %v654, %v978
      %v1051 = vsel %vm1015, %v655, %v979
      %v1052 = vsel %vm1016, %v656, %v980
      %v1053 = vsel %vm1017, %v657, %v981
      %v1054 = vsel %vm1018, %v658, %v982
      %v1055 = vsel %vm1019, %v659, %v983
      %v1056 = vsel %vm1020, %v660, %v984
      %v1057 = vsel %vm1021, %v661, %v985
      %v1058 = vsel %vm1022, %v662, %v986
      %v1059 = vsel %vm1023, %v663, %v987
      %v1060 = vsel %vm1024, %v664, %v988
      %v1061 = vsel %vm1025, %v665, %v989
      %v1062 = vsel %vm1026, %v666, %v990
      %v1063 = vsel %vm1027, %v667, %v991
      %v1064 = vsel %vm1028, %v668, %v992
      %v1065 = vsel %vm1029, %v669, %v993
      %v1066 = vsel %vm1030, %v670, %v994
      %v1067 = vsel %vm1031, %v671, %v995
      %v1068 = vsel %vm1032, %v672, %v996
      %v1069 = vsel %vm1033, %v673, %v997
      %v1070 = vsel %vm1034, %v674, %v998
      %v1071 = vsel %vm1035, %v675, %v999
      %v1072 = vsel %vm1036, %v676, %v1000
      %v1073 = vsel %vm1037, %v677, %v1001
      %v1074 = vsel %vm1038, %v678, %v1002
      %v1075 = vsel %vm1039, %v679, %v1003
      %v1076 = vsel %vm1040, %v680, %v1004
      %v1077 = vsel %vm1041, %v681, %v1005
      %v1078 = vsel %vm1042, %v682, %v1006
      %v1079 = vsel %vm1043, %v683, %v1007
      %v1080 = vmin.f32 %v1044, 20.0
      %v1081 = vmin.f32 %v1045, 20.0
      %v1082 = vmin.f32 %v1046, 20.0
      %v1083 = vmin.f32 %v1047, 20.0
      %v1084 = vmin.f32 %v1048, 20.0
      %v1085 = vmin.f32 %v1049, 20.0
      %v1086 = vmin.f32 %v1050, 20.0
      %v1087 = vmin.f32 %v1051, 20.0
      %v1088 = vmin.f32 %v1052, 20.0
      %v1089 = vmin.f32 %v1053, 20.0
      %v1090 = vmin.f32 %v1054, 20.0
      %v1091 = vmin.f32 %v1055, 20.0
      %v1092 = vmin.f32 %v1056, 20.0
      %v1093 = vmin.f32 %v1057, 20.0
      %v1094 = vmin.f32 %v1058, 20.0
      %v1095 = vmin.f32 %v1059, 20.0
      %v1096 = vmin.f32 %v1060, 20.0
      %v1097 = vmin.f32 %v1061, 20.0
      %v1098 = vmin.f32 %v1062, 20.0
      %v1099 = vmin.f32 %v1063, 20.0
      %v1100 = vmin.f32 %v1064, 20.0
      %v1101 = vmin.f32 %v1065, 20.0
      %v1102 = vmin.f32 %v1066, 20.0
      %v1103 = vmin.f32 %v1067, 20.0
      %v1104 = vmin.f32 %v1068, 20.0
      %v1105 = vmin.f32 %v1069, 20.0
      %v1106 = vmin.f32 %v1070, 20.0
      %v1107 = vmin.f32 %v1071, 20.0
      %v1108 = vmin.f32 %v1072, 20.0
      %v1109 = vmin.f32 %v1073, 20.0
      %v1110 = vmin.f32 %v1074, 20.0
      %v1111 = vmin.f32 %v1075, 20.0
      %v1112 = vmin.f32 %v1076, 20.0
      %v1113 = vmin.f32 %v1077, 20.0
      %v1114 = vmin.f32 %v1078, 20.0
      %v1115 = vmin.f32 %v1079, 20.0
      %v1116 = vmul.f32 %v1080, 1.442695
      %v1117 = vpow.pop %v1116
      %v1118 = vmul.f32 %v1081, 1.442695
      %v1119 = vpow.pop %v1118
      %v1120 = vmul.f32 %v1082, 1.442695
      %v1121 = vpow.pop %v1120
      %v1122 = vmul.f32 %v1083, 1.442695
      %v1123 = vpow.pop %v1122
      %v1124 = vmul.f32 %v1084, 1.442695
      %v1125 = vpow.pop %v1124
      %v1126 = vmul.f32 %v1085, 1.442695
      %v1127 = vpow.pop %v1126
      %v1128 = vmul.f32 %v1086, 1.442695
      %v1129 = vpow.pop %v1128
      %v1130 = vmul.f32 %v1087, 1.442695
      %v1131 = vpow.pop %v1130
      %v1132 = vmul.f32 %v1088, 1.442695
      %v1133 = vpow.pop %v1132
      %v1134 = vmul.f32 %v1089, 1.442695
      %v1135 = vpow.pop %v1134
      %v1136 = vmul.f32 %v1090, 1.442695
      %v1137 = vpow.pop %v1136
      %v1138 = vmul.f32 %v1091, 1.442695
      %v1139 = vpow.pop %v1138
      %v1140 = vmul.f32 %v1092, 1.442695
      %v1141 = vpow.pop %v1140
      %v1142 = vmul.f32 %v1093, 1.442695
      %v1143 = vpow.pop %v1142
      %v1144 = vmul.f32 %v1094, 1.442695
      %v1145 = vpow.pop %v1144
      %v1146 = vmul.f32 %v1095, 1.442695
      %v1147 = vpow.pop %v1146
      %v1148 = vmul.f32 %v1096, 1.442695
      %v1149 = vpow.pop %v1148
      %v1150 = vmul.f32 %v1097, 1.442695
      %v1151 = vpow.pop %v1150
      %v1152 = vmul.f32 %v1098, 1.442695
      %v1153 = vpow.pop %v1152
      %v1154 = vmul.f32 %v1099, 1.442695
      %v1155 = vpow.pop %v1154
      %v1156 = vmul.f32 %v1100, 1.442695
      %v1157 = vpow.pop %v1156
      %v1158 = vmul.f32 %v1101, 1.442695
      %v1159 = vpow.pop %v1158
      %v1160 = vmul.f32 %v1102, 1.442695
      %v1161 = vpow.pop %v1160
      %v1162 = vmul.f32 %v1103, 1.442695
      %v1163 = vpow.pop %v1162
      %v1164 = vmul.f32 %v1104, 1.442695
      %v1165 = vpow.pop %v1164
      %v1166 = vmul.f32 %v1105, 1.442695
      %v1167 = vpow.pop %v1166
      %v1168 = vmul.f32 %v1106, 1.442695
      %v1169 = vpow.pop %v1168
      %v1170 = vmul.f32 %v1107, 1.442695
      %v1171 = vpow.pop %v1170
      %v1172 = vmul.f32 %v1108, 1.442695
      %v1173 = vpow.pop %v1172
      %v1174 = vmul.f32 %v1109, 1.442695
      %v1175 = vpow.pop %v1174
      %v1176 = vmul.f32 %v1110, 1.442695
      %v1177 = vpow.pop %v1176
      %v1178 = vmul.f32 %v1111, 1.442695
      %v1179 = vpow.pop %v1178
      %v1180 = vmul.f32 %v1112, 1.442695
      %v1181 = vpow.pop %v1180
      %v1182 = vmul.f32 %v1113, 1.442695
      %v1183 = vpow.pop %v1182
      %v1184 = vmul.f32 %v1114, 1.442695
      %v1185 = vpow.pop %v1184
      %v1186 = vmul.f32 %v1115, 1.442695
      %v1187 = vpow.pop %v1186
      %v1188 = vadd.f32 %v1117, 2.0
      %v1189 = vadd.f32 %v1119, 2.0
      %v1190 = vadd.f32 %v1121, 2.0
      %v1191 = vadd.f32 %v1123, 2.0
      %v1192 = vadd.f32 %v1125, 2.0
      %v1193 = vadd.f32 %v1127, 2.0
      %v1194 = vadd.f32 %v1129, 2.0
      %v1195 = vadd.f32 %v1131, 2.0
      %v1196 = vadd.f32 %v1133, 2.0
      %v1197 = vadd.f32 %v1135, 2.0
      %v1198 = vadd.f32 %v1137, 2.0
      %v1199 = vadd.f32 %v1139, 2.0
      %v1200 = vadd.f32 %v1141, 2.0
      %v1201 = vadd.f32 %v1143, 2.0
      %v1202 = vadd.f32 %v1145, 2.0
      %v1203 = vadd.f32 %v1147, 2.0
      %v1204 = vadd.f32 %v1149, 2.0
      %v1205 = vadd.f32 %v1151, 2.0
      %v1206 = vadd.f32 %v1153, 2.0
      %v1207 = vadd.f32 %v1155, 2.0
      %v1208 = vadd.f32 %v1157, 2.0
      %v1209 = vadd.f32 %v1159, 2.0
      %v1210 = vadd.f32 %v1161, 2.0
      %v1211 = vadd.f32 %v1163, 2.0
      %v1212 = vadd.f32 %v1165, 2.0
      %v1213 = vadd.f32 %v1167, 2.0
      %v1214 = vadd.f32 %v1169, 2.0
      %v1215 = vadd.f32 %v1171, 2.0
      %v1216 = vadd.f32 %v1173, 2.0
      %v1217 = vadd.f32 %v1175, 2.0
      %v1218 = vadd.f32 %v1177, 2.0
      %v1219 = vadd.f32 %v1179, 2.0
      %v1220 = vadd.f32 %v1181, 2.0
      %v1221 = vadd.f32 %v1183, 2.0
      %v1222 = vadd.f32 %v1185, 2.0
      %v1223 = vadd.f32 %v1187, 2.0
      %v1224 = vmul.f32 %v1117, %v1188
      %v1225 = vmul.f32 %v1119, %v1189
      %v1226 = vmul.f32 %v1121, %v1190
      %v1227 = vmul.f32 %v1123, %v1191
      %v1228 = vmul.f32 %v1125, %v1192
      %v1229 = vmul.f32 %v1127, %v1193
      %v1230 = vmul.f32 %v1129, %v1194
      %v1231 = vmul.f32 %v1131, %v1195
      %v1232 = vmul.f32 %v1133, %v1196
      %v1233 = vmul.f32 %v1135, %v1197
      %v1234 = vmul.f32 %v1137, %v1198
      %v1235 = vmul.f32 %v1139, %v1199
      %v1236 = vmul.f32 %v1141, %v1200
      %v1237 = vmul.f32 %v1143, %v1201
      %v1238 = vmul.f32 %v1145, %v1202
      %v1239 = vmul.f32 %v1147, %v1203
      %v1240 = vmul.f32 %v1149, %v1204
      %v1241 = vmul.f32 %v1151, %v1205
      %v1242 = vmul.f32 %v1153, %v1206
      %v1243 = vmul.f32 %v1155, %v1207
      %v1244 = vmul.f32 %v1157, %v1208
      %v1245 = vmul.f32 %v1159, %v1209
      %v1246 = vmul.f32 %v1161, %v1210
      %v1247 = vmul.f32 %v1163, %v1211
      %v1248 = vmul.f32 %v1165, %v1212
      %v1249 = vmul.f32 %v1167, %v1213
      %v1250 = vmul.f32 %v1169, %v1214
      %v1251 = vmul.f32 %v1171, %v1215
      %v1252 = vmul.f32 %v1173, %v1216
      %v1253 = vmul.f32 %v1175, %v1217
      %v1254 = vmul.f32 %v1177, %v1218
      %v1255 = vmul.f32 %v1179, %v1219
      %v1256 = vmul.f32 %v1181, %v1220
      %v1257 = vmul.f32 %v1183, %v1221
      %v1258 = vmul.f32 %v1185, %v1222
      %v1259 = vmul.f32 %v1187, %v1223
      %v1260 = vmul.f32 %v1044, %v1224
      %v1261 = vmul.f32 %v1045, %v1225
      %v1262 = vmul.f32 %v1046, %v1226
      %v1263 = vmul.f32 %v1047, %v1227
      %v1264 = vmul.f32 %v1048, %v1228
      %v1265 = vmul.f32 %v1049, %v1229
      %v1266 = vmul.f32 %v1050, %v1230
      %v1267 = vmul.f32 %v1051, %v1231
      %v1268 = vmul.f32 %v1052, %v1232
      %v1269 = vmul.f32 %v1053, %v1233
      %v1270 = vmul.f32 %v1054, %v1234
      %v1271 = vmul.f32 %v1055, %v1235
      %v1272 = vmul.f32 %v1056, %v1236
      %v1273 = vmul.f32 %v1057, %v1237
      %v1274 = vmul.f32 %v1058, %v1238
      %v1275 = vmul.f32 %v1059, %v1239
      %v1276 = vmul.f32 %v1060, %v1240
      %v1277 = vmul.f32 %v1061, %v1241
      %v1278 = vmul.f32 %v1062, %v1242
      %v1279 = vmul.f32 %v1063, %v1243
      %v1280 = vmul.f32 %v1064, %v1244
      %v1281 = vmul.f32 %v1065, %v1245
      %v1282 = vmul.f32 %v1066, %v1246
      %v1283 = vmul.f32 %v1067, %v1247
      %v1284 = vmul.f32 %v1068, %v1248
      %v1285 = vmul.f32 %v1069, %v1249
      %v1286 = vmul.f32 %v1070, %v1250
      %v1287 = vmul.f32 %v1071, %v1251
      %v1288 = vmul.f32 %v1072, %v1252
      %v1289 = vmul.f32 %v1073, %v1253
      %v1290 = vmul.f32 %v1074, %v1254
      %v1291 = vmul.f32 %v1075, %v1255
      %v1292 = vmul.f32 %v1076, %v1256
      %v1293 = vmul.f32 %v1077, %v1257
      %v1294 = vmul.f32 %v1078, %v1258
      %v1295 = vmul.f32 %v1079, %v1259
      %v1296 = vadd.f32 %v1224, 2.0
      %v1297 = vadd.f32 %v1225, 2.0
      %v1298 = vadd.f32 %v1226, 2.0
      %v1299 = vadd.f32 %v1227, 2.0
      %v1300 = vadd.f32 %v1228, 2.0
      %v1301 = vadd.f32 %v1229, 2.0
      %v1302 = vadd.f32 %v1230, 2.0
      %v1303 = vadd.f32 %v1231, 2.0
      %v1304 = vadd.f32 %v1232, 2.0
      %v1305 = vadd.f32 %v1233, 2.0
      %v1306 = vadd.f32 %v1234, 2.0
      %v1307 = vadd.f32 %v1235, 2.0
      %v1308 = vadd.f32 %v1236, 2.0
      %v1309 = vadd.f32 %v1237, 2.0
      %v1310 = vadd.f32 %v1238, 2.0
      %v1311 = vadd.f32 %v1239, 2.0
      %v1312 = vadd.f32 %v1240, 2.0
      %v1313 = vadd.f32 %v1241, 2.0
      %v1314 = vadd.f32 %v1242, 2.0
      %v1315 = vadd.f32 %v1243, 2.0
      %v1316 = vadd.f32 %v1244, 2.0
      %v1317 = vadd.f32 %v1245, 2.0
      %v1318 = vadd.f32 %v1246, 2.0
      %v1319 = vadd.f32 %v1247, 2.0
      %v1320 = vadd.f32 %v1248, 2.0
      %v1321 = vadd.f32 %v1249, 2.0
      %v1322 = vadd.f32 %v1250, 2.0
      %v1323 = vadd.f32 %v1251, 2.0
      %v1324 = vadd.f32 %v1252, 2.0
      %v1325 = vadd.f32 %v1253, 2.0
      %v1326 = vadd.f32 %v1254, 2.0
      %v1327 = vadd.f32 %v1255, 2.0
      %v1328 = vadd.f32 %v1256, 2.0
      %v1329 = vadd.f32 %v1257, 2.0
      %v1330 = vadd.f32 %v1258, 2.0
      %v1331 = vadd.f32 %v1259, 2.0
      %v1332 = vrcp.pop %v1296
      %v1333 = vrcp.pop %v1297
      %v1334 = vrcp.pop %v1298
      %v1335 = vrcp.pop %v1299
      %v1336 = vrcp.pop %v1300
      %v1337 = vrcp.pop %v1301
      %v1338 = vrcp.pop %v1302
      %v1339 = vrcp.pop %v1303
      %v1340 = vrcp.pop %v1304
      %v1341 = vrcp.pop %v1305
      %v1342 = vrcp.pop %v1306
      %v1343 = vrcp.pop %v1307
      %v1344 = vrcp.pop %v1308
      %v1345 = vrcp.pop %v1309
      %v1346 = vrcp.pop %v1310
      %v1347 = vrcp.pop %v1311
      %v1348 = vrcp.pop %v1312
      %v1349 = vrcp.pop %v1313
      %v1350 = vrcp.pop %v1314
      %v1351 = vrcp.pop %v1315
      %v1352 = vrcp.pop %v1316
      %v1353 = vrcp.pop %v1317
      %v1354 = vrcp.pop %v1318
      %v1355 = vrcp.pop %v1319
      %v1356 = vrcp.pop %v1320
      %v1357 = vrcp.pop %v1321
      %v1358 = vrcp.pop %v1322
      %v1359 = vrcp.pop %v1323
      %v1360 = vrcp.pop %v1324
      %v1361 = vrcp.pop %v1325
      %v1362 = vrcp.pop %v1326
      %v1363 = vrcp.pop %v1327
      %v1364 = vrcp.pop %v1328
      %v1365 = vrcp.pop %v1329
      %v1366 = vrcp.pop %v1330
      %v1367 = vrcp.pop %v1331
      %v1368 = vmul.f32 %v1260, %v1332
      %v1369 = vmul.f32 %v1261, %v1333
      %v1370 = vmul.f32 %v1262, %v1334
      %v1371 = vmul.f32 %v1263, %v1335
      %v1372 = vmul.f32 %v1264, %v1336
      %v1373 = vmul.f32 %v1265, %v1337
      %v1374 = vmul.f32 %v1266, %v1338
      %v1375 = vmul.f32 %v1267, %v1339
      %v1376 = vmul.f32 %v1268, %v1340
      %v1377 = vmul.f32 %v1269, %v1341
      %v1378 = vmul.f32 %v1270, %v1342
      %v1379 = vmul.f32 %v1271, %v1343
      %v1380 = vmul.f32 %v1272, %v1344
      %v1381 = vmul.f32 %v1273, %v1345
      %v1382 = vmul.f32 %v1274, %v1346
      %v1383 = vmul.f32 %v1275, %v1347
      %v1384 = vmul.f32 %v1276, %v1348
      %v1385 = vmul.f32 %v1277, %v1349
      %v1386 = vmul.f32 %v1278, %v1350
      %v1387 = vmul.f32 %v1279, %v1351
      %v1388 = vmul.f32 %v1280, %v1352
      %v1389 = vmul.f32 %v1281, %v1353
      %v1390 = vmul.f32 %v1282, %v1354
      %v1391 = vmul.f32 %v1283, %v1355
      %v1392 = vmul.f32 %v1284, %v1356
      %v1393 = vmul.f32 %v1285, %v1357
      %v1394 = vmul.f32 %v1286, %v1358
      %v1395 = vmul.f32 %v1287, %v1359
      %v1396 = vmul.f32 %v1288, %v1360
      %v1397 = vmul.f32 %v1289, %v1361
      %v1398 = vmul.f32 %v1290, %v1362
      %v1399 = vmul.f32 %v1291, %v1363
      %v1400 = vmul.f32 %v1292, %v1364
      %v1401 = vmul.f32 %v1293, %v1365
      %v1402 = vmul.f32 %v1294, %v1366
      %v1403 = vmul.f32 %v1295, %v1367
      %vm1404 = vcmp.gt.f32.partialorder %v1044, 20.0
      %vm1405 = vcmp.gt.f32.partialorder %v1045, 20.0
      %vm1406 = vcmp.gt.f32.partialorder %v1046, 20.0
      %vm1407 = vcmp.gt.f32.partialorder %v1047, 20.0
      %vm1408 = vcmp.gt.f32.partialorder %v1048, 20.0
      %vm1409 = vcmp.gt.f32.partialorder %v1049, 20.0
      %vm1410 = vcmp.gt.f32.partialorder %v1050, 20.0
      %vm1411 = vcmp.gt.f32.partialorder %v1051, 20.0
      %vm1412 = vcmp.gt.f32.partialorder %v1052, 20.0
      %vm1413 = vcmp.gt.f32.partialorder %v1053, 20.0
      %vm1414 = vcmp.gt.f32.partialorder %v1054, 20.0
      %vm1415 = vcmp.gt.f32.partialorder %v1055, 20.0
      %vm1416 = vcmp.gt.f32.partialorder %v1056, 20.0
      %vm1417 = vcmp.gt.f32.partialorder %v1057, 20.0
      %vm1418 = vcmp.gt.f32.partialorder %v1058, 20.0
      %vm1419 = vcmp.gt.f32.partialorder %v1059, 20.0
      %vm1420 = vcmp.gt.f32.partialorder %v1060, 20.0
      %vm1421 = vcmp.gt.f32.partialorder %v1061, 20.0
      %vm1422 = vcmp.gt.f32.partialorder %v1062, 20.0
      %vm1423 = vcmp.gt.f32.partialorder %v1063, 20.0
      %vm1424 = vcmp.gt.f32.partialorder %v1064, 20.0
      %vm1425 = vcmp.gt.f32.partialorder %v1065, 20.0
      %vm1426 = vcmp.gt.f32.partialorder %v1066, 20.0
      %vm1427 = vcmp.gt.f32.partialorder %v1067, 20.0
      %vm1428 = vcmp.gt.f32.partialorder %v1068, 20.0
      %vm1429 = vcmp.gt.f32.partialorder %v1069, 20.0
      %vm1430 = vcmp.gt.f32.partialorder %v1070, 20.0
      %vm1431 = vcmp.gt.f32.partialorder %v1071, 20.0
      %vm1432 = vcmp.gt.f32.partialorder %v1072, 20.0
      %vm1433 = vcmp.gt.f32.partialorder %v1073, 20.0
      %vm1434 = vcmp.gt.f32.partialorder %v1074, 20.0
      %vm1435 = vcmp.gt.f32.partialorder %v1075, 20.0
      %vm1436 = vcmp.gt.f32.partialorder %v1076, 20.0
      %vm1437 = vcmp.gt.f32.partialorder %v1077, 20.0
      %vm1438 = vcmp.gt.f32.partialorder %v1078, 20.0
      %vm1439 = vcmp.gt.f32.partialorder %v1079, 20.0
      %v1440 = vsel %vm1404, %v1044, %v1368
      %v1441 = vsel %vm1405, %v1045, %v1369
      %v1442 = vsel %vm1406, %v1046, %v1370
      %v1443 = vsel %vm1407, %v1047, %v1371
      %v1444 = vsel %vm1408, %v1048, %v1372
      %v1445 = vsel %vm1409, %v1049, %v1373
      %v1446 = vsel %vm1410, %v1050, %v1374
      %v1447 = vsel %vm1411, %v1051, %v1375
      %v1448 = vsel %vm1412, %v1052, %v1376
      %v1449 = vsel %vm1413, %v1053, %v1377
      %v1450 = vsel %vm1414, %v1054, %v1378
      %v1451 = vsel %vm1415, %v1055, %v1379
      %v1452 = vsel %vm1416, %v1056, %v1380
      %v1453 = vsel %vm1417, %v1057, %v1381
      %v1454 = vsel %vm1418, %v1058, %v1382
      %v1455 = vsel %vm1419, %v1059, %v1383
      %v1456 = vsel %vm1420, %v1060, %v1384
      %v1457 = vsel %vm1421, %v1061, %v1385
      %v1458 = vsel %vm1422, %v1062, %v1386
      %v1459 = vsel %vm1423, %v1063, %v1387
      %v1460 = vsel %vm1424, %v1064, %v1388
      %v1461 = vsel %vm1425, %v1065, %v1389
      %v1462 = vsel %vm1426, %v1066, %v1390
      %v1463 = vsel %vm1427, %v1067, %v1391
      %v1464 = vsel %vm1428, %v1068, %v1392
      %v1465 = vsel %vm1429, %v1069, %v1393
      %v1466 = vsel %vm1430, %v1070, %v1394
      %v1467 = vsel %vm1431, %v1071, %v1395
      %v1468 = vsel %vm1432, %v1072, %v1396
      %v1469 = vsel %vm1433, %v1073, %v1397
      %v1470 = vsel %vm1434, %v1074, %v1398
      %v1471 = vsel %vm1435, %v1075, %v1399
      %v1472 = vsel %vm1436, %v1076, %v1400
      %v1473 = vsel %vm1437, %v1077, %v1401
      %v1474 = vsel %vm1438, %v1078, %v1402
      %v1475 = vsel %vm1439, %v1079, %v1403
      %v1476 = vsel 0, %v1440, 0.0
      %v1477 = vsel 0, %v1441, 0.0
      %v1478 = vsel 1, %v1442, 0.0
      %v1479 = vsel 1, %v1443, 0.0
      %v1480 = vsel 1, %v1444, 0.0
      %v1481 = vsel 1, %v1445, 0.0
      %v1482 = vsel 1, %v1446, 0.0
      %v1483 = vsel 1, %v1447, 0.0
      %v1484 = vsel 1, %v1448, 0.0
      %v1485 = vsel 1, %v1449, 0.0
      %v1486 = vsel 1, %v1450, 0.0
      %v1487 = vsel 1, %v1451, 0.0
      %v1488 = vsel 1, %v1452, 0.0
      %v1489 = vsel 1, %v1453, 0.0
      %v1490 = vsel 1, %v1454, 0.0
      %v1491 = vsel 1, %v1455, 0.0
      %v1492 = vsel 1, %v1456, 0.0
      %v1493 = vsel 1, %v1457, 0.0
      %v1494 = vsel 1, %v1458, 0.0
      %v1495 = vsel 1, %v1459, 0.0
      %v1496 = vsel 1, %v1460, 0.0
      %v1497 = vsel 1, %v1461, 0.0
      %v1498 = vsel 1, %v1462, 0.0
      %v1499 = vsel 1, %v1463, 0.0
      %v1500 = vsel 1, %v1464, 0.0
      %v1501 = vsel 1, %v1465, 0.0
      %v1502 = vsel 1, %v1466, 0.0
      %v1503 = vsel 1, %v1467, 0.0
      %v1504 = vsel 1, %v1468, 0.0
      %v1505 = vsel 1, %v1469, 0.0
      %v1506 = vsel 1, %v1470, 0.0
      %v1507 = vsel 1, %v1471, 0.0
      %v1508 = vsel 1, %v1472, 0.0
      %v1509 = vsel 1, %v1473, 0.0
      %v1510 = vsel 0, %v1474, 0.0
      %v1511 = vsel 0, %v1475, 0.0
      %v1512 = vpack.c.bf16 %v1476, %v1476
      %v1513 = vpack.c.bf16 %v1477, %v1477
      %v1514 = vpack.c.bf16 %v1478, %v1478
      %v1515 = vpack.c.bf16 %v1479, %v1479
      %v1516 = vpack.c.bf16 %v1480, %v1480
      %v1517 = vpack.c.bf16 %v1481, %v1481
      %v1518 = vpack.c.bf16 %v1482, %v1482
      %v1519 = vpack.c.bf16 %v1483, %v1483
      %v1520 = vpack.c.bf16 %v1484, %v1484
      %v1521 = vpack.c.bf16 %v1485, %v1485
      %v1522 = vpack.c.bf16 %v1486, %v1486
      %v1523 = vpack.c.bf16 %v1487, %v1487
      %v1524 = vpack.c.bf16 %v1488, %v1488
      %v1525 = vpack.c.bf16 %v1489, %v1489
      %v1526 = vpack.c.bf16 %v1490, %v1490
      %v1527 = vpack.c.bf16 %v1491, %v1491
      %v1528 = vpack.c.bf16 %v1492, %v1492
      %v1529 = vpack.c.bf16 %v1493, %v1493
      %v1530 = vpack.c.bf16 %v1494, %v1494
      %v1531 = vpack.c.bf16 %v1495, %v1495
      %v1532 = vpack.c.bf16 %v1496, %v1496
      %v1533 = vpack.c.bf16 %v1497, %v1497
      %v1534 = vpack.c.bf16 %v1498, %v1498
      %v1535 = vpack.c.bf16 %v1499, %v1499
      %v1536 = vpack.c.bf16 %v1500, %v1500
      %v1537 = vpack.c.bf16 %v1501, %v1501
      %v1538 = vpack.c.bf16 %v1502, %v1502
      %v1539 = vpack.c.bf16 %v1503, %v1503
      %v1540 = vpack.c.bf16 %v1504, %v1504
      %v1541 = vpack.c.bf16 %v1505, %v1505
      %v1542 = vpack.c.bf16 %v1506, %v1506
      %v1543 = vpack.c.bf16 %v1507, %v1507
      %v1544 = vpack.c.bf16 %v1508, %v1508
      %v1545 = vpack.c.bf16 %v1509, %v1509
      %v1546 = vpack.c.bf16 %v1510, %v1510
      %v1547 = vpack.c.bf16 %v1511, %v1511
      %v1584 = vunpack.c.l.b16 %v1512
      %v1585 = vunpack.c.l.b16 %v1513
      %v1586 = vunpack.c.l.b16 %v1514
      %v1587 = vunpack.c.l.b16 %v1515
      %v1588 = vunpack.c.l.b16 %v1516
      %v1589 = vunpack.c.l.b16 %v1517
      %v1590 = vunpack.c.l.b16 %v1518
      %v1591 = vunpack.c.l.b16 %v1519
      %v1592 = vunpack.c.l.b16 %v1520
      %v1593 = vunpack.c.l.b16 %v1521
      %v1594 = vunpack.c.l.b16 %v1522
      %v1595 = vunpack.c.l.b16 %v1523
      %v1596 = vunpack.c.l.b16 %v1524
      %v1597 = vunpack.c.l.b16 %v1525
      %v1598 = vunpack.c.l.b16 %v1526
      %v1599 = vunpack.c.l.b16 %v1527
      %v1600 = vunpack.c.l.b16 %v1528
      %v1601 = vunpack.c.l.b16 %v1529
      %v1602 = vunpack.c.l.b16 %v1530
      %v1603 = vunpack.c.l.b16 %v1531
      %v1604 = vunpack.c.l.b16 %v1532
      %v1605 = vunpack.c.l.b16 %v1533
      %v1606 = vunpack.c.l.b16 %v1534
      %v1607 = vunpack.c.l.b16 %v1535
      %v1608 = vunpack.c.l.b16 %v1536
      %v1609 = vunpack.c.l.b16 %v1537
      %v1610 = vunpack.c.l.b16 %v1538
      %v1611 = vunpack.c.l.b16 %v1539
      %v1612 = vunpack.c.l.b16 %v1540
      %v1613 = vunpack.c.l.b16 %v1541
      %v1614 = vunpack.c.l.b16 %v1542
      %v1615 = vunpack.c.l.b16 %v1543
      %v1616 = vunpack.c.l.b16 %v1544
      %v1617 = vunpack.c.l.b16 %v1545
      %v1618 = vunpack.c.l.b16 %v1546
      %v1619 = vunpack.c.l.b16 %v1547
      %v1620 = vpack.c.b16 %v1585, %v1584
      %v1621 = vpack.c.b16 %v1587, %v1586
      %v1622 = vpack.c.b16 %v1589, %v1588
      %v1623 = vpack.c.b16 %v1591, %v1590
      %v1624 = vpack.c.b16 %v1593, %v1592
      %v1625 = vpack.c.b16 %v1595, %v1594
      %v1626 = vpack.c.b16 %v1597, %v1596
      %v1627 = vpack.c.b16 %v1599, %v1598
      %v1628 = vpack.c.b16 %v1601, %v1600
      %v1629 = vpack.c.b16 %v1603, %v1602
      %v1630 = vpack.c.b16 %v1605, %v1604
      %v1631 = vpack.c.b16 %v1607, %v1606
      %v1632 = vpack.c.b16 %v1609, %v1608
      %v1633 = vpack.c.b16 %v1611, %v1610
      %v1634 = vpack.c.b16 %v1613, %v1612
      %v1635 = vpack.c.b16 %v1615, %v1614
      %v1636 = vpack.c.b16 %v1617, %v1616
      %v1637 = vpack.c.b16 %v1619, %v1618
      %v1639 = vshrl.u32 %v1620, 16
      %v1641 = vrot.slane %v1639, 7
      %v1642 = vshll.u32 %v1620, 16
      %v1644 = vor.u32 %v1641, %v1642
      %v1646 = vshrl.u32 %v1621, 16
      %v1648 = vrot.slane %v1646, 7
      %v1649 = vshll.u32 %v1621, 16
      %v1651 = vor.u32 %v1648, %v1649
      %v1653 = vshrl.u32 %v1622, 16
      %v1655 = vrot.slane %v1653, 7
      %v1656 = vshll.u32 %v1622, 16
      %v1658 = vor.u32 %v1655, %v1656
      %v1660 = vshrl.u32 %v1623, 16
      %v1662 = vrot.slane %v1660, 7
      %v1663 = vshll.u32 %v1623, 16
      %v1665 = vor.u32 %v1662, %v1663
      %v1667 = vshrl.u32 %v1624, 16
      %v1669 = vrot.slane %v1667, 7
      %v1670 = vshll.u32 %v1624, 16
      %v1672 = vor.u32 %v1669, %v1670
      %v1674 = vshrl.u32 %v1625, 16
      %v1676 = vrot.slane %v1674, 7
      %v1677 = vshll.u32 %v1625, 16
      %v1679 = vor.u32 %v1676, %v1677
      %v1681 = vshrl.u32 %v1626, 16
      %v1683 = vrot.slane %v1681, 7
      %v1684 = vshll.u32 %v1626, 16
      %v1686 = vor.u32 %v1683, %v1684
      %v1688 = vshrl.u32 %v1627, 16
      %v1690 = vrot.slane %v1688, 7
      %v1691 = vshll.u32 %v1627, 16
      %v1693 = vor.u32 %v1690, %v1691
      %v1695 = vshrl.u32 %v1628, 16
      %v1697 = vrot.slane %v1695, 7
      %v1698 = vshll.u32 %v1628, 16
      %v1700 = vor.u32 %v1697, %v1698
      %v1702 = vshrl.u32 %v1629, 16
      %v1704 = vrot.slane %v1702, 7
      %v1705 = vshll.u32 %v1629, 16
      %v1707 = vor.u32 %v1704, %v1705
      %v1709 = vshrl.u32 %v1630, 16
      %v1711 = vrot.slane %v1709, 7
      %v1712 = vshll.u32 %v1630, 16
      %v1714 = vor.u32 %v1711, %v1712
      %v1716 = vshrl.u32 %v1631, 16
      %v1718 = vrot.slane %v1716, 7
      %v1719 = vshll.u32 %v1631, 16
      %v1721 = vor.u32 %v1718, %v1719
      %v1723 = vshrl.u32 %v1632, 16
      %v1725 = vrot.slane %v1723, 7
      %v1726 = vshll.u32 %v1632, 16
      %v1728 = vor.u32 %v1725, %v1726
      %v1730 = vshrl.u32 %v1633, 16
      %v1732 = vrot.slane %v1730, 7
      %v1733 = vshll.u32 %v1633, 16
      %v1735 = vor.u32 %v1732, %v1733
      %v1737 = vshrl.u32 %v1634, 16
      %v1739 = vrot.slane %v1737, 7
      %v1740 = vshll.u32 %v1634, 16
      %v1742 = vor.u32 %v1739, %v1740
      %v1744 = vshrl.u32 %v1635, 16
      %v1746 = vrot.slane %v1744, 7
      %v1747 = vshll.u32 %v1635, 16
      %v1749 = vor.u32 %v1746, %v1747
      %v1751 = vshrl.u32 %v1636, 16
      %v1753 = vrot.slane %v1751, 7
      %v1754 = vshll.u32 %v1636, 16
      %v1756 = vor.u32 %v1753, %v1754
      %v1758 = vshrl.u32 %v1637, 16
      %v1760 = vrot.slane %v1758, 7
      %v1761 = vshll.u32 %v1637, 16
      %v1763 = vor.u32 %v1760, %v1761
      %vm1800 = vcmask 1040384
      %vm1801 = vsmask.f32 256
      %vm1802 = vmand %vm1800, %vm1801
      %v1803 = vsel %vm1802, 0, %v1644
      %v1804 = vsel %vm1802, 0, %v1651
      %v1805 = vsel %vm1802, 0, %v1658
      %v1806 = vsel %vm1802, 0, %v1665
      %v1807 = vsel %vm1802, 0, %v1672
      %v1808 = vsel %vm1802, 0, %v1679
      %v1809 = vsel %vm1802, 0, %v1686
      %v1810 = vsel %vm1802, 0, %v1693
      %v1811 = vsel %vm1802, 0, %v1700
      %v1812 = vsel %vm1802, 0, %v1707
      %v1813 = vsel %vm1802, 0, %v1714
      %v1814 = vsel %vm1802, 0, %v1721
      %v1815 = vsel %vm1802, 0, %v1728
      %v1816 = vsel %vm1802, 0, %v1735
      %v1817 = vsel %vm1802, 0, %v1742
      %v1818 = vsel %vm1802, 0, %v1749
      %v1819 = vsel %vm1802, 0, %v1756
      %v1820 = vsel %vm1802, 0, %v1763
      %v1821 = vsel %vm1802, %v1641, 0
      %v1822 = vsel %vm1802, %v1648, 0
      %v1823 = vsel %vm1802, %v1655, 0
      %v1824 = vsel %vm1802, %v1662, 0
      %v1825 = vsel %vm1802, %v1669, 0
      %v1826 = vsel %vm1802, %v1676, 0
      %v1827 = vsel %vm1802, %v1683, 0
      %v1828 = vsel %vm1802, %v1690, 0
      %v1829 = vsel %vm1802, %v1697, 0
      %v1830 = vsel %vm1802, %v1704, 0
      %v1831 = vsel %vm1802, %v1711, 0
      %v1832 = vsel %vm1802, %v1718, 0
      %v1833 = vsel %vm1802, %v1725, 0
      %v1834 = vsel %vm1802, %v1732, 0
      %v1835 = vsel %vm1802, %v1739, 0
      %v1836 = vsel %vm1802, %v1746, 0
      %v1837 = vsel %vm1802, %v1753, 0
      %v1838 = vsel %vm1802, %v1760, 0
      %vm1839 = vsmask.f32 7424
      %v1841 = vshrl.u32 %v1803, 16
      %v1843 = vshll.u32 %v1803, 16
      %v1845 = vrot.slane %v1843, 1
      %v1846 = vor.u32 %v1841, %v1845
      %v1848 = vshll.u32 %v1821, 16
      %v1850 = vrot.slane %v1848, 1
      %v1851 = vsel %vm1839, %v1846, %v1850
      %v1853 = vshrl.u32 %v1804, 16
      %v1855 = vshll.u32 %v1804, 16
      %v1857 = vrot.slane %v1855, 1
      %v1858 = vor.u32 %v1853, %v1857
      %v1860 = vshll.u32 %v1822, 16
      %v1862 = vrot.slane %v1860, 1
      %v1863 = vsel %vm1839, %v1858, %v1862
      %v1865 = vshrl.u32 %v1805, 16
      %v1867 = vshll.u32 %v1805, 16
      %v1869 = vrot.slane %v1867, 1
      %v1870 = vor.u32 %v1865, %v1869
      %v1872 = vshll.u32 %v1823, 16
      %v1874 = vrot.slane %v1872, 1
      %v1875 = vsel %vm1839, %v1870, %v1874
      %v1877 = vshrl.u32 %v1806, 16
      %v1879 = vshll.u32 %v1806, 16
      %v1881 = vrot.slane %v1879, 1
      %v1882 = vor.u32 %v1877, %v1881
      %v1884 = vshll.u32 %v1824, 16
      %v1886 = vrot.slane %v1884, 1
      %v1887 = vsel %vm1839, %v1882, %v1886
      %v1889 = vshrl.u32 %v1807, 16
      %v1891 = vshll.u32 %v1807, 16
      %v1893 = vrot.slane %v1891, 1
      %v1894 = vor.u32 %v1889, %v1893
      %v1896 = vshll.u32 %v1825, 16
      %v1898 = vrot.slane %v1896, 1
      %v1899 = vsel %vm1839, %v1894, %v1898
      %v1901 = vshrl.u32 %v1808, 16
      %v1903 = vshll.u32 %v1808, 16
      %v1905 = vrot.slane %v1903, 1
      %v1906 = vor.u32 %v1901, %v1905
      %v1908 = vshll.u32 %v1826, 16
      %v1910 = vrot.slane %v1908, 1
      %v1911 = vsel %vm1839, %v1906, %v1910
      %v1913 = vshrl.u32 %v1809, 16
      %v1915 = vshll.u32 %v1809, 16
      %v1917 = vrot.slane %v1915, 1
      %v1918 = vor.u32 %v1913, %v1917
      %v1920 = vshll.u32 %v1827, 16
      %v1922 = vrot.slane %v1920, 1
      %v1923 = vsel %vm1839, %v1918, %v1922
      %v1925 = vshrl.u32 %v1810, 16
      %v1927 = vshll.u32 %v1810, 16
      %v1929 = vrot.slane %v1927, 1
      %v1930 = vor.u32 %v1925, %v1929
      %v1932 = vshll.u32 %v1828, 16
      %v1934 = vrot.slane %v1932, 1
      %v1935 = vsel %vm1839, %v1930, %v1934
      %v1937 = vshrl.u32 %v1811, 16
      %v1939 = vshll.u32 %v1811, 16
      %v1941 = vrot.slane %v1939, 1
      %v1942 = vor.u32 %v1937, %v1941
      %v1944 = vshll.u32 %v1829, 16
      %v1946 = vrot.slane %v1944, 1
      %v1947 = vsel %vm1839, %v1942, %v1946
      %v1949 = vshrl.u32 %v1812, 16
      %v1951 = vshll.u32 %v1812, 16
      %v1953 = vrot.slane %v1951, 1
      %v1954 = vor.u32 %v1949, %v1953
      %v1956 = vshll.u32 %v1830, 16
      %v1958 = vrot.slane %v1956, 1
      %v1959 = vsel %vm1839, %v1954, %v1958
      %v1961 = vshrl.u32 %v1813, 16
      %v1963 = vshll.u32 %v1813, 16
      %v1965 = vrot.slane %v1963, 1
      %v1966 = vor.u32 %v1961, %v1965
      %v1968 = vshll.u32 %v1831, 16
      %v1970 = vrot.slane %v1968, 1
      %v1971 = vsel %vm1839, %v1966, %v1970
      %v1973 = vshrl.u32 %v1814, 16
      %v1975 = vshll.u32 %v1814, 16
      %v1977 = vrot.slane %v1975, 1
      %v1978 = vor.u32 %v1973, %v1977
      %v1980 = vshll.u32 %v1832, 16
      %v1982 = vrot.slane %v1980, 1
      %v1983 = vsel %vm1839, %v1978, %v1982
      %v1985 = vshrl.u32 %v1815, 16
      %v1987 = vshll.u32 %v1815, 16
      %v1989 = vrot.slane %v1987, 1
      %v1990 = vor.u32 %v1985, %v1989
      %v1992 = vshll.u32 %v1833, 16
      %v1994 = vrot.slane %v1992, 1
      %v1995 = vsel %vm1839, %v1990, %v1994
      %v1997 = vshrl.u32 %v1816, 16
      %v1999 = vshll.u32 %v1816, 16
      %v2001 = vrot.slane %v1999, 1
      %v2002 = vor.u32 %v1997, %v2001
      %v2004 = vshll.u32 %v1834, 16
      %v2006 = vrot.slane %v2004, 1
      %v2007 = vsel %vm1839, %v2002, %v2006
      %v2009 = vshrl.u32 %v1817, 16
      %v2011 = vshll.u32 %v1817, 16
      %v2013 = vrot.slane %v2011, 1
      %v2014 = vor.u32 %v2009, %v2013
      %v2016 = vshll.u32 %v1835, 16
      %v2018 = vrot.slane %v2016, 1
      %v2019 = vsel %vm1839, %v2014, %v2018
      %v2021 = vshrl.u32 %v1818, 16
      %v2023 = vshll.u32 %v1818, 16
      %v2025 = vrot.slane %v2023, 1
      %v2026 = vor.u32 %v2021, %v2025
      %v2028 = vshll.u32 %v1836, 16
      %v2030 = vrot.slane %v2028, 1
      %v2031 = vsel %vm1839, %v2026, %v2030
      %v2033 = vshrl.u32 %v1819, 16
      %v2035 = vshll.u32 %v1819, 16
      %v2037 = vrot.slane %v2035, 1
      %v2038 = vor.u32 %v2033, %v2037
      %v2040 = vshll.u32 %v1837, 16
      %v2042 = vrot.slane %v2040, 1
      %v2043 = vsel %vm1839, %v2038, %v2042
      %v2045 = vshrl.u32 %v1820, 16
      %v2047 = vshll.u32 %v1820, 16
      %v2049 = vrot.slane %v2047, 1
      %v2050 = vor.u32 %v2045, %v2049
      %v2052 = vshll.u32 %v1838, 16
      %v2054 = vrot.slane %v2052, 1
      %v2055 = vsel %vm1839, %v2050, %v2054
      %2056 = vrot.lane.b32.xlu0 %v1851, 8
      %v2057 = vpop.permute.xlu0 %2056
      %2058 = vrot.lane.b32.xlu0 %v1863, 8
      %v2059 = vpop.permute.xlu0 %2058
      %2060 = vrot.lane.b32.xlu0 %v1875, 8
      %v2061 = vpop.permute.xlu0 %2060
      %2062 = vrot.lane.b32.xlu0 %v1887, 8
      %v2063 = vpop.permute.xlu0 %2062
      %2064 = vrot.lane.b32.xlu0 %v1899, 8
      %v2065 = vpop.permute.xlu0 %2064
      %2066 = vrot.lane.b32.xlu0 %v1911, 8
      %v2067 = vpop.permute.xlu0 %2066
      %2068 = vrot.lane.b32.xlu0 %v1923, 8
      %v2069 = vpop.permute.xlu0 %2068
      %2070 = vrot.lane.b32.xlu0 %v1935, 8
      %v2071 = vpop.permute.xlu0 %2070
      %2072 = vrot.lane.b32.xlu0 %v1947, 8
      %v2073 = vpop.permute.xlu0 %2072
      %2074 = vrot.lane.b32.xlu0 %v1959, 8
      %v2075 = vpop.permute.xlu0 %2074
      %2076 = vrot.lane.b32.xlu0 %v1971, 8
      %v2077 = vpop.permute.xlu0 %2076
      %2078 = vrot.lane.b32.xlu0 %v1983, 8
      %v2079 = vpop.permute.xlu0 %2078
      %2080 = vrot.lane.b32.xlu0 %v1995, 8
      %v2081 = vpop.permute.xlu0 %2080
      %2082 = vrot.lane.b32.xlu0 %v2007, 8
      %v2083 = vpop.permute.xlu0 %2082
      %2084 = vrot.lane.b32.xlu0 %v2019, 8
      %v2085 = vpop.permute.xlu0 %2084
      %2086 = vrot.lane.b32.xlu0 %v2031, 8
      %v2087 = vpop.permute.xlu0 %2086
      %2088 = vrot.lane.b32.xlu0 %v2043, 8
      %v2089 = vpop.permute.xlu0 %2088
      %2090 = vrot.lane.b32.xlu0 %v2055, 8
      %v2091 = vpop.permute.xlu0 %2090
      %vm2128 = vcmask 1046528
      %v2129 = vrot.slane %v1803, 1
      %v2130 = vrot.slane %v1821, 1
      %v2131 = vsel %vm2128, %v2129, %v2130
      %v2132 = vrot.slane %v1804, 1
      %v2133 = vrot.slane %v1822, 1
      %v2134 = vsel %vm2128, %v2132, %v2133
      %v2135 = vrot.slane %v1805, 1
      %v2136 = vrot.slane %v1823, 1
      %v2137 = vsel %vm2128, %v2135, %v2136
      %v2138 = vrot.slane %v1806, 1
      %v2139 = vrot.slane %v1824, 1
      %v2140 = vsel %vm2128, %v2138, %v2139
      %v2141 = vrot.slane %v1807, 1
      %v2142 = vrot.slane %v1825, 1
      %v2143 = vsel %vm2128, %v2141, %v2142
      %v2144 = vrot.slane %v1808, 1
      %v2145 = vrot.slane %v1826, 1
      %v2146 = vsel %vm2128, %v2144, %v2145
      %v2147 = vrot.slane %v1809, 1
      %v2148 = vrot.slane %v1827, 1
      %v2149 = vsel %vm2128, %v2147, %v2148
      %v2150 = vrot.slane %v1810, 1
      %v2151 = vrot.slane %v1828, 1
      %v2152 = vsel %vm2128, %v2150, %v2151
      %v2153 = vrot.slane %v1811, 1
      %v2154 = vrot.slane %v1829, 1
      %v2155 = vsel %vm2128, %v2153, %v2154
      %v2156 = vrot.slane %v1812, 1
      %v2157 = vrot.slane %v1830, 1
      %v2158 = vsel %vm2128, %v2156, %v2157
      %v2159 = vrot.slane %v1813, 1
      %v2160 = vrot.slane %v1831, 1
      %v2161 = vsel %vm2128, %v2159, %v2160
      %v2162 = vrot.slane %v1814, 1
      %v2163 = vrot.slane %v1832, 1
      %v2164 = vsel %vm2128, %v2162, %v2163
      %v2165 = vrot.slane %v1815, 1
      %v2166 = vrot.slane %v1833, 1
      %v2167 = vsel %vm2128, %v2165, %v2166
      %v2168 = vrot.slane %v1816, 1
      %v2169 = vrot.slane %v1834, 1
      %v2170 = vsel %vm2128, %v2168, %v2169
      %v2171 = vrot.slane %v1817, 1
      %v2172 = vrot.slane %v1835, 1
      %v2173 = vsel %vm2128, %v2171, %v2172
      %v2174 = vrot.slane %v1818, 1
      %v2175 = vrot.slane %v1836, 1
      %v2176 = vsel %vm2128, %v2174, %v2175
      %v2177 = vrot.slane %v1819, 1
      %v2178 = vrot.slane %v1837, 1
      %v2179 = vsel %vm2128, %v2177, %v2178
      %v2180 = vrot.slane %v1820, 1
      %v2181 = vrot.slane %v1838, 1
      %v2182 = vsel %vm2128, %v2180, %v2181
      %2183 = vrot.lane.b32.xlu0 %v2131, 16
      %v2184 = vpop.permute.xlu0 %2183
      %2185 = vrot.lane.b32.xlu0 %v2134, 16
      %v2186 = vpop.permute.xlu0 %2185
      %2187 = vrot.lane.b32.xlu0 %v2137, 16
      %v2188 = vpop.permute.xlu0 %2187
      %2189 = vrot.lane.b32.xlu0 %v2140, 16
      %v2190 = vpop.permute.xlu0 %2189
      %2191 = vrot.lane.b32.xlu0 %v2143, 16
      %v2192 = vpop.permute.xlu0 %2191
      %2193 = vrot.lane.b32.xlu0 %v2146, 16
      %v2194 = vpop.permute.xlu0 %2193
      %2195 = vrot.lane.b32.xlu0 %v2149, 16
      %v2196 = vpop.permute.xlu0 %2195
      %2197 = vrot.lane.b32.xlu0 %v2152, 16
      %v2198 = vpop.permute.xlu0 %2197
      %2199 = vrot.lane.b32.xlu0 %v2155, 16
      %v2200 = vpop.permute.xlu0 %2199
      %2201 = vrot.lane.b32.xlu0 %v2158, 16
      %v2202 = vpop.permute.xlu0 %2201
      %2203 = vrot.lane.b32.xlu0 %v2161, 16
      %v2204 = vpop.permute.xlu0 %2203
      %2205 = vrot.lane.b32.xlu0 %v2164, 16
      %v2206 = vpop.permute.xlu0 %2205
      %2207 = vrot.lane.b32.xlu0 %v2167, 16
      %v2208 = vpop.permute.xlu0 %2207
      %2209 = vrot.lane.b32.xlu0 %v2170, 16
      %v2210 = vpop.permute.xlu0 %2209
      %2211 = vrot.lane.b32.xlu0 %v2173, 16
      %v2212 = vpop.permute.xlu0 %2211
      %2213 = vrot.lane.b32.xlu0 %v2176, 16
      %v2214 = vpop.permute.xlu0 %2213
      %2215 = vrot.lane.b32.xlu0 %v2179, 16
      %v2216 = vpop.permute.xlu0 %2215
      %2217 = vrot.lane.b32.xlu0 %v2182, 16
      %v2218 = vpop.permute.xlu0 %2217
      %v2220 = vsel %vm450, %v1803, %v2057
      %v2222 = vsel %vm450, %v1804, %v2059
      %v2224 = vsel %vm450, %v1805, %v2061
      %v2226 = vsel %vm450, %v1806, %v2063
      %v2228 = vsel %vm450, %v1807, %v2065
      %v2230 = vsel %vm450, %v1808, %v2067
      %v2232 = vsel %vm450, %v1809, %v2069
      %v2234 = vsel %vm450, %v1810, %v2071
      %v2236 = vsel %vm450, %v1811, %v2073
      %v2238 = vsel %vm450, %v1812, %v2075
      %v2240 = vsel %vm450, %v1813, %v2077
      %v2242 = vsel %vm450, %v1814, %v2079
      %v2244 = vsel %vm450, %v1815, %v2081
      %v2246 = vsel %vm450, %v1816, %v2083
      %v2248 = vsel %vm450, %v1817, %v2085
      %v2250 = vsel %vm450, %v1818, %v2087
      %v2252 = vsel %vm450, %v1819, %v2089
      %v2254 = vsel %vm450, %v1820, %v2091
      %vm2255 = vcmask 130048
      %v2257 = vsel %vm2255, %v2220, %v2184
      %v2259 = vsel %vm2255, %v2222, %v2186
      %v2261 = vsel %vm2255, %v2224, %v2188
      %v2263 = vsel %vm2255, %v2226, %v2190
      %v2265 = vsel %vm2255, %v2228, %v2192
      %v2267 = vsel %vm2255, %v2230, %v2194
      %v2269 = vsel %vm2255, %v2232, %v2196
      %v2271 = vsel %vm2255, %v2234, %v2198
      %v2273 = vsel %vm2255, %v2236, %v2200
      %v2275 = vsel %vm2255, %v2238, %v2202
      %v2277 = vsel %vm2255, %v2240, %v2204
      %v2279 = vsel %vm2255, %v2242, %v2206
      %v2281 = vsel %vm2255, %v2244, %v2208
      %v2283 = vsel %vm2255, %v2246, %v2210
      %v2285 = vsel %vm2255, %v2248, %v2212
      %v2287 = vsel %vm2255, %v2250, %v2214
      %v2289 = vsel %vm2255, %v2252, %v2216
      %v2291 = vsel %vm2255, %v2254, %v2218
      %v2292 = vld [vmem:[%s5] sm:$0xf]
      %v2293 = vld [vmem:[%s5 + $0x4] sm:$0xf]
      %v2294 = vld [vmem:[%s5 + $0x8] sm:$0xf]
      %s2295 = scalar_lea.vmem %s5, 12
      %v2296 = vld [vmem:[%s2295] sm:$0xf]
      %v2297 = vld [vmem:[%s2295 + $0x4] sm:$0xf]
      %v2298 = vld [vmem:[%s2295 + $0x8] sm:$0xf]
      %v2302 = vunpack.c.l.b16 %v2296
      %v2303 = vunpack.c.l.b16 %v2297
      %v2304 = vunpack.c.l.b16 %v2298
      %v2305 = vpack.c.b16 %v2303, %v2302
      %v2306 = vpack.c.b16 %v2304, %v2304
      %vm2308 = vcmask 195584
      %v2309 = vsel %vm2308, %v2259, 0
      %v2311 = vsel %vm2308, %v2261, 0
      %v2313 = vsel %vm2308, %v2263, 0
      %v2315 = vsel %vm2308, %v2265, 0
      %v2317 = vsel %vm2308, %v2267, 0
      %v2319 = vsel %vm2308, %v2269, 0
      %v2321 = vsel %vm2308, %v2271, 0
      %v2323 = vsel %vm2308, %v2273, 0
      %v2325 = vsel %vm2308, %v2275, 0
      %v2327 = vsel %vm2308, %v2277, 0
      %v2329 = vsel %vm2308, %v2279, 0
      %v2331 = vsel %vm2308, %v2281, 0
      %v2333 = vsel %vm2308, %v2283, 0
      %v2335 = vsel %vm2308, %v2285, 0
      %v2337 = vsel %vm2308, %v2287, 0
      %v2339 = vsel %vm2308, %v2289, 0
      %v2342 = vsel %vm505, %v2306, 0
      %2344 = vmatpush.bf16.msra.mxu0 0
      %2345 = vmatpush.bf16.msra.mxu0 0
      %2346 = vmatpush.bf16.msra.mxu0 0
      %2347 = vmatpush.bf16.msra.mxu0 0
      %2348 = vmatpush.bf16.msra.mxu0 0
      %2349 = vmatpush.bf16.msra.mxu0 0
      %2350 = vmatpush.bf16.msra.mxu0 %v2342
      %2351 = vmatpush.bf16.msra.mxu0 %v2305
      %2352 = vmatmul.bf16.gmra.mxu0 %v2309
      %v2353 = vpop.f32.mrf.mxu0
      %v2354 = vadd.f32 0.0, %v2353
      %v2355 = vpop.f32.mrf.mxu0
      %v2356 = vadd.f32 0.0, %v2355
      %2357 = vmatmul.bf16.gmra.mxu0 %v2311
      %v2358 = vpop.f32.mrf.mxu0
      %v2359 = vadd.f32 0.0, %v2358
      %v2360 = vpop.f32.mrf.mxu0
      %v2361 = vadd.f32 0.0, %v2360
      %2362 = vmatmul.bf16.gmra.mxu0 %v2313
      %v2363 = vpop.f32.mrf.mxu0
      %v2364 = vadd.f32 0.0, %v2363
      %v2365 = vpop.f32.mrf.mxu0
      %v2366 = vadd.f32 0.0, %v2365
      %2367 = vmatmul.bf16.gmra.mxu0 %v2315
      %v2368 = vpop.f32.mrf.mxu0
      %v2369 = vadd.f32 0.0, %v2368
      %v2370 = vpop.f32.mrf.mxu0
      %v2371 = vadd.f32 0.0, %v2370
      %2372 = vmatmul.bf16.gmra.mxu0 %v2317
      %v2373 = vpop.f32.mrf.mxu0
      %v2374 = vadd.f32 0.0, %v2373
      %v2375 = vpop.f32.mrf.mxu0
      %v2376 = vadd.f32 0.0, %v2375
      %2377 = vmatmul.bf16.gmra.mxu0 %v2319
      %v2378 = vpop.f32.mrf.mxu0
      %v2379 = vadd.f32 0.0, %v2378
      %v2380 = vpop.f32.mrf.mxu0
      %v2381 = vadd.f32 0.0, %v2380
      %2382 = vmatmul.bf16.gmra.mxu0 %v2321
      %v2383 = vpop.f32.mrf.mxu0
      %v2384 = vadd.f32 0.0, %v2383
      %v2385 = vpop.f32.mrf.mxu0
      %v2386 = vadd.f32 0.0, %v2385
      %2387 = vmatmul.bf16.gmra.mxu0 %v2323
      %v2388 = vpop.f32.mrf.mxu0
      %v2389 = vadd.f32 0.0, %v2388
      %v2390 = vpop.f32.mrf.mxu0
      %v2391 = vadd.f32 0.0, %v2390
      %2392 = vmatmul.bf16.gmra.mxu0 %v2325
      %v2393 = vpop.f32.mrf.mxu0
      %v2394 = vadd.f32 0.0, %v2393
      %v2395 = vpop.f32.mrf.mxu0
      %v2396 = vadd.f32 0.0, %v2395
      %2397 = vmatmul.bf16.gmra.mxu0 %v2327
      %v2398 = vpop.f32.mrf.mxu0
      %v2399 = vadd.f32 0.0, %v2398
      %v2400 = vpop.f32.mrf.mxu0
      %v2401 = vadd.f32 0.0, %v2400
      %2402 = vmatmul.bf16.gmra.mxu0 %v2329
      %v2403 = vpop.f32.mrf.mxu0
      %v2404 = vadd.f32 0.0, %v2403
      %v2405 = vpop.f32.mrf.mxu0
      %v2406 = vadd.f32 0.0, %v2405
      %2407 = vmatmul.bf16.gmra.mxu0 %v2331
      %v2408 = vpop.f32.mrf.mxu0
      %v2409 = vadd.f32 0.0, %v2408
      %v2410 = vpop.f32.mrf.mxu0
      %v2411 = vadd.f32 0.0, %v2410
      %2412 = vmatmul.bf16.gmra.mxu0 %v2333
      %v2413 = vpop.f32.mrf.mxu0
      %v2414 = vadd.f32 0.0, %v2413
      %v2415 = vpop.f32.mrf.mxu0
      %v2416 = vadd.f32 0.0, %v2415
      %2417 = vmatmul.bf16.gmra.mxu0 %v2335
      %v2418 = vpop.f32.mrf.mxu0
      %v2419 = vadd.f32 0.0, %v2418
      %v2420 = vpop.f32.mrf.mxu0
      %v2421 = vadd.f32 0.0, %v2420
      %2422 = vmatmul.bf16.gmra.mxu0 %v2337
      %v2423 = vpop.f32.mrf.mxu0
      %v2424 = vadd.f32 0.0, %v2423
      %v2425 = vpop.f32.mrf.mxu0
      %v2426 = vadd.f32 0.0, %v2425
      %2427 = vmatmul.bf16.gmra.mxu0 %v2339
      %v2428 = vpop.f32.mrf.mxu0
      %v2429 = vadd.f32 0.0, %v2428
      %v2430 = vpop.f32.mrf.mxu0
      %v2431 = vadd.f32 0.0, %v2430
      %2432 = vdwg.mxu0
      %v2436 = vunpack.c.l.b16 %v2292
      %v2437 = vunpack.c.l.b16 %v2293
      %v2438 = vunpack.c.l.b16 %v2294
      %v2439 = vpack.c.b16 %v2437, %v2436
      %v2440 = vpack.c.b16 %v2438, %v2438
      %v2442 = vsel %vm2308, %v2257, 0
      %v2445 = vsel %vm505, %v2440, 0
      %2447 = vmatpush.bf16.msra.mxu0 0
      %2448 = vmatpush.bf16.msra.mxu0 0
      %2449 = vmatpush.bf16.msra.mxu0 0
      %2450 = vmatpush.bf16.msra.mxu0 0
      %2451 = vmatpush.bf16.msra.mxu0 0
      %2452 = vmatpush.bf16.msra.mxu0 0
      %2453 = vmatpush.bf16.msra.mxu0 %v2445
      %2454 = vmatpush.bf16.msra.mxu0 %v2439
      %2455 = vmatmul.bf16.gmra.mxu0 %v2442
      %v2456 = vpop.f32.mrf.mxu0
      %v2457 = vadd.f32 %v2354, %v2456
      %v2458 = vpop.f32.mrf.mxu0
      %v2459 = vadd.f32 %v2356, %v2458
      %2460 = vmatmul.bf16.gmra.mxu0 %v2309
      %v2461 = vpop.f32.mrf.mxu0
      %v2462 = vadd.f32 %v2359, %v2461
      %v2463 = vpop.f32.mrf.mxu0
      %v2464 = vadd.f32 %v2361, %v2463
      %2465 = vmatmul.bf16.gmra.mxu0 %v2311
      %v2466 = vpop.f32.mrf.mxu0
      %v2467 = vadd.f32 %v2364, %v2466
      %v2468 = vpop.f32.mrf.mxu0
      %v2469 = vadd.f32 %v2366, %v2468
      %2470 = vmatmul.bf16.gmra.mxu0 %v2313
      %v2471 = vpop.f32.mrf.mxu0
      %v2472 = vadd.f32 %v2369, %v2471
      %v2473 = vpop.f32.mrf.mxu0
      %v2474 = vadd.f32 %v2371, %v2473
      %2475 = vmatmul.bf16.gmra.mxu0 %v2315
      %v2476 = vpop.f32.mrf.mxu0
      %v2477 = vadd.f32 %v2374, %v2476
      %v2478 = vpop.f32.mrf.mxu0
      %v2479 = vadd.f32 %v2376, %v2478
      %2480 = vmatmul.bf16.gmra.mxu0 %v2317
      %v2481 = vpop.f32.mrf.mxu0
      %v2482 = vadd.f32 %v2379, %v2481
      %v2483 = vpop.f32.mrf.mxu0
      %v2484 = vadd.f32 %v2381, %v2483
      %2485 = vmatmul.bf16.gmra.mxu0 %v2319
      %v2486 = vpop.f32.mrf.mxu0
      %v2487 = vadd.f32 %v2384, %v2486
      %v2488 = vpop.f32.mrf.mxu0
      %v2489 = vadd.f32 %v2386, %v2488
      %2490 = vmatmul.bf16.gmra.mxu0 %v2321
      %v2491 = vpop.f32.mrf.mxu0
      %v2492 = vadd.f32 %v2389, %v2491
      %v2493 = vpop.f32.mrf.mxu0
      %v2494 = vadd.f32 %v2391, %v2493
      %2495 = vmatmul.bf16.gmra.mxu0 %v2323
      %v2496 = vpop.f32.mrf.mxu0
      %v2497 = vadd.f32 %v2394, %v2496
      %v2498 = vpop.f32.mrf.mxu0
      %v2499 = vadd.f32 %v2396, %v2498
      %2500 = vmatmul.bf16.gmra.mxu0 %v2325
      %v2501 = vpop.f32.mrf.mxu0
      %v2502 = vadd.f32 %v2399, %v2501
      %v2503 = vpop.f32.mrf.mxu0
      %v2504 = vadd.f32 %v2401, %v2503
      %2505 = vmatmul.bf16.gmra.mxu0 %v2327
      %v2506 = vpop.f32.mrf.mxu0
      %v2507 = vadd.f32 %v2404, %v2506
      %v2508 = vpop.f32.mrf.mxu0
      %v2509 = vadd.f32 %v2406, %v2508
      %2510 = vmatmul.bf16.gmra.mxu0 %v2329
      %v2511 = vpop.f32.mrf.mxu0
      %v2512 = vadd.f32 %v2409, %v2511
      %v2513 = vpop.f32.mrf.mxu0
      %v2514 = vadd.f32 %v2411, %v2513
      %2515 = vmatmul.bf16.gmra.mxu0 %v2331
      %v2516 = vpop.f32.mrf.mxu0
      %v2517 = vadd.f32 %v2414, %v2516
      %v2518 = vpop.f32.mrf.mxu0
      %v2519 = vadd.f32 %v2416, %v2518
      %2520 = vmatmul.bf16.gmra.mxu0 %v2333
      %v2521 = vpop.f32.mrf.mxu0
      %v2522 = vadd.f32 %v2419, %v2521
      %v2523 = vpop.f32.mrf.mxu0
      %v2524 = vadd.f32 %v2421, %v2523
      %2525 = vmatmul.bf16.gmra.mxu0 %v2335
      %v2526 = vpop.f32.mrf.mxu0
      %v2527 = vadd.f32 %v2424, %v2526
      %v2528 = vpop.f32.mrf.mxu0
      %v2529 = vadd.f32 %v2426, %v2528
      %2530 = vmatmul.bf16.gmra.mxu0 %v2337
      %v2531 = vpop.f32.mrf.mxu0
      %v2532 = vadd.f32 %v2429, %v2531
      %v2533 = vpop.f32.mrf.mxu0
      %v2534 = vadd.f32 %v2431, %v2533
      %2535 = vdwg.mxu0
      %s2536 = scalar_lea.vmem %s5, 24
      %v2537 = vld [vmem:[%s2536] sm:$0xf]
      %v2538 = vld [vmem:[%s2536 + $0x4] sm:$0xf]
      %v2539 = vld [vmem:[%s2536 + $0x8] sm:$0xf]
      %v2543 = vunpack.c.l.b16 %v2537
      %v2544 = vunpack.c.l.b16 %v2538
      %v2545 = vunpack.c.l.b16 %v2539
      %v2546 = vpack.c.b16 %v2544, %v2543
      %v2547 = vpack.c.b16 %v2545, %v2545
      %v2549 = vsel %vm2308, %v2291, 0
      %v2552 = vsel %vm505, %v2547, 0
      %2554 = vmatpush.bf16.msra.mxu0 0
      %2555 = vmatpush.bf16.msra.mxu0 0
      %2556 = vmatpush.bf16.msra.mxu0 0
      %2557 = vmatpush.bf16.msra.mxu0 0
      %2558 = vmatpush.bf16.msra.mxu0 0
      %2559 = vmatpush.bf16.msra.mxu0 0
      %2560 = vmatpush.bf16.msra.mxu0 %v2552
      %2561 = vmatpush.bf16.msra.mxu0 %v2546
      %2562 = vmatmul.bf16.gmra.mxu0 %v2311
      %v2563 = vpop.f32.mrf.mxu0
      %v2564 = vadd.f32 0.0, %v2563
      %v2565 = vpop.f32.mrf.mxu0
      %v2566 = vadd.f32 0.0, %v2565
      %2567 = vmatmul.bf16.gmra.mxu0 %v2313
      %v2568 = vpop.f32.mrf.mxu0
      %v2569 = vadd.f32 0.0, %v2568
      %v2570 = vpop.f32.mrf.mxu0
      %v2571 = vadd.f32 0.0, %v2570
      %2572 = vmatmul.bf16.gmra.mxu0 %v2315
      %v2573 = vpop.f32.mrf.mxu0
      %v2574 = vadd.f32 0.0, %v2573
      %v2575 = vpop.f32.mrf.mxu0
      %v2576 = vadd.f32 0.0, %v2575
      %2577 = vmatmul.bf16.gmra.mxu0 %v2317
      %v2578 = vpop.f32.mrf.mxu0
      %v2579 = vadd.f32 0.0, %v2578
      %v2580 = vpop.f32.mrf.mxu0
      %v2581 = vadd.f32 0.0, %v2580
      %2582 = vmatmul.bf16.gmra.mxu0 %v2319
      %v2583 = vpop.f32.mrf.mxu0
      %v2584 = vadd.f32 0.0, %v2583
      %v2585 = vpop.f32.mrf.mxu0
      %v2586 = vadd.f32 0.0, %v2585
      %2587 = vmatmul.bf16.gmra.mxu0 %v2321
      %v2588 = vpop.f32.mrf.mxu0
      %v2589 = vadd.f32 0.0, %v2588
      %v2590 = vpop.f32.mrf.mxu0
      %v2591 = vadd.f32 0.0, %v2590
      %2592 = vmatmul.bf16.gmra.mxu0 %v2323
      %v2593 = vpop.f32.mrf.mxu0
      %v2594 = vadd.f32 0.0, %v2593
      %v2595 = vpop.f32.mrf.mxu0
      %v2596 = vadd.f32 0.0, %v2595
      %2597 = vmatmul.bf16.gmra.mxu0 %v2325
      %v2598 = vpop.f32.mrf.mxu0
      %v2599 = vadd.f32 0.0, %v2598
      %v2600 = vpop.f32.mrf.mxu0
      %v2601 = vadd.f32 0.0, %v2600
      %2602 = vmatmul.bf16.gmra.mxu0 %v2327
      %v2603 = vpop.f32.mrf.mxu0
      %v2604 = vadd.f32 0.0, %v2603
      %v2605 = vpop.f32.mrf.mxu0
      %v2606 = vadd.f32 0.0, %v2605
      %2607 = vmatmul.bf16.gmra.mxu0 %v2329
      %v2608 = vpop.f32.mrf.mxu0
      %v2609 = vadd.f32 0.0, %v2608
      %v2610 = vpop.f32.mrf.mxu0
      %v2611 = vadd.f32 0.0, %v2610
      %2612 = vmatmul.bf16.gmra.mxu0 %v2331
      %v2613 = vpop.f32.mrf.mxu0
      %v2614 = vadd.f32 0.0, %v2613
      %v2615 = vpop.f32.mrf.mxu0
      %v2616 = vadd.f32 0.0, %v2615
      %2617 = vmatmul.bf16.gmra.mxu0 %v2333
      %v2618 = vpop.f32.mrf.mxu0
      %v2619 = vadd.f32 0.0, %v2618
      %v2620 = vpop.f32.mrf.mxu0
      %v2621 = vadd.f32 0.0, %v2620
      %2622 = vmatmul.bf16.gmra.mxu0 %v2335
      %v2623 = vpop.f32.mrf.mxu0
      %v2624 = vadd.f32 0.0, %v2623
      %v2625 = vpop.f32.mrf.mxu0
      %v2626 = vadd.f32 0.0, %v2625
      %2627 = vmatmul.bf16.gmra.mxu0 %v2337
      %v2628 = vpop.f32.mrf.mxu0
      %v2629 = vadd.f32 0.0, %v2628
      %v2630 = vpop.f32.mrf.mxu0
      %v2631 = vadd.f32 0.0, %v2630
      %2632 = vmatmul.bf16.gmra.mxu0 %v2339
      %v2633 = vpop.f32.mrf.mxu0
      %v2634 = vadd.f32 0.0, %v2633
      %v2635 = vpop.f32.mrf.mxu0
      %v2636 = vadd.f32 0.0, %v2635
      %2637 = vmatmul.bf16.gmra.mxu0 %v2549
      %v2638 = vpop.f32.mrf.mxu0
      %v2639 = vadd.f32 0.0, %v2638
      %v2640 = vpop.f32.mrf.mxu0
      %v2641 = vadd.f32 0.0, %v2640
      %2642 = vdwg.mxu0
      %v2643 = vadd.f32 %v2457, %v2564
      %v2644 = vadd.f32 %v2459, %v2566
      %v2645 = vadd.f32 %v2462, %v2569
      %v2646 = vadd.f32 %v2464, %v2571
      %v2647 = vadd.f32 %v2467, %v2574
      %v2648 = vadd.f32 %v2469, %v2576
      %v2649 = vadd.f32 %v2472, %v2579
      %v2650 = vadd.f32 %v2474, %v2581
      %v2651 = vadd.f32 %v2477, %v2584
      %v2652 = vadd.f32 %v2479, %v2586
      %v2653 = vadd.f32 %v2482, %v2589
      %v2654 = vadd.f32 %v2484, %v2591
      %v2655 = vadd.f32 %v2487, %v2594
      %v2656 = vadd.f32 %v2489, %v2596
      %v2657 = vadd.f32 %v2492, %v2599
      %v2658 = vadd.f32 %v2494, %v2601
      %v2659 = vadd.f32 %v2497, %v2604
      %v2660 = vadd.f32 %v2499, %v2606
      %v2661 = vadd.f32 %v2502, %v2609
      %v2662 = vadd.f32 %v2504, %v2611
      %v2663 = vadd.f32 %v2507, %v2614
      %v2664 = vadd.f32 %v2509, %v2616
      %v2665 = vadd.f32 %v2512, %v2619
      %v2666 = vadd.f32 %v2514, %v2621
      %v2667 = vadd.f32 %v2517, %v2624
      %v2668 = vadd.f32 %v2519, %v2626
      %v2669 = vadd.f32 %v2522, %v2629
      %v2670 = vadd.f32 %v2524, %v2631
      %v2671 = vadd.f32 %v2527, %v2634
      %v2672 = vadd.f32 %v2529, %v2636
      %v2673 = vadd.f32 %v2532, %v2639
      %v2674 = vadd.f32 %v2534, %v2641
      %v2675 = vpack.c.bf16 %v2643, %v2643
      %v2676 = vpack.c.bf16 %v2644, %v2644
      %v2677 = vpack.c.bf16 %v2645, %v2645
      %v2678 = vpack.c.bf16 %v2646, %v2646
      %v2679 = vpack.c.bf16 %v2647, %v2647
      %v2680 = vpack.c.bf16 %v2648, %v2648
      %v2681 = vpack.c.bf16 %v2649, %v2649
      %v2682 = vpack.c.bf16 %v2650, %v2650
      %v2683 = vpack.c.bf16 %v2651, %v2651
      %v2684 = vpack.c.bf16 %v2652, %v2652
      %v2685 = vpack.c.bf16 %v2653, %v2653
      %v2686 = vpack.c.bf16 %v2654, %v2654
      %v2687 = vpack.c.bf16 %v2655, %v2655
      %v2688 = vpack.c.bf16 %v2656, %v2656
      %v2689 = vpack.c.bf16 %v2657, %v2657
      %v2690 = vpack.c.bf16 %v2658, %v2658
      %v2691 = vpack.c.bf16 %v2659, %v2659
      %v2692 = vpack.c.bf16 %v2660, %v2660
      %v2693 = vpack.c.bf16 %v2661, %v2661
      %v2694 = vpack.c.bf16 %v2662, %v2662
      %v2695 = vpack.c.bf16 %v2663, %v2663
      %v2696 = vpack.c.bf16 %v2664, %v2664
      %v2697 = vpack.c.bf16 %v2665, %v2665
      %v2698 = vpack.c.bf16 %v2666, %v2666
      %v2699 = vpack.c.bf16 %v2667, %v2667
      %v2700 = vpack.c.bf16 %v2668, %v2668
      %v2701 = vpack.c.bf16 %v2669, %v2669
      %v2702 = vpack.c.bf16 %v2670, %v2670
      %v2703 = vpack.c.bf16 %v2671, %v2671
      %v2704 = vpack.c.bf16 %v2672, %v2672
      %v2705 = vpack.c.bf16 %v2673, %v2673
      %v2706 = vpack.c.bf16 %v2674, %v2674
      %vm2707 = vcmask 60416
      %2708 = vst.msk [vmem:[%s388] sm:$0xf] %vm2707, %v2675
      %2709 = vst.msk [vmem:[%s388 + $0x4] sm:$0xf] %vm2707, %v2676
      %2710 = vst.msk [vmem:[%s388 + $0x8] sm:$0xf] %vm2707, %v2677
      %2711 = vst.msk [vmem:[%s388 + $0xc] sm:$0xf] %vm2707, %v2678
      %2712 = vst.msk [vmem:[%s388 + $0x10] sm:$0xf] %vm2707, %v2679
      %2713 = vst.msk [vmem:[%s388 + $0x14] sm:$0xf] %vm2707, %v2680
      %2714 = vst.msk [vmem:[%s388 + $0x18] sm:$0xf] %vm2707, %v2681
      %2715 = vst.msk [vmem:[%s388 + $0x1c] sm:$0xf] %vm2707, %v2682
      %2716 = vst.msk [vmem:[%s388 + $0x20] sm:$0xf] %vm2707, %v2683
      %2717 = vst.msk [vmem:[%s388 + $0x24] sm:$0xf] %vm2707, %v2684
      %2718 = vst.msk [vmem:[%s388 + $0x28] sm:$0xf] %vm2707, %v2685
      %2719 = vst.msk [vmem:[%s388 + $0x2c] sm:$0xf] %vm2707, %v2686
      %2720 = vst.msk [vmem:[%s388 + $0x30] sm:$0xf] %vm2707, %v2687
      %2721 = vst.msk [vmem:[%s388 + $0x34] sm:$0xf] %vm2707, %v2688
      %2722 = vst.msk [vmem:[%s388 + $0x38] sm:$0xf] %vm2707, %v2689
      %2723 = vst.msk [vmem:[%s388 + $0x3c] sm:$0xf] %vm2707, %v2690
      %2724 = vst.msk [vmem:[%s388 + $0x40] sm:$0xf] %vm2707, %v2691
      %2725 = vst.msk [vmem:[%s388 + $0x44] sm:$0xf] %vm2707, %v2692
      %2726 = vst.msk [vmem:[%s388 + $0x48] sm:$0xf] %vm2707, %v2693
      %2727 = vst.msk [vmem:[%s388 + $0x4c] sm:$0xf] %vm2707, %v2694
      %2728 = vst.msk [vmem:[%s388 + $0x50] sm:$0xf] %vm2707, %v2695
      %2729 = vst.msk [vmem:[%s388 + $0x54] sm:$0xf] %vm2707, %v2696
      %2730 = vst.msk [vmem:[%s388 + $0x58] sm:$0xf] %vm2707, %v2697
      %2731 = vst.msk [vmem:[%s388 + $0x5c] sm:$0xf] %vm2707, %v2698
      %2732 = vst.msk [vmem:[%s388 + $0x60] sm:$0xf] %vm2707, %v2699
      %2733 = vst.msk [vmem:[%s388 + $0x64] sm:$0xf] %vm2707, %v2700
      %2734 = vst.msk [vmem:[%s388 + $0x68] sm:$0xf] %vm2707, %v2701
      %2735 = vst.msk [vmem:[%s388 + $0x6c] sm:$0xf] %vm2707, %v2702
      %2736 = vst.msk [vmem:[%s388 + $0x70] sm:$0xf] %vm2707, %v2703
      %2737 = vst.msk [vmem:[%s388 + $0x74] sm:$0xf] %vm2707, %v2704
      %2738 = vst.msk [vmem:[%s388 + $0x78] sm:$0xf] %vm2707, %v2705
      %2739 = vst.msk [vmem:[%s388 + $0x7c] sm:$0xf] %vm2707, %v2706
      %v2740 = vsel %vm450, %v2643, 0.0
      %v2741 = vsel %vm450, %v2644, 0.0
      %v2742 = vadd.f32 %v2740, %v2741
      %v2743 = vsel %vm450, %v2645, 0.0
      %v2744 = vadd.f32 %v2742, %v2743
      %v2745 = vsel %vm450, %v2646, 0.0
      %v2746 = vadd.f32 %v2744, %v2745
      %v2747 = vsel %vm450, %v2647, 0.0
      %v2748 = vadd.f32 %v2746, %v2747
      %v2749 = vsel %vm450, %v2648, 0.0
      %v2750 = vadd.f32 %v2748, %v2749
      %v2751 = vsel %vm450, %v2649, 0.0
      %v2752 = vadd.f32 %v2750, %v2751
      %v2753 = vsel %vm450, %v2650, 0.0
      %v2754 = vadd.f32 %v2752, %v2753
      %v2755 = vsel %vm450, %v2651, 0.0
      %v2756 = vadd.f32 %v2754, %v2755
      %v2757 = vsel %vm450, %v2652, 0.0
      %v2758 = vadd.f32 %v2756, %v2757
      %v2759 = vsel %vm450, %v2653, 0.0
      %v2760 = vadd.f32 %v2758, %v2759
      %v2761 = vsel %vm450, %v2654, 0.0
      %v2762 = vadd.f32 %v2760, %v2761
      %v2763 = vsel %vm450, %v2655, 0.0
      %v2764 = vadd.f32 %v2762, %v2763
      %v2765 = vsel %vm450, %v2656, 0.0
      %v2766 = vadd.f32 %v2764, %v2765
      %v2767 = vsel %vm450, %v2657, 0.0
      %v2768 = vadd.f32 %v2766, %v2767
      %v2769 = vsel %vm450, %v2658, 0.0
      %v2770 = vadd.f32 %v2768, %v2769
      %v2771 = vsel %vm450, %v2659, 0.0
      %v2772 = vadd.f32 %v2770, %v2771
      %v2773 = vsel %vm450, %v2660, 0.0
      %v2774 = vadd.f32 %v2772, %v2773
      %v2775 = vsel %vm450, %v2661, 0.0
      %v2776 = vadd.f32 %v2774, %v2775
      %v2777 = vsel %vm450, %v2662, 0.0
      %v2778 = vadd.f32 %v2776, %v2777
      %v2779 = vsel %vm450, %v2663, 0.0
      %v2780 = vadd.f32 %v2778, %v2779
      %v2781 = vsel %vm450, %v2664, 0.0
      %v2782 = vadd.f32 %v2780, %v2781
      %v2783 = vsel %vm450, %v2665, 0.0
      %v2784 = vadd.f32 %v2782, %v2783
      %v2785 = vsel %vm450, %v2666, 0.0
      %v2786 = vadd.f32 %v2784, %v2785
      %v2787 = vsel %vm450, %v2667, 0.0
      %v2788 = vadd.f32 %v2786, %v2787
      %v2789 = vsel %vm450, %v2668, 0.0
      %v2790 = vadd.f32 %v2788, %v2789
      %v2791 = vsel %vm450, %v2669, 0.0
      %v2792 = vadd.f32 %v2790, %v2791
      %v2793 = vsel %vm450, %v2670, 0.0
      %v2794 = vadd.f32 %v2792, %v2793
      %v2795 = vsel %vm450, %v2671, 0.0
      %v2796 = vadd.f32 %v2794, %v2795
      %v2797 = vsel %vm450, %v2672, 0.0
      %v2798 = vadd.f32 %v2796, %v2797
      %v2799 = vsel %vm450, %v2673, 0.0
      %v2800 = vadd.f32 %v2798, %v2799
      %v2801 = vsel %vm450, %v2674, 0.0
      %v2802 = vadd.f32 %v2800, %v2801
      %v2803 = vrot.slane %v2802, 4
      %v2804 = vadd.f32 %v2802, %v2803
      %v2805 = vrot.slane %v2804, 2
      %v2806 = vadd.f32 %v2804, %v2805
      %v2807 = vrot.slane %v2806, 1
      %v2808 = vadd.f32 %v2806, %v2807
      %v2809 = vmul.f32 %v2808, 0.00390625
      %v2810 = vsub.f32 %v2643, %v2809
      %v2811 = vsub.f32 %v2644, %v2809
      %v2812 = vsub.f32 %v2645, %v2809
      %v2813 = vsub.f32 %v2646, %v2809
      %v2814 = vsub.f32 %v2647, %v2809
      %v2815 = vsub.f32 %v2648, %v2809
      %v2816 = vsub.f32 %v2649, %v2809
      %v2817 = vsub.f32 %v2650, %v2809
      %v2818 = vsub.f32 %v2651, %v2809
      %v2819 = vsub.f32 %v2652, %v2809
      %v2820 = vsub.f32 %v2653, %v2809
      %v2821 = vsub.f32 %v2654, %v2809
      %v2822 = vsub.f32 %v2655, %v2809
      %v2823 = vsub.f32 %v2656, %v2809
      %v2824 = vsub.f32 %v2657, %v2809
      %v2825 = vsub.f32 %v2658, %v2809
      %v2826 = vsub.f32 %v2659, %v2809
      %v2827 = vsub.f32 %v2660, %v2809
      %v2828 = vsub.f32 %v2661, %v2809
      %v2829 = vsub.f32 %v2662, %v2809
      %v2830 = vsub.f32 %v2663, %v2809
      %v2831 = vsub.f32 %v2664, %v2809
      %v2832 = vsub.f32 %v2665, %v2809
      %v2833 = vsub.f32 %v2666, %v2809
      %v2834 = vsub.f32 %v2667, %v2809
      %v2835 = vsub.f32 %v2668, %v2809
      %v2836 = vsub.f32 %v2669, %v2809
      %v2837 = vsub.f32 %v2670, %v2809
      %v2838 = vsub.f32 %v2671, %v2809
      %v2839 = vsub.f32 %v2672, %v2809
      %v2840 = vsub.f32 %v2673, %v2809
      %v2841 = vsub.f32 %v2674, %v2809
      %v2842 = vmul.f32 %v2810, %v2810
      %v2843 = vmul.f32 %v2811, %v2811
      %v2844 = vmul.f32 %v2812, %v2812
      %v2845 = vmul.f32 %v2813, %v2813
      %v2846 = vmul.f32 %v2814, %v2814
      %v2847 = vmul.f32 %v2815, %v2815
      %v2848 = vmul.f32 %v2816, %v2816
      %v2849 = vmul.f32 %v2817, %v2817
      %v2850 = vmul.f32 %v2818, %v2818
      %v2851 = vmul.f32 %v2819, %v2819
      %v2852 = vmul.f32 %v2820, %v2820
      %v2853 = vmul.f32 %v2821, %v2821
      %v2854 = vmul.f32 %v2822, %v2822
      %v2855 = vmul.f32 %v2823, %v2823
      %v2856 = vmul.f32 %v2824, %v2824
      %v2857 = vmul.f32 %v2825, %v2825
      %v2858 = vmul.f32 %v2826, %v2826
      %v2859 = vmul.f32 %v2827, %v2827
      %v2860 = vmul.f32 %v2828, %v2828
      %v2861 = vmul.f32 %v2829, %v2829
      %v2862 = vmul.f32 %v2830, %v2830
      %v2863 = vmul.f32 %v2831, %v2831
      %v2864 = vmul.f32 %v2832, %v2832
      %v2865 = vmul.f32 %v2833, %v2833
      %v2866 = vmul.f32 %v2834, %v2834
      %v2867 = vmul.f32 %v2835, %v2835
      %v2868 = vmul.f32 %v2836, %v2836
      %v2869 = vmul.f32 %v2837, %v2837
      %v2870 = vmul.f32 %v2838, %v2838
      %v2871 = vmul.f32 %v2839, %v2839
      %v2872 = vmul.f32 %v2840, %v2840
      %v2873 = vmul.f32 %v2841, %v2841
      %v2874 = vsel %vm450, %v2842, 0.0
      %v2875 = vsel %vm450, %v2843, 0.0
      %v2876 = vadd.f32 %v2874, %v2875
      %v2877 = vsel %vm450, %v2844, 0.0
      %v2878 = vadd.f32 %v2876, %v2877
      %v2879 = vsel %vm450, %v2845, 0.0
      %v2880 = vadd.f32 %v2878, %v2879
      %v2881 = vsel %vm450, %v2846, 0.0
      %v2882 = vadd.f32 %v2880, %v2881
      %v2883 = vsel %vm450, %v2847, 0.0
      %v2884 = vadd.f32 %v2882, %v2883
      %v2885 = vsel %vm450, %v2848, 0.0
      %v2886 = vadd.f32 %v2884, %v2885
      %v2887 = vsel %vm450, %v2849, 0.0
      %v2888 = vadd.f32 %v2886, %v2887
      %v2889 = vsel %vm450, %v2850, 0.0
      %v2890 = vadd.f32 %v2888, %v2889
      %v2891 = vsel %vm450, %v2851, 0.0
      %v2892 = vadd.f32 %v2890, %v2891
      %v2893 = vsel %vm450, %v2852, 0.0
      %v2894 = vadd.f32 %v2892, %v2893
      %v2895 = vsel %vm450, %v2853, 0.0
      %v2896 = vadd.f32 %v2894, %v2895
      %v2897 = vsel %vm450, %v2854, 0.0
      %v2898 = vadd.f32 %v2896, %v2897
      %v2899 = vsel %vm450, %v2855, 0.0
      %v2900 = vadd.f32 %v2898, %v2899
      %v2901 = vsel %vm450, %v2856, 0.0
      %v2902 = vadd.f32 %v2900, %v2901
      %v2903 = vsel %vm450, %v2857, 0.0
      %v2904 = vadd.f32 %v2902, %v2903
      %v2905 = vsel %vm450, %v2858, 0.0
      %v2906 = vadd.f32 %v2904, %v2905
      %v2907 = vsel %vm450, %v2859, 0.0
      %v2908 = vadd.f32 %v2906, %v2907
      %v2909 = vsel %vm450, %v2860, 0.0
      %v2910 = vadd.f32 %v2908, %v2909
      %v2911 = vsel %vm450, %v2861, 0.0
      %v2912 = vadd.f32 %v2910, %v2911
      %v2913 = vsel %vm450, %v2862, 0.0
      %v2914 = vadd.f32 %v2912, %v2913
      %v2915 = vsel %vm450, %v2863, 0.0
      %v2916 = vadd.f32 %v2914, %v2915
      %v2917 = vsel %vm450, %v2864, 0.0
      %v2918 = vadd.f32 %v2916, %v2917
      %v2919 = vsel %vm450, %v2865, 0.0
      %v2920 = vadd.f32 %v2918, %v2919
      %v2921 = vsel %vm450, %v2866, 0.0
      %v2922 = vadd.f32 %v2920, %v2921
      %v2923 = vsel %vm450, %v2867, 0.0
      %v2924 = vadd.f32 %v2922, %v2923
      %v2925 = vsel %vm450, %v2868, 0.0
      %v2926 = vadd.f32 %v2924, %v2925
      %v2927 = vsel %vm450, %v2869, 0.0
      %v2928 = vadd.f32 %v2926, %v2927
      %v2929 = vsel %vm450, %v2870, 0.0
      %v2930 = vadd.f32 %v2928, %v2929
      %v2931 = vsel %vm450, %v2871, 0.0
      %v2932 = vadd.f32 %v2930, %v2931
      %v2933 = vsel %vm450, %v2872, 0.0
      %v2934 = vadd.f32 %v2932, %v2933
      %v2935 = vsel %vm450, %v2873, 0.0
      %v2936 = vadd.f32 %v2934, %v2935
      %v2937 = vrot.slane %v2936, 4
      %v2938 = vadd.f32 %v2936, %v2937
      %v2939 = vrot.slane %v2938, 2
      %v2940 = vadd.f32 %v2938, %v2939
      %v2941 = vrot.slane %v2940, 1
      %v2942 = vadd.f32 %v2940, %v2941
      %vm2943 = vcmask 1040384
      %v2944 = vsel %vm2943, %v2808, %v2942
      %vm2945 = vcmask 58368
      %2946 = vst.msk [vmem:[%s393] sm:$0x3] %vm2945, %v2944
      %s2947 = smul.u32 16, %s19
      %p2948 = scmp.lt.s32.totalorder %s2947, 31
      %s2949 = scalar_select %p2948, %s2947, 31
      %s2950 = smul.addr %s2949, 2
      %s2951 = smul.addr %s2950, 4
      %s2952 = scalar_lea.vmem %s6, %s2951
      %p2953 = scmp.lt.s32.totalorder %s19, 1
      %s2954 = scalar_select %p2953, %s19, 1
      %s2955 = smul.addr %s2954, 2
      %s2956 = scalar_lea.vmem %s7, %s2955
      // Predicated region
      $region45: #{resblock_forward.6} parent=43 // pred_check
        %p2957 = pneg %p194
      $region46: #{resblock_forward.6} parent=43 // pred_check_branch
        %2959 = sbr.rel (%p2957) target = $region48
      $region47: #{resblock_forward.6} parent=43 // pred_region
        %s2960 = smul.u32 16, %s19
      $region48: #{resblock_forward.6} parent=43 // pred_fallthru
        _
      // Predicated region
      $region49: #{resblock_forward.6} parent=43 // pred_check
        %p2961 = pneg %p220
      $region50: #{resblock_forward.6} parent=43 // pred_check_branch
        %2963 = sbr.rel (%p2961) target = $region52
      $region51: #{resblock_forward.6} parent=43 // pred_region
        _
      $region52: #{resblock_forward.6} parent=43 // pred_fallthru
        _
    $region44: #{resblock_forward.6} parent=5 // pred_fallthru
      _
    %p2964 = scmp.le.s32.totalorder 2, %s14
    // Predicated region
    $region53: #{resblock_forward.6} parent=5 // pred_check
      %p2965 = pneg %p2964
    $region54: #{resblock_forward.6} parent=5 // pred_check_branch
      %2967 = sbr.rel (%p2965) target = $region56
    $region55: #{resblock_forward.6} parent=5 // pred_region
      %s2968 = ssub.s32 %s14, 2
      // Predicated region
      $region57: #{resblock_forward.6} parent=55 // pred_check
        %p2969 = pneg %p200
      $region58: #{resblock_forward.6} parent=55 // pred_check_branch
        %2971 = sbr.rel (%p2969) target = $region60
      $region59: #{resblock_forward.6} parent=55 // pred_region
        %s2972 = smul.u32 16, %s20
        %p2973 = scmp.lt.s32.totalorder %s2972, 31
        %s2974 = scalar_select %p2973, %s2972, 31
        %s2975 = smul.addr %s2974, 2
        %s2976 = smul.addr %s2975, 4
        %s2977 = scalar_lea.vmem %s6, %s2976
      $region60: #{resblock_forward.6} parent=55 // pred_fallthru
        _
      // Predicated region
      $region61: #{resblock_forward.6} parent=55 // pred_check
        %p2978 = pneg %p226
      $region62: #{resblock_forward.6} parent=55 // pred_check_branch
        %2980 = sbr.rel (%p2978) target = $region64
      $region63: #{resblock_forward.6} parent=55 // pred_region
        %p2981 = scmp.lt.s32.totalorder %s20, 1
        %s2982 = scalar_select %p2981, %s20, 1
        %s2983 = smul.addr %s2982, 2
        %s2984 = scalar_lea.vmem %s7, %s2983
      $region64: #{resblock_forward.6} parent=55 // pred_fallthru
        _
    $region56: #{resblock_forward.6} parent=5 // pred_fallthru
      _
  $region6: #{resblock_forward.6} parent=0 // loop_footer
    %s18 = sadd.s32 1, %s14
  $region7: #{resblock_forward.6} parent=0 // loop_footer_branch
    %13 = sbr.rel target = $region3
  $region8: #{resblock_forward.6} parent=0 // loop_exit
    _

</llo_original>
